<compile_context>
chip_gen: v5e
topology: v5e:2x2
jax: 0.10.0
libtpu: 0.0.40
codegen_flags: <defaults>
</compile_context>

<pallas_src>
import numpy as np
import jax
import jax.numpy as jnp
from jax.experimental import pallas as pl
from jax.experimental.pallas import tpu as pltpu

EPS = 1e-5  # PyTorch LayerNorm default eps


# --------------------------- model configuration ---------------------------

def layer_configs(nz, ngf, nc, resks=3):
    rk, rp = (resks, resks), (resks // 2, resks // 2)
    return [
        dict(cin=nz,      cout=ngf * 8, k=(3, 3), s=(1, 1), p=(0, 0), bias=False),
        dict(cin=ngf * 8, cout=ngf * 4, k=(4, 4), s=(3, 1), p=(1, 1), bias=False),
        dict(cin=ngf * 4, cout=ngf * 4, k=rk,     s=(1, 1), p=rp,     bias=True),
        dict(cin=ngf * 4, cout=ngf * 4, k=rk,     s=(1, 1), p=rp,     bias=True),
        dict(cin=ngf * 4, cout=ngf * 2, k=(5, 4), s=(4, 1), p=(1, 1), bias=False),
        dict(cin=ngf * 2, cout=ngf * 2, k=rk,     s=(1, 1), p=rp,     bias=True),
        dict(cin=ngf * 2, cout=ngf * 2, k=rk,     s=(1, 1), p=rp,     bias=True),
        dict(cin=ngf * 2, cout=ngf,     k=(5, 4), s=(2, 1), p=(1, 0), bias=False),
        dict(cin=ngf,     cout=nc,      k=(5, 4), s=(2, 2), p=(0, 1), bias=True),
    ]


def ln_shapes(ngf):
    return [(ngf * 8, 3, 3), (ngf * 4, 8, 4), (ngf * 4, 8, 4), (ngf * 4, 8, 4),
            (ngf * 2, 31, 5), (ngf * 2, 31, 5), (ngf * 2, 31, 5), (ngf, 63, 8)]


def init_raw_params(key, nz, ngf, nc):
    """Raw (PyTorch-layout) parameters: wt (Cin,Cout,kh,kw), bias, gamma, beta."""
    cfgs = layer_configs(nz, ngf, nc)
    lns = ln_shapes(ngf)
    raw = []
    for i, cfg in enumerate(cfgs):
        key, kw_, kb_, kg_, kbe_ = jax.random.split(key, 5)
        cin, cout = cfg["cin"], cfg["cout"]
        kh, kwid = cfg["k"]
        wt = 0.05 * jax.random.normal(kw_, (cin, cout, kh, kwid), jnp.float32)
        bias = (0.01 * jax.random.normal(kb_, (cout,), jnp.float32)
                if cfg["bias"] else None)
        if i < 8:
            C, H, W = lns[i]
            gamma = 1.0 + 0.1 * jax.random.normal(kg_, (C, H, W), jnp.float32)
            beta = 0.1 * jax.random.normal(kbe_, (C, H, W), jnp.float32)
        else:
            gamma = beta = None
        raw.append(dict(wt=wt, bias=bias, gamma=gamma, beta=beta))
    return raw, cfgs


# -------------------- fold ConvTranspose2d into matmuls ---------------------

def _fold_layer(wt, cfg, H_in, W_in):
    """Fold one ConvTranspose2d into per-height-tap constant matrices.

    With activations stored as A[(cin, w), h], the layer output (layout
    Y[(cout, wo), ho]) is   Y = sum_di  (Wmat[di] @ A) @ Hsel[di].
    """
    wt = np.asarray(wt)
    cin, cout, kh, kw = wt.shape
    sh, sw = cfg["s"]
    ph, pw = cfg["p"]
    padh, padw = kh - 1 - ph, kw - 1 - pw
    Hp = (H_in - 1) * sh + 1 + 2 * padh
    Wp = (W_in - 1) * sw + 1 + 2 * padw
    Ho, Wo = Hp - kh + 1, Wp - kw + 1

    # Rh[h, hi] = 1 iff padded/dilated row hi holds original row h (likewise Rw)
    Rh = np.zeros((H_in, Hp), np.float32)
    Rh[np.arange(H_in), padh + np.arange(H_in) * sh] = 1.0
    Rw = np.zeros((W_in, Wp), np.float32)
    Rw[np.arange(W_in), padw + np.arange(W_in) * sw] = 1.0

    # flipped kernel: Wf[ci, di, dj, co] = wt[ci, co, kh-1-di, kw-1-dj]
    Wf = np.flip(wt, axis=(2, 3)).transpose(0, 2, 3, 1)

    # Hsel[di][h, ho] = Rh[h, ho + di]
    Hsel = np.stack([Rh[:, di:di + Ho] for di in range(kh)], axis=0)

    # Guard: every Hsel column must be a pure 0/1 selection (at most one
    # nonzero), so applying it to f32 activations is exact.
    assert np.all((Hsel == 0.0) | (Hsel == 1.0))
    assert np.all(Hsel.sum(axis=1) <= 1.0 + 1e-6)

    # Wmat[di][(co,wo),(ci,w)] = sum_dj Wf[ci,di,dj,co] * Rw[w, wo + dj]
    Wmat = np.zeros((kh, cout * Wo, cin * W_in), np.float32)
    for di in range(kh):
        m = np.zeros((cout, Wo, cin, W_in), np.float32)
        for dj in range(kw):
            m += np.einsum("ab,cd->bdac", Wf[:, di, dj, :], Rw[:, dj:dj + Wo])
        Wmat[di] = m.reshape(cout * Wo, cin * W_in)
    return Wmat, Hsel, Ho, Wo


def _round_up(x, m):
    return ((x + m - 1) // m) * m


class _Slab:
    """Packs many small 2-D constants into one (rows, cols) slab.

    Each constant is placed at column 0 with its row offset aligned to `align`
    (sublane-tile aligned: 16 for bf16, 8 for f32) so in-kernel static slices
    start on tile boundaries.
    """

    def __init__(self, align, dtype):
        self.align, self.dtype = align, dtype
        self.rows, self.cols, self.parts = 0, 0, []

    def add(self, arr):
        arr = np.asarray(arr, np.float32)
        assert arr.ndim == 2
        off = self.rows
        self.parts.append((off, arr))
        self.rows += _round_up(arr.shape[0], self.align)
        self.cols = max(self.cols, arr.shape[1])
        return off

    def build(self):
        rows = _round_up(max(self.rows, self.align), self.align)
        buf = np.zeros((rows, self.cols), np.float32)
        for off, arr in self.parts:
            buf[off:off + arr.shape[0], :arr.shape[1]] = arr
        return jnp.asarray(buf, self.dtype)


def prepare_fused_params(raw, cfgs):
    """Pack all layer constants into 2 slabs + static per-layer metadata."""
    wslab = _Slab(align=16, dtype=jnp.bfloat16)   # tap-stacked conv weights
    pslab = _Slab(align=8, dtype=jnp.float32)     # Hsel / bias / gamma / beta
    H, W = 1, 1
    meta = []
    for i, (p, cfg) in enumerate(zip(raw, cfgs)):
        Wmat, Hsel, Ho, Wo = _fold_layer(p["wt"], cfg, H, W)
        kh = cfg["k"][0]
        M = cfg["cout"] * Wo
        K = cfg["cin"] * W
        hstride = _round_up(max(H, 1), 8)          # 8-aligned per-tap Hsel block
        wstack = Wmat.reshape(kh * M, K)           # taps stacked along M
        hstack = np.zeros((kh * hstride, Ho), np.float32)
        for di in range(kh):
            hstack[di * hstride:di * hstride + H, :] = Hsel[di]
        lay = dict(kh=kh, M=M, K=K, Hin=H, Ho=Ho, Wo=Wo, hstride=hstride,
                   has_bias=p["bias"] is not None, has_ln=i < 8,
                   woff=wslab.add(wstack), hoff=pslab.add(hstack))
        if lay["has_bias"]:
            b2 = np.repeat(np.asarray(p["bias"]), Wo).reshape(M, 1)
            lay["boff"] = pslab.add(b2)
        if lay["has_ln"]:
            g2 = np.asarray(p["gamma"]).transpose(0, 2, 1).reshape(M, Ho)
            be2 = np.asarray(p["beta"]).transpose(0, 2, 1).reshape(M, Ho)
            lay["goff"] = pslab.add(g2)
            lay["beoff"] = pslab.add(be2)
        meta.append(lay)
        H, W = Ho, Wo
    return wslab.build(), pslab.build(), meta


# ------------------------------ fused kernel --------------------------------

def build_fused_forward(wslab, pslab, meta, nz, batch):
    rows = meta[-1]["M"]      # nc * W_out = 16
    h_out = meta[-1]["Ho"]    # 129

    def kernel(z_ref, w_ref, p_ref, o_ref):

        def apply_layer(a, lay):
            kh, M, K = lay["kh"], lay["M"], lay["K"]
            Hin, Ho = lay["Hin"], lay["Ho"]
            woff, hoff, hstride = lay["woff"], lay["hoff"], lay["hstride"]

            if Hin == 1:
                # 1x1 spatial input (layer 0): select-then-matmul (exact f32
                # outer product on the VPU, bf16 only at the MXU operand).
                y = None
                for di in range(kh):
                    sel = p_ref[hoff + di * hstride:hoff + di * hstride + 1, 0:Ho]
                    x = (a * sel).astype(jnp.bfloat16)            # (K, Ho)
                    wdi = w_ref[woff + di * M:woff + (di + 1) * M, 0:K]
                    c = jnp.dot(wdi, x, preferred_element_type=jnp.float32)
                    y = c if y is None else y + c
            else:
                # One tall bf16 MXU matmul over all kh stacked height taps ...
                wmat = w_ref[woff:woff + kh * M, 0:K]             # bf16
                t = jnp.dot(wmat, a.astype(jnp.bfloat16),
                            preferred_element_type=jnp.float32)   # (kh*M, Hin)
                # ... then kh tiny, exact f32 0/1 column selections, summed.
                y = None
                for di in range(kh):
                    sel = p_ref[hoff + di * hstride:
                                hoff + di * hstride + Hin, 0:Ho]  # (Hin, Ho)
                    c = jnp.dot(t[di * M:(di + 1) * M, :], sel,
                                preferred_element_type=jnp.float32)
                    y = c if y is None else y + c

            if lay["has_bias"]:
                y = y + p_ref[lay["boff"]:lay["boff"] + M, 0:1]   # (M,1) bcast

            if lay["has_ln"]:
                inv_n = 1.0 / float(M * Ho)
                mu = jnp.sum(y) * inv_n                 # mean
                d = y - mu                              # reused for normalize
                var = jnp.sum(d * d) * inv_n            # mean-subtracted var
                g = p_ref[lay["goff"]:lay["goff"] + M, 0:Ho]
                be = p_ref[lay["beoff"]:lay["beoff"] + M, 0:Ho]
                y = d * jax.lax.rsqrt(var + EPS) * g + be
                y = jnp.maximum(y, 0.0)                 # ReLU
            else:                                       # final layer: Softplus
                y = jnp.maximum(y, 0.0) + jnp.log1p(jnp.exp(-jnp.abs(y)))
            return y

        x = apply_layer(z_ref[...], meta[0])            # (nz,1) -> (192,3)
        x = apply_layer(x, meta[1])
        h = apply_layer(x, meta[2])
        h = apply_layer(h, meta[3])
        x = x + h                                       # residual add (VMEM)
        x = apply_layer(x, meta[4])
        h = apply_layer(x, meta[5])
        h = apply_layer(h, meta[6])
        x = x + h                                       # residual add (VMEM)
        x = apply_layer(x, meta[7])
        x = apply_layer(x, meta[8])                     # (16, 129)
        o_ref[...] = x                                  # lane-dense store

    return pl.pallas_call(
        kernel,
        out_shape=jax.ShapeDtypeStruct((batch, rows, h_out), jnp.float32),
        grid=(batch,),
        in_specs=[
            pl.BlockSpec((None, nz, 1), lambda b: (b, 0, 0)),
            pl.BlockSpec(wslab.shape, lambda b: (0, 0)),   # grid-invariant slab
            pl.BlockSpec(pslab.shape, lambda b: (0, 0)),   # grid-invariant slab
        ],
        out_specs=pl.BlockSpec((None, rows, h_out), lambda b: (b, 0, 0)),
        compiler_params=pltpu.CompilerParams(dimension_semantics=("parallel",)),
    )


# ----------------------- pure-JAX reference (no Pallas) ----------------------

def _convT_ref(x, wt, stride, pad):
    cin, cout, kh, kw = wt.shape
    sh, sw = stride
    ph, pw = pad
    wf = jnp.flip(wt, axis=(2, 3)).transpose(1, 0, 2, 3)   # (Cout, Cin, kh, kw)
    return jax.lax.conv_general_dilated(
        x, wf, window_strides=(1, 1),
        padding=((kh - 1 - ph, kh - 1 - ph), (kw - 1 - pw, kw - 1 - pw)),
        lhs_dilation=(sh, sw),
        dimension_numbers=("NCHW", "OIHW", "NCHW"))


def reference_forward(z, raw, cfgs, nz):
    B = z.shape[0]

    def layer(x, i):
        p, cfg = raw[i], cfgs[i]
        y = _convT_ref(x, p["wt"], cfg["s"], cfg["p"])
        if p["bias"] is not None:
            y = y + p["bias"][None, :, None, None]
        if i < 8:
            mu = jnp.mean(y, axis=(1, 2, 3), keepdims=True)
            var = jnp.mean((y - mu) ** 2, axis=(1, 2, 3), keepdims=True)
            y = (y - mu) * jax.lax.rsqrt(var + EPS)
            y = y * p["gamma"][None] + p["beta"][None]
            y = jnp.maximum(y, 0.0)
        else:
            y = jax.nn.softplus(y)
        return y

    x = z.reshape(B, nz, 1, 1)
    x = layer(x, 0)
    x = layer(x, 1)
    h = layer(x, 2)
    h = layer(h, 3)
    x = x + h
    x = layer(x, 4)
    h = layer(x, 5)
    h = layer(h, 6)
    x = x + h
    x = layer(x, 7)
    x = layer(x, 8)
    return x


# ----------------------------------- main ------------------------------------

if __name__ == "__main__":
    nz, ngf, nc, batch = 16, 8, 1, 2
    key = jax.random.PRNGKey(0)
    kp, kz = jax.random.split(key)

    raw, cfgs = init_raw_params(kp, nz, ngf, nc)
    wslab, pslab, meta = prepare_fused_params(raw, cfgs)
    z = jax.random.normal(kz, (batch, nz), jnp.float32)

    fused = build_fused_forward(wslab, pslab, meta, nz, batch)
    rows = meta[-1]["M"]      # 16  (nc * W_out)
    h_out = meta[-1]["Ho"]    # 129
    w_out = meta[-1]["Wo"]    # 16

    @jax.jit
    def fwd(zz, ws, ps):
        # Hot path returns the kernel's lane-dense native layout
        # (B, nc*W_out, H_out); no post-kernel reshape/transpose.
        return fused(zz.reshape(batch, nz, 1), ws, ps)

    out_native = jax.block_until_ready(fwd(z, wslab, pslab))
    assert out_native.shape == (batch, rows, h_out), out_native.shape

    # NCHW conversion only for validation against the PyTorch-equivalent
    # XLA reference (kept out of the jitted forward on purpose).
    out_nchw = np.asarray(out_native).reshape(batch, nc, w_out, h_out)
    out_nchw = out_nchw.transpose(0, 1, 3, 2)            # (B, nc, H, W)

    assert out_nchw.shape == (batch, nc, 129, 16), out_nchw.shape
    assert np.all(np.isfinite(out_nchw))
    assert np.all(out_nchw >= 0.0)                       # softplus is >= 0

    ref = np.asarray(jax.block_until_ready(reference_forward(z, raw, cfgs, nz)))
    err = float(np.max(np.abs(out_nchw - ref)))
    assert err < 0.1, f"mismatch vs reference: max abs err {err}"

    print("KERNEL_OK")
</pallas_src>

<mosaic_0001>
module attributes {stable_mosaic.version = 11 : i64} {
  func.func @kernel(%arg0: i32, %arg1: memref<1x16x1xf32, #tpu.memory_space<vmem>>, %arg2: memref<3136x192xbf16, #tpu.memory_space<vmem>>, %arg3: memref<3008x129xf32, #tpu.memory_space<vmem>>, %arg4: memref<1x16x129xf32, #tpu.memory_space<vmem>>) attributes {dimension_semantics = [#tpu.dimension_semantics<parallel>], iteration_bounds = array<i64: 2>, scalar_prefetch = 0 : i64, scratch_operands = 0 : i64, tpu.core_type = #tpu.core_type<tc>, window_params = [{transform_indices = @transform_0, window_bounds = array<i64: 1, 16, 1>}, {pipeline_mode = #tpu.pipeline_mode<synchronous>, transform_indices = @transform_1, window_bounds = array<i64: 3136, 192>}, {pipeline_mode = #tpu.pipeline_mode<synchronous>, transform_indices = @transform_2, window_bounds = array<i64: 3008, 129>}, {transform_indices = @transform_3, window_bounds = array<i64: 1, 16, 129>}]} {
    %c0 = arith.constant 0 : index
    %c0_0 = arith.constant 0 : index
    %c0_1 = arith.constant 0 : index
    %0 = vector.load %arg1[%c0, %c0_0, %c0_1] : memref<1x16x1xf32, #tpu.memory_space<vmem>>, vector<1x16x1xf32>
    %1 = vector.shape_cast %0 : vector<1x16x1xf32> to vector<16x1xf32>
    %c0_2 = arith.constant 0 : index
    %c0_3 = arith.constant 0 : index
    %2 = vector.load %arg3[%c0_2, %c0_3] : memref<3008x129xf32, #tpu.memory_space<vmem>>, vector<1x3xf32>
    %3 = vector.broadcast %1 : vector<16x1xf32> to vector<16x3xf32>
    %4 = vector.broadcast %2 : vector<1x3xf32> to vector<16x3xf32>
    %5 = arith.mulf %3, %4 : vector<16x3xf32>
    %6 = arith.truncf %5 : vector<16x3xf32> to vector<16x3xbf16>
    %c0_4 = arith.constant 0 : index
    %c0_5 = arith.constant 0 : index
    %7 = vector.load %arg2[%c0_4, %c0_5] : memref<3136x192xbf16, #tpu.memory_space<vmem>>, vector<192x16xbf16>
    %cst = arith.constant dense<0.000000e+00> : vector<192x3xf32>
    %8 = tpu.matmul %7, %6, %cst {dimension_numbers = #tpu.dot_dimension_numbers<[1], [0], [0], [1], [0, 0, 1, 1], [], []>} : vector<192x16xbf16>, vector<16x3xbf16>, vector<192x3xf32> -> vector<192x3xf32>
    %c8 = arith.constant 8 : index
    %c0_6 = arith.constant 0 : index
    %9 = vector.load %arg3[%c8, %c0_6] : memref<3008x129xf32, #tpu.memory_space<vmem>>, vector<1x3xf32>
    %10 = vector.broadcast %1 : vector<16x1xf32> to vector<16x3xf32>
    %11 = vector.broadcast %9 : vector<1x3xf32> to vector<16x3xf32>
    %12 = arith.mulf %10, %11 : vector<16x3xf32>
    %13 = arith.truncf %12 : vector<16x3xf32> to vector<16x3xbf16>
    %c192 = arith.constant 192 : index
    %c0_7 = arith.constant 0 : index
    %14 = vector.load %arg2[%c192, %c0_7] : memref<3136x192xbf16, #tpu.memory_space<vmem>>, vector<192x16xbf16>
    %cst_8 = arith.constant dense<0.000000e+00> : vector<192x3xf32>
    %15 = tpu.matmul %14, %13, %cst_8 {dimension_numbers = #tpu.dot_dimension_numbers<[1], [0], [0], [1], [0, 0, 1, 1], [], []>} : vector<192x16xbf16>, vector<16x3xbf16>, vector<192x3xf32> -> vector<192x3xf32>
    %16 = arith.addf %8, %15 : vector<192x3xf32>
    %c16 = arith.constant 16 : index
    %c0_9 = arith.constant 0 : index
    %17 = vector.load %arg3[%c16, %c0_9] : memref<3008x129xf32, #tpu.memory_space<vmem>>, vector<1x3xf32>
    %18 = vector.broadcast %1 : vector<16x1xf32> to vector<16x3xf32>
    %19 = vector.broadcast %17 : vector<1x3xf32> to vector<16x3xf32>
    %20 = arith.mulf %18, %19 : vector<16x3xf32>
    %21 = arith.truncf %20 : vector<16x3xf32> to vector<16x3xbf16>
    %c384 = arith.constant 384 : index
    %c0_10 = arith.constant 0 : index
    %22 = vector.load %arg2[%c384, %c0_10] : memref<3136x192xbf16, #tpu.memory_space<vmem>>, vector<192x16xbf16>
    %cst_11 = arith.constant dense<0.000000e+00> : vector<192x3xf32>
    %23 = tpu.matmul %22, %21, %cst_11 {dimension_numbers = #tpu.dot_dimension_numbers<[1], [0], [0], [1], [0, 0, 1, 1], [], []>} : vector<192x16xbf16>, vector<16x3xbf16>, vector<192x3xf32> -> vector<192x3xf32>
    %24 = arith.addf %16, %23 : vector<192x3xf32>
    %25 = vector.shape_cast %24 : vector<192x3xf32> to vector<1x192x3xf32>
    %cst_12 = arith.constant dense<0.000000e+00> : vector<1xf32>
    %26 = vector.multi_reduction <add>, %25, %cst_12 [1, 2] : vector<1x192x3xf32> to vector<1xf32>
    %27 = vector.shape_cast %26 : vector<1xf32> to vector<1x1x1xf32>
    %28 = vector.extract %27[0, 0, 0] : f32 from vector<1x1x1xf32>
    %cst_13 = arith.constant 0.00173611112 : f32
    %29 = arith.mulf %28, %cst_13 : f32
    %30 = vector.broadcast %29 : f32 to vector<192x3xf32>
    %31 = arith.subf %24, %30 : vector<192x3xf32>
    %32 = arith.mulf %31, %31 : vector<192x3xf32>
    %33 = vector.shape_cast %32 : vector<192x3xf32> to vector<1x192x3xf32>
    %cst_14 = arith.constant dense<0.000000e+00> : vector<1xf32>
    %34 = vector.multi_reduction <add>, %33, %cst_14 [1, 2] : vector<1x192x3xf32> to vector<1xf32>
    %35 = vector.shape_cast %34 : vector<1xf32> to vector<1x1x1xf32>
    %36 = vector.extract %35[0, 0, 0] : f32 from vector<1x1x1xf32>
    %cst_15 = arith.constant 0.00173611112 : f32
    %37 = arith.mulf %36, %cst_15 : f32
    %c24 = arith.constant 24 : index
    %c0_16 = arith.constant 0 : index
    %38 = vector.load %arg3[%c24, %c0_16] : memref<3008x129xf32, #tpu.memory_space<vmem>>, vector<192x3xf32>
    %c216 = arith.constant 216 : index
    %c0_17 = arith.constant 0 : index
    %39 = vector.load %arg3[%c216, %c0_17] : memref<3008x129xf32, #tpu.memory_space<vmem>>, vector<192x3xf32>
    %cst_18 = arith.constant 9.99999974E-6 : f32
    %40 = arith.addf %37, %cst_18 : f32
    %41 = math.rsqrt %40 : f32
    %42 = vector.broadcast %41 : f32 to vector<192x3xf32>
    %43 = arith.mulf %31, %42 : vector<192x3xf32>
    %44 = arith.mulf %43, %38 : vector<192x3xf32>
    %45 = arith.addf %44, %39 : vector<192x3xf32>
    %cst_19 = arith.constant 0.000000e+00 : f32
    %46 = vector.broadcast %cst_19 : f32 to vector<192x3xf32>
    %47 = arith.maximumf %45, %46 : vector<192x3xf32>
    %c576 = arith.constant 576 : index
    %c0_20 = arith.constant 0 : index
    %48 = vector.load %arg2[%c576, %c0_20] : memref<3136x192xbf16, #tpu.memory_space<vmem>>, vector<512x192xbf16>
    %49 = arith.truncf %47 : vector<192x3xf32> to vector<192x3xbf16>
    %cst_21 = arith.constant dense<0.000000e+00> : vector<512x3xf32>
    %50 = tpu.matmul %48, %49, %cst_21 {dimension_numbers = #tpu.dot_dimension_numbers<[1], [0], [0], [1], [0, 0, 1, 1], [], []>} : vector<512x192xbf16>, vector<192x3xbf16>, vector<512x3xf32> -> vector<512x3xf32>
    %c408 = arith.constant 408 : index
    %c0_22 = arith.constant 0 : index
    %51 = vector.load %arg3[%c408, %c0_22] : memref<3008x129xf32, #tpu.memory_space<vmem>>, vector<3x8xf32>
    %52 = vector.extract_strided_slice %50 {offsets = [0, 0], sizes = [128, 3], strides = [1, 1]} : vector<512x3xf32> to vector<128x3xf32>
    %cst_23 = arith.constant dense<0.000000e+00> : vector<128x8xf32>
    %53 = tpu.matmul %52, %51, %cst_23 {dimension_numbers = #tpu.dot_dimension_numbers<[1], [0], [0], [1], [0, 0, 1, 1], [], []>} : vector<128x3xf32>, vector<3x8xf32>, vector<128x8xf32> -> vector<128x8xf32>
    %c416 = arith.constant 416 : index
    %c0_24 = arith.constant 0 : index
    %54 = vector.load %arg3[%c416, %c0_24] : memref<3008x129xf32, #tpu.memory_space<vmem>>, vector<3x8xf32>
    %55 = vector.extract_strided_slice %50 {offsets = [128, 0], sizes = [128, 3], strides = [1, 1]} : vector<512x3xf32> to vector<128x3xf32>
    %cst_25 = arith.constant dense<0.000000e+00> : vector<128x8xf32>
    %56 = tpu.matmul %55, %54, %cst_25 {dimension_numbers = #tpu.dot_dimension_numbers<[1], [0], [0], [1], [0, 0, 1, 1], [], []>} : vector<128x3xf32>, vector<3x8xf32>, vector<128x8xf32> -> vector<128x8xf32>
    %57 = arith.addf %53, %56 : vector<128x8xf32>
    %c424 = arith.constant 424 : index
    %c0_26 = arith.constant 0 : index
    %58 = vector.load %arg3[%c424, %c0_26] : memref<3008x129xf32, #tpu.memory_space<vmem>>, vector<3x8xf32>
    %59 = vector.extract_strided_slice %50 {offsets = [256, 0], sizes = [128, 3], strides = [1, 1]} : vector<512x3xf32> to vector<128x3xf32>
    %cst_27 = arith.constant dense<0.000000e+00> : vector<128x8xf32>
    %60 = tpu.matmul %59, %58, %cst_27 {dimension_numbers = #tpu.dot_dimension_numbers<[1], [0], [0], [1], [0, 0, 1, 1], [], []>} : vector<128x3xf32>, vector<3x8xf32>, vector<128x8xf32> -> vector<128x8xf32>
    %61 = arith.addf %57, %60 : vector<128x8xf32>
    %c432 = arith.constant 432 : index
    %c0_28 = arith.constant 0 : index
    %62 = vector.load %arg3[%c432, %c0_28] : memref<3008x129xf32, #tpu.memory_space<vmem>>, vector<3x8xf32>
    %63 = vector.extract_strided_slice %50 {offsets = [384, 0], sizes = [128, 3], strides = [1, 1]} : vector<512x3xf32> to vector<128x3xf32>
    %cst_29 = arith.constant dense<0.000000e+00> : vector<128x8xf32>
    %64 = tpu.matmul %63, %62, %cst_29 {dimension_numbers = #tpu.dot_dimension_numbers<[1], [0], [0], [1], [0, 0, 1, 1], [], []>} : vector<128x3xf32>, vector<3x8xf32>, vector<128x8xf32> -> vector<128x8xf32>
    %65 = arith.addf %61, %64 : vector<128x8xf32>
    %66 = vector.shape_cast %65 : vector<128x8xf32> to vector<1x128x8xf32>
    %cst_30 = arith.constant dense<0.000000e+00> : vector<1xf32>
    %67 = vector.multi_reduction <add>, %66, %cst_30 [1, 2] : vector<1x128x8xf32> to vector<1xf32>
    %68 = vector.shape_cast %67 : vector<1xf32> to vector<1x1x1xf32>
    %69 = vector.extract %68[0, 0, 0] : f32 from vector<1x1x1xf32>
    %cst_31 = arith.constant 9.765625E-4 : f32
    %70 = arith.mulf %69, %cst_31 : f32
    %71 = vector.broadcast %70 : f32 to vector<128x8xf32>
    %72 = arith.subf %65, %71 : vector<128x8xf32>
    %73 = arith.mulf %72, %72 : vector<128x8xf32>
    %74 = vector.shape_cast %73 : vector<128x8xf32> to vector<1x128x8xf32>
    %cst_32 = arith.constant dense<0.000000e+00> : vector<1xf32>
    %75 = vector.multi_reduction <add>, %74, %cst_32 [1, 2] : vector<1x128x8xf32> to vector<1xf32>
    %76 = vector.shape_cast %75 : vector<1xf32> to vector<1x1x1xf32>
    %77 = vector.extract %76[0, 0, 0] : f32 from vector<1x1x1xf32>
    %cst_33 = arith.constant 9.765625E-4 : f32
    %78 = arith.mulf %77, %cst_33 : f32
    %c440 = arith.constant 440 : index
    %c0_34 = arith.constant 0 : index
    %79 = vector.load %arg3[%c440, %c0_34] : memref<3008x129xf32, #tpu.memory_space<vmem>>, vector<128x8xf32>
    %c568 = arith.constant 568 : index
    %c0_35 = arith.constant 0 : index
    %80 = vector.load %arg3[%c568, %c0_35] : memref<3008x129xf32, #tpu.memory_space<vmem>>, vector<128x8xf32>
    %cst_36 = arith.constant 9.99999974E-6 : f32
    %81 = arith.addf %78, %cst_36 : f32
    %82 = math.rsqrt %81 : f32
    %83 = vector.broadcast %82 : f32 to vector<128x8xf32>
    %84 = arith.mulf %72, %83 : vector<128x8xf32>
    %85 = arith.mulf %84, %79 : vector<128x8xf32>
    %86 = arith.addf %85, %80 : vector<128x8xf32>
    %cst_37 = arith.constant 0.000000e+00 : f32
    %87 = vector.broadcast %cst_37 : f32 to vector<128x8xf32>
    %88 = arith.maximumf %86, %87 : vector<128x8xf32>
    %c1088 = arith.constant 1088 : index
    %c0_38 = arith.constant 0 : index
    %89 = vector.load %arg2[%c1088, %c0_38] : memref<3136x192xbf16, #tpu.memory_space<vmem>>, vector<384x128xbf16>
    %90 = arith.truncf %88 : vector<128x8xf32> to vector<128x8xbf16>
    %cst_39 = arith.constant dense<0.000000e+00> : vector<384x8xf32>
    %91 = tpu.matmul %89, %90, %cst_39 {dimension_numbers = #tpu.dot_dimension_numbers<[1], [0], [0], [1], [0, 0, 1, 1], [], []>} : vector<384x128xbf16>, vector<128x8xbf16>, vector<384x8xf32> -> vector<384x8xf32>
    %c696 = arith.constant 696 : index
    %c0_40 = arith.constant 0 : index
    %92 = vector.load %arg3[%c696, %c0_40] : memref<3008x129xf32, #tpu.memory_space<vmem>>, vector<8x8xf32>
    %93 = vector.extract_strided_slice %91 {offsets = [0, 0], sizes = [128, 8], strides = [1, 1]} : vector<384x8xf32> to vector<128x8xf32>
    %cst_41 = arith.constant dense<0.000000e+00> : vector<128x8xf32>
    %94 = tpu.matmul %93, %92, %cst_41 {dimension_numbers = #tpu.dot_dimension_numbers<[1], [0], [0], [1], [0, 0, 1, 1], [], []>} : vector<128x8xf32>, vector<8x8xf32>, vector<128x8xf32> -> vector<128x8xf32>
    %c704 = arith.constant 704 : index
    %c0_42 = arith.constant 0 : index
    %95 = vector.load %arg3[%c704, %c0_42] : memref<3008x129xf32, #tpu.memory_space<vmem>>, vector<8x8xf32>
    %96 = vector.extract_strided_slice %91 {offsets = [128, 0], sizes = [128, 8], strides = [1, 1]} : vector<384x8xf32> to vector<128x8xf32>
    %cst_43 = arith.constant dense<0.000000e+00> : vector<128x8xf32>
    %97 = tpu.matmul %96, %95, %cst_43 {dimension_numbers = #tpu.dot_dimension_numbers<[1], [0], [0], [1], [0, 0, 1, 1], [], []>} : vector<128x8xf32>, vector<8x8xf32>, vector<128x8xf32> -> vector<128x8xf32>
    %98 = arith.addf %94, %97 : vector<128x8xf32>
    %c712 = arith.constant 712 : index
    %c0_44 = arith.constant 0 : index
    %99 = vector.load %arg3[%c712, %c0_44] : memref<3008x129xf32, #tpu.memory_space<vmem>>, vector<8x8xf32>
    %100 = vector.extract_strided_slice %91 {offsets = [256, 0], sizes = [128, 8], strides = [1, 1]} : vector<384x8xf32> to vector<128x8xf32>
    %cst_45 = arith.constant dense<0.000000e+00> : vector<128x8xf32>
    %101 = tpu.matmul %100, %99, %cst_45 {dimension_numbers = #tpu.dot_dimension_numbers<[1], [0], [0], [1], [0, 0, 1, 1], [], []>} : vector<128x8xf32>, vector<8x8xf32>, vector<128x8xf32> -> vector<128x8xf32>
    %102 = arith.addf %98, %101 : vector<128x8xf32>
    %c720 = arith.constant 720 : index
    %c0_46 = arith.constant 0 : index
    %103 = vector.load %arg3[%c720, %c0_46] : memref<3008x129xf32, #tpu.memory_space<vmem>>, vector<128x1xf32>
    %104 = vector.broadcast %103 : vector<128x1xf32> to vector<128x8xf32>
    %105 = arith.addf %102, %104 : vector<128x8xf32>
    %106 = vector.shape_cast %105 : vector<128x8xf32> to vector<1x128x8xf32>
    %cst_47 = arith.constant dense<0.000000e+00> : vector<1xf32>
    %107 = vector.multi_reduction <add>, %106, %cst_47 [1, 2] : vector<1x128x8xf32> to vector<1xf32>
    %108 = vector.shape_cast %107 : vector<1xf32> to vector<1x1x1xf32>
    %109 = vector.extract %108[0, 0, 0] : f32 from vector<1x1x1xf32>
    %cst_48 = arith.constant 9.765625E-4 : f32
    %110 = arith.mulf %109, %cst_48 : f32
    %111 = vector.broadcast %110 : f32 to vector<128x8xf32>
    %112 = arith.subf %105, %111 : vector<128x8xf32>
    %113 = arith.mulf %112, %112 : vector<128x8xf32>
    %114 = vector.shape_cast %113 : vector<128x8xf32> to vector<1x128x8xf32>
    %cst_49 = arith.constant dense<0.000000e+00> : vector<1xf32>
    %115 = vector.multi_reduction <add>, %114, %cst_49 [1, 2] : vector<1x128x8xf32> to vector<1xf32>
    %116 = vector.shape_cast %115 : vector<1xf32> to vector<1x1x1xf32>
    %117 = vector.extract %116[0, 0, 0] : f32 from vector<1x1x1xf32>
    %cst_50 = arith.constant 9.765625E-4 : f32
    %118 = arith.mulf %117, %cst_50 : f32
    %c848 = arith.constant 848 : index
    %c0_51 = arith.constant 0 : index
    %119 = vector.load %arg3[%c848, %c0_51] : memref<3008x129xf32, #tpu.memory_space<vmem>>, vector<128x8xf32>
    %c976 = arith.constant 976 : index
    %c0_52 = arith.constant 0 : index
    %120 = vector.load %arg3[%c976, %c0_52] : memref<3008x129xf32, #tpu.memory_space<vmem>>, vector<128x8xf32>
    %cst_53 = arith.constant 9.99999974E-6 : f32
    %121 = arith.addf %118, %cst_53 : f32
    %122 = math.rsqrt %121 : f32
    %123 = vector.broadcast %122 : f32 to vector<128x8xf32>
    %124 = arith.mulf %112, %123 : vector<128x8xf32>
    %125 = arith.mulf %124, %119 : vector<128x8xf32>
    %126 = arith.addf %125, %120 : vector<128x8xf32>
    %cst_54 = arith.constant 0.000000e+00 : f32
    %127 = vector.broadcast %cst_54 : f32 to vector<128x8xf32>
    %128 = arith.maximumf %126, %127 : vector<128x8xf32>
    %c1472 = arith.constant 1472 : index
    %c0_55 = arith.constant 0 : index
    %129 = vector.load %arg2[%c1472, %c0_55] : memref<3136x192xbf16, #tpu.memory_space<vmem>>, vector<384x128xbf16>
    %130 = arith.truncf %128 : vector<128x8xf32> to vector<128x8xbf16>
    %cst_56 = arith.constant dense<0.000000e+00> : vector<384x8xf32>
    %131 = tpu.matmul %129, %130, %cst_56 {dimension_numbers = #tpu.dot_dimension_numbers<[1], [0], [0], [1], [0, 0, 1, 1], [], []>} : vector<384x128xbf16>, vector<128x8xbf16>, vector<384x8xf32> -> vector<384x8xf32>
    %c1104 = arith.constant 1104 : index
    %c0_57 = arith.constant 0 : index
    %132 = vector.load %arg3[%c1104, %c0_57] : memref<3008x129xf32, #tpu.memory_space<vmem>>, vector<8x8xf32>
    %133 = vector.extract_strided_slice %131 {offsets = [0, 0], sizes = [128, 8], strides = [1, 1]} : vector<384x8xf32> to vector<128x8xf32>
    %cst_58 = arith.constant dense<0.000000e+00> : vector<128x8xf32>
    %134 = tpu.matmul %133, %132, %cst_58 {dimension_numbers = #tpu.dot_dimension_numbers<[1], [0], [0], [1], [0, 0, 1, 1], [], []>} : vector<128x8xf32>, vector<8x8xf32>, vector<128x8xf32> -> vector<128x8xf32>
    %c1112 = arith.constant 1112 : index
    %c0_59 = arith.constant 0 : index
    %135 = vector.load %arg3[%c1112, %c0_59] : memref<3008x129xf32, #tpu.memory_space<vmem>>, vector<8x8xf32>
    %136 = vector.extract_strided_slice %131 {offsets = [128, 0], sizes = [128, 8], strides = [1, 1]} : vector<384x8xf32> to vector<128x8xf32>
    %cst_60 = arith.constant dense<0.000000e+00> : vector<128x8xf32>
    %137 = tpu.matmul %136, %135, %cst_60 {dimension_numbers = #tpu.dot_dimension_numbers<[1], [0], [0], [1], [0, 0, 1, 1], [], []>} : vector<128x8xf32>, vector<8x8xf32>, vector<128x8xf32> -> vector<128x8xf32>
    %138 = arith.addf %134, %137 : vector<128x8xf32>
    %c1120 = arith.constant 1120 : index
    %c0_61 = arith.constant 0 : index
    %139 = vector.load %arg3[%c1120, %c0_61] : memref<3008x129xf32, #tpu.memory_space<vmem>>, vector<8x8xf32>
    %140 = vector.extract_strided_slice %131 {offsets = [256, 0], sizes = [128, 8], strides = [1, 1]} : vector<384x8xf32> to vector<128x8xf32>
    %cst_62 = arith.constant dense<0.000000e+00> : vector<128x8xf32>
    %141 = tpu.matmul %140, %139, %cst_62 {dimension_numbers = #tpu.dot_dimension_numbers<[1], [0], [0], [1], [0, 0, 1, 1], [], []>} : vector<128x8xf32>, vector<8x8xf32>, vector<128x8xf32> -> vector<128x8xf32>
    %142 = arith.addf %138, %141 : vector<128x8xf32>
    %c1128 = arith.constant 1128 : index
    %c0_63 = arith.constant 0 : index
    %143 = vector.load %arg3[%c1128, %c0_63] : memref<3008x129xf32, #tpu.memory_space<vmem>>, vector<128x1xf32>
    %144 = vector.broadcast %143 : vector<128x1xf32> to vector<128x8xf32>
    %145 = arith.addf %142, %144 : vector<128x8xf32>
    %146 = vector.shape_cast %145 : vector<128x8xf32> to vector<1x128x8xf32>
    %cst_64 = arith.constant dense<0.000000e+00> : vector<1xf32>
    %147 = vector.multi_reduction <add>, %146, %cst_64 [1, 2] : vector<1x128x8xf32> to vector<1xf32>
    %148 = vector.shape_cast %147 : vector<1xf32> to vector<1x1x1xf32>
    %149 = vector.extract %148[0, 0, 0] : f32 from vector<1x1x1xf32>
    %cst_65 = arith.constant 9.765625E-4 : f32
    %150 = arith.mulf %149, %cst_65 : f32
    %151 = vector.broadcast %150 : f32 to vector<128x8xf32>
    %152 = arith.subf %145, %151 : vector<128x8xf32>
    %153 = arith.mulf %152, %152 : vector<128x8xf32>
    %154 = vector.shape_cast %153 : vector<128x8xf32> to vector<1x128x8xf32>
    %cst_66 = arith.constant dense<0.000000e+00> : vector<1xf32>
    %155 = vector.multi_reduction <add>, %154, %cst_66 [1, 2] : vector<1x128x8xf32> to vector<1xf32>
    %156 = vector.shape_cast %155 : vector<1xf32> to vector<1x1x1xf32>
    %157 = vector.extract %156[0, 0, 0] : f32 from vector<1x1x1xf32>
    %cst_67 = arith.constant 9.765625E-4 : f32
    %158 = arith.mulf %157, %cst_67 : f32
    %c1256 = arith.constant 1256 : index
    %c0_68 = arith.constant 0 : index
    %159 = vector.load %arg3[%c1256, %c0_68] : memref<3008x129xf32, #tpu.memory_space<vmem>>, vector<128x8xf32>
    %c1384 = arith.constant 1384 : index
    %c0_69 = arith.constant 0 : index
    %160 = vector.load %arg3[%c1384, %c0_69] : memref<3008x129xf32, #tpu.memory_space<vmem>>, vector<128x8xf32>
    %cst_70 = arith.constant 9.99999974E-6 : f32
    %161 = arith.addf %158, %cst_70 : f32
    %162 = math.rsqrt %161 : f32
    %163 = vector.broadcast %162 : f32 to vector<128x8xf32>
    %164 = arith.mulf %152, %163 : vector<128x8xf32>
    %165 = arith.mulf %164, %159 : vector<128x8xf32>
    %166 = arith.addf %165, %160 : vector<128x8xf32>
    %cst_71 = arith.constant 0.000000e+00 : f32
    %167 = vector.broadcast %cst_71 : f32 to vector<128x8xf32>
    %168 = arith.maximumf %166, %167 : vector<128x8xf32>
    %169 = arith.addf %88, %168 : vector<128x8xf32>
    %c1856 = arith.constant 1856 : index
    %c0_72 = arith.constant 0 : index
    %170 = vector.load %arg2[%c1856, %c0_72] : memref<3136x192xbf16, #tpu.memory_space<vmem>>, vector<400x128xbf16>
    %171 = arith.truncf %169 : vector<128x8xf32> to vector<128x8xbf16>
    %cst_73 = arith.constant dense<0.000000e+00> : vector<400x8xf32>
    %172 = tpu.matmul %170, %171, %cst_73 {dimension_numbers = #tpu.dot_dimension_numbers<[1], [0], [0], [1], [0, 0, 1, 1], [], []>} : vector<400x128xbf16>, vector<128x8xbf16>, vector<400x8xf32> -> vector<400x8xf32>
    %c1512 = arith.constant 1512 : index
    %c0_74 = arith.constant 0 : index
    %173 = vector.load %arg3[%c1512, %c0_74] : memref<3008x129xf32, #tpu.memory_space<vmem>>, vector<8x31xf32>
    %174 = vector.extract_strided_slice %172 {offsets = [0, 0], sizes = [80, 8], strides = [1, 1]} : vector<400x8xf32> to vector<80x8xf32>
    %cst_75 = arith.constant dense<0.000000e+00> : vector<80x31xf32>
    %175 = tpu.matmul %174, %173, %cst_75 {dimension_numbers = #tpu.dot_dimension_numbers<[1], [0], [0], [1], [0, 0, 1, 1], [], []>} : vector<80x8xf32>, vector<8x31xf32>, vector<80x31xf32> -> vector<80x31xf32>
    %c1520 = arith.constant 1520 : index
    %c0_76 = arith.constant 0 : index
    %176 = vector.load %arg3[%c1520, %c0_76] : memref<3008x129xf32, #tpu.memory_space<vmem>>, vector<8x31xf32>
    %177 = vector.extract_strided_slice %172 {offsets = [80, 0], sizes = [80, 8], strides = [1, 1]} : vector<400x8xf32> to vector<80x8xf32>
    %cst_77 = arith.constant dense<0.000000e+00> : vector<80x31xf32>
    %178 = tpu.matmul %177, %176, %cst_77 {dimension_numbers = #tpu.dot_dimension_numbers<[1], [0], [0], [1], [0, 0, 1, 1], [], []>} : vector<80x8xf32>, vector<8x31xf32>, vector<80x31xf32> -> vector<80x31xf32>
    %179 = arith.addf %175, %178 : vector<80x31xf32>
    %c1528 = arith.constant 1528 : index
    %c0_78 = arith.constant 0 : index
    %180 = vector.load %arg3[%c1528, %c0_78] : memref<3008x129xf32, #tpu.memory_space<vmem>>, vector<8x31xf32>
    %181 = vector.extract_strided_slice %172 {offsets = [160, 0], sizes = [80, 8], strides = [1, 1]} : vector<400x8xf32> to vector<80x8xf32>
    %cst_79 = arith.constant dense<0.000000e+00> : vector<80x31xf32>
    %182 = tpu.matmul %181, %180, %cst_79 {dimension_numbers = #tpu.dot_dimension_numbers<[1], [0], [0], [1], [0, 0, 1, 1], [], []>} : vector<80x8xf32>, vector<8x31xf32>, vector<80x31xf32> -> vector<80x31xf32>
    %183 = arith.addf %179, %182 : vector<80x31xf32>
    %c1536 = arith.constant 1536 : index
    %c0_80 = arith.constant 0 : index
    %184 = vector.load %arg3[%c1536, %c0_80] : memref<3008x129xf32, #tpu.memory_space<vmem>>, vector<8x31xf32>
    %185 = vector.extract_strided_slice %172 {offsets = [240, 0], sizes = [80, 8], strides = [1, 1]} : vector<400x8xf32> to vector<80x8xf32>
    %cst_81 = arith.constant dense<0.000000e+00> : vector<80x31xf32>
    %186 = tpu.matmul %185, %184, %cst_81 {dimension_numbers = #tpu.dot_dimension_numbers<[1], [0], [0], [1], [0, 0, 1, 1], [], []>} : vector<80x8xf32>, vector<8x31xf32>, vector<80x31xf32> -> vector<80x31xf32>
    %187 = arith.addf %183, %186 : vector<80x31xf32>
    %c1544 = arith.constant 1544 : index
    %c0_82 = arith.constant 0 : index
    %188 = vector.load %arg3[%c1544, %c0_82] : memref<3008x129xf32, #tpu.memory_space<vmem>>, vector<8x31xf32>
    %189 = vector.extract_strided_slice %172 {offsets = [320, 0], sizes = [80, 8], strides = [1, 1]} : vector<400x8xf32> to vector<80x8xf32>
    %cst_83 = arith.constant dense<0.000000e+00> : vector<80x31xf32>
    %190 = tpu.matmul %189, %188, %cst_83 {dimension_numbers = #tpu.dot_dimension_numbers<[1], [0], [0], [1], [0, 0, 1, 1], [], []>} : vector<80x8xf32>, vector<8x31xf32>, vector<80x31xf32> -> vector<80x31xf32>
    %191 = arith.addf %187, %190 : vector<80x31xf32>
    %192 = vector.shape_cast %191 : vector<80x31xf32> to vector<1x80x31xf32>
    %cst_84 = arith.constant dense<0.000000e+00> : vector<1xf32>
    %193 = vector.multi_reduction <add>, %192, %cst_84 [1, 2] : vector<1x80x31xf32> to vector<1xf32>
    %194 = vector.shape_cast %193 : vector<1xf32> to vector<1x1x1xf32>
    %195 = vector.extract %194[0, 0, 0] : f32 from vector<1x1x1xf32>
    %cst_85 = arith.constant 4.032258E-4 : f32
    %196 = arith.mulf %195, %cst_85 : f32
    %197 = vector.broadcast %196 : f32 to vector<80x31xf32>
    %198 = arith.subf %191, %197 : vector<80x31xf32>
    %199 = arith.mulf %198, %198 : vector<80x31xf32>
    %200 = vector.shape_cast %199 : vector<80x31xf32> to vector<1x80x31xf32>
    %cst_86 = arith.constant dense<0.000000e+00> : vector<1xf32>
    %201 = vector.multi_reduction <add>, %200, %cst_86 [1, 2] : vector<1x80x31xf32> to vector<1xf32>
    %202 = vector.shape_cast %201 : vector<1xf32> to vector<1x1x1xf32>
    %203 = vector.extract %202[0, 0, 0] : f32 from vector<1x1x1xf32>
    %cst_87 = arith.constant 4.032258E-4 : f32
    %204 = arith.mulf %203, %cst_87 : f32
    %c1552 = arith.constant 1552 : index
    %c0_88 = arith.constant 0 : index
    %205 = vector.load %arg3[%c1552, %c0_88] : memref<3008x129xf32, #tpu.memory_space<vmem>>, vector<80x31xf32>
    %c1632 = arith.constant 1632 : index
    %c0_89 = arith.constant 0 : index
    %206 = vector.load %arg3[%c1632, %c0_89] : memref<3008x129xf32, #tpu.memory_space<vmem>>, vector<80x31xf32>
    %cst_90 = arith.constant 9.99999974E-6 : f32
    %207 = arith.addf %204, %cst_90 : f32
    %208 = math.rsqrt %207 : f32
    %209 = vector.broadcast %208 : f32 to vector<80x31xf32>
    %210 = arith.mulf %198, %209 : vector<80x31xf32>
    %211 = arith.mulf %210, %205 : vector<80x31xf32>
    %212 = arith.addf %211, %206 : vector<80x31xf32>
    %cst_91 = arith.constant 0.000000e+00 : f32
    %213 = vector.broadcast %cst_91 : f32 to vector<80x31xf32>
    %214 = arith.maximumf %212, %213 : vector<80x31xf32>
    %c2256 = arith.constant 2256 : index
    %c0_92 = arith.constant 0 : index
    %215 = vector.load %arg2[%c2256, %c0_92] : memref<3136x192xbf16, #tpu.memory_space<vmem>>, vector<240x80xbf16>
    %216 = arith.truncf %214 : vector<80x31xf32> to vector<80x31xbf16>
    %cst_93 = arith.constant dense<0.000000e+00> : vector<240x31xf32>
    %217 = tpu.matmul %215, %216, %cst_93 {dimension_numbers = #tpu.dot_dimension_numbers<[1], [0], [0], [1], [0, 0, 1, 1], [], []>} : vector<240x80xbf16>, vector<80x31xbf16>, vector<240x31xf32> -> vector<240x31xf32>
    %c1712 = arith.constant 1712 : index
    %c0_94 = arith.constant 0 : index
    %218 = vector.load %arg3[%c1712, %c0_94] : memref<3008x129xf32, #tpu.memory_space<vmem>>, vector<31x31xf32>
    %219 = vector.extract_strided_slice %217 {offsets = [0, 0], sizes = [80, 31], strides = [1, 1]} : vector<240x31xf32> to vector<80x31xf32>
    %cst_95 = arith.constant dense<0.000000e+00> : vector<80x31xf32>
    %220 = tpu.matmul %219, %218, %cst_95 {dimension_numbers = #tpu.dot_dimension_numbers<[1], [0], [0], [1], [0, 0, 1, 1], [], []>} : vector<80x31xf32>, vector<31x31xf32>, vector<80x31xf32> -> vector<80x31xf32>
    %c1744 = arith.constant 1744 : index
    %c0_96 = arith.constant 0 : index
    %221 = vector.load %arg3[%c1744, %c0_96] : memref<3008x129xf32, #tpu.memory_space<vmem>>, vector<31x31xf32>
    %222 = vector.extract_strided_slice %217 {offsets = [80, 0], sizes = [80, 31], strides = [1, 1]} : vector<240x31xf32> to vector<80x31xf32>
    %cst_97 = arith.constant dense<0.000000e+00> : vector<80x31xf32>
    %223 = tpu.matmul %222, %221, %cst_97 {dimension_numbers = #tpu.dot_dimension_numbers<[1], [0], [0], [1], [0, 0, 1, 1], [], []>} : vector<80x31xf32>, vector<31x31xf32>, vector<80x31xf32> -> vector<80x31xf32>
    %224 = arith.addf %220, %223 : vector<80x31xf32>
    %c1776 = arith.constant 1776 : index
    %c0_98 = arith.constant 0 : index
    %225 = vector.load %arg3[%c1776, %c0_98] : memref<3008x129xf32, #tpu.memory_space<vmem>>, vector<31x31xf32>
    %226 = vector.extract_strided_slice %217 {offsets = [160, 0], sizes = [80, 31], strides = [1, 1]} : vector<240x31xf32> to vector<80x31xf32>
    %cst_99 = arith.constant dense<0.000000e+00> : vector<80x31xf32>
    %227 = tpu.matmul %226, %225, %cst_99 {dimension_numbers = #tpu.dot_dimension_numbers<[1], [0], [0], [1], [0, 0, 1, 1], [], []>} : vector<80x31xf32>, vector<31x31xf32>, vector<80x31xf32> -> vector<80x31xf32>
    %228 = arith.addf %224, %227 : vector<80x31xf32>
    %c1808 = arith.constant 1808 : index
    %c0_100 = arith.constant 0 : index
    %229 = vector.load %arg3[%c1808, %c0_100] : memref<3008x129xf32, #tpu.memory_space<vmem>>, vector<80x1xf32>
    %230 = vector.broadcast %229 : vector<80x1xf32> to vector<80x31xf32>
    %231 = arith.addf %228, %230 : vector<80x31xf32>
    %232 = vector.shape_cast %231 : vector<80x31xf32> to vector<1x80x31xf32>
    %cst_101 = arith.constant dense<0.000000e+00> : vector<1xf32>
    %233 = vector.multi_reduction <add>, %232, %cst_101 [1, 2] : vector<1x80x31xf32> to vector<1xf32>
    %234 = vector.shape_cast %233 : vector<1xf32> to vector<1x1x1xf32>
    %235 = vector.extract %234[0, 0, 0] : f32 from vector<1x1x1xf32>
    %cst_102 = arith.constant 4.032258E-4 : f32
    %236 = arith.mulf %235, %cst_102 : f32
    %237 = vector.broadcast %236 : f32 to vector<80x31xf32>
    %238 = arith.subf %231, %237 : vector<80x31xf32>
    %239 = arith.mulf %238, %238 : vector<80x31xf32>
    %240 = vector.shape_cast %239 : vector<80x31xf32> to vector<1x80x31xf32>
    %cst_103 = arith.constant dense<0.000000e+00> : vector<1xf32>
    %241 = vector.multi_reduction <add>, %240, %cst_103 [1, 2] : vector<1x80x31xf32> to vector<1xf32>
    %242 = vector.shape_cast %241 : vector<1xf32> to vector<1x1x1xf32>
    %243 = vector.extract %242[0, 0, 0] : f32 from vector<1x1x1xf32>
    %cst_104 = arith.constant 4.032258E-4 : f32
    %244 = arith.mulf %243, %cst_104 : f32
    %c1888 = arith.constant 1888 : index
    %c0_105 = arith.constant 0 : index
    %245 = vector.load %arg3[%c1888, %c0_105] : memref<3008x129xf32, #tpu.memory_space<vmem>>, vector<80x31xf32>
    %c1968 = arith.constant 1968 : index
    %c0_106 = arith.constant 0 : index
    %246 = vector.load %arg3[%c1968, %c0_106] : memref<3008x129xf32, #tpu.memory_space<vmem>>, vector<80x31xf32>
    %cst_107 = arith.constant 9.99999974E-6 : f32
    %247 = arith.addf %244, %cst_107 : f32
    %248 = math.rsqrt %247 : f32
    %249 = vector.broadcast %248 : f32 to vector<80x31xf32>
    %250 = arith.mulf %238, %249 : vector<80x31xf32>
    %251 = arith.mulf %250, %245 : vector<80x31xf32>
    %252 = arith.addf %251, %246 : vector<80x31xf32>
    %cst_108 = arith.constant 0.000000e+00 : f32
    %253 = vector.broadcast %cst_108 : f32 to vector<80x31xf32>
    %254 = arith.maximumf %252, %253 : vector<80x31xf32>
    %c2496 = arith.constant 2496 : index
    %c0_109 = arith.constant 0 : index
    %255 = vector.load %arg2[%c2496, %c0_109] : memref<3136x192xbf16, #tpu.memory_space<vmem>>, vector<240x80xbf16>
    %256 = arith.truncf %254 : vector<80x31xf32> to vector<80x31xbf16>
    %cst_110 = arith.constant dense<0.000000e+00> : vector<240x31xf32>
    %257 = tpu.matmul %255, %256, %cst_110 {dimension_numbers = #tpu.dot_dimension_numbers<[1], [0], [0], [1], [0, 0, 1, 1], [], []>} : vector<240x80xbf16>, vector<80x31xbf16>, vector<240x31xf32> -> vector<240x31xf32>
    %c2048 = arith.constant 2048 : index
    %c0_111 = arith.constant 0 : index
    %258 = vector.load %arg3[%c2048, %c0_111] : memref<3008x129xf32, #tpu.memory_space<vmem>>, vector<31x31xf32>
    %259 = vector.extract_strided_slice %257 {offsets = [0, 0], sizes = [80, 31], strides = [1, 1]} : vector<240x31xf32> to vector<80x31xf32>
    %cst_112 = arith.constant dense<0.000000e+00> : vector<80x31xf32>
    %260 = tpu.matmul %259, %258, %cst_112 {dimension_numbers = #tpu.dot_dimension_numbers<[1], [0], [0], [1], [0, 0, 1, 1], [], []>} : vector<80x31xf32>, vector<31x31xf32>, vector<80x31xf32> -> vector<80x31xf32>
    %c2080 = arith.constant 2080 : index
    %c0_113 = arith.constant 0 : index
    %261 = vector.load %arg3[%c2080, %c0_113] : memref<3008x129xf32, #tpu.memory_space<vmem>>, vector<31x31xf32>
    %262 = vector.extract_strided_slice %257 {offsets = [80, 0], sizes = [80, 31], strides = [1, 1]} : vector<240x31xf32> to vector<80x31xf32>
    %cst_114 = arith.constant dense<0.000000e+00> : vector<80x31xf32>
    %263 = tpu.matmul %262, %261, %cst_114 {dimension_numbers = #tpu.dot_dimension_numbers<[1], [0], [0], [1], [0, 0, 1, 1], [], []>} : vector<80x31xf32>, vector<31x31xf32>, vector<80x31xf32> -> vector<80x31xf32>
    %264 = arith.addf %260, %263 : vector<80x31xf32>
    %c2112 = arith.constant 2112 : index
    %c0_115 = arith.constant 0 : index
    %265 = vector.load %arg3[%c2112, %c0_115] : memref<3008x129xf32, #tpu.memory_space<vmem>>, vector<31x31xf32>
    %266 = vector.extract_strided_slice %257 {offsets = [160, 0], sizes = [80, 31], strides = [1, 1]} : vector<240x31xf32> to vector<80x31xf32>
    %cst_116 = arith.constant dense<0.000000e+00> : vector<80x31xf32>
    %267 = tpu.matmul %266, %265, %cst_116 {dimension_numbers = #tpu.dot_dimension_numbers<[1], [0], [0], [1], [0, 0, 1, 1], [], []>} : vector<80x31xf32>, vector<31x31xf32>, vector<80x31xf32> -> vector<80x31xf32>
    %268 = arith.addf %264, %267 : vector<80x31xf32>
    %c2144 = arith.constant 2144 : index
    %c0_117 = arith.constant 0 : index
    %269 = vector.load %arg3[%c2144, %c0_117] : memref<3008x129xf32, #tpu.memory_space<vmem>>, vector<80x1xf32>
    %270 = vector.broadcast %269 : vector<80x1xf32> to vector<80x31xf32>
    %271 = arith.addf %268, %270 : vector<80x31xf32>
    %272 = vector.shape_cast %271 : vector<80x31xf32> to vector<1x80x31xf32>
    %cst_118 = arith.constant dense<0.000000e+00> : vector<1xf32>
    %273 = vector.multi_reduction <add>, %272, %cst_118 [1, 2] : vector<1x80x31xf32> to vector<1xf32>
    %274 = vector.shape_cast %273 : vector<1xf32> to vector<1x1x1xf32>
    %275 = vector.extract %274[0, 0, 0] : f32 from vector<1x1x1xf32>
    %cst_119 = arith.constant 4.032258E-4 : f32
    %276 = arith.mulf %275, %cst_119 : f32
    %277 = vector.broadcast %276 : f32 to vector<80x31xf32>
    %278 = arith.subf %271, %277 : vector<80x31xf32>
    %279 = arith.mulf %278, %278 : vector<80x31xf32>
    %280 = vector.shape_cast %279 : vector<80x31xf32> to vector<1x80x31xf32>
    %cst_120 = arith.constant dense<0.000000e+00> : vector<1xf32>
    %281 = vector.multi_reduction <add>, %280, %cst_120 [1, 2] : vector<1x80x31xf32> to vector<1xf32>
    %282 = vector.shape_cast %281 : vector<1xf32> to vector<1x1x1xf32>
    %283 = vector.extract %282[0, 0, 0] : f32 from vector<1x1x1xf32>
    %cst_121 = arith.constant 4.032258E-4 : f32
    %284 = arith.mulf %283, %cst_121 : f32
    %c2224 = arith.constant 2224 : index
    %c0_122 = arith.constant 0 : index
    %285 = vector.load %arg3[%c2224, %c0_122] : memref<3008x129xf32, #tpu.memory_space<vmem>>, vector<80x31xf32>
    %c2304 = arith.constant 2304 : index
    %c0_123 = arith.constant 0 : index
    %286 = vector.load %arg3[%c2304, %c0_123] : memref<3008x129xf32, #tpu.memory_space<vmem>>, vector<80x31xf32>
    %cst_124 = arith.constant 9.99999974E-6 : f32
    %287 = arith.addf %284, %cst_124 : f32
    %288 = math.rsqrt %287 : f32
    %289 = vector.broadcast %288 : f32 to vector<80x31xf32>
    %290 = arith.mulf %278, %289 : vector<80x31xf32>
    %291 = arith.mulf %290, %285 : vector<80x31xf32>
    %292 = arith.addf %291, %286 : vector<80x31xf32>
    %cst_125 = arith.constant 0.000000e+00 : f32
    %293 = vector.broadcast %cst_125 : f32 to vector<80x31xf32>
    %294 = arith.maximumf %292, %293 : vector<80x31xf32>
    %295 = arith.addf %214, %294 : vector<80x31xf32>
    %c2736 = arith.constant 2736 : index
    %c0_126 = arith.constant 0 : index
    %296 = vector.load %arg2[%c2736, %c0_126] : memref<3136x192xbf16, #tpu.memory_space<vmem>>, vector<320x80xbf16>
    %297 = arith.truncf %295 : vector<80x31xf32> to vector<80x31xbf16>
    %cst_127 = arith.constant dense<0.000000e+00> : vector<320x31xf32>
    %298 = tpu.matmul %296, %297, %cst_127 {dimension_numbers = #tpu.dot_dimension_numbers<[1], [0], [0], [1], [0, 0, 1, 1], [], []>} : vector<320x80xbf16>, vector<80x31xbf16>, vector<320x31xf32> -> vector<320x31xf32>
    %c2384 = arith.constant 2384 : index
    %c0_128 = arith.constant 0 : index
    %299 = vector.load %arg3[%c2384, %c0_128] : memref<3008x129xf32, #tpu.memory_space<vmem>>, vector<31x63xf32>
    %300 = vector.extract_strided_slice %298 {offsets = [0, 0], sizes = [64, 31], strides = [1, 1]} : vector<320x31xf32> to vector<64x31xf32>
    %cst_129 = arith.constant dense<0.000000e+00> : vector<64x63xf32>
    %301 = tpu.matmul %300, %299, %cst_129 {dimension_numbers = #tpu.dot_dimension_numbers<[1], [0], [0], [1], [0, 0, 1, 1], [], []>} : vector<64x31xf32>, vector<31x63xf32>, vector<64x63xf32> -> vector<64x63xf32>
    %c2416 = arith.constant 2416 : index
    %c0_130 = arith.constant 0 : index
    %302 = vector.load %arg3[%c2416, %c0_130] : memref<3008x129xf32, #tpu.memory_space<vmem>>, vector<31x63xf32>
    %303 = vector.extract_strided_slice %298 {offsets = [64, 0], sizes = [64, 31], strides = [1, 1]} : vector<320x31xf32> to vector<64x31xf32>
    %cst_131 = arith.constant dense<0.000000e+00> : vector<64x63xf32>
    %304 = tpu.matmul %303, %302, %cst_131 {dimension_numbers = #tpu.dot_dimension_numbers<[1], [0], [0], [1], [0, 0, 1, 1], [], []>} : vector<64x31xf32>, vector<31x63xf32>, vector<64x63xf32> -> vector<64x63xf32>
    %305 = arith.addf %301, %304 : vector<64x63xf32>
    %c2448 = arith.constant 2448 : index
    %c0_132 = arith.constant 0 : index
    %306 = vector.load %arg3[%c2448, %c0_132] : memref<3008x129xf32, #tpu.memory_space<vmem>>, vector<31x63xf32>
    %307 = vector.extract_strided_slice %298 {offsets = [128, 0], sizes = [64, 31], strides = [1, 1]} : vector<320x31xf32> to vector<64x31xf32>
    %cst_133 = arith.constant dense<0.000000e+00> : vector<64x63xf32>
    %308 = tpu.matmul %307, %306, %cst_133 {dimension_numbers = #tpu.dot_dimension_numbers<[1], [0], [0], [1], [0, 0, 1, 1], [], []>} : vector<64x31xf32>, vector<31x63xf32>, vector<64x63xf32> -> vector<64x63xf32>
    %309 = arith.addf %305, %308 : vector<64x63xf32>
    %c2480 = arith.constant 2480 : index
    %c0_134 = arith.constant 0 : index
    %310 = vector.load %arg3[%c2480, %c0_134] : memref<3008x129xf32, #tpu.memory_space<vmem>>, vector<31x63xf32>
    %311 = vector.extract_strided_slice %298 {offsets = [192, 0], sizes = [64, 31], strides = [1, 1]} : vector<320x31xf32> to vector<64x31xf32>
    %cst_135 = arith.constant dense<0.000000e+00> : vector<64x63xf32>
    %312 = tpu.matmul %311, %310, %cst_135 {dimension_numbers = #tpu.dot_dimension_numbers<[1], [0], [0], [1], [0, 0, 1, 1], [], []>} : vector<64x31xf32>, vector<31x63xf32>, vector<64x63xf32> -> vector<64x63xf32>
    %313 = arith.addf %309, %312 : vector<64x63xf32>
    %c2512 = arith.constant 2512 : index
    %c0_136 = arith.constant 0 : index
    %314 = vector.load %arg3[%c2512, %c0_136] : memref<3008x129xf32, #tpu.memory_space<vmem>>, vector<31x63xf32>
    %315 = vector.extract_strided_slice %298 {offsets = [256, 0], sizes = [64, 31], strides = [1, 1]} : vector<320x31xf32> to vector<64x31xf32>
    %cst_137 = arith.constant dense<0.000000e+00> : vector<64x63xf32>
    %316 = tpu.matmul %315, %314, %cst_137 {dimension_numbers = #tpu.dot_dimension_numbers<[1], [0], [0], [1], [0, 0, 1, 1], [], []>} : vector<64x31xf32>, vector<31x63xf32>, vector<64x63xf32> -> vector<64x63xf32>
    %317 = arith.addf %313, %316 : vector<64x63xf32>
    %318 = vector.shape_cast %317 : vector<64x63xf32> to vector<1x64x63xf32>
    %cst_138 = arith.constant dense<0.000000e+00> : vector<1xf32>
    %319 = vector.multi_reduction <add>, %318, %cst_138 [1, 2] : vector<1x64x63xf32> to vector<1xf32>
    %320 = vector.shape_cast %319 : vector<1xf32> to vector<1x1x1xf32>
    %321 = vector.extract %320[0, 0, 0] : f32 from vector<1x1x1xf32>
    %cst_139 = arith.constant 2.48015887E-4 : f32
    %322 = arith.mulf %321, %cst_139 : f32
    %323 = vector.broadcast %322 : f32 to vector<64x63xf32>
    %324 = arith.subf %317, %323 : vector<64x63xf32>
    %325 = arith.mulf %324, %324 : vector<64x63xf32>
    %326 = vector.shape_cast %325 : vector<64x63xf32> to vector<1x64x63xf32>
    %cst_140 = arith.constant dense<0.000000e+00> : vector<1xf32>
    %327 = vector.multi_reduction <add>, %326, %cst_140 [1, 2] : vector<1x64x63xf32> to vector<1xf32>
    %328 = vector.shape_cast %327 : vector<1xf32> to vector<1x1x1xf32>
    %329 = vector.extract %328[0, 0, 0] : f32 from vector<1x1x1xf32>
    %cst_141 = arith.constant 2.48015887E-4 : f32
    %330 = arith.mulf %329, %cst_141 : f32
    %c2544 = arith.constant 2544 : index
    %c0_142 = arith.constant 0 : index
    %331 = vector.load %arg3[%c2544, %c0_142] : memref<3008x129xf32, #tpu.memory_space<vmem>>, vector<64x63xf32>
    %c2608 = arith.constant 2608 : index
    %c0_143 = arith.constant 0 : index
    %332 = vector.load %arg3[%c2608, %c0_143] : memref<3008x129xf32, #tpu.memory_space<vmem>>, vector<64x63xf32>
    %cst_144 = arith.constant 9.99999974E-6 : f32
    %333 = arith.addf %330, %cst_144 : f32
    %334 = math.rsqrt %333 : f32
    %335 = vector.broadcast %334 : f32 to vector<64x63xf32>
    %336 = arith.mulf %324, %335 : vector<64x63xf32>
    %337 = arith.mulf %336, %331 : vector<64x63xf32>
    %338 = arith.addf %337, %332 : vector<64x63xf32>
    %cst_145 = arith.constant 0.000000e+00 : f32
    %339 = vector.broadcast %cst_145 : f32 to vector<64x63xf32>
    %340 = arith.maximumf %338, %339 : vector<64x63xf32>
    %c3056 = arith.constant 3056 : index
    %c0_146 = arith.constant 0 : index
    %341 = vector.load %arg2[%c3056, %c0_146] : memref<3136x192xbf16, #tpu.memory_space<vmem>>, vector<80x64xbf16>
    %342 = arith.truncf %340 : vector<64x63xf32> to vector<64x63xbf16>
    %cst_147 = arith.constant dense<0.000000e+00> : vector<80x63xf32>
    %343 = tpu.matmul %341, %342, %cst_147 {dimension_numbers = #tpu.dot_dimension_numbers<[1], [0], [0], [1], [0, 0, 1, 1], [], []>} : vector<80x64xbf16>, vector<64x63xbf16>, vector<80x63xf32> -> vector<80x63xf32>
    %c2672 = arith.constant 2672 : index
    %c0_148 = arith.constant 0 : index
    %344 = vector.load %arg3[%c2672, %c0_148] : memref<3008x129xf32, #tpu.memory_space<vmem>>, vector<63x129xf32>
    %345 = vector.extract_strided_slice %343 {offsets = [0, 0], sizes = [16, 63], strides = [1, 1]} : vector<80x63xf32> to vector<16x63xf32>
    %cst_149 = arith.constant dense<0.000000e+00> : vector<16x129xf32>
    %346 = tpu.matmul %345, %344, %cst_149 {dimension_numbers = #tpu.dot_dimension_numbers<[1], [0], [0], [1], [0, 0, 1, 1], [], []>} : vector<16x63xf32>, vector<63x129xf32>, vector<16x129xf32> -> vector<16x129xf32>
    %c2736_150 = arith.constant 2736 : index
    %c0_151 = arith.constant 0 : index
    %347 = vector.load %arg3[%c2736_150, %c0_151] : memref<3008x129xf32, #tpu.memory_space<vmem>>, vector<63x129xf32>
    %348 = vector.extract_strided_slice %343 {offsets = [16, 0], sizes = [16, 63], strides = [1, 1]} : vector<80x63xf32> to vector<16x63xf32>
    %cst_152 = arith.constant dense<0.000000e+00> : vector<16x129xf32>
    %349 = tpu.matmul %348, %347, %cst_152 {dimension_numbers = #tpu.dot_dimension_numbers<[1], [0], [0], [1], [0, 0, 1, 1], [], []>} : vector<16x63xf32>, vector<63x129xf32>, vector<16x129xf32> -> vector<16x129xf32>
    %350 = arith.addf %346, %349 : vector<16x129xf32>
    %c2800 = arith.constant 2800 : index
    %c0_153 = arith.constant 0 : index
    %351 = vector.load %arg3[%c2800, %c0_153] : memref<3008x129xf32, #tpu.memory_space<vmem>>, vector<63x129xf32>
    %352 = vector.extract_strided_slice %343 {offsets = [32, 0], sizes = [16, 63], strides = [1, 1]} : vector<80x63xf32> to vector<16x63xf32>
    %cst_154 = arith.constant dense<0.000000e+00> : vector<16x129xf32>
    %353 = tpu.matmul %352, %351, %cst_154 {dimension_numbers = #tpu.dot_dimension_numbers<[1], [0], [0], [1], [0, 0, 1, 1], [], []>} : vector<16x63xf32>, vector<63x129xf32>, vector<16x129xf32> -> vector<16x129xf32>
    %354 = arith.addf %350, %353 : vector<16x129xf32>
    %c2864 = arith.constant 2864 : index
    %c0_155 = arith.constant 0 : index
    %355 = vector.load %arg3[%c2864, %c0_155] : memref<3008x129xf32, #tpu.memory_space<vmem>>, vector<63x129xf32>
    %356 = vector.extract_strided_slice %343 {offsets = [48, 0], sizes = [16, 63], strides = [1, 1]} : vector<80x63xf32> to vector<16x63xf32>
    %cst_156 = arith.constant dense<0.000000e+00> : vector<16x129xf32>
    %357 = tpu.matmul %356, %355, %cst_156 {dimension_numbers = #tpu.dot_dimension_numbers<[1], [0], [0], [1], [0, 0, 1, 1], [], []>} : vector<16x63xf32>, vector<63x129xf32>, vector<16x129xf32> -> vector<16x129xf32>
    %358 = arith.addf %354, %357 : vector<16x129xf32>
    %c2928 = arith.constant 2928 : index
    %c0_157 = arith.constant 0 : index
    %359 = vector.load %arg3[%c2928, %c0_157] : memref<3008x129xf32, #tpu.memory_space<vmem>>, vector<63x129xf32>
    %360 = vector.extract_strided_slice %343 {offsets = [64, 0], sizes = [16, 63], strides = [1, 1]} : vector<80x63xf32> to vector<16x63xf32>
    %cst_158 = arith.constant dense<0.000000e+00> : vector<16x129xf32>
    %361 = tpu.matmul %360, %359, %cst_158 {dimension_numbers = #tpu.dot_dimension_numbers<[1], [0], [0], [1], [0, 0, 1, 1], [], []>} : vector<16x63xf32>, vector<63x129xf32>, vector<16x129xf32> -> vector<16x129xf32>
    %362 = arith.addf %358, %361 : vector<16x129xf32>
    %c2992 = arith.constant 2992 : index
    %c0_159 = arith.constant 0 : index
    %363 = vector.load %arg3[%c2992, %c0_159] : memref<3008x129xf32, #tpu.memory_space<vmem>>, vector<16x1xf32>
    %364 = vector.broadcast %363 : vector<16x1xf32> to vector<16x129xf32>
    %365 = arith.addf %362, %364 : vector<16x129xf32>
    %cst_160 = arith.constant 0.000000e+00 : f32
    %366 = vector.broadcast %cst_160 : f32 to vector<16x129xf32>
    %367 = arith.maximumf %365, %366 : vector<16x129xf32>
    %368 = math.absf %365 : vector<16x129xf32>
    %cst_161 = arith.constant 0.000000e+00 : f32
    %369 = vector.broadcast %cst_161 : f32 to vector<16x129xf32>
    %370 = arith.subf %369, %368 : vector<16x129xf32>
    %371 = math.exp %370 : vector<16x129xf32>
    %372 = math.log1p %371 : vector<16x129xf32>
    %373 = arith.addf %367, %372 : vector<16x129xf32>
    %c0_162 = arith.constant 0 : index
    %c0_163 = arith.constant 0 : index
    %c0_164 = arith.constant 0 : index
    %374 = vector.load %arg4[%c0_162, %c0_163, %c0_164] : memref<1x16x129xf32, #tpu.memory_space<vmem>>, vector<1x16x129xf32>
    %375 = vector.shape_cast %374 : vector<1x16x129xf32> to vector<16x129xf32>
    %376 = vector.shape_cast %373 : vector<16x129xf32> to vector<1x16x129xf32>
    tpu.vector_store %arg4[%c0_162, %c0_163, %c0_164], %376 {strides = array<i32>} : memref<1x16x129xf32, #tpu.memory_space<vmem>>, vector<1x16x129xf32>,
    return
  }
  func.func @transform_0(%arg0: i32) -> (i32, i32, i32) {
    %c0_i32 = arith.constant 0 : i32
    %c0_i32_0 = arith.constant 0 : i32
    %c0_i32_1 = arith.constant 0 : i32
    return %arg0, %c0_i32, %c0_i32_0 : i32, i32, i32
  }
  func.func @transform_1(%arg0: i32) -> (i32, i32) {
    %c0_i32 = arith.constant 0 : i32
    %c0_i32_0 = arith.constant 0 : i32
    %c0_i32_1 = arith.constant 0 : i32
    return %c0_i32, %c0_i32_0 : i32, i32
  }
  func.func @transform_2(%arg0: i32) -> (i32, i32) {
    %c0_i32 = arith.constant 0 : i32
    %c0_i32_0 = arith.constant 0 : i32
    %c0_i32_1 = arith.constant 0 : i32
    return %c0_i32, %c0_i32_0 : i32, i32
  }
  func.func @transform_3(%arg0: i32) -> (i32, i32, i32) {
    %c0_i32 = arith.constant 0 : i32
    %c0_i32_0 = arith.constant 0 : i32
    %c0_i32_1 = arith.constant 0 : i32
    return %arg0, %c0_i32, %c0_i32_0 : i32, i32, i32
  }
}

</mosaic_0001>

<llo_original>
// kernel: fwd.1
$region0: #{fwd.1}
  #allocation0 [shape = 'u32[]', space=smem, size = 0x4, offset = 0x4, fixed_abs, tag = 'smem constant byte address 0x4 - core index']
  #allocation1 [shape = 'u32[72,128]{1,0:T(1,128)}', space=vmem, size = 0x9000, scoped, tag = 'internal scratch']
  %s0 = inlined_call_operand.vmem [shape: f32[2,16,1], index: 0, kind: input, shape index: {}]
  %s1 = inlined_call_operand.vmem [shape: bf16[3136,192], index: 1, kind: input, shape index: {}]
  %s2 = inlined_call_operand.vmem [shape: f32[3008,129], index: 2, kind: input, shape index: {}]
  %s3 = inlined_call_operand.hbm [shape: f32[2,16,129], index: 3, kind: output, shape index: {}]
  %s4 = sld [smem:[#allocation0]]
  $region45: #{fwd.1} parent=0
    _
  %s6 = ssub.s32 1, %s4
  %s7 = scalar_select 0, %s6, %s4
  $region1: #{fwd.1} parent=0
    #allocation2 [shape = 'u8[32768]{0}', space=vmem, size = 0x8000, scoped, tag = 'output window, operand 0']
    #allocation3 [shape = 's32[2]{0}', space=sflag, size = 0x8, scoped, tag = 'scoped memory for fwd.1']
    %8 = vsyncpa [#allocation3], 0
    %s9 = scalar_lea.sflag [#allocation3], 1
    %10 = vsyncpa %s9, 0
    loop: start=0, step=1, limit=4
    $region2: #{fwd.1} parent=1 // loop_pre_header
      _
    $region3: #{fwd.1} parent=1 // loop_header
      %s12 = sphi 0, %s16
      %p13 = scmp.ge.s32.totalorder %s12, 4
      %s22 = sphi 0, %s24
      %s25 = sphi 0, %s22
      %s26 = sphi 0, %s25
      %s42 = sphi 0, %s26
      %s46 = sphi 0, %s46
      %s48 = sphi 0, %s46
      %s49 = sphi 0, %s48
      %s63 = sphi 0, %s49
      %s67 = sphi 0, %s67
      %s69 = sphi 0, %s67
      %s70 = sphi 0, %s69
      %s84 = sphi 0, %s70
      %s90 = sphi 0, %s92
      %s93 = sphi 0, %s90
      %s94 = sphi 0, %s93
      %s110 = sphi 0, %s94
    $region4: #{fwd.1} parent=1 // loop_header_branch
      %15 = sbr.rel (%p13) target = $region8
    $region5: #{fwd.1} parent=1 // loop_body
      %s17 = ssub.s32 %s12, 1
      %s18 = ssub.s32 %s12, 2
      %s19 = sadd.s32 %s12, 1
      %s20 = ssub.s32 %s12, %s19
      %p21 = scmp.eq.s32.totalorder %s20, 0
      %s23 = sadd.s32 %s22, 1
      %s24 = scalar_select %p21, %s22, %s23
      %p27 = pneg %p21
      %p28 = scmp.eq.s32.totalorder %s12, 1
      %p29 = por %p27, %p28
      %p30 = scmp.ne.s32.totalorder %s22, %s25
      %p31 = scmp.eq.s32.totalorder %s12, 0
      %p32 = por %p30, %p31
      %p33 = scmp.ne.s32.totalorder %s22, %s25
      %p34 = scmp.eq.s32.totalorder %s17, 1
      %p35 = por %p33, %p34
      %p36 = scmp.ne.s32.totalorder %s25, %s26
      %p37 = scmp.eq.s32.totalorder %s17, 0
      %p38 = por %p36, %p37
      %p39 = scmp.ne.s32.totalorder %s25, %s26
      %p40 = scmp.eq.s32.totalorder %s18, 1
      %p41 = por %p39, %p40
      %p43 = scmp.ne.s32.totalorder %s26, %s42
      %p44 = scmp.eq.s32.totalorder %s18, 0
      %p45 = por %p43, %p44
      %s47 = sadd.s32 %s46, 1
      %p50 = scmp.eq.s32.totalorder %s12, 1
      %p51 = scmp.ne.s32.totalorder %s46, %s48
      %p52 = scmp.eq.s32.totalorder %s12, 0
      %p53 = por %p51, %p52
      %p54 = scmp.ne.s32.totalorder %s46, %s48
      %p55 = scmp.eq.s32.totalorder %s17, 1
      %p56 = por %p54, %p55
      %p57 = scmp.ne.s32.totalorder %s48, %s49
      %p58 = scmp.eq.s32.totalorder %s17, 0
      %p59 = por %p57, %p58
      %p60 = scmp.ne.s32.totalorder %s48, %s49
      %p61 = scmp.eq.s32.totalorder %s18, 1
      %p62 = por %p60, %p61
      %p64 = scmp.ne.s32.totalorder %s49, %s63
      %p65 = scmp.eq.s32.totalorder %s18, 0
      %p66 = por %p64, %p65
      %s68 = sadd.s32 %s67, 1
      %p71 = scmp.eq.s32.totalorder %s12, 1
      %p72 = scmp.ne.s32.totalorder %s67, %s69
      %p73 = scmp.eq.s32.totalorder %s12, 0
      %p74 = por %p72, %p73
      %p75 = scmp.ne.s32.totalorder %s67, %s69
      %p76 = scmp.eq.s32.totalorder %s17, 1
      %p77 = por %p75, %p76
      %p78 = scmp.ne.s32.totalorder %s69, %s70
      %p79 = scmp.eq.s32.totalorder %s17, 0
      %p80 = por %p78, %p79
      %p81 = scmp.ne.s32.totalorder %s69, %s70
      %p82 = scmp.eq.s32.totalorder %s18, 1
      %p83 = por %p81, %p82
      %p85 = scmp.ne.s32.totalorder %s70, %s84
      %p86 = scmp.eq.s32.totalorder %s18, 0
      %p87 = por %p85, %p86
      %s88 = ssub.s32 %s12, %s19
      %p89 = scmp.eq.s32.totalorder %s88, 0
      %s91 = sadd.s32 %s90, 1
      %s92 = scalar_select %p89, %s90, %s91
      %p95 = pneg %p89
      %p96 = scmp.eq.s32.totalorder %s12, 1
      %p97 = por %p95, %p96
      %p98 = scmp.ne.s32.totalorder %s90, %s93
      %p99 = scmp.eq.s32.totalorder %s12, 0
      %p100 = por %p98, %p99
      %p101 = scmp.ne.s32.totalorder %s90, %s93
      %p102 = scmp.eq.s32.totalorder %s17, 1
      %p103 = por %p101, %p102
      %p104 = scmp.ne.s32.totalorder %s93, %s94
      %p105 = scmp.eq.s32.totalorder %s17, 0
      %p106 = por %p104, %p105
      %p107 = scmp.ne.s32.totalorder %s93, %s94
      %p108 = scmp.eq.s32.totalorder %s18, 1
      %p109 = por %p107, %p108
      %p111 = scmp.ne.s32.totalorder %s94, %s110
      %p112 = scmp.eq.s32.totalorder %s18, 0
      %p113 = por %p111, %p112
      %p114 = scmp.le.s32.totalorder 1, %s12
      %p115 = scmp.lt.s32.totalorder %s12, 3
      %p116 = pnand %p114, %p115
      %p117 = pneg %p116
      // Predicated region
      $region9: #{fwd.1} parent=5 // pred_check
        _
      $region10: #{fwd.1} parent=5 // pred_check_branch
        %119 = sbr.rel (%p116) target = $region12
      $region11: #{fwd.1} parent=5 // pred_region
        %s120 = ssub.s32 %s12, 1
        // Predicated region
        $region13: #{fwd.1} parent=11 // pred_check
          %p121 = pneg %p59
        $region14: #{fwd.1} parent=11 // pred_check_branch
          %123 = sbr.rel (%p121) target = $region16
        $region15: #{fwd.1} parent=11 // pred_region
          _
        $region16: #{fwd.1} parent=11 // pred_fallthru
          _
        // Predicated region
        $region17: #{fwd.1} parent=11 // pred_check
          %p124 = pneg %p80
        $region18: #{fwd.1} parent=11 // pred_check_branch
          %126 = sbr.rel (%p124) target = $region20
        $region19: #{fwd.1} parent=11 // pred_region
          _
        $region20: #{fwd.1} parent=11 // pred_fallthru
          _
      $region12: #{fwd.1} parent=5 // pred_fallthru
        _
      %p127 = scmp.lt.s32.totalorder %s12, 2
      // Predicated region
      $region21: #{fwd.1} parent=5 // pred_check
        %p128 = pneg %p127
      $region22: #{fwd.1} parent=5 // pred_check_branch
        %130 = sbr.rel (%p128) target = $region24
      $region23: #{fwd.1} parent=5 // pred_region
        // Predicated region
        $region25: #{fwd.1} parent=23 // pred_check
          %p131 = pneg %p32
        $region26: #{fwd.1} parent=23 // pred_check_branch
          %133 = sbr.rel (%p131) target = $region28
        $region27: #{fwd.1} parent=23 // pred_region
          %p134 = scmp.lt.s32.totalorder %s12, 1
          %s135 = scalar_select %p134, %s12, 1
          %s136 = smul.addr %s135, 2
          %s137 = smul.addr %s136, 8
          %s138 = scalar_lea.vmem %s0, %s137
        $region28: #{fwd.1} parent=23 // pred_fallthru
          _
      $region24: #{fwd.1} parent=5 // pred_fallthru
        _
      %p139 = scmp.le.s32.totalorder 1, %s12
      %p140 = scmp.lt.s32.totalorder %s12, 3
      %p141 = pnand %p139, %p140
      %p142 = pneg %p141
      // Predicated region
      $region29: #{fwd.1} parent=5 // pred_check
        _
      $region30: #{fwd.1} parent=5 // pred_check_branch
        %144 = sbr.rel (%p141) target = $region32
      $region31: #{fwd.1} parent=5 // pred_region
        %s145 = ssub.s32 %s12, 1
        %p146 = scmp.lt.s32.totalorder %s17, 1
        %s147 = scalar_select %p146, %s17, 1
        %s148 = smul.addr %s147, 2
        %s149 = smul.addr %s148, 8
        %s150 = scalar_lea.vmem %s0, %s149
        %p151 = pneg %p38
        %p152 = pneg %p35
        %p153 = pneg %p59
        %p154 = pneg %p56
        %p155 = pneg %p80
        %p156 = pneg %p77
        %p157 = pneg %p106
        %p158 = pneg %p103
        %s159 = sand.u32 %s93, 1
        %s160 = scalar_lea.sflag [#allocation3], %s159
        %s161 = sand.u32 %s93, 1
        %s162 = smul.addr %s161, 32
        %s163 = scalar_lea.vmem [#allocation2], %s162
        %p164 = scmp.lt.s32.totalorder %s17, 1
        %s165 = scalar_select %p164, %s17, 1
        %s166 = smul.addr %s165, 2
        %s167 = smul.addr %s166, 8
        %s168 = scalar_lea.vmem %s0, %s167
        %v170 = vld [vmem:[%s168] sm:$0xff]
        %v171 = vld [vmem:[%s168 + $0x8] sm:$0xff]
        %v172 = vld [vmem:[%s2] ss:$0 sm:$0xff]
        %174 = vset.pattern.permute.xlu0 0
        %175 = vperm.xlu0 %174, %v170
        %v176 = vpop.permute.xlu0 %175
        %179 = vset.pattern.permute.xlu0 0
        %180 = vperm.xlu0 %179, %v171
        %v181 = vpop.permute.xlu0 %180
        %v183 = vmul.f32 %v176, %v172
        %v184 = vmul.f32 %v181, %v172
        %v185 = vpack.c.bf16 %v184, %v183
        %v186 = vld [vmem:[%s1] sm:$0xf]
        %v187 = vld [vmem:[%s1 + $0x8] sm:$0xf]
        %v188 = vld [vmem:[%s1 + $0x10] sm:$0xf]
        %v189 = vld [vmem:[%s1 + $0x18] sm:$0xf]
        %v190 = vld [vmem:[%s1 + $0x20] sm:$0xf]
        %v191 = vld [vmem:[%s1 + $0x28] sm:$0xf]
        %v192 = vld [vmem:[%s1 + $0x30] sm:$0xf]
        %v193 = vld [vmem:[%s1 + $0x38] sm:$0xf]
        %v194 = vld [vmem:[%s1 + $0x40] sm:$0xf]
        %v195 = vld [vmem:[%s1 + $0x48] sm:$0xf]
        %v196 = vld [vmem:[%s1 + $0x50] sm:$0xf]
        %v197 = vld [vmem:[%s1 + $0x58] sm:$0xf]
        %v198 = vld [vmem:[%s1 + $0x60] sm:$0xf]
        %v199 = vld [vmem:[%s1 + $0x68] sm:$0xf]
        %v200 = vld [vmem:[%s1 + $0x70] sm:$0xf]
        %v201 = vld [vmem:[%s1 + $0x78] sm:$0xf]
        %v202 = vld [vmem:[%s1 + $0x80] sm:$0xf]
        %v203 = vld [vmem:[%s1 + $0x88] sm:$0xf]
        %v204 = vld [vmem:[%s1 + $0x90] sm:$0xf]
        %v205 = vld [vmem:[%s1 + $0x98] sm:$0xf]
        %v206 = vld [vmem:[%s1 + $0xa0] sm:$0xf]
        %v207 = vld [vmem:[%s1 + $0xa8] sm:$0xf]
        %v208 = vld [vmem:[%s1 + $0xb0] sm:$0xf]
        %v209 = vld [vmem:[%s1 + $0xb8] sm:$0xf]
        %v210 = vld [vmem:[%s2 + $0x10] ss:$0 sm:$0xff]
        %v211 = vmul.f32 %v176, %v210
        %v212 = vmul.f32 %v181, %v210
        %v213 = vpack.c.bf16 %v212, %v211
        %v214 = vld [vmem:[%s1 + $0xc0] sm:$0xf]
        %v215 = vld [vmem:[%s1 + $0xc8] sm:$0xf]
        %v216 = vld [vmem:[%s1 + $0xd0] sm:$0xf]
        %v217 = vld [vmem:[%s1 + $0xd8] sm:$0xf]
        %v218 = vld [vmem:[%s1 + $0xe0] sm:$0xf]
        %v219 = vld [vmem:[%s1 + $0xe8] sm:$0xf]
        %v220 = vld [vmem:[%s1 + $0xf0] sm:$0xf]
        %v221 = vld [vmem:[%s1 + $0xf8] sm:$0xf]
        %v222 = vld [vmem:[%s1 + $0x100] sm:$0xf]
        %v223 = vld [vmem:[%s1 + $0x108] sm:$0xf]
        %v224 = vld [vmem:[%s1 + $0x110] sm:$0xf]
        %v225 = vld [vmem:[%s1 + $0x118] sm:$0xf]
        %v226 = vld [vmem:[%s1 + $0x120] sm:$0xf]
        %v227 = vld [vmem:[%s1 + $0x128] sm:$0xf]
        %v228 = vld [vmem:[%s1 + $0x130] sm:$0xf]
        %v229 = vld [vmem:[%s1 + $0x138] sm:$0xf]
        %v230 = vld [vmem:[%s1 + $0x140] sm:$0xf]
        %v231 = vld [vmem:[%s1 + $0x148] sm:$0xf]
        %v232 = vld [vmem:[%s1 + $0x150] sm:$0xf]
        %v233 = vld [vmem:[%s1 + $0x158] sm:$0xf]
        %v234 = vld [vmem:[%s1 + $0x160] sm:$0xf]
        %v235 = vld [vmem:[%s1 + $0x168] sm:$0xf]
        %v236 = vld [vmem:[%s1 + $0x170] sm:$0xf]
        %v237 = vld [vmem:[%s1 + $0x178] sm:$0xf]
        %v262 = vunpack.c.l.b16 %v214
        %v263 = vunpack.c.l.b16 %v215
        %v264 = vunpack.c.l.b16 %v216
        %v265 = vunpack.c.l.b16 %v217
        %v266 = vunpack.c.l.b16 %v218
        %v267 = vunpack.c.l.b16 %v219
        %v268 = vunpack.c.l.b16 %v220
        %v269 = vunpack.c.l.b16 %v221
        %v270 = vunpack.c.l.b16 %v222
        %v271 = vunpack.c.l.b16 %v223
        %v272 = vunpack.c.l.b16 %v224
        %v273 = vunpack.c.l.b16 %v225
        %v274 = vunpack.c.l.b16 %v226
        %v275 = vunpack.c.l.b16 %v227
        %v276 = vunpack.c.l.b16 %v228
        %v277 = vunpack.c.l.b16 %v229
        %v278 = vunpack.c.l.b16 %v230
        %v279 = vunpack.c.l.b16 %v231
        %v280 = vunpack.c.l.b16 %v232
        %v281 = vunpack.c.l.b16 %v233
        %v282 = vunpack.c.l.b16 %v234
        %v283 = vunpack.c.l.b16 %v235
        %v284 = vunpack.c.l.b16 %v236
        %v285 = vunpack.c.l.b16 %v237
        %v286 = vpack.c.b16 %v263, %v262
        %v287 = vpack.c.b16 %v265, %v264
        %v288 = vpack.c.b16 %v267, %v266
        %v289 = vpack.c.b16 %v269, %v268
        %v290 = vpack.c.b16 %v271, %v270
        %v291 = vpack.c.b16 %v273, %v272
        %v292 = vpack.c.b16 %v275, %v274
        %v293 = vpack.c.b16 %v277, %v276
        %v294 = vpack.c.b16 %v279, %v278
        %v295 = vpack.c.b16 %v281, %v280
        %v296 = vpack.c.b16 %v283, %v282
        %v297 = vpack.c.b16 %v285, %v284
        %vm298 = vcmask 130048
        %v300 = vsel %vm298, %v286, 0
        %v303 = vsel %vm298, %v287, 0
        %v306 = vsel %vm298, %v288, 0
        %v309 = vsel %vm298, %v289, 0
        %v312 = vsel %vm298, %v290, 0
        %v315 = vsel %vm298, %v291, 0
        %v318 = vsel %vm298, %v292, 0
        %v321 = vsel %vm298, %v293, 0
        %v324 = vsel %vm298, %v294, 0
        %v327 = vsel %vm298, %v295, 0
        %v330 = vsel %vm298, %v296, 0
        %v333 = vsel %vm298, %v297, 0
        %335 = vmatpush.bf16.msra.mxu0 0
        %336 = vmatpush.bf16.msra.mxu0 0
        %337 = vmatpush.bf16.msra.mxu0 0
        %338 = vmatpush.bf16.msra.mxu0 0
        %339 = vmatpush.bf16.msra.mxu0 0
        %340 = vmatpush.bf16.msra.mxu0 0
        %341 = vmatpush.bf16.msra.mxu0 0
        %342 = vmatpush.bf16.msra.mxu0 %v213
        %343 = vmatmul.bf16.gmra.mxu0 %v300
        %v344 = vpop.f32.mrf.mxu0
        %v345 = vadd.f32 0.0, %v344
        %v346 = vpop.f32.mrf.mxu0
        %v347 = vadd.f32 0.0, %v346
        %348 = vmatmul.bf16.gmra.mxu0 %v303
        %v349 = vpop.f32.mrf.mxu0
        %v350 = vadd.f32 0.0, %v349
        %v351 = vpop.f32.mrf.mxu0
        %v352 = vadd.f32 0.0, %v351
        %353 = vmatmul.bf16.gmra.mxu0 %v306
        %v354 = vpop.f32.mrf.mxu0
        %v355 = vadd.f32 0.0, %v354
        %v356 = vpop.f32.mrf.mxu0
        %v357 = vadd.f32 0.0, %v356
        %358 = vmatmul.bf16.gmra.mxu0 %v309
        %v359 = vpop.f32.mrf.mxu0
        %v360 = vadd.f32 0.0, %v359
        %v361 = vpop.f32.mrf.mxu0
        %v362 = vadd.f32 0.0, %v361
        %363 = vmatmul.bf16.gmra.mxu0 %v312
        %v364 = vpop.f32.mrf.mxu0
        %v365 = vadd.f32 0.0, %v364
        %v366 = vpop.f32.mrf.mxu0
        %v367 = vadd.f32 0.0, %v366
        %368 = vmatmul.bf16.gmra.mxu0 %v315
        %v369 = vpop.f32.mrf.mxu0
        %v370 = vadd.f32 0.0, %v369
        %v371 = vpop.f32.mrf.mxu0
        %v372 = vadd.f32 0.0, %v371
        %373 = vmatmul.bf16.gmra.mxu0 %v318
        %v374 = vpop.f32.mrf.mxu0
        %v375 = vadd.f32 0.0, %v374
        %v376 = vpop.f32.mrf.mxu0
        %v377 = vadd.f32 0.0, %v376
        %378 = vmatmul.bf16.gmra.mxu0 %v321
        %v379 = vpop.f32.mrf.mxu0
        %v380 = vadd.f32 0.0, %v379
        %v381 = vpop.f32.mrf.mxu0
        %v382 = vadd.f32 0.0, %v381
        %383 = vmatmul.bf16.gmra.mxu0 %v324
        %v384 = vpop.f32.mrf.mxu0
        %v385 = vadd.f32 0.0, %v384
        %v386 = vpop.f32.mrf.mxu0
        %v387 = vadd.f32 0.0, %v386
        %388 = vmatmul.bf16.gmra.mxu0 %v327
        %v389 = vpop.f32.mrf.mxu0
        %v390 = vadd.f32 0.0, %v389
        %v391 = vpop.f32.mrf.mxu0
        %v392 = vadd.f32 0.0, %v391
        %393 = vmatmul.bf16.gmra.mxu0 %v330
        %v394 = vpop.f32.mrf.mxu0
        %v395 = vadd.f32 0.0, %v394
        %v396 = vpop.f32.mrf.mxu0
        %v397 = vadd.f32 0.0, %v396
        %398 = vmatmul.bf16.gmra.mxu0 %v333
        %v399 = vpop.f32.mrf.mxu0
        %v400 = vadd.f32 0.0, %v399
        %v401 = vpop.f32.mrf.mxu0
        %v402 = vadd.f32 0.0, %v401
        %403 = vdwg.mxu0
        %v428 = vunpack.c.l.b16 %v186
        %v429 = vunpack.c.l.b16 %v187
        %v430 = vunpack.c.l.b16 %v188
        %v431 = vunpack.c.l.b16 %v189
        %v432 = vunpack.c.l.b16 %v190
        %v433 = vunpack.c.l.b16 %v191
        %v434 = vunpack.c.l.b16 %v192
        %v435 = vunpack.c.l.b16 %v193
        %v436 = vunpack.c.l.b16 %v194
        %v437 = vunpack.c.l.b16 %v195
        %v438 = vunpack.c.l.b16 %v196
        %v439 = vunpack.c.l.b16 %v197
        %v440 = vunpack.c.l.b16 %v198
        %v441 = vunpack.c.l.b16 %v199
        %v442 = vunpack.c.l.b16 %v200
        %v443 = vunpack.c.l.b16 %v201
        %v444 = vunpack.c.l.b16 %v202
        %v445 = vunpack.c.l.b16 %v203
        %v446 = vunpack.c.l.b16 %v204
        %v447 = vunpack.c.l.b16 %v205
        %v448 = vunpack.c.l.b16 %v206
        %v449 = vunpack.c.l.b16 %v207
        %v450 = vunpack.c.l.b16 %v208
        %v451 = vunpack.c.l.b16 %v209
        %v452 = vpack.c.b16 %v429, %v428
        %v453 = vpack.c.b16 %v431, %v430
        %v454 = vpack.c.b16 %v433, %v432
        %v455 = vpack.c.b16 %v435, %v434
        %v456 = vpack.c.b16 %v437, %v436
        %v457 = vpack.c.b16 %v439, %v438
        %v458 = vpack.c.b16 %v441, %v440
        %v459 = vpack.c.b16 %v443, %v442
        %v460 = vpack.c.b16 %v445, %v444
        %v461 = vpack.c.b16 %v447, %v446
        %v462 = vpack.c.b16 %v449, %v448
        %v463 = vpack.c.b16 %v451, %v450
        %v465 = vsel %vm298, %v452, 0
        %v468 = vsel %vm298, %v453, 0
        %v471 = vsel %vm298, %v454, 0
        %v474 = vsel %vm298, %v455, 0
        %v477 = vsel %vm298, %v456, 0
        %v480 = vsel %vm298, %v457, 0
        %v483 = vsel %vm298, %v458, 0
        %v486 = vsel %vm298, %v459, 0
        %v489 = vsel %vm298, %v460, 0
        %v492 = vsel %vm298, %v461, 0
        %v495 = vsel %vm298, %v462, 0
        %v498 = vsel %vm298, %v463, 0
        %500 = vmatpush.bf16.msra.mxu0 0
        %501 = vmatpush.bf16.msra.mxu0 0
        %502 = vmatpush.bf16.msra.mxu0 0
        %503 = vmatpush.bf16.msra.mxu0 0
        %504 = vmatpush.bf16.msra.mxu0 0
        %505 = vmatpush.bf16.msra.mxu0 0
        %506 = vmatpush.bf16.msra.mxu0 0
        %507 = vmatpush.bf16.msra.mxu0 %v185
        %508 = vmatmul.bf16.gmra.mxu0 %v465
        %v509 = vpop.f32.mrf.mxu0
        %v510 = vadd.f32 %v345, %v509
        %v511 = vpop.f32.mrf.mxu0
        %v512 = vadd.f32 %v347, %v511
        %513 = vmatmul.bf16.gmra.mxu0 %v468
        %v514 = vpop.f32.mrf.mxu0
        %v515 = vadd.f32 %v350, %v514
        %v516 = vpop.f32.mrf.mxu0
        %v517 = vadd.f32 %v352, %v516
        %518 = vmatmul.bf16.gmra.mxu0 %v471
        %v519 = vpop.f32.mrf.mxu0
        %v520 = vadd.f32 %v355, %v519
        %v521 = vpop.f32.mrf.mxu0
        %v522 = vadd.f32 %v357, %v521
        %523 = vmatmul.bf16.gmra.mxu0 %v474
        %v524 = vpop.f32.mrf.mxu0
        %v525 = vadd.f32 %v360, %v524
        %v526 = vpop.f32.mrf.mxu0
        %v527 = vadd.f32 %v362, %v526
        %528 = vmatmul.bf16.gmra.mxu0 %v477
        %v529 = vpop.f32.mrf.mxu0
        %v530 = vadd.f32 %v365, %v529
        %v531 = vpop.f32.mrf.mxu0
        %v532 = vadd.f32 %v367, %v531
        %533 = vmatmul.bf16.gmra.mxu0 %v480
        %v534 = vpop.f32.mrf.mxu0
        %v535 = vadd.f32 %v370, %v534
        %v536 = vpop.f32.mrf.mxu0
        %v537 = vadd.f32 %v372, %v536
        %538 = vmatmul.bf16.gmra.mxu0 %v483
        %v539 = vpop.f32.mrf.mxu0
        %v540 = vadd.f32 %v375, %v539
        %v541 = vpop.f32.mrf.mxu0
        %v542 = vadd.f32 %v377, %v541
        %543 = vmatmul.bf16.gmra.mxu0 %v486
        %v544 = vpop.f32.mrf.mxu0
        %v545 = vadd.f32 %v380, %v544
        %v546 = vpop.f32.mrf.mxu0
        %v547 = vadd.f32 %v382, %v546
        %548 = vmatmul.bf16.gmra.mxu0 %v489
        %v549 = vpop.f32.mrf.mxu0
        %v550 = vadd.f32 %v385, %v549
        %v551 = vpop.f32.mrf.mxu0
        %v552 = vadd.f32 %v387, %v551
        %553 = vmatmul.bf16.gmra.mxu0 %v492
        %v554 = vpop.f32.mrf.mxu0
        %v555 = vadd.f32 %v390, %v554
        %v556 = vpop.f32.mrf.mxu0
        %v557 = vadd.f32 %v392, %v556
        %558 = vmatmul.bf16.gmra.mxu0 %v495
        %v559 = vpop.f32.mrf.mxu0
        %v560 = vadd.f32 %v395, %v559
        %v561 = vpop.f32.mrf.mxu0
        %v562 = vadd.f32 %v397, %v561
        %563 = vmatmul.bf16.gmra.mxu0 %v498
        %v564 = vpop.f32.mrf.mxu0
        %v565 = vadd.f32 %v400, %v564
        %v566 = vpop.f32.mrf.mxu0
        %v567 = vadd.f32 %v402, %v566
        %568 = vdwg.mxu0
        %v569 = vld [vmem:[%s2 + $0x20] ss:$0 sm:$0xff]
        %v570 = vmul.f32 %v176, %v569
        %v571 = vmul.f32 %v181, %v569
        %v572 = vpack.c.bf16 %v571, %v570
        %v573 = vld [vmem:[%s1 + $0x180] sm:$0xf]
        %v574 = vld [vmem:[%s1 + $0x188] sm:$0xf]
        %v575 = vld [vmem:[%s1 + $0x190] sm:$0xf]
        %v576 = vld [vmem:[%s1 + $0x198] sm:$0xf]
        %v577 = vld [vmem:[%s1 + $0x1a0] sm:$0xf]
        %v578 = vld [vmem:[%s1 + $0x1a8] sm:$0xf]
        %v579 = vld [vmem:[%s1 + $0x1b0] sm:$0xf]
        %v580 = vld [vmem:[%s1 + $0x1b8] sm:$0xf]
        %v581 = vld [vmem:[%s1 + $0x1c0] sm:$0xf]
        %v582 = vld [vmem:[%s1 + $0x1c8] sm:$0xf]
        %v583 = vld [vmem:[%s1 + $0x1d0] sm:$0xf]
        %v584 = vld [vmem:[%s1 + $0x1d8] sm:$0xf]
        %v585 = vld [vmem:[%s1 + $0x1e0] sm:$0xf]
        %v586 = vld [vmem:[%s1 + $0x1e8] sm:$0xf]
        %v587 = vld [vmem:[%s1 + $0x1f0] sm:$0xf]
        %v588 = vld [vmem:[%s1 + $0x1f8] sm:$0xf]
        %v589 = vld [vmem:[%s1 + $0x200] sm:$0xf]
        %v590 = vld [vmem:[%s1 + $0x208] sm:$0xf]
        %v591 = vld [vmem:[%s1 + $0x210] sm:$0xf]
        %v592 = vld [vmem:[%s1 + $0x218] sm:$0xf]
        %v593 = vld [vmem:[%s1 + $0x220] sm:$0xf]
        %v594 = vld [vmem:[%s1 + $0x228] sm:$0xf]
        %v595 = vld [vmem:[%s1 + $0x230] sm:$0xf]
        %v596 = vld [vmem:[%s1 + $0x238] sm:$0xf]
        %v621 = vunpack.c.l.b16 %v573
        %v622 = vunpack.c.l.b16 %v574
        %v623 = vunpack.c.l.b16 %v575
        %v624 = vunpack.c.l.b16 %v576
        %v625 = vunpack.c.l.b16 %v577
        %v626 = vunpack.c.l.b16 %v578
        %v627 = vunpack.c.l.b16 %v579
        %v628 = vunpack.c.l.b16 %v580
        %v629 = vunpack.c.l.b16 %v581
        %v630 = vunpack.c.l.b16 %v582
        %v631 = vunpack.c.l.b16 %v583
        %v632 = vunpack.c.l.b16 %v584
        %v633 = vunpack.c.l.b16 %v585
        %v634 = vunpack.c.l.b16 %v586
        %v635 = vunpack.c.l.b16 %v587
        %v636 = vunpack.c.l.b16 %v588
        %v637 = vunpack.c.l.b16 %v589
        %v638 = vunpack.c.l.b16 %v590
        %v639 = vunpack.c.l.b16 %v591
        %v640 = vunpack.c.l.b16 %v592
        %v641 = vunpack.c.l.b16 %v593
        %v642 = vunpack.c.l.b16 %v594
        %v643 = vunpack.c.l.b16 %v595
        %v644 = vunpack.c.l.b16 %v596
        %v645 = vpack.c.b16 %v622, %v621
        %v646 = vpack.c.b16 %v624, %v623
        %v647 = vpack.c.b16 %v626, %v625
        %v648 = vpack.c.b16 %v628, %v627
        %v649 = vpack.c.b16 %v630, %v629
        %v650 = vpack.c.b16 %v632, %v631
        %v651 = vpack.c.b16 %v634, %v633
        %v652 = vpack.c.b16 %v636, %v635
        %v653 = vpack.c.b16 %v638, %v637
        %v654 = vpack.c.b16 %v640, %v639
        %v655 = vpack.c.b16 %v642, %v641
        %v656 = vpack.c.b16 %v644, %v643
        %v658 = vsel %vm298, %v645, 0
        %v661 = vsel %vm298, %v646, 0
        %v664 = vsel %vm298, %v647, 0
        %v667 = vsel %vm298, %v648, 0
        %v670 = vsel %vm298, %v649, 0
        %v673 = vsel %vm298, %v650, 0
        %v676 = vsel %vm298, %v651, 0
        %v679 = vsel %vm298, %v652, 0
        %v682 = vsel %vm298, %v653, 0
        %v685 = vsel %vm298, %v654, 0
        %v688 = vsel %vm298, %v655, 0
        %v691 = vsel %vm298, %v656, 0
        %693 = vmatpush.bf16.msra.mxu0 0
        %694 = vmatpush.bf16.msra.mxu0 0
        %695 = vmatpush.bf16.msra.mxu0 0
        %696 = vmatpush.bf16.msra.mxu0 0
        %697 = vmatpush.bf16.msra.mxu0 0
        %698 = vmatpush.bf16.msra.mxu0 0
        %699 = vmatpush.bf16.msra.mxu0 0
        %700 = vmatpush.bf16.msra.mxu0 %v572
        %701 = vmatmul.bf16.gmra.mxu0 %v658
        %v702 = vpop.f32.mrf.mxu0
        %v703 = vadd.f32 0.0, %v702
        %v704 = vpop.f32.mrf.mxu0
        %v705 = vadd.f32 0.0, %v704
        %706 = vmatmul.bf16.gmra.mxu0 %v661
        %v707 = vpop.f32.mrf.mxu0
        %v708 = vadd.f32 0.0, %v707
        %v709 = vpop.f32.mrf.mxu0
        %v710 = vadd.f32 0.0, %v709
        %711 = vmatmul.bf16.gmra.mxu0 %v664
        %v712 = vpop.f32.mrf.mxu0
        %v713 = vadd.f32 0.0, %v712
        %v714 = vpop.f32.mrf.mxu0
        %v715 = vadd.f32 0.0, %v714
        %716 = vmatmul.bf16.gmra.mxu0 %v667
        %v717 = vpop.f32.mrf.mxu0
        %v718 = vadd.f32 0.0, %v717
        %v719 = vpop.f32.mrf.mxu0
        %v720 = vadd.f32 0.0, %v719
        %721 = vmatmul.bf16.gmra.mxu0 %v670
        %v722 = vpop.f32.mrf.mxu0
        %v723 = vadd.f32 0.0, %v722
        %v724 = vpop.f32.mrf.mxu0
        %v725 = vadd.f32 0.0, %v724
        %726 = vmatmul.bf16.gmra.mxu0 %v673
        %v727 = vpop.f32.mrf.mxu0
        %v728 = vadd.f32 0.0, %v727
        %v729 = vpop.f32.mrf.mxu0
        %v730 = vadd.f32 0.0, %v729
        %731 = vmatmul.bf16.gmra.mxu0 %v676
        %v732 = vpop.f32.mrf.mxu0
        %v733 = vadd.f32 0.0, %v732
        %v734 = vpop.f32.mrf.mxu0
        %v735 = vadd.f32 0.0, %v734
        %736 = vmatmul.bf16.gmra.mxu0 %v679
        %v737 = vpop.f32.mrf.mxu0
        %v738 = vadd.f32 0.0, %v737
        %v739 = vpop.f32.mrf.mxu0
        %v740 = vadd.f32 0.0, %v739
        %741 = vmatmul.bf16.gmra.mxu0 %v682
        %v742 = vpop.f32.mrf.mxu0
        %v743 = vadd.f32 0.0, %v742
        %v744 = vpop.f32.mrf.mxu0
        %v745 = vadd.f32 0.0, %v744
        %746 = vmatmul.bf16.gmra.mxu0 %v685
        %v747 = vpop.f32.mrf.mxu0
        %v748 = vadd.f32 0.0, %v747
        %v749 = vpop.f32.mrf.mxu0
        %v750 = vadd.f32 0.0, %v749
        %751 = vmatmul.bf16.gmra.mxu0 %v688
        %v752 = vpop.f32.mrf.mxu0
        %v753 = vadd.f32 0.0, %v752
        %v754 = vpop.f32.mrf.mxu0
        %v755 = vadd.f32 0.0, %v754
        %756 = vmatmul.bf16.gmra.mxu0 %v691
        %v757 = vpop.f32.mrf.mxu0
        %v758 = vadd.f32 0.0, %v757
        %v759 = vpop.f32.mrf.mxu0
        %v760 = vadd.f32 0.0, %v759
        %761 = vdwg.mxu0
        %v762 = vadd.f32 %v510, %v703
        %v763 = vadd.f32 %v512, %v705
        %v764 = vadd.f32 %v515, %v708
        %v765 = vadd.f32 %v517, %v710
        %v766 = vadd.f32 %v520, %v713
        %v767 = vadd.f32 %v522, %v715
        %v768 = vadd.f32 %v525, %v718
        %v769 = vadd.f32 %v527, %v720
        %v770 = vadd.f32 %v530, %v723
        %v771 = vadd.f32 %v532, %v725
        %v772 = vadd.f32 %v535, %v728
        %v773 = vadd.f32 %v537, %v730
        %v774 = vadd.f32 %v540, %v733
        %v775 = vadd.f32 %v542, %v735
        %v776 = vadd.f32 %v545, %v738
        %v777 = vadd.f32 %v547, %v740
        %v778 = vadd.f32 %v550, %v743
        %v779 = vadd.f32 %v552, %v745
        %v780 = vadd.f32 %v555, %v748
        %v781 = vadd.f32 %v557, %v750
        %v782 = vadd.f32 %v560, %v753
        %v783 = vadd.f32 %v562, %v755
        %v784 = vadd.f32 %v565, %v758
        %v785 = vadd.f32 %v567, %v760
        %vm786 = vcmask 23552
        %v787 = vsel %vm786, %v762, 0.0
        %v788 = vsel %vm786, %v763, 0.0
        %v789 = vadd.f32 %v787, %v788
        %v790 = vsel %vm786, %v764, 0.0
        %v791 = vadd.f32 %v789, %v790
        %v792 = vsel %vm786, %v765, 0.0
        %v793 = vadd.f32 %v791, %v792
        %v794 = vsel %vm786, %v766, 0.0
        %v795 = vadd.f32 %v793, %v794
        %v796 = vsel %vm786, %v767, 0.0
        %v797 = vadd.f32 %v795, %v796
        %v798 = vsel %vm786, %v768, 0.0
        %v799 = vadd.f32 %v797, %v798
        %v800 = vsel %vm786, %v769, 0.0
        %v801 = vadd.f32 %v799, %v800
        %v802 = vsel %vm786, %v770, 0.0
        %v803 = vadd.f32 %v801, %v802
        %v804 = vsel %vm786, %v771, 0.0
        %v805 = vadd.f32 %v803, %v804
        %v806 = vsel %vm786, %v772, 0.0
        %v807 = vadd.f32 %v805, %v806
        %v808 = vsel %vm786, %v773, 0.0
        %v809 = vadd.f32 %v807, %v808
        %v810 = vsel %vm786, %v774, 0.0
        %v811 = vadd.f32 %v809, %v810
        %v812 = vsel %vm786, %v775, 0.0
        %v813 = vadd.f32 %v811, %v812
        %v814 = vsel %vm786, %v776, 0.0
        %v815 = vadd.f32 %v813, %v814
        %v816 = vsel %vm786, %v777, 0.0
        %v817 = vadd.f32 %v815, %v816
        %v818 = vsel %vm786, %v778, 0.0
        %v819 = vadd.f32 %v817, %v818
        %v820 = vsel %vm786, %v779, 0.0
        %v821 = vadd.f32 %v819, %v820
        %v822 = vsel %vm786, %v780, 0.0
        %v823 = vadd.f32 %v821, %v822
        %v824 = vsel %vm786, %v781, 0.0
        %v825 = vadd.f32 %v823, %v824
        %v826 = vsel %vm786, %v782, 0.0
        %v827 = vadd.f32 %v825, %v826
        %v828 = vsel %vm786, %v783, 0.0
        %v829 = vadd.f32 %v827, %v828
        %v830 = vsel %vm786, %v784, 0.0
        %v831 = vadd.f32 %v829, %v830
        %v832 = vsel %vm786, %v785, 0.0
        %v833 = vadd.f32 %v831, %v832
        %834 = vadd.xlane.f32.xlu0 %v833
        %v835 = vpop.xlane.xlu0 %834
        %v836 = vrot.slane %v835, 4
        %v837 = vadd.f32 %v835, %v836
        %v838 = vrot.slane %v837, 2
        %v839 = vadd.f32 %v837, %v838
        %v840 = vrot.slane %v839, 1
        %v841 = vadd.f32 %v839, %v840
        %s842 = vtos %v841
        %s843 = smul.f32 %s842, 0.0017361111
        %v844 = vstv %s843
        %v845 = vsub.f32 %v762, %v844
        %v846 = vsub.f32 %v763, %v844
        %v847 = vsub.f32 %v764, %v844
        %v848 = vsub.f32 %v765, %v844
        %v849 = vsub.f32 %v766, %v844
        %v850 = vsub.f32 %v767, %v844
        %v851 = vsub.f32 %v768, %v844
        %v852 = vsub.f32 %v769, %v844
        %v853 = vsub.f32 %v770, %v844
        %v854 = vsub.f32 %v771, %v844
        %v855 = vsub.f32 %v772, %v844
        %v856 = vsub.f32 %v773, %v844
        %v857 = vsub.f32 %v774, %v844
        %v858 = vsub.f32 %v775, %v844
        %v859 = vsub.f32 %v776, %v844
        %v860 = vsub.f32 %v777, %v844
        %v861 = vsub.f32 %v778, %v844
        %v862 = vsub.f32 %v779, %v844
        %v863 = vsub.f32 %v780, %v844
        %v864 = vsub.f32 %v781, %v844
        %v865 = vsub.f32 %v782, %v844
        %v866 = vsub.f32 %v783, %v844
        %v867 = vsub.f32 %v784, %v844
        %v868 = vsub.f32 %v785, %v844
        %v869 = vmul.f32 %v845, %v845
        %v870 = vmul.f32 %v846, %v846
        %v871 = vmul.f32 %v847, %v847
        %v872 = vmul.f32 %v848, %v848
        %v873 = vmul.f32 %v849, %v849
        %v874 = vmul.f32 %v850, %v850
        %v875 = vmul.f32 %v851, %v851
        %v876 = vmul.f32 %v852, %v852
        %v877 = vmul.f32 %v853, %v853
        %v878 = vmul.f32 %v854, %v854
        %v879 = vmul.f32 %v855, %v855
        %v880 = vmul.f32 %v856, %v856
        %v881 = vmul.f32 %v857, %v857
        %v882 = vmul.f32 %v858, %v858
        %v883 = vmul.f32 %v859, %v859
        %v884 = vmul.f32 %v860, %v860
        %v885 = vmul.f32 %v861, %v861
        %v886 = vmul.f32 %v862, %v862
        %v887 = vmul.f32 %v863, %v863
        %v888 = vmul.f32 %v864, %v864
        %v889 = vmul.f32 %v865, %v865
        %v890 = vmul.f32 %v866, %v866
        %v891 = vmul.f32 %v867, %v867
        %v892 = vmul.f32 %v868, %v868
        %v893 = vsel %vm786, %v869, 0.0
        %v894 = vsel %vm786, %v870, 0.0
        %v895 = vadd.f32 %v893, %v894
        %v896 = vsel %vm786, %v871, 0.0
        %v897 = vadd.f32 %v895, %v896
        %v898 = vsel %vm786, %v872, 0.0
        %v899 = vadd.f32 %v897, %v898
        %v900 = vsel %vm786, %v873, 0.0
        %v901 = vadd.f32 %v899, %v900
        %v902 = vsel %vm786, %v874, 0.0
        %v903 = vadd.f32 %v901, %v902
        %v904 = vsel %vm786, %v875, 0.0
        %v905 = vadd.f32 %v903, %v904
        %v906 = vsel %vm786, %v876, 0.0
        %v907 = vadd.f32 %v905, %v906
        %v908 = vsel %vm786, %v877, 0.0
        %v909 = vadd.f32 %v907, %v908
        %v910 = vsel %vm786, %v878, 0.0
        %v911 = vadd.f32 %v909, %v910
        %v912 = vsel %vm786, %v879, 0.0
        %v913 = vadd.f32 %v911, %v912
        %v914 = vsel %vm786, %v880, 0.0
        %v915 = vadd.f32 %v913, %v914
        %v916 = vsel %vm786, %v881, 0.0
        %v917 = vadd.f32 %v915, %v916
        %v918 = vsel %vm786, %v882, 0.0
        %v919 = vadd.f32 %v917, %v918
        %v920 = vsel %vm786, %v883, 0.0
        %v921 = vadd.f32 %v919, %v920
        %v922 = vsel %vm786, %v884, 0.0
        %v923 = vadd.f32 %v921, %v922
        %v924 = vsel %vm786, %v885, 0.0
        %v925 = vadd.f32 %v923, %v924
        %v926 = vsel %vm786, %v886, 0.0
        %v927 = vadd.f32 %v925, %v926
        %v928 = vsel %vm786, %v887, 0.0
        %v929 = vadd.f32 %v927, %v928
        %v930 = vsel %vm786, %v888, 0.0
        %v931 = vadd.f32 %v929, %v930
        %v932 = vsel %vm786, %v889, 0.0
        %v933 = vadd.f32 %v931, %v932
        %v934 = vsel %vm786, %v890, 0.0
        %v935 = vadd.f32 %v933, %v934
        %v936 = vsel %vm786, %v891, 0.0
        %v937 = vadd.f32 %v935, %v936
        %v938 = vsel %vm786, %v892, 0.0
        %v939 = vadd.f32 %v937, %v938
        %940 = vadd.xlane.f32.xlu0 %v939
        %v941 = vpop.xlane.xlu0 %940
        %v942 = vrot.slane %v941, 4
        %v943 = vadd.f32 %v941, %v942
        %v944 = vrot.slane %v943, 2
        %v945 = vadd.f32 %v943, %v944
        %v946 = vrot.slane %v945, 1
        %v947 = vadd.f32 %v945, %v946
        %s948 = vtos %v947
        %s949 = smul.f32 %s948, 0.0017361111
        %v950 = vld [vmem:[%s2 + $0x30] sm:$0xff]
        %v951 = vld [vmem:[%s2 + $0x40] sm:$0xff]
        %v952 = vld [vmem:[%s2 + $0x50] sm:$0xff]
        %v953 = vld [vmem:[%s2 + $0x60] sm:$0xff]
        %v954 = vld [vmem:[%s2 + $0x70] sm:$0xff]
        %v955 = vld [vmem:[%s2 + $0x80] sm:$0xff]
        %v956 = vld [vmem:[%s2 + $0x90] sm:$0xff]
        %v957 = vld [vmem:[%s2 + $0xa0] sm:$0xff]
        %v958 = vld [vmem:[%s2 + $0xb0] sm:$0xff]
        %v959 = vld [vmem:[%s2 + $0xc0] sm:$0xff]
        %v960 = vld [vmem:[%s2 + $0xd0] sm:$0xff]
        %v961 = vld [vmem:[%s2 + $0xe0] sm:$0xff]
        %v962 = vld [vmem:[%s2 + $0xf0] sm:$0xff]
        %v963 = vld [vmem:[%s2 + $0x100] sm:$0xff]
        %v964 = vld [vmem:[%s2 + $0x110] sm:$0xff]
        %v965 = vld [vmem:[%s2 + $0x120] sm:$0xff]
        %v966 = vld [vmem:[%s2 + $0x130] sm:$0xff]
        %v967 = vld [vmem:[%s2 + $0x140] sm:$0xff]
        %v968 = vld [vmem:[%s2 + $0x150] sm:$0xff]
        %v969 = vld [vmem:[%s2 + $0x160] sm:$0xff]
        %v970 = vld [vmem:[%s2 + $0x170] sm:$0xff]
        %v971 = vld [vmem:[%s2 + $0x180] sm:$0xff]
        %v972 = vld [vmem:[%s2 + $0x190] sm:$0xff]
        %v973 = vld [vmem:[%s2 + $0x1a0] sm:$0xff]
        %v974 = vld [vmem:[%s2 + $0x1b0] sm:$0xff]
        %v975 = vld [vmem:[%s2 + $0x1c0] sm:$0xff]
        %v976 = vld [vmem:[%s2 + $0x1d0] sm:$0xff]
        %v977 = vld [vmem:[%s2 + $0x1e0] sm:$0xff]
        %v978 = vld [vmem:[%s2 + $0x1f0] sm:$0xff]
        %v979 = vld [vmem:[%s2 + $0x200] sm:$0xff]
        %v980 = vld [vmem:[%s2 + $0x210] sm:$0xff]
        %v981 = vld [vmem:[%s2 + $0x220] sm:$0xff]
        %v982 = vld [vmem:[%s2 + $0x230] sm:$0xff]
        %v983 = vld [vmem:[%s2 + $0x240] sm:$0xff]
        %v984 = vld [vmem:[%s2 + $0x250] sm:$0xff]
        %v985 = vld [vmem:[%s2 + $0x260] sm:$0xff]
        %v986 = vld [vmem:[%s2 + $0x270] sm:$0xff]
        %v987 = vld [vmem:[%s2 + $0x280] sm:$0xff]
        %v988 = vld [vmem:[%s2 + $0x290] sm:$0xff]
        %v989 = vld [vmem:[%s2 + $0x2a0] sm:$0xff]
        %v990 = vld [vmem:[%s2 + $0x2b0] sm:$0xff]
        %v991 = vld [vmem:[%s2 + $0x2c0] sm:$0xff]
        %v992 = vld [vmem:[%s2 + $0x2d0] sm:$0xff]
        %v993 = vld [vmem:[%s2 + $0x2e0] sm:$0xff]
        %v994 = vld [vmem:[%s2 + $0x2f0] sm:$0xff]
        %v995 = vld [vmem:[%s2 + $0x300] sm:$0xff]
        %v996 = vld [vmem:[%s2 + $0x310] sm:$0xff]
        %v997 = vld [vmem:[%s2 + $0x320] sm:$0xff]
        %s998 = sadd.f32 %s949, 1e-05
        %v999 = vstv %s998
        %v1000 = vrsqrt.pop %v999
        %v1001 = vmul.f32 %v1000, %v999
        %v1002 = vmul.f32 %v1001, %v1000
        %v1003 = vmul.f32 0.5, %v1002
        %v1004 = vsub.f32 1.5, %v1003
        %v1005 = vmul.f32 %v1000, %v1004
        %vm1006 = vweird.f32 %v999
        %vm1007 = vweird.f32 %v1000
        %vm1008 = vmor %vm1006, %vm1007
        %v1009 = vsel %vm1008, %v1000, %v1005
        %s1010 = vtos %v1009
        %v1011 = vstv %s1010
        %v1012 = vmul.f32 %v845, %v1011
        %v1013 = vmul.f32 %v846, %v1011
        %v1014 = vmul.f32 %v847, %v1011
        %v1015 = vmul.f32 %v848, %v1011
        %v1016 = vmul.f32 %v849, %v1011
        %v1017 = vmul.f32 %v850, %v1011
        %v1018 = vmul.f32 %v851, %v1011
        %v1019 = vmul.f32 %v852, %v1011
        %v1020 = vmul.f32 %v853, %v1011
        %v1021 = vmul.f32 %v854, %v1011
        %v1022 = vmul.f32 %v855, %v1011
        %v1023 = vmul.f32 %v856, %v1011
        %v1024 = vmul.f32 %v857, %v1011
        %v1025 = vmul.f32 %v858, %v1011
        %v1026 = vmul.f32 %v859, %v1011
        %v1027 = vmul.f32 %v860, %v1011
        %v1028 = vmul.f32 %v861, %v1011
        %v1029 = vmul.f32 %v862, %v1011
        %v1030 = vmul.f32 %v863, %v1011
        %v1031 = vmul.f32 %v864, %v1011
        %v1032 = vmul.f32 %v865, %v1011
        %v1033 = vmul.f32 %v866, %v1011
        %v1034 = vmul.f32 %v867, %v1011
        %v1035 = vmul.f32 %v868, %v1011
        %v1036 = vmul.f32 %v1012, %v950
        %v1037 = vmul.f32 %v1013, %v951
        %v1038 = vmul.f32 %v1014, %v952
        %v1039 = vmul.f32 %v1015, %v953
        %v1040 = vmul.f32 %v1016, %v954
        %v1041 = vmul.f32 %v1017, %v955
        %v1042 = vmul.f32 %v1018, %v956
        %v1043 = vmul.f32 %v1019, %v957
        %v1044 = vmul.f32 %v1020, %v958
        %v1045 = vmul.f32 %v1021, %v959
        %v1046 = vmul.f32 %v1022, %v960
        %v1047 = vmul.f32 %v1023, %v961
        %v1048 = vmul.f32 %v1024, %v962
        %v1049 = vmul.f32 %v1025, %v963
        %v1050 = vmul.f32 %v1026, %v964
        %v1051 = vmul.f32 %v1027, %v965
        %v1052 = vmul.f32 %v1028, %v966
        %v1053 = vmul.f32 %v1029, %v967
        %v1054 = vmul.f32 %v1030, %v968
        %v1055 = vmul.f32 %v1031, %v969
        %v1056 = vmul.f32 %v1032, %v970
        %v1057 = vmul.f32 %v1033, %v971
        %v1058 = vmul.f32 %v1034, %v972
        %v1059 = vmul.f32 %v1035, %v973
        %v1060 = vadd.f32 %v1036, %v974
        %v1061 = vadd.f32 %v1037, %v975
        %v1062 = vadd.f32 %v1038, %v976
        %v1063 = vadd.f32 %v1039, %v977
        %v1064 = vadd.f32 %v1040, %v978
        %v1065 = vadd.f32 %v1041, %v979
        %v1066 = vadd.f32 %v1042, %v980
        %v1067 = vadd.f32 %v1043, %v981
        %v1068 = vadd.f32 %v1044, %v982
        %v1069 = vadd.f32 %v1045, %v983
        %v1070 = vadd.f32 %v1046, %v984
        %v1071 = vadd.f32 %v1047, %v985
        %v1072 = vadd.f32 %v1048, %v986
        %v1073 = vadd.f32 %v1049, %v987
        %v1074 = vadd.f32 %v1050, %v988
        %v1075 = vadd.f32 %v1051, %v989
        %v1076 = vadd.f32 %v1052, %v990
        %v1077 = vadd.f32 %v1053, %v991
        %v1078 = vadd.f32 %v1054, %v992
        %v1079 = vadd.f32 %v1055, %v993
        %v1080 = vadd.f32 %v1056, %v994
        %v1081 = vadd.f32 %v1057, %v995
        %v1082 = vadd.f32 %v1058, %v996
        %v1083 = vadd.f32 %v1059, %v997
        %v1084 = vmax.f32 %v1060, 0.0
        %v1085 = vmax.f32 %v1061, 0.0
        %v1086 = vmax.f32 %v1062, 0.0
        %v1087 = vmax.f32 %v1063, 0.0
        %v1088 = vmax.f32 %v1064, 0.0
        %v1089 = vmax.f32 %v1065, 0.0
        %v1090 = vmax.f32 %v1066, 0.0
        %v1091 = vmax.f32 %v1067, 0.0
        %v1092 = vmax.f32 %v1068, 0.0
        %v1093 = vmax.f32 %v1069, 0.0
        %v1094 = vmax.f32 %v1070, 0.0
        %v1095 = vmax.f32 %v1071, 0.0
        %v1096 = vmax.f32 %v1072, 0.0
        %v1097 = vmax.f32 %v1073, 0.0
        %v1098 = vmax.f32 %v1074, 0.0
        %v1099 = vmax.f32 %v1075, 0.0
        %v1100 = vmax.f32 %v1076, 0.0
        %v1101 = vmax.f32 %v1077, 0.0
        %v1102 = vmax.f32 %v1078, 0.0
        %v1103 = vmax.f32 %v1079, 0.0
        %v1104 = vmax.f32 %v1080, 0.0
        %v1105 = vmax.f32 %v1081, 0.0
        %v1106 = vmax.f32 %v1082, 0.0
        %v1107 = vmax.f32 %v1083, 0.0
        %v1108 = vld [vmem:[%s1 + $0x240] sm:$0xff]
        %v1109 = vld [vmem:[%s1 + $0x248] sm:$0xff]
        %v1110 = vld [vmem:[%s1 + $0x250] sm:$0xff]
        %v1111 = vld [vmem:[%s1 + $0x258] sm:$0xff]
        %v1112 = vld [vmem:[%s1 + $0x260] sm:$0xff]
        %v1113 = vld [vmem:[%s1 + $0x268] sm:$0xff]
        %v1114 = vld [vmem:[%s1 + $0x270] sm:$0xff]
        %v1115 = vld [vmem:[%s1 + $0x278] sm:$0xff]
        %v1116 = vld [vmem:[%s1 + $0x280] sm:$0xff]
        %v1117 = vld [vmem:[%s1 + $0x288] sm:$0xff]
        %v1118 = vld [vmem:[%s1 + $0x290] sm:$0xff]
        %v1119 = vld [vmem:[%s1 + $0x298] sm:$0xff]
        %v1120 = vld [vmem:[%s1 + $0x2a0] sm:$0xff]
        %v1121 = vld [vmem:[%s1 + $0x2a8] sm:$0xff]
        %v1122 = vld [vmem:[%s1 + $0x2b0] sm:$0xff]
        %v1123 = vld [vmem:[%s1 + $0x2b8] sm:$0xff]
        %v1124 = vld [vmem:[%s1 + $0x2c0] sm:$0xff]
        %v1125 = vld [vmem:[%s1 + $0x2c8] sm:$0xff]
        %v1126 = vld [vmem:[%s1 + $0x2d0] sm:$0xff]
        %v1127 = vld [vmem:[%s1 + $0x2d8] sm:$0xff]
        %v1128 = vld [vmem:[%s1 + $0x2e0] sm:$0xff]
        %v1129 = vld [vmem:[%s1 + $0x2e8] sm:$0xff]
        %v1130 = vld [vmem:[%s1 + $0x2f0] sm:$0xff]
        %v1131 = vld [vmem:[%s1 + $0x2f8] sm:$0xff]
        %v1132 = vld [vmem:[%s1 + $0x300] sm:$0xff]
        %v1133 = vld [vmem:[%s1 + $0x308] sm:$0xff]
        %v1134 = vld [vmem:[%s1 + $0x310] sm:$0xff]
        %v1135 = vld [vmem:[%s1 + $0x318] sm:$0xff]
        %v1136 = vld [vmem:[%s1 + $0x320] sm:$0xff]
        %v1137 = vld [vmem:[%s1 + $0x328] sm:$0xff]
        %v1138 = vld [vmem:[%s1 + $0x330] sm:$0xff]
        %v1139 = vld [vmem:[%s1 + $0x338] sm:$0xff]
        %v1140 = vld [vmem:[%s1 + $0x340] sm:$0xff]
        %v1141 = vld [vmem:[%s1 + $0x348] sm:$0xff]
        %v1142 = vld [vmem:[%s1 + $0x350] sm:$0xff]
        %v1143 = vld [vmem:[%s1 + $0x358] sm:$0xff]
        %v1144 = vld [vmem:[%s1 + $0x360] sm:$0xff]
        %v1145 = vld [vmem:[%s1 + $0x368] sm:$0xff]
        %v1146 = vld [vmem:[%s1 + $0x370] sm:$0xff]
        %v1147 = vld [vmem:[%s1 + $0x378] sm:$0xff]
        %v1148 = vld [vmem:[%s1 + $0x380] sm:$0xff]
        %v1149 = vld [vmem:[%s1 + $0x388] sm:$0xff]
        %v1150 = vld [vmem:[%s1 + $0x390] sm:$0xff]
        %v1151 = vld [vmem:[%s1 + $0x398] sm:$0xff]
        %v1152 = vld [vmem:[%s1 + $0x3a0] sm:$0xff]
        %v1153 = vld [vmem:[%s1 + $0x3a8] sm:$0xff]
        %v1154 = vld [vmem:[%s1 + $0x3b0] sm:$0xff]
        %v1155 = vld [vmem:[%s1 + $0x3b8] sm:$0xff]
        %v1156 = vld [vmem:[%s1 + $0x3c0] sm:$0xff]
        %v1157 = vld [vmem:[%s1 + $0x3c8] sm:$0xff]
        %v1158 = vld [vmem:[%s1 + $0x3d0] sm:$0xff]
        %v1159 = vld [vmem:[%s1 + $0x3d8] sm:$0xff]
        %v1160 = vld [vmem:[%s1 + $0x3e0] sm:$0xff]
        %v1161 = vld [vmem:[%s1 + $0x3e8] sm:$0xff]
        %v1162 = vld [vmem:[%s1 + $0x3f0] sm:$0xff]
        %v1163 = vld [vmem:[%s1 + $0x3f8] sm:$0xff]
        %v1164 = vld [vmem:[%s1 + $0x400] sm:$0xff]
        %v1165 = vld [vmem:[%s1 + $0x408] sm:$0xff]
        %v1166 = vld [vmem:[%s1 + $0x410] sm:$0xff]
        %v1167 = vld [vmem:[%s1 + $0x418] sm:$0xff]
        %v1168 = vld [vmem:[%s1 + $0x420] sm:$0xff]
        %v1169 = vld [vmem:[%s1 + $0x428] sm:$0xff]
        %v1170 = vld [vmem:[%s1 + $0x430] sm:$0xff]
        %v1171 = vld [vmem:[%s1 + $0x438] sm:$0xff]
        %v1172 = vpack.c.bf16 %v1085, %v1084
        %v1173 = vpack.c.bf16 %v1087, %v1086
        %v1174 = vpack.c.bf16 %v1089, %v1088
        %v1175 = vpack.c.bf16 %v1091, %v1090
        %v1176 = vpack.c.bf16 %v1093, %v1092
        %v1177 = vpack.c.bf16 %v1095, %v1094
        %v1178 = vpack.c.bf16 %v1097, %v1096
        %v1179 = vpack.c.bf16 %v1099, %v1098
        %v1180 = vpack.c.bf16 %v1101, %v1100
        %v1181 = vpack.c.bf16 %v1103, %v1102
        %v1182 = vpack.c.bf16 %v1105, %v1104
        %v1183 = vpack.c.bf16 %v1107, %v1106
        %v1248 = vunpack.c.l.b16 %v1108
        %v1249 = vunpack.c.h.b16 %v1108
        %v1250 = vunpack.c.l.b16 %v1109
        %v1251 = vunpack.c.h.b16 %v1109
        %v1252 = vunpack.c.l.b16 %v1110
        %v1253 = vunpack.c.h.b16 %v1110
        %v1254 = vunpack.c.l.b16 %v1111
        %v1255 = vunpack.c.h.b16 %v1111
        %v1256 = vunpack.c.l.b16 %v1112
        %v1257 = vunpack.c.h.b16 %v1112
        %v1258 = vunpack.c.l.b16 %v1113
        %v1259 = vunpack.c.h.b16 %v1113
        %v1260 = vunpack.c.l.b16 %v1114
        %v1261 = vunpack.c.h.b16 %v1114
        %v1262 = vunpack.c.l.b16 %v1115
        %v1263 = vunpack.c.h.b16 %v1115
        %v1264 = vunpack.c.l.b16 %v1116
        %v1265 = vunpack.c.h.b16 %v1116
        %v1266 = vunpack.c.l.b16 %v1117
        %v1267 = vunpack.c.h.b16 %v1117
        %v1268 = vunpack.c.l.b16 %v1118
        %v1269 = vunpack.c.h.b16 %v1118
        %v1270 = vunpack.c.l.b16 %v1119
        %v1271 = vunpack.c.h.b16 %v1119
        %v1272 = vunpack.c.l.b16 %v1120
        %v1273 = vunpack.c.h.b16 %v1120
        %v1274 = vunpack.c.l.b16 %v1121
        %v1275 = vunpack.c.h.b16 %v1121
        %v1276 = vunpack.c.l.b16 %v1122
        %v1277 = vunpack.c.h.b16 %v1122
        %v1278 = vunpack.c.l.b16 %v1123
        %v1279 = vunpack.c.h.b16 %v1123
        %v1280 = vunpack.c.l.b16 %v1124
        %v1281 = vunpack.c.h.b16 %v1124
        %v1282 = vunpack.c.l.b16 %v1125
        %v1283 = vunpack.c.h.b16 %v1125
        %v1284 = vunpack.c.l.b16 %v1126
        %v1285 = vunpack.c.h.b16 %v1126
        %v1286 = vunpack.c.l.b16 %v1127
        %v1287 = vunpack.c.h.b16 %v1127
        %v1288 = vunpack.c.l.b16 %v1128
        %v1289 = vunpack.c.h.b16 %v1128
        %v1290 = vunpack.c.l.b16 %v1129
        %v1291 = vunpack.c.h.b16 %v1129
        %v1292 = vunpack.c.l.b16 %v1130
        %v1293 = vunpack.c.h.b16 %v1130
        %v1294 = vunpack.c.l.b16 %v1131
        %v1295 = vunpack.c.h.b16 %v1131
        %v1296 = vunpack.c.l.b16 %v1132
        %v1297 = vunpack.c.h.b16 %v1132
        %v1298 = vunpack.c.l.b16 %v1133
        %v1299 = vunpack.c.h.b16 %v1133
        %v1300 = vunpack.c.l.b16 %v1134
        %v1301 = vunpack.c.h.b16 %v1134
        %v1302 = vunpack.c.l.b16 %v1135
        %v1303 = vunpack.c.h.b16 %v1135
        %v1304 = vunpack.c.l.b16 %v1136
        %v1305 = vunpack.c.h.b16 %v1136
        %v1306 = vunpack.c.l.b16 %v1137
        %v1307 = vunpack.c.h.b16 %v1137
        %v1308 = vunpack.c.l.b16 %v1138
        %v1309 = vunpack.c.h.b16 %v1138
        %v1310 = vunpack.c.l.b16 %v1139
        %v1311 = vunpack.c.h.b16 %v1139
        %v1312 = vunpack.c.l.b16 %v1140
        %v1313 = vunpack.c.h.b16 %v1140
        %v1314 = vunpack.c.l.b16 %v1141
        %v1315 = vunpack.c.h.b16 %v1141
        %v1316 = vunpack.c.l.b16 %v1142
        %v1317 = vunpack.c.h.b16 %v1142
        %v1318 = vunpack.c.l.b16 %v1143
        %v1319 = vunpack.c.h.b16 %v1143
        %v1320 = vunpack.c.l.b16 %v1144
        %v1321 = vunpack.c.h.b16 %v1144
        %v1322 = vunpack.c.l.b16 %v1145
        %v1323 = vunpack.c.h.b16 %v1145
        %v1324 = vunpack.c.l.b16 %v1146
        %v1325 = vunpack.c.h.b16 %v1146
        %v1326 = vunpack.c.l.b16 %v1147
        %v1327 = vunpack.c.h.b16 %v1147
        %v1328 = vunpack.c.l.b16 %v1148
        %v1329 = vunpack.c.h.b16 %v1148
        %v1330 = vunpack.c.l.b16 %v1149
        %v1331 = vunpack.c.h.b16 %v1149
        %v1332 = vunpack.c.l.b16 %v1150
        %v1333 = vunpack.c.h.b16 %v1150
        %v1334 = vunpack.c.l.b16 %v1151
        %v1335 = vunpack.c.h.b16 %v1151
        %v1336 = vunpack.c.l.b16 %v1152
        %v1337 = vunpack.c.h.b16 %v1152
        %v1338 = vunpack.c.l.b16 %v1153
        %v1339 = vunpack.c.h.b16 %v1153
        %v1340 = vunpack.c.l.b16 %v1154
        %v1341 = vunpack.c.h.b16 %v1154
        %v1342 = vunpack.c.l.b16 %v1155
        %v1343 = vunpack.c.h.b16 %v1155
        %v1344 = vunpack.c.l.b16 %v1156
        %v1345 = vunpack.c.h.b16 %v1156
        %v1346 = vunpack.c.l.b16 %v1157
        %v1347 = vunpack.c.h.b16 %v1157
        %v1348 = vunpack.c.l.b16 %v1158
        %v1349 = vunpack.c.h.b16 %v1158
        %v1350 = vunpack.c.l.b16 %v1159
        %v1351 = vunpack.c.h.b16 %v1159
        %v1352 = vunpack.c.l.b16 %v1160
        %v1353 = vunpack.c.h.b16 %v1160
        %v1354 = vunpack.c.l.b16 %v1161
        %v1355 = vunpack.c.h.b16 %v1161
        %v1356 = vunpack.c.l.b16 %v1162
        %v1357 = vunpack.c.h.b16 %v1162
        %v1358 = vunpack.c.l.b16 %v1163
        %v1359 = vunpack.c.h.b16 %v1163
        %v1360 = vunpack.c.l.b16 %v1164
        %v1361 = vunpack.c.h.b16 %v1164
        %v1362 = vunpack.c.l.b16 %v1165
        %v1363 = vunpack.c.h.b16 %v1165
        %v1364 = vunpack.c.l.b16 %v1166
        %v1365 = vunpack.c.h.b16 %v1166
        %v1366 = vunpack.c.l.b16 %v1167
        %v1367 = vunpack.c.h.b16 %v1167
        %v1368 = vunpack.c.l.b16 %v1168
        %v1369 = vunpack.c.h.b16 %v1168
        %v1370 = vunpack.c.l.b16 %v1169
        %v1371 = vunpack.c.h.b16 %v1169
        %v1372 = vunpack.c.l.b16 %v1170
        %v1373 = vunpack.c.h.b16 %v1170
        %v1374 = vunpack.c.l.b16 %v1171
        %v1375 = vunpack.c.h.b16 %v1171
        %v1376 = vpack.c.b16 %v1250, %v1248
        %v1377 = vpack.c.b16 %v1251, %v1249
        %v1378 = vpack.c.b16 %v1254, %v1252
        %v1379 = vpack.c.b16 %v1255, %v1253
        %v1380 = vpack.c.b16 %v1258, %v1256
        %v1381 = vpack.c.b16 %v1259, %v1257
        %v1382 = vpack.c.b16 %v1262, %v1260
        %v1383 = vpack.c.b16 %v1263, %v1261
        %v1384 = vpack.c.b16 %v1266, %v1264
        %v1385 = vpack.c.b16 %v1267, %v1265
        %v1386 = vpack.c.b16 %v1270, %v1268
        %v1387 = vpack.c.b16 %v1271, %v1269
        %v1388 = vpack.c.b16 %v1274, %v1272
        %v1389 = vpack.c.b16 %v1275, %v1273
        %v1390 = vpack.c.b16 %v1278, %v1276
        %v1391 = vpack.c.b16 %v1279, %v1277
        %v1392 = vpack.c.b16 %v1282, %v1280
        %v1393 = vpack.c.b16 %v1283, %v1281
        %v1394 = vpack.c.b16 %v1286, %v1284
        %v1395 = vpack.c.b16 %v1287, %v1285
        %v1396 = vpack.c.b16 %v1290, %v1288
        %v1397 = vpack.c.b16 %v1291, %v1289
        %v1398 = vpack.c.b16 %v1294, %v1292
        %v1399 = vpack.c.b16 %v1295, %v1293
        %v1400 = vpack.c.b16 %v1298, %v1296
        %v1401 = vpack.c.b16 %v1299, %v1297
        %v1402 = vpack.c.b16 %v1302, %v1300
        %v1403 = vpack.c.b16 %v1303, %v1301
        %v1404 = vpack.c.b16 %v1306, %v1304
        %v1405 = vpack.c.b16 %v1307, %v1305
        %v1406 = vpack.c.b16 %v1310, %v1308
        %v1407 = vpack.c.b16 %v1311, %v1309
        %v1408 = vpack.c.b16 %v1314, %v1312
        %v1409 = vpack.c.b16 %v1315, %v1313
        %v1410 = vpack.c.b16 %v1318, %v1316
        %v1411 = vpack.c.b16 %v1319, %v1317
        %v1412 = vpack.c.b16 %v1322, %v1320
        %v1413 = vpack.c.b16 %v1323, %v1321
        %v1414 = vpack.c.b16 %v1326, %v1324
        %v1415 = vpack.c.b16 %v1327, %v1325
        %v1416 = vpack.c.b16 %v1330, %v1328
        %v1417 = vpack.c.b16 %v1331, %v1329
        %v1418 = vpack.c.b16 %v1334, %v1332
        %v1419 = vpack.c.b16 %v1335, %v1333
        %v1420 = vpack.c.b16 %v1338, %v1336
        %v1421 = vpack.c.b16 %v1339, %v1337
        %v1422 = vpack.c.b16 %v1342, %v1340
        %v1423 = vpack.c.b16 %v1343, %v1341
        %v1424 = vpack.c.b16 %v1346, %v1344
        %v1425 = vpack.c.b16 %v1347, %v1345
        %v1426 = vpack.c.b16 %v1350, %v1348
        %v1427 = vpack.c.b16 %v1351, %v1349
        %v1428 = vpack.c.b16 %v1354, %v1352
        %v1429 = vpack.c.b16 %v1355, %v1353
        %v1430 = vpack.c.b16 %v1358, %v1356
        %v1431 = vpack.c.b16 %v1359, %v1357
        %v1432 = vpack.c.b16 %v1362, %v1360
        %v1433 = vpack.c.b16 %v1363, %v1361
        %v1434 = vpack.c.b16 %v1366, %v1364
        %v1435 = vpack.c.b16 %v1367, %v1365
        %v1436 = vpack.c.b16 %v1370, %v1368
        %v1437 = vpack.c.b16 %v1371, %v1369
        %v1438 = vpack.c.b16 %v1374, %v1372
        %v1439 = vpack.c.b16 %v1375, %v1373
        %vm1472 = vcmask 523264
        %v1474 = vsel %vm1472, %v1377, 0
        %v1477 = vsel %vm1472, %v1379, 0
        %v1480 = vsel %vm1472, %v1381, 0
        %v1483 = vsel %vm1472, %v1383, 0
        %v1486 = vsel %vm1472, %v1385, 0
        %v1489 = vsel %vm1472, %v1387, 0
        %v1492 = vsel %vm1472, %v1389, 0
        %v1495 = vsel %vm1472, %v1391, 0
        %v1498 = vsel %vm1472, %v1393, 0
        %v1501 = vsel %vm1472, %v1395, 0
        %v1504 = vsel %vm1472, %v1397, 0
        %v1507 = vsel %vm1472, %v1399, 0
        %v1510 = vsel %vm1472, %v1401, 0
        %v1513 = vsel %vm1472, %v1403, 0
        %v1516 = vsel %vm1472, %v1405, 0
        %v1519 = vsel %vm1472, %v1407, 0
        %v1522 = vsel %vm1472, %v1409, 0
        %v1525 = vsel %vm1472, %v1411, 0
        %v1528 = vsel %vm1472, %v1413, 0
        %v1531 = vsel %vm1472, %v1415, 0
        %v1534 = vsel %vm1472, %v1417, 0
        %v1537 = vsel %vm1472, %v1419, 0
        %v1540 = vsel %vm1472, %v1421, 0
        %v1543 = vsel %vm1472, %v1423, 0
        %v1546 = vsel %vm1472, %v1425, 0
        %v1549 = vsel %vm1472, %v1427, 0
        %v1552 = vsel %vm1472, %v1429, 0
        %v1555 = vsel %vm1472, %v1431, 0
        %v1558 = vsel %vm1472, %v1433, 0
        %v1561 = vsel %vm1472, %v1435, 0
        %v1564 = vsel %vm1472, %v1437, 0
        %v1567 = vsel %vm1472, %v1439, 0
        %1569 = vmatpush.bf16.msra.mxu0 %v1179
        %1570 = vmatpush.bf16.msra.mxu0 %v1178
        %1571 = vmatpush.bf16.msra.mxu0 %v1177
        %1572 = vmatpush.bf16.msra.mxu0 %v1176
        %1573 = vmatpush.bf16.msra.mxu0 %v1175
        %1574 = vmatpush.bf16.msra.mxu0 %v1174
        %1575 = vmatpush.bf16.msra.mxu0 %v1173
        %1576 = vmatpush.bf16.msra.mxu0 %v1172
        %1577 = vmatmul.bf16.gmra.mxu0 %v1376
        %v1578 = vpop.f32.mrf.mxu0
        %v1579 = vadd.f32 0.0, %v1578
        %v1580 = vpop.f32.mrf.mxu0
        %v1581 = vadd.f32 0.0, %v1580
        %1582 = vmatmul.bf16.gmra.mxu0 %v1378
        %v1583 = vpop.f32.mrf.mxu0
        %v1584 = vadd.f32 0.0, %v1583
        %v1585 = vpop.f32.mrf.mxu0
        %v1586 = vadd.f32 0.0, %v1585
        %1587 = vmatmul.bf16.gmra.mxu0 %v1380
        %v1588 = vpop.f32.mrf.mxu0
        %v1589 = vadd.f32 0.0, %v1588
        %v1590 = vpop.f32.mrf.mxu0
        %v1591 = vadd.f32 0.0, %v1590
        %1592 = vmatmul.bf16.gmra.mxu0 %v1382
        %v1593 = vpop.f32.mrf.mxu0
        %v1594 = vadd.f32 0.0, %v1593
        %v1595 = vpop.f32.mrf.mxu0
        %v1596 = vadd.f32 0.0, %v1595
        %1597 = vmatmul.bf16.gmra.mxu0 %v1384
        %v1598 = vpop.f32.mrf.mxu0
        %v1599 = vadd.f32 0.0, %v1598
        %v1600 = vpop.f32.mrf.mxu0
        %v1601 = vadd.f32 0.0, %v1600
        %1602 = vmatmul.bf16.gmra.mxu0 %v1386
        %v1603 = vpop.f32.mrf.mxu0
        %v1604 = vadd.f32 0.0, %v1603
        %v1605 = vpop.f32.mrf.mxu0
        %v1606 = vadd.f32 0.0, %v1605
        %1607 = vmatmul.bf16.gmra.mxu0 %v1388
        %v1608 = vpop.f32.mrf.mxu0
        %v1609 = vadd.f32 0.0, %v1608
        %v1610 = vpop.f32.mrf.mxu0
        %v1611 = vadd.f32 0.0, %v1610
        %1612 = vmatmul.bf16.gmra.mxu0 %v1390
        %v1613 = vpop.f32.mrf.mxu0
        %v1614 = vadd.f32 0.0, %v1613
        %v1615 = vpop.f32.mrf.mxu0
        %v1616 = vadd.f32 0.0, %v1615
        %1617 = vmatmul.bf16.gmra.mxu0 %v1392
        %v1618 = vpop.f32.mrf.mxu0
        %v1619 = vadd.f32 0.0, %v1618
        %v1620 = vpop.f32.mrf.mxu0
        %v1621 = vadd.f32 0.0, %v1620
        %1622 = vmatmul.bf16.gmra.mxu0 %v1394
        %v1623 = vpop.f32.mrf.mxu0
        %v1624 = vadd.f32 0.0, %v1623
        %v1625 = vpop.f32.mrf.mxu0
        %v1626 = vadd.f32 0.0, %v1625
        %1627 = vmatmul.bf16.gmra.mxu0 %v1396
        %v1628 = vpop.f32.mrf.mxu0
        %v1629 = vadd.f32 0.0, %v1628
        %v1630 = vpop.f32.mrf.mxu0
        %v1631 = vadd.f32 0.0, %v1630
        %1632 = vmatmul.bf16.gmra.mxu0 %v1398
        %v1633 = vpop.f32.mrf.mxu0
        %v1634 = vadd.f32 0.0, %v1633
        %v1635 = vpop.f32.mrf.mxu0
        %v1636 = vadd.f32 0.0, %v1635
        %1637 = vmatmul.bf16.gmra.mxu0 %v1400
        %v1638 = vpop.f32.mrf.mxu0
        %v1639 = vadd.f32 0.0, %v1638
        %v1640 = vpop.f32.mrf.mxu0
        %v1641 = vadd.f32 0.0, %v1640
        %1642 = vmatmul.bf16.gmra.mxu0 %v1402
        %v1643 = vpop.f32.mrf.mxu0
        %v1644 = vadd.f32 0.0, %v1643
        %v1645 = vpop.f32.mrf.mxu0
        %v1646 = vadd.f32 0.0, %v1645
        %1647 = vmatmul.bf16.gmra.mxu0 %v1404
        %v1648 = vpop.f32.mrf.mxu0
        %v1649 = vadd.f32 0.0, %v1648
        %v1650 = vpop.f32.mrf.mxu0
        %v1651 = vadd.f32 0.0, %v1650
        %1652 = vmatmul.bf16.gmra.mxu0 %v1406
        %v1653 = vpop.f32.mrf.mxu0
        %v1654 = vadd.f32 0.0, %v1653
        %v1655 = vpop.f32.mrf.mxu0
        %v1656 = vadd.f32 0.0, %v1655
        %1657 = vmatmul.bf16.gmra.mxu0 %v1408
        %v1658 = vpop.f32.mrf.mxu0
        %v1659 = vadd.f32 0.0, %v1658
        %v1660 = vpop.f32.mrf.mxu0
        %v1661 = vadd.f32 0.0, %v1660
        %1662 = vmatmul.bf16.gmra.mxu0 %v1410
        %v1663 = vpop.f32.mrf.mxu0
        %v1664 = vadd.f32 0.0, %v1663
        %v1665 = vpop.f32.mrf.mxu0
        %v1666 = vadd.f32 0.0, %v1665
        %1667 = vmatmul.bf16.gmra.mxu0 %v1412
        %v1668 = vpop.f32.mrf.mxu0
        %v1669 = vadd.f32 0.0, %v1668
        %v1670 = vpop.f32.mrf.mxu0
        %v1671 = vadd.f32 0.0, %v1670
        %1672 = vmatmul.bf16.gmra.mxu0 %v1414
        %v1673 = vpop.f32.mrf.mxu0
        %v1674 = vadd.f32 0.0, %v1673
        %v1675 = vpop.f32.mrf.mxu0
        %v1676 = vadd.f32 0.0, %v1675
        %1677 = vmatmul.bf16.gmra.mxu0 %v1416
        %v1678 = vpop.f32.mrf.mxu0
        %v1679 = vadd.f32 0.0, %v1678
        %v1680 = vpop.f32.mrf.mxu0
        %v1681 = vadd.f32 0.0, %v1680
        %1682 = vmatmul.bf16.gmra.mxu0 %v1418
        %v1683 = vpop.f32.mrf.mxu0
        %v1684 = vadd.f32 0.0, %v1683
        %v1685 = vpop.f32.mrf.mxu0
        %v1686 = vadd.f32 0.0, %v1685
        %1687 = vmatmul.bf16.gmra.mxu0 %v1420
        %v1688 = vpop.f32.mrf.mxu0
        %v1689 = vadd.f32 0.0, %v1688
        %v1690 = vpop.f32.mrf.mxu0
        %v1691 = vadd.f32 0.0, %v1690
        %1692 = vmatmul.bf16.gmra.mxu0 %v1422
        %v1693 = vpop.f32.mrf.mxu0
        %v1694 = vadd.f32 0.0, %v1693
        %v1695 = vpop.f32.mrf.mxu0
        %v1696 = vadd.f32 0.0, %v1695
        %1697 = vmatmul.bf16.gmra.mxu0 %v1424
        %v1698 = vpop.f32.mrf.mxu0
        %v1699 = vadd.f32 0.0, %v1698
        %v1700 = vpop.f32.mrf.mxu0
        %v1701 = vadd.f32 0.0, %v1700
        %1702 = vmatmul.bf16.gmra.mxu0 %v1426
        %v1703 = vpop.f32.mrf.mxu0
        %v1704 = vadd.f32 0.0, %v1703
        %v1705 = vpop.f32.mrf.mxu0
        %v1706 = vadd.f32 0.0, %v1705
        %1707 = vmatmul.bf16.gmra.mxu0 %v1428
        %v1708 = vpop.f32.mrf.mxu0
        %v1709 = vadd.f32 0.0, %v1708
        %v1710 = vpop.f32.mrf.mxu0
        %v1711 = vadd.f32 0.0, %v1710
        %1712 = vmatmul.bf16.gmra.mxu0 %v1430
        %v1713 = vpop.f32.mrf.mxu0
        %v1714 = vadd.f32 0.0, %v1713
        %v1715 = vpop.f32.mrf.mxu0
        %v1716 = vadd.f32 0.0, %v1715
        %1717 = vmatmul.bf16.gmra.mxu0 %v1432
        %v1718 = vpop.f32.mrf.mxu0
        %v1719 = vadd.f32 0.0, %v1718
        %v1720 = vpop.f32.mrf.mxu0
        %v1721 = vadd.f32 0.0, %v1720
        %1722 = vmatmul.bf16.gmra.mxu0 %v1434
        %v1723 = vpop.f32.mrf.mxu0
        %v1724 = vadd.f32 0.0, %v1723
        %v1725 = vpop.f32.mrf.mxu0
        %v1726 = vadd.f32 0.0, %v1725
        %1727 = vmatmul.bf16.gmra.mxu0 %v1436
        %v1728 = vpop.f32.mrf.mxu0
        %v1729 = vadd.f32 0.0, %v1728
        %v1730 = vpop.f32.mrf.mxu0
        %v1731 = vadd.f32 0.0, %v1730
        %1732 = vmatmul.bf16.gmra.mxu0 %v1438
        %v1733 = vpop.f32.mrf.mxu0
        %v1734 = vadd.f32 0.0, %v1733
        %v1735 = vpop.f32.mrf.mxu0
        %v1736 = vadd.f32 0.0, %v1735
        %1737 = vdwg.mxu0
        %1738 = vmatpush.bf16.msra.mxu0 0
        %1739 = vmatpush.bf16.msra.mxu0 0
        %1740 = vmatpush.bf16.msra.mxu0 0
        %1741 = vmatpush.bf16.msra.mxu0 0
        %1742 = vmatpush.bf16.msra.mxu0 %v1183
        %1743 = vmatpush.bf16.msra.mxu0 %v1182
        %1744 = vmatpush.bf16.msra.mxu0 %v1181
        %1745 = vmatpush.bf16.msra.mxu0 %v1180
        %1746 = vmatmul.bf16.gmra.mxu0 %v1474
        %v1747 = vpop.f32.mrf.mxu0
        %v1748 = vadd.f32 %v1579, %v1747
        %v1749 = vpop.f32.mrf.mxu0
        %v1750 = vadd.f32 %v1581, %v1749
        %1751 = vmatmul.bf16.gmra.mxu0 %v1477
        %v1752 = vpop.f32.mrf.mxu0
        %v1753 = vadd.f32 %v1584, %v1752
        %v1754 = vpop.f32.mrf.mxu0
        %v1755 = vadd.f32 %v1586, %v1754
        %1756 = vmatmul.bf16.gmra.mxu0 %v1480
        %v1757 = vpop.f32.mrf.mxu0
        %v1758 = vadd.f32 %v1589, %v1757
        %v1759 = vpop.f32.mrf.mxu0
        %v1760 = vadd.f32 %v1591, %v1759
        %1761 = vmatmul.bf16.gmra.mxu0 %v1483
        %v1762 = vpop.f32.mrf.mxu0
        %v1763 = vadd.f32 %v1594, %v1762
        %v1764 = vpop.f32.mrf.mxu0
        %v1765 = vadd.f32 %v1596, %v1764
        %1766 = vmatmul.bf16.gmra.mxu0 %v1486
        %v1767 = vpop.f32.mrf.mxu0
        %v1768 = vadd.f32 %v1599, %v1767
        %v1769 = vpop.f32.mrf.mxu0
        %v1770 = vadd.f32 %v1601, %v1769
        %1771 = vmatmul.bf16.gmra.mxu0 %v1489
        %v1772 = vpop.f32.mrf.mxu0
        %v1773 = vadd.f32 %v1604, %v1772
        %v1774 = vpop.f32.mrf.mxu0
        %v1775 = vadd.f32 %v1606, %v1774
        %1776 = vmatmul.bf16.gmra.mxu0 %v1492
        %v1777 = vpop.f32.mrf.mxu0
        %v1778 = vadd.f32 %v1609, %v1777
        %v1779 = vpop.f32.mrf.mxu0
        %v1780 = vadd.f32 %v1611, %v1779
        %1781 = vmatmul.bf16.gmra.mxu0 %v1495
        %v1782 = vpop.f32.mrf.mxu0
        %v1783 = vadd.f32 %v1614, %v1782
        %v1784 = vpop.f32.mrf.mxu0
        %v1785 = vadd.f32 %v1616, %v1784
        %1786 = vmatmul.bf16.gmra.mxu0 %v1498
        %v1787 = vpop.f32.mrf.mxu0
        %v1788 = vadd.f32 %v1619, %v1787
        %v1789 = vpop.f32.mrf.mxu0
        %v1790 = vadd.f32 %v1621, %v1789
        %1791 = vmatmul.bf16.gmra.mxu0 %v1501
        %v1792 = vpop.f32.mrf.mxu0
        %v1793 = vadd.f32 %v1624, %v1792
        %v1794 = vpop.f32.mrf.mxu0
        %v1795 = vadd.f32 %v1626, %v1794
        %1796 = vmatmul.bf16.gmra.mxu0 %v1504
        %v1797 = vpop.f32.mrf.mxu0
        %v1798 = vadd.f32 %v1629, %v1797
        %v1799 = vpop.f32.mrf.mxu0
        %v1800 = vadd.f32 %v1631, %v1799
        %1801 = vmatmul.bf16.gmra.mxu0 %v1507
        %v1802 = vpop.f32.mrf.mxu0
        %v1803 = vadd.f32 %v1634, %v1802
        %v1804 = vpop.f32.mrf.mxu0
        %v1805 = vadd.f32 %v1636, %v1804
        %1806 = vmatmul.bf16.gmra.mxu0 %v1510
        %v1807 = vpop.f32.mrf.mxu0
        %v1808 = vadd.f32 %v1639, %v1807
        %v1809 = vpop.f32.mrf.mxu0
        %v1810 = vadd.f32 %v1641, %v1809
        %1811 = vmatmul.bf16.gmra.mxu0 %v1513
        %v1812 = vpop.f32.mrf.mxu0
        %v1813 = vadd.f32 %v1644, %v1812
        %v1814 = vpop.f32.mrf.mxu0
        %v1815 = vadd.f32 %v1646, %v1814
        %1816 = vmatmul.bf16.gmra.mxu0 %v1516
        %v1817 = vpop.f32.mrf.mxu0
        %v1818 = vadd.f32 %v1649, %v1817
        %v1819 = vpop.f32.mrf.mxu0
        %v1820 = vadd.f32 %v1651, %v1819
        %1821 = vmatmul.bf16.gmra.mxu0 %v1519
        %v1822 = vpop.f32.mrf.mxu0
        %v1823 = vadd.f32 %v1654, %v1822
        %v1824 = vpop.f32.mrf.mxu0
        %v1825 = vadd.f32 %v1656, %v1824
        %1826 = vmatmul.bf16.gmra.mxu0 %v1522
        %v1827 = vpop.f32.mrf.mxu0
        %v1828 = vadd.f32 %v1659, %v1827
        %v1829 = vpop.f32.mrf.mxu0
        %v1830 = vadd.f32 %v1661, %v1829
        %1831 = vmatmul.bf16.gmra.mxu0 %v1525
        %v1832 = vpop.f32.mrf.mxu0
        %v1833 = vadd.f32 %v1664, %v1832
        %v1834 = vpop.f32.mrf.mxu0
        %v1835 = vadd.f32 %v1666, %v1834
        %1836 = vmatmul.bf16.gmra.mxu0 %v1528
        %v1837 = vpop.f32.mrf.mxu0
        %v1838 = vadd.f32 %v1669, %v1837
        %v1839 = vpop.f32.mrf.mxu0
        %v1840 = vadd.f32 %v1671, %v1839
        %1841 = vmatmul.bf16.gmra.mxu0 %v1531
        %v1842 = vpop.f32.mrf.mxu0
        %v1843 = vadd.f32 %v1674, %v1842
        %v1844 = vpop.f32.mrf.mxu0
        %v1845 = vadd.f32 %v1676, %v1844
        %1846 = vmatmul.bf16.gmra.mxu0 %v1534
        %v1847 = vpop.f32.mrf.mxu0
        %v1848 = vadd.f32 %v1679, %v1847
        %v1849 = vpop.f32.mrf.mxu0
        %v1850 = vadd.f32 %v1681, %v1849
        %1851 = vmatmul.bf16.gmra.mxu0 %v1537
        %v1852 = vpop.f32.mrf.mxu0
        %v1853 = vadd.f32 %v1684, %v1852
        %v1854 = vpop.f32.mrf.mxu0
        %v1855 = vadd.f32 %v1686, %v1854
        %1856 = vmatmul.bf16.gmra.mxu0 %v1540
        %v1857 = vpop.f32.mrf.mxu0
        %v1858 = vadd.f32 %v1689, %v1857
        %v1859 = vpop.f32.mrf.mxu0
        %v1860 = vadd.f32 %v1691, %v1859
        %1861 = vmatmul.bf16.gmra.mxu0 %v1543
        %v1862 = vpop.f32.mrf.mxu0
        %v1863 = vadd.f32 %v1694, %v1862
        %v1864 = vpop.f32.mrf.mxu0
        %v1865 = vadd.f32 %v1696, %v1864
        %1866 = vmatmul.bf16.gmra.mxu0 %v1546
        %v1867 = vpop.f32.mrf.mxu0
        %v1868 = vadd.f32 %v1699, %v1867
        %v1869 = vpop.f32.mrf.mxu0
        %v1870 = vadd.f32 %v1701, %v1869
        %1871 = vmatmul.bf16.gmra.mxu0 %v1549
        %v1872 = vpop.f32.mrf.mxu0
        %v1873 = vadd.f32 %v1704, %v1872
        %v1874 = vpop.f32.mrf.mxu0
        %v1875 = vadd.f32 %v1706, %v1874
        %1876 = vmatmul.bf16.gmra.mxu0 %v1552
        %v1877 = vpop.f32.mrf.mxu0
        %v1878 = vadd.f32 %v1709, %v1877
        %v1879 = vpop.f32.mrf.mxu0
        %v1880 = vadd.f32 %v1711, %v1879
        %1881 = vmatmul.bf16.gmra.mxu0 %v1555
        %v1882 = vpop.f32.mrf.mxu0
        %v1883 = vadd.f32 %v1714, %v1882
        %v1884 = vpop.f32.mrf.mxu0
        %v1885 = vadd.f32 %v1716, %v1884
        %1886 = vmatmul.bf16.gmra.mxu0 %v1558
        %v1887 = vpop.f32.mrf.mxu0
        %v1888 = vadd.f32 %v1719, %v1887
        %v1889 = vpop.f32.mrf.mxu0
        %v1890 = vadd.f32 %v1721, %v1889
        %1891 = vmatmul.bf16.gmra.mxu0 %v1561
        %v1892 = vpop.f32.mrf.mxu0
        %v1893 = vadd.f32 %v1724, %v1892
        %v1894 = vpop.f32.mrf.mxu0
        %v1895 = vadd.f32 %v1726, %v1894
        %1896 = vmatmul.bf16.gmra.mxu0 %v1564
        %v1897 = vpop.f32.mrf.mxu0
        %v1898 = vadd.f32 %v1729, %v1897
        %v1899 = vpop.f32.mrf.mxu0
        %v1900 = vadd.f32 %v1731, %v1899
        %1901 = vmatmul.bf16.gmra.mxu0 %v1567
        %v1902 = vpop.f32.mrf.mxu0
        %v1903 = vadd.f32 %v1734, %v1902
        %v1904 = vpop.f32.mrf.mxu0
        %v1905 = vadd.f32 %v1736, %v1904
        %1906 = vdwg.mxu0
        %v1907 = vld [vmem:[%s2 + $0x330] sm:$0x7]
        %v1908 = vld [vmem:[%s2 + $0x340] sm:$0x7]
        %v1910 = vsel %vm786, %v1788, 0
        %v1913 = vsel %vm786, %v1790, 0
        %v1916 = vsel %vm786, %v1793, 0
        %v1919 = vsel %vm786, %v1795, 0
        %v1922 = vsel %vm786, %v1798, 0
        %v1925 = vsel %vm786, %v1800, 0
        %v1928 = vsel %vm786, %v1803, 0
        %v1931 = vsel %vm786, %v1805, 0
        %v1934 = vsel %vm786, %v1808, 0
        %v1937 = vsel %vm786, %v1810, 0
        %v1940 = vsel %vm786, %v1813, 0
        %v1943 = vsel %vm786, %v1815, 0
        %v1946 = vsel %vm786, %v1818, 0
        %v1949 = vsel %vm786, %v1820, 0
        %v1952 = vsel %vm786, %v1823, 0
        %v1955 = vsel %vm786, %v1825, 0
        %vm1957 = vcmask 1042432
        %v1959 = vsel %vm1957, %v1908, 0
        %1961 = vmatpush.msra.mxu0 0.0
        %1962 = vmatpush.msra.mxu0 0.0
        %1963 = vmatpush.msra.mxu0 0.0
        %1964 = vmatpush.msra.mxu0 0.0
        %1965 = vmatpush.msra.mxu0 0.0
        %1966 = vmatpush.msra.mxu0 0.0
        %1967 = vmatpush.msra.mxu0 0.0
        %1968 = vmatpush.msra.mxu0 0.0
        %1969 = vmatpush.msra.mxu0 0.0
        %1970 = vmatpush.msra.mxu0 0.0
        %1971 = vmatpush.msra.mxu0 0.0
        %1972 = vmatpush.msra.mxu0 0.0
        %1973 = vmatpush.msra.mxu0 0.0
        %1974 = vmatpush.msra.mxu0 0.0
        %1975 = vmatpush.msra.mxu0 0.0
        %1976 = vmatpush.msra.mxu0 %v1959
        %1977 = vmatmul.f32.gmra.mxu0 %v1910
        %v1978 = vpop.f32.mrf.mxu0
        %v1979 = vadd.f32 0.0, %v1978
        %1980 = vmatmul.f32.gmra.mxu0 %v1913
        %v1981 = vpop.f32.mrf.mxu0
        %v1982 = vadd.f32 0.0, %v1981
        %1983 = vmatmul.f32.gmra.mxu0 %v1916
        %v1984 = vpop.f32.mrf.mxu0
        %v1985 = vadd.f32 0.0, %v1984
        %1986 = vmatmul.f32.gmra.mxu0 %v1919
        %v1987 = vpop.f32.mrf.mxu0
        %v1988 = vadd.f32 0.0, %v1987
        %1989 = vmatmul.f32.gmra.mxu0 %v1922
        %v1990 = vpop.f32.mrf.mxu0
        %v1991 = vadd.f32 0.0, %v1990
        %1992 = vmatmul.f32.gmra.mxu0 %v1925
        %v1993 = vpop.f32.mrf.mxu0
        %v1994 = vadd.f32 0.0, %v1993
        %1995 = vmatmul.f32.gmra.mxu0 %v1928
        %v1996 = vpop.f32.mrf.mxu0
        %v1997 = vadd.f32 0.0, %v1996
        %1998 = vmatmul.f32.gmra.mxu0 %v1931
        %v1999 = vpop.f32.mrf.mxu0
        %v2000 = vadd.f32 0.0, %v1999
        %2001 = vmatmul.f32.gmra.mxu0 %v1934
        %v2002 = vpop.f32.mrf.mxu0
        %v2003 = vadd.f32 0.0, %v2002
        %2004 = vmatmul.f32.gmra.mxu0 %v1937
        %v2005 = vpop.f32.mrf.mxu0
        %v2006 = vadd.f32 0.0, %v2005
        %2007 = vmatmul.f32.gmra.mxu0 %v1940
        %v2008 = vpop.f32.mrf.mxu0
        %v2009 = vadd.f32 0.0, %v2008
        %2010 = vmatmul.f32.gmra.mxu0 %v1943
        %v2011 = vpop.f32.mrf.mxu0
        %v2012 = vadd.f32 0.0, %v2011
        %2013 = vmatmul.f32.gmra.mxu0 %v1946
        %v2014 = vpop.f32.mrf.mxu0
        %v2015 = vadd.f32 0.0, %v2014
        %2016 = vmatmul.f32.gmra.mxu0 %v1949
        %v2017 = vpop.f32.mrf.mxu0
        %v2018 = vadd.f32 0.0, %v2017
        %2019 = vmatmul.f32.gmra.mxu0 %v1952
        %v2020 = vpop.f32.mrf.mxu0
        %v2021 = vadd.f32 0.0, %v2020
        %2022 = vmatmul.f32.gmra.mxu0 %v1955
        %v2023 = vpop.f32.mrf.mxu0
        %v2024 = vadd.f32 0.0, %v2023
        %2025 = vdwg.mxu0
        %v2027 = vsel %vm786, %v1748, 0
        %v2030 = vsel %vm786, %v1750, 0
        %v2033 = vsel %vm786, %v1753, 0
        %v2036 = vsel %vm786, %v1755, 0
        %v2039 = vsel %vm786, %v1758, 0
        %v2042 = vsel %vm786, %v1760, 0
        %v2045 = vsel %vm786, %v1763, 0
        %v2048 = vsel %vm786, %v1765, 0
        %v2051 = vsel %vm786, %v1768, 0
        %v2054 = vsel %vm786, %v1770, 0
        %v2057 = vsel %vm786, %v1773, 0
        %v2060 = vsel %vm786, %v1775, 0
        %v2063 = vsel %vm786, %v1778, 0
        %v2066 = vsel %vm786, %v1780, 0
        %v2069 = vsel %vm786, %v1783, 0
        %v2072 = vsel %vm786, %v1785, 0
        %v2075 = vsel %vm1957, %v1907, 0
        %2077 = vmatpush.msra.mxu0 0.0
        %2078 = vmatpush.msra.mxu0 0.0
        %2079 = vmatpush.msra.mxu0 0.0
        %2080 = vmatpush.msra.mxu0 0.0
        %2081 = vmatpush.msra.mxu0 0.0
        %2082 = vmatpush.msra.mxu0 0.0
        %2083 = vmatpush.msra.mxu0 0.0
        %2084 = vmatpush.msra.mxu0 0.0
        %2085 = vmatpush.msra.mxu0 0.0
        %2086 = vmatpush.msra.mxu0 0.0
        %2087 = vmatpush.msra.mxu0 0.0
        %2088 = vmatpush.msra.mxu0 0.0
        %2089 = vmatpush.msra.mxu0 0.0
        %2090 = vmatpush.msra.mxu0 0.0
        %2091 = vmatpush.msra.mxu0 0.0
        %2092 = vmatpush.msra.mxu0 %v2075
        %2093 = vmatmul.f32.gmra.mxu0 %v2027
        %v2094 = vpop.f32.mrf.mxu0
        %v2095 = vadd.f32 %v1979, %v2094
        %2096 = vmatmul.f32.gmra.mxu0 %v2030
        %v2097 = vpop.f32.mrf.mxu0
        %v2098 = vadd.f32 %v1982, %v2097
        %2099 = vmatmul.f32.gmra.mxu0 %v2033
        %v2100 = vpop.f32.mrf.mxu0
        %v2101 = vadd.f32 %v1985, %v2100
        %2102 = vmatmul.f32.gmra.mxu0 %v2036
        %v2103 = vpop.f32.mrf.mxu0
        %v2104 = vadd.f32 %v1988, %v2103
        %2105 = vmatmul.f32.gmra.mxu0 %v2039
        %v2106 = vpop.f32.mrf.mxu0
        %v2107 = vadd.f32 %v1991, %v2106
        %2108 = vmatmul.f32.gmra.mxu0 %v2042
        %v2109 = vpop.f32.mrf.mxu0
        %v2110 = vadd.f32 %v1994, %v2109
        %2111 = vmatmul.f32.gmra.mxu0 %v2045
        %v2112 = vpop.f32.mrf.mxu0
        %v2113 = vadd.f32 %v1997, %v2112
        %2114 = vmatmul.f32.gmra.mxu0 %v2048
        %v2115 = vpop.f32.mrf.mxu0
        %v2116 = vadd.f32 %v2000, %v2115
        %2117 = vmatmul.f32.gmra.mxu0 %v2051
        %v2118 = vpop.f32.mrf.mxu0
        %v2119 = vadd.f32 %v2003, %v2118
        %2120 = vmatmul.f32.gmra.mxu0 %v2054
        %v2121 = vpop.f32.mrf.mxu0
        %v2122 = vadd.f32 %v2006, %v2121
        %2123 = vmatmul.f32.gmra.mxu0 %v2057
        %v2124 = vpop.f32.mrf.mxu0
        %v2125 = vadd.f32 %v2009, %v2124
        %2126 = vmatmul.f32.gmra.mxu0 %v2060
        %v2127 = vpop.f32.mrf.mxu0
        %v2128 = vadd.f32 %v2012, %v2127
        %2129 = vmatmul.f32.gmra.mxu0 %v2063
        %v2130 = vpop.f32.mrf.mxu0
        %v2131 = vadd.f32 %v2015, %v2130
        %2132 = vmatmul.f32.gmra.mxu0 %v2066
        %v2133 = vpop.f32.mrf.mxu0
        %v2134 = vadd.f32 %v2018, %v2133
        %2135 = vmatmul.f32.gmra.mxu0 %v2069
        %v2136 = vpop.f32.mrf.mxu0
        %v2137 = vadd.f32 %v2021, %v2136
        %2138 = vmatmul.f32.gmra.mxu0 %v2072
        %v2139 = vpop.f32.mrf.mxu0
        %v2140 = vadd.f32 %v2024, %v2139
        %2141 = vdwg.mxu0
        %v2142 = vld [vmem:[%s2 + $0x350] sm:$0x7]
        %v2144 = vsel %vm786, %v1828, 0
        %v2147 = vsel %vm786, %v1830, 0
        %v2150 = vsel %vm786, %v1833, 0
        %v2153 = vsel %vm786, %v1835, 0
        %v2156 = vsel %vm786, %v1838, 0
        %v2159 = vsel %vm786, %v1840, 0
        %v2162 = vsel %vm786, %v1843, 0
        %v2165 = vsel %vm786, %v1845, 0
        %v2168 = vsel %vm786, %v1848, 0
        %v2171 = vsel %vm786, %v1850, 0
        %v2174 = vsel %vm786, %v1853, 0
        %v2177 = vsel %vm786, %v1855, 0
        %v2180 = vsel %vm786, %v1858, 0
        %v2183 = vsel %vm786, %v1860, 0
        %v2186 = vsel %vm786, %v1863, 0
        %v2189 = vsel %vm786, %v1865, 0
        %v2192 = vsel %vm1957, %v2142, 0
        %2194 = vmatpush.msra.mxu0 0.0
        %2195 = vmatpush.msra.mxu0 0.0
        %2196 = vmatpush.msra.mxu0 0.0
        %2197 = vmatpush.msra.mxu0 0.0
        %2198 = vmatpush.msra.mxu0 0.0
        %2199 = vmatpush.msra.mxu0 0.0
        %2200 = vmatpush.msra.mxu0 0.0
        %2201 = vmatpush.msra.mxu0 0.0
        %2202 = vmatpush.msra.mxu0 0.0
        %2203 = vmatpush.msra.mxu0 0.0
        %2204 = vmatpush.msra.mxu0 0.0
        %2205 = vmatpush.msra.mxu0 0.0
        %2206 = vmatpush.msra.mxu0 0.0
        %2207 = vmatpush.msra.mxu0 0.0
        %2208 = vmatpush.msra.mxu0 0.0
        %2209 = vmatpush.msra.mxu0 %v2192
        %2210 = vmatmul.f32.gmra.mxu0 %v2144
        %v2211 = vpop.f32.mrf.mxu0
        %v2212 = vadd.f32 0.0, %v2211
        %2213 = vmatmul.f32.gmra.mxu0 %v2147
        %v2214 = vpop.f32.mrf.mxu0
        %v2215 = vadd.f32 0.0, %v2214
        %2216 = vmatmul.f32.gmra.mxu0 %v2150
        %v2217 = vpop.f32.mrf.mxu0
        %v2218 = vadd.f32 0.0, %v2217
        %2219 = vmatmul.f32.gmra.mxu0 %v2153
        %v2220 = vpop.f32.mrf.mxu0
        %v2221 = vadd.f32 0.0, %v2220
        %2222 = vmatmul.f32.gmra.mxu0 %v2156
        %v2223 = vpop.f32.mrf.mxu0
        %v2224 = vadd.f32 0.0, %v2223
        %2225 = vmatmul.f32.gmra.mxu0 %v2159
        %v2226 = vpop.f32.mrf.mxu0
        %v2227 = vadd.f32 0.0, %v2226
        %2228 = vmatmul.f32.gmra.mxu0 %v2162
        %v2229 = vpop.f32.mrf.mxu0
        %v2230 = vadd.f32 0.0, %v2229
        %2231 = vmatmul.f32.gmra.mxu0 %v2165
        %v2232 = vpop.f32.mrf.mxu0
        %v2233 = vadd.f32 0.0, %v2232
        %2234 = vmatmul.f32.gmra.mxu0 %v2168
        %v2235 = vpop.f32.mrf.mxu0
        %v2236 = vadd.f32 0.0, %v2235
        %2237 = vmatmul.f32.gmra.mxu0 %v2171
        %v2238 = vpop.f32.mrf.mxu0
        %v2239 = vadd.f32 0.0, %v2238
        %2240 = vmatmul.f32.gmra.mxu0 %v2174
        %v2241 = vpop.f32.mrf.mxu0
        %v2242 = vadd.f32 0.0, %v2241
        %2243 = vmatmul.f32.gmra.mxu0 %v2177
        %v2244 = vpop.f32.mrf.mxu0
        %v2245 = vadd.f32 0.0, %v2244
        %2246 = vmatmul.f32.gmra.mxu0 %v2180
        %v2247 = vpop.f32.mrf.mxu0
        %v2248 = vadd.f32 0.0, %v2247
        %2249 = vmatmul.f32.gmra.mxu0 %v2183
        %v2250 = vpop.f32.mrf.mxu0
        %v2251 = vadd.f32 0.0, %v2250
        %2252 = vmatmul.f32.gmra.mxu0 %v2186
        %v2253 = vpop.f32.mrf.mxu0
        %v2254 = vadd.f32 0.0, %v2253
        %2255 = vmatmul.f32.gmra.mxu0 %v2189
        %v2256 = vpop.f32.mrf.mxu0
        %v2257 = vadd.f32 0.0, %v2256
        %2258 = vdwg.mxu0
        %v2259 = vadd.f32 %v2095, %v2212
        %v2260 = vadd.f32 %v2098, %v2215
        %v2261 = vadd.f32 %v2101, %v2218
        %v2262 = vadd.f32 %v2104, %v2221
        %v2263 = vadd.f32 %v2107, %v2224
        %v2264 = vadd.f32 %v2110, %v2227
        %v2265 = vadd.f32 %v2113, %v2230
        %v2266 = vadd.f32 %v2116, %v2233
        %v2267 = vadd.f32 %v2119, %v2236
        %v2268 = vadd.f32 %v2122, %v2239
        %v2269 = vadd.f32 %v2125, %v2242
        %v2270 = vadd.f32 %v2128, %v2245
        %v2271 = vadd.f32 %v2131, %v2248
        %v2272 = vadd.f32 %v2134, %v2251
        %v2273 = vadd.f32 %v2137, %v2254
        %v2274 = vadd.f32 %v2140, %v2257
        %v2275 = vld [vmem:[%s2 + $0x360] sm:$0x7]
        %v2277 = vsel %vm786, %v1868, 0
        %v2280 = vsel %vm786, %v1870, 0
        %v2283 = vsel %vm786, %v1873, 0
        %v2286 = vsel %vm786, %v1875, 0
        %v2289 = vsel %vm786, %v1878, 0
        %v2292 = vsel %vm786, %v1880, 0
        %v2295 = vsel %vm786, %v1883, 0
        %v2298 = vsel %vm786, %v1885, 0
        %v2301 = vsel %vm786, %v1888, 0
        %v2304 = vsel %vm786, %v1890, 0
        %v2307 = vsel %vm786, %v1893, 0
        %v2310 = vsel %vm786, %v1895, 0
        %v2313 = vsel %vm786, %v1898, 0
        %v2316 = vsel %vm786, %v1900, 0
        %v2319 = vsel %vm786, %v1903, 0
        %v2322 = vsel %vm786, %v1905, 0
        %v2325 = vsel %vm1957, %v2275, 0
        %2327 = vmatpush.msra.mxu0 0.0
        %2328 = vmatpush.msra.mxu0 0.0
        %2329 = vmatpush.msra.mxu0 0.0
        %2330 = vmatpush.msra.mxu0 0.0
        %2331 = vmatpush.msra.mxu0 0.0
        %2332 = vmatpush.msra.mxu0 0.0
        %2333 = vmatpush.msra.mxu0 0.0
        %2334 = vmatpush.msra.mxu0 0.0
        %2335 = vmatpush.msra.mxu0 0.0
        %2336 = vmatpush.msra.mxu0 0.0
        %2337 = vmatpush.msra.mxu0 0.0
        %2338 = vmatpush.msra.mxu0 0.0
        %2339 = vmatpush.msra.mxu0 0.0
        %2340 = vmatpush.msra.mxu0 0.0
        %2341 = vmatpush.msra.mxu0 0.0
        %2342 = vmatpush.msra.mxu0 %v2325
        %2343 = vmatmul.f32.gmra.mxu0 %v2277
        %v2344 = vpop.f32.mrf.mxu0
        %v2345 = vadd.f32 0.0, %v2344
        %2346 = vmatmul.f32.gmra.mxu0 %v2280
        %v2347 = vpop.f32.mrf.mxu0
        %v2348 = vadd.f32 0.0, %v2347
        %2349 = vmatmul.f32.gmra.mxu0 %v2283
        %v2350 = vpop.f32.mrf.mxu0
        %v2351 = vadd.f32 0.0, %v2350
        %2352 = vmatmul.f32.gmra.mxu0 %v2286
        %v2353 = vpop.f32.mrf.mxu0
        %v2354 = vadd.f32 0.0, %v2353
        %2355 = vmatmul.f32.gmra.mxu0 %v2289
        %v2356 = vpop.f32.mrf.mxu0
        %v2357 = vadd.f32 0.0, %v2356
        %2358 = vmatmul.f32.gmra.mxu0 %v2292
        %v2359 = vpop.f32.mrf.mxu0
        %v2360 = vadd.f32 0.0, %v2359
        %2361 = vmatmul.f32.gmra.mxu0 %v2295
        %v2362 = vpop.f32.mrf.mxu0
        %v2363 = vadd.f32 0.0, %v2362
        %2364 = vmatmul.f32.gmra.mxu0 %v2298
        %v2365 = vpop.f32.mrf.mxu0
        %v2366 = vadd.f32 0.0, %v2365
        %2367 = vmatmul.f32.gmra.mxu0 %v2301
        %v2368 = vpop.f32.mrf.mxu0
        %v2369 = vadd.f32 0.0, %v2368
        %2370 = vmatmul.f32.gmra.mxu0 %v2304
        %v2371 = vpop.f32.mrf.mxu0
        %v2372 = vadd.f32 0.0, %v2371
        %2373 = vmatmul.f32.gmra.mxu0 %v2307
        %v2374 = vpop.f32.mrf.mxu0
        %v2375 = vadd.f32 0.0, %v2374
        %2376 = vmatmul.f32.gmra.mxu0 %v2310
        %v2377 = vpop.f32.mrf.mxu0
        %v2378 = vadd.f32 0.0, %v2377
        %2379 = vmatmul.f32.gmra.mxu0 %v2313
        %v2380 = vpop.f32.mrf.mxu0
        %v2381 = vadd.f32 0.0, %v2380
        %2382 = vmatmul.f32.gmra.mxu0 %v2316
        %v2383 = vpop.f32.mrf.mxu0
        %v2384 = vadd.f32 0.0, %v2383
        %2385 = vmatmul.f32.gmra.mxu0 %v2319
        %v2386 = vpop.f32.mrf.mxu0
        %v2387 = vadd.f32 0.0, %v2386
        %2388 = vmatmul.f32.gmra.mxu0 %v2322
        %v2389 = vpop.f32.mrf.mxu0
        %v2390 = vadd.f32 0.0, %v2389
        %2391 = vdwg.mxu0
        %v2392 = vadd.f32 %v2259, %v2345
        %v2393 = vadd.f32 %v2260, %v2348
        %v2394 = vadd.f32 %v2261, %v2351
        %v2395 = vadd.f32 %v2262, %v2354
        %v2396 = vadd.f32 %v2263, %v2357
        %v2397 = vadd.f32 %v2264, %v2360
        %v2398 = vadd.f32 %v2265, %v2363
        %v2399 = vadd.f32 %v2266, %v2366
        %v2400 = vadd.f32 %v2267, %v2369
        %v2401 = vadd.f32 %v2268, %v2372
        %v2402 = vadd.f32 %v2269, %v2375
        %v2403 = vadd.f32 %v2270, %v2378
        %v2404 = vadd.f32 %v2271, %v2381
        %v2405 = vadd.f32 %v2272, %v2384
        %v2406 = vadd.f32 %v2273, %v2387
        %v2407 = vadd.f32 %v2274, %v2390
        %vm2408 = vcmask 64512
        %v2409 = vsel %vm2408, %v2392, 0.0
        %v2410 = vsel %vm2408, %v2393, 0.0
        %v2411 = vadd.f32 %v2409, %v2410
        %v2412 = vsel %vm2408, %v2394, 0.0
        %v2413 = vadd.f32 %v2411, %v2412
        %v2414 = vsel %vm2408, %v2395, 0.0
        %v2415 = vadd.f32 %v2413, %v2414
        %v2416 = vsel %vm2408, %v2396, 0.0
        %v2417 = vadd.f32 %v2415, %v2416
        %v2418 = vsel %vm2408, %v2397, 0.0
        %v2419 = vadd.f32 %v2417, %v2418
        %v2420 = vsel %vm2408, %v2398, 0.0
        %v2421 = vadd.f32 %v2419, %v2420
        %v2422 = vsel %vm2408, %v2399, 0.0
        %v2423 = vadd.f32 %v2421, %v2422
        %v2424 = vsel %vm2408, %v2400, 0.0
        %v2425 = vadd.f32 %v2423, %v2424
        %v2426 = vsel %vm2408, %v2401, 0.0
        %v2427 = vadd.f32 %v2425, %v2426
        %v2428 = vsel %vm2408, %v2402, 0.0
        %v2429 = vadd.f32 %v2427, %v2428
        %v2430 = vsel %vm2408, %v2403, 0.0
        %v2431 = vadd.f32 %v2429, %v2430
        %v2432 = vsel %vm2408, %v2404, 0.0
        %v2433 = vadd.f32 %v2431, %v2432
        %v2434 = vsel %vm2408, %v2405, 0.0
        %v2435 = vadd.f32 %v2433, %v2434
        %v2436 = vsel %vm2408, %v2406, 0.0
        %v2437 = vadd.f32 %v2435, %v2436
        %v2438 = vsel %vm2408, %v2407, 0.0
        %v2439 = vadd.f32 %v2437, %v2438
        %2440 = vadd.xlane.f32.xlu0 %v2439
        %v2441 = vpop.xlane.xlu0 %2440
        %v2442 = vrot.slane %v2441, 4
        %v2443 = vadd.f32 %v2441, %v2442
        %v2444 = vrot.slane %v2443, 2
        %v2445 = vadd.f32 %v2443, %v2444
        %v2446 = vrot.slane %v2445, 1
        %v2447 = vadd.f32 %v2445, %v2446
        %s2448 = vtos %v2447
        %s2449 = smul.f32 %s2448, 0.0009765625
        %v2450 = vstv %s2449
        %v2451 = vsub.f32 %v2392, %v2450
        %v2452 = vsub.f32 %v2393, %v2450
        %v2453 = vsub.f32 %v2394, %v2450
        %v2454 = vsub.f32 %v2395, %v2450
        %v2455 = vsub.f32 %v2396, %v2450
        %v2456 = vsub.f32 %v2397, %v2450
        %v2457 = vsub.f32 %v2398, %v2450
        %v2458 = vsub.f32 %v2399, %v2450
        %v2459 = vsub.f32 %v2400, %v2450
        %v2460 = vsub.f32 %v2401, %v2450
        %v2461 = vsub.f32 %v2402, %v2450
        %v2462 = vsub.f32 %v2403, %v2450
        %v2463 = vsub.f32 %v2404, %v2450
        %v2464 = vsub.f32 %v2405, %v2450
        %v2465 = vsub.f32 %v2406, %v2450
        %v2466 = vsub.f32 %v2407, %v2450
        %v2467 = vmul.f32 %v2451, %v2451
        %v2468 = vmul.f32 %v2452, %v2452
        %v2469 = vmul.f32 %v2453, %v2453
        %v2470 = vmul.f32 %v2454, %v2454
        %v2471 = vmul.f32 %v2455, %v2455
        %v2472 = vmul.f32 %v2456, %v2456
        %v2473 = vmul.f32 %v2457, %v2457
        %v2474 = vmul.f32 %v2458, %v2458
        %v2475 = vmul.f32 %v2459, %v2459
        %v2476 = vmul.f32 %v2460, %v2460
        %v2477 = vmul.f32 %v2461, %v2461
        %v2478 = vmul.f32 %v2462, %v2462
        %v2479 = vmul.f32 %v2463, %v2463
        %v2480 = vmul.f32 %v2464, %v2464
        %v2481 = vmul.f32 %v2465, %v2465
        %v2482 = vmul.f32 %v2466, %v2466
        %v2483 = vsel %vm2408, %v2467, 0.0
        %v2484 = vsel %vm2408, %v2468, 0.0
        %v2485 = vadd.f32 %v2483, %v2484
        %v2486 = vsel %vm2408, %v2469, 0.0
        %v2487 = vadd.f32 %v2485, %v2486
        %v2488 = vsel %vm2408, %v2470, 0.0
        %v2489 = vadd.f32 %v2487, %v2488
        %v2490 = vsel %vm2408, %v2471, 0.0
        %v2491 = vadd.f32 %v2489, %v2490
        %v2492 = vsel %vm2408, %v2472, 0.0
        %v2493 = vadd.f32 %v2491, %v2492
        %v2494 = vsel %vm2408, %v2473, 0.0
        %v2495 = vadd.f32 %v2493, %v2494
        %v2496 = vsel %vm2408, %v2474, 0.0
        %v2497 = vadd.f32 %v2495, %v2496
        %v2498 = vsel %vm2408, %v2475, 0.0
        %v2499 = vadd.f32 %v2497, %v2498
        %v2500 = vsel %vm2408, %v2476, 0.0
        %v2501 = vadd.f32 %v2499, %v2500
        %v2502 = vsel %vm2408, %v2477, 0.0
        %v2503 = vadd.f32 %v2501, %v2502
        %v2504 = vsel %vm2408, %v2478, 0.0
        %v2505 = vadd.f32 %v2503, %v2504
        %v2506 = vsel %vm2408, %v2479, 0.0
        %v2507 = vadd.f32 %v2505, %v2506
        %v2508 = vsel %vm2408, %v2480, 0.0
        %v2509 = vadd.f32 %v2507, %v2508
        %v2510 = vsel %vm2408, %v2481, 0.0
        %v2511 = vadd.f32 %v2509, %v2510
        %v2512 = vsel %vm2408, %v2482, 0.0
        %v2513 = vadd.f32 %v2511, %v2512
        %2514 = vadd.xlane.f32.xlu0 %v2513
        %v2515 = vpop.xlane.xlu0 %2514
        %v2516 = vrot.slane %v2515, 4
        %v2517 = vadd.f32 %v2515, %v2516
        %v2518 = vrot.slane %v2517, 2
        %v2519 = vadd.f32 %v2517, %v2518
        %v2520 = vrot.slane %v2519, 1
        %v2521 = vadd.f32 %v2519, %v2520
        %s2522 = vtos %v2521
        %s2523 = smul.f32 %s2522, 0.0009765625
        %v2524 = vld [vmem:[%s2 + $0x370] sm:$0xff]
        %v2525 = vld [vmem:[%s2 + $0x380] sm:$0xff]
        %v2526 = vld [vmem:[%s2 + $0x390] sm:$0xff]
        %v2527 = vld [vmem:[%s2 + $0x3a0] sm:$0xff]
        %v2528 = vld [vmem:[%s2 + $0x3b0] sm:$0xff]
        %v2529 = vld [vmem:[%s2 + $0x3c0] sm:$0xff]
        %v2530 = vld [vmem:[%s2 + $0x3d0] sm:$0xff]
        %v2531 = vld [vmem:[%s2 + $0x3e0] sm:$0xff]
        %v2532 = vld [vmem:[%s2 + $0x3f0] sm:$0xff]
        %v2533 = vld [vmem:[%s2 + $0x400] sm:$0xff]
        %v2534 = vld [vmem:[%s2 + $0x410] sm:$0xff]
        %v2535 = vld [vmem:[%s2 + $0x420] sm:$0xff]
        %v2536 = vld [vmem:[%s2 + $0x430] sm:$0xff]
        %v2537 = vld [vmem:[%s2 + $0x440] sm:$0xff]
        %v2538 = vld [vmem:[%s2 + $0x450] sm:$0xff]
        %v2539 = vld [vmem:[%s2 + $0x460] sm:$0xff]
        %v2540 = vld [vmem:[%s2 + $0x470] sm:$0xff]
        %v2541 = vld [vmem:[%s2 + $0x480] sm:$0xff]
        %v2542 = vld [vmem:[%s2 + $0x490] sm:$0xff]
        %v2543 = vld [vmem:[%s2 + $0x4a0] sm:$0xff]
        %v2544 = vld [vmem:[%s2 + $0x4b0] sm:$0xff]
        %v2545 = vld [vmem:[%s2 + $0x4c0] sm:$0xff]
        %v2546 = vld [vmem:[%s2 + $0x4d0] sm:$0xff]
        %v2547 = vld [vmem:[%s2 + $0x4e0] sm:$0xff]
        %v2548 = vld [vmem:[%s2 + $0x4f0] sm:$0xff]
        %v2549 = vld [vmem:[%s2 + $0x500] sm:$0xff]
        %v2550 = vld [vmem:[%s2 + $0x510] sm:$0xff]
        %v2551 = vld [vmem:[%s2 + $0x520] sm:$0xff]
        %v2552 = vld [vmem:[%s2 + $0x530] sm:$0xff]
        %v2553 = vld [vmem:[%s2 + $0x540] sm:$0xff]
        %v2554 = vld [vmem:[%s2 + $0x550] sm:$0xff]
        %v2555 = vld [vmem:[%s2 + $0x560] sm:$0xff]
        %s2556 = sadd.f32 %s2523, 1e-05
        %v2557 = vstv %s2556
        %v2558 = vrsqrt.pop %v2557
        %v2559 = vmul.f32 %v2558, %v2557
        %v2560 = vmul.f32 %v2559, %v2558
        %v2561 = vmul.f32 0.5, %v2560
        %v2562 = vsub.f32 1.5, %v2561
        %v2563 = vmul.f32 %v2558, %v2562
        %vm2564 = vweird.f32 %v2557
        %vm2565 = vweird.f32 %v2558
        %vm2566 = vmor %vm2564, %vm2565
        %v2567 = vsel %vm2566, %v2558, %v2563
        %s2568 = vtos %v2567
        %v2569 = vstv %s2568
        %v2570 = vmul.f32 %v2451, %v2569
        %v2571 = vmul.f32 %v2452, %v2569
        %v2572 = vmul.f32 %v2453, %v2569
        %v2573 = vmul.f32 %v2454, %v2569
        %v2574 = vmul.f32 %v2455, %v2569
        %v2575 = vmul.f32 %v2456, %v2569
        %v2576 = vmul.f32 %v2457, %v2569
        %v2577 = vmul.f32 %v2458, %v2569
        %v2578 = vmul.f32 %v2459, %v2569
        %v2579 = vmul.f32 %v2460, %v2569
        %v2580 = vmul.f32 %v2461, %v2569
        %v2581 = vmul.f32 %v2462, %v2569
        %v2582 = vmul.f32 %v2463, %v2569
        %v2583 = vmul.f32 %v2464, %v2569
        %v2584 = vmul.f32 %v2465, %v2569
        %v2585 = vmul.f32 %v2466, %v2569
        %v2586 = vmul.f32 %v2570, %v2524
        %v2587 = vmul.f32 %v2571, %v2525
        %v2588 = vmul.f32 %v2572, %v2526
        %v2589 = vmul.f32 %v2573, %v2527
        %v2590 = vmul.f32 %v2574, %v2528
        %v2591 = vmul.f32 %v2575, %v2529
        %v2592 = vmul.f32 %v2576, %v2530
        %v2593 = vmul.f32 %v2577, %v2531
        %v2594 = vmul.f32 %v2578, %v2532
        %v2595 = vmul.f32 %v2579, %v2533
        %v2596 = vmul.f32 %v2580, %v2534
        %v2597 = vmul.f32 %v2581, %v2535
        %v2598 = vmul.f32 %v2582, %v2536
        %v2599 = vmul.f32 %v2583, %v2537
        %v2600 = vmul.f32 %v2584, %v2538
        %v2601 = vmul.f32 %v2585, %v2539
        %v2602 = vadd.f32 %v2586, %v2540
        %v2603 = vadd.f32 %v2587, %v2541
        %v2604 = vadd.f32 %v2588, %v2542
        %v2605 = vadd.f32 %v2589, %v2543
        %v2606 = vadd.f32 %v2590, %v2544
        %v2607 = vadd.f32 %v2591, %v2545
        %v2608 = vadd.f32 %v2592, %v2546
        %v2609 = vadd.f32 %v2593, %v2547
        %v2610 = vadd.f32 %v2594, %v2548
        %v2611 = vadd.f32 %v2595, %v2549
        %v2612 = vadd.f32 %v2596, %v2550
        %v2613 = vadd.f32 %v2597, %v2551
        %v2614 = vadd.f32 %v2598, %v2552
        %v2615 = vadd.f32 %v2599, %v2553
        %v2616 = vadd.f32 %v2600, %v2554
        %v2617 = vadd.f32 %v2601, %v2555
        %v2618 = vmax.f32 %v2602, 0.0
        %v2619 = vmax.f32 %v2603, 0.0
        %v2620 = vmax.f32 %v2604, 0.0
        %v2621 = vmax.f32 %v2605, 0.0
        %v2622 = vmax.f32 %v2606, 0.0
        %v2623 = vmax.f32 %v2607, 0.0
        %v2624 = vmax.f32 %v2608, 0.0
        %v2625 = vmax.f32 %v2609, 0.0
        %v2626 = vmax.f32 %v2610, 0.0
        %v2627 = vmax.f32 %v2611, 0.0
        %v2628 = vmax.f32 %v2612, 0.0
        %v2629 = vmax.f32 %v2613, 0.0
        %v2630 = vmax.f32 %v2614, 0.0
        %v2631 = vmax.f32 %v2615, 0.0
        %v2632 = vmax.f32 %v2616, 0.0
        %v2633 = vmax.f32 %v2617, 0.0
        %v2634 = vld [vmem:[%s1 + $0x440] sm:$0xf]
        %v2635 = vld [vmem:[%s1 + $0x448] sm:$0xf]
        %v2636 = vld [vmem:[%s1 + $0x450] sm:$0xf]
        %v2637 = vld [vmem:[%s1 + $0x458] sm:$0xf]
        %v2638 = vld [vmem:[%s1 + $0x460] sm:$0xf]
        %v2639 = vld [vmem:[%s1 + $0x468] sm:$0xf]
        %v2640 = vld [vmem:[%s1 + $0x470] sm:$0xf]
        %v2641 = vld [vmem:[%s1 + $0x478] sm:$0xf]
        %v2642 = vld [vmem:[%s1 + $0x480] sm:$0xf]
        %v2643 = vld [vmem:[%s1 + $0x488] sm:$0xf]
        %v2644 = vld [vmem:[%s1 + $0x490] sm:$0xf]
        %v2645 = vld [vmem:[%s1 + $0x498] sm:$0xf]
        %v2646 = vld [vmem:[%s1 + $0x4a0] sm:$0xf]
        %v2647 = vld [vmem:[%s1 + $0x4a8] sm:$0xf]
        %v2648 = vld [vmem:[%s1 + $0x4b0] sm:$0xf]
        %v2649 = vld [vmem:[%s1 + $0x4b8] sm:$0xf]
        %v2650 = vld [vmem:[%s1 + $0x4c0] sm:$0xf]
        %v2651 = vld [vmem:[%s1 + $0x4c8] sm:$0xf]
        %v2652 = vld [vmem:[%s1 + $0x4d0] sm:$0xf]
        %v2653 = vld [vmem:[%s1 + $0x4d8] sm:$0xf]
        %v2654 = vld [vmem:[%s1 + $0x4e0] sm:$0xf]
        %v2655 = vld [vmem:[%s1 + $0x4e8] sm:$0xf]
        %v2656 = vld [vmem:[%s1 + $0x4f0] sm:$0xf]
        %v2657 = vld [vmem:[%s1 + $0x4f8] sm:$0xf]
        %v2658 = vld [vmem:[%s1 + $0x500] sm:$0xf]
        %v2659 = vld [vmem:[%s1 + $0x508] sm:$0xf]
        %v2660 = vld [vmem:[%s1 + $0x510] sm:$0xf]
        %v2661 = vld [vmem:[%s1 + $0x518] sm:$0xf]
        %v2662 = vld [vmem:[%s1 + $0x520] sm:$0xf]
        %v2663 = vld [vmem:[%s1 + $0x528] sm:$0xf]
        %v2664 = vld [vmem:[%s1 + $0x530] sm:$0xf]
        %v2665 = vld [vmem:[%s1 + $0x538] sm:$0xf]
        %v2666 = vld [vmem:[%s1 + $0x540] sm:$0xf]
        %v2667 = vld [vmem:[%s1 + $0x548] sm:$0xf]
        %v2668 = vld [vmem:[%s1 + $0x550] sm:$0xf]
        %v2669 = vld [vmem:[%s1 + $0x558] sm:$0xf]
        %v2670 = vld [vmem:[%s1 + $0x560] sm:$0xf]
        %v2671 = vld [vmem:[%s1 + $0x568] sm:$0xf]
        %v2672 = vld [vmem:[%s1 + $0x570] sm:$0xf]
        %v2673 = vld [vmem:[%s1 + $0x578] sm:$0xf]
        %v2674 = vld [vmem:[%s1 + $0x580] sm:$0xf]
        %v2675 = vld [vmem:[%s1 + $0x588] sm:$0xf]
        %v2676 = vld [vmem:[%s1 + $0x590] sm:$0xf]
        %v2677 = vld [vmem:[%s1 + $0x598] sm:$0xf]
        %v2678 = vld [vmem:[%s1 + $0x5a0] sm:$0xf]
        %v2679 = vld [vmem:[%s1 + $0x5a8] sm:$0xf]
        %v2680 = vld [vmem:[%s1 + $0x5b0] sm:$0xf]
        %v2681 = vld [vmem:[%s1 + $0x5b8] sm:$0xf]
        %v2682 = vpack.c.bf16 %v2619, %v2618
        %v2683 = vpack.c.bf16 %v2621, %v2620
        %v2684 = vpack.c.bf16 %v2623, %v2622
        %v2685 = vpack.c.bf16 %v2625, %v2624
        %v2686 = vpack.c.bf16 %v2627, %v2626
        %v2687 = vpack.c.bf16 %v2629, %v2628
        %v2688 = vpack.c.bf16 %v2631, %v2630
        %v2689 = vpack.c.bf16 %v2633, %v2632
        %v2738 = vunpack.c.l.b16 %v2634
        %v2739 = vunpack.c.l.b16 %v2635
        %v2740 = vunpack.c.l.b16 %v2636
        %v2741 = vunpack.c.l.b16 %v2637
        %v2742 = vunpack.c.l.b16 %v2638
        %v2743 = vunpack.c.l.b16 %v2639
        %v2744 = vunpack.c.l.b16 %v2640
        %v2745 = vunpack.c.l.b16 %v2641
        %v2746 = vunpack.c.l.b16 %v2642
        %v2747 = vunpack.c.l.b16 %v2643
        %v2748 = vunpack.c.l.b16 %v2644
        %v2749 = vunpack.c.l.b16 %v2645
        %v2750 = vunpack.c.l.b16 %v2646
        %v2751 = vunpack.c.l.b16 %v2647
        %v2752 = vunpack.c.l.b16 %v2648
        %v2753 = vunpack.c.l.b16 %v2649
        %v2754 = vunpack.c.l.b16 %v2650
        %v2755 = vunpack.c.l.b16 %v2651
        %v2756 = vunpack.c.l.b16 %v2652
        %v2757 = vunpack.c.l.b16 %v2653
        %v2758 = vunpack.c.l.b16 %v2654
        %v2759 = vunpack.c.l.b16 %v2655
        %v2760 = vunpack.c.l.b16 %v2656
        %v2761 = vunpack.c.l.b16 %v2657
        %v2762 = vunpack.c.l.b16 %v2658
        %v2763 = vunpack.c.l.b16 %v2659
        %v2764 = vunpack.c.l.b16 %v2660
        %v2765 = vunpack.c.l.b16 %v2661
        %v2766 = vunpack.c.l.b16 %v2662
        %v2767 = vunpack.c.l.b16 %v2663
        %v2768 = vunpack.c.l.b16 %v2664
        %v2769 = vunpack.c.l.b16 %v2665
        %v2770 = vunpack.c.l.b16 %v2666
        %v2771 = vunpack.c.l.b16 %v2667
        %v2772 = vunpack.c.l.b16 %v2668
        %v2773 = vunpack.c.l.b16 %v2669
        %v2774 = vunpack.c.l.b16 %v2670
        %v2775 = vunpack.c.l.b16 %v2671
        %v2776 = vunpack.c.l.b16 %v2672
        %v2777 = vunpack.c.l.b16 %v2673
        %v2778 = vunpack.c.l.b16 %v2674
        %v2779 = vunpack.c.l.b16 %v2675
        %v2780 = vunpack.c.l.b16 %v2676
        %v2781 = vunpack.c.l.b16 %v2677
        %v2782 = vunpack.c.l.b16 %v2678
        %v2783 = vunpack.c.l.b16 %v2679
        %v2784 = vunpack.c.l.b16 %v2680
        %v2785 = vunpack.c.l.b16 %v2681
        %v2786 = vpack.c.b16 %v2739, %v2738
        %v2787 = vpack.c.b16 %v2741, %v2740
        %v2788 = vpack.c.b16 %v2743, %v2742
        %v2789 = vpack.c.b16 %v2745, %v2744
        %v2790 = vpack.c.b16 %v2747, %v2746
        %v2791 = vpack.c.b16 %v2749, %v2748
        %v2792 = vpack.c.b16 %v2751, %v2750
        %v2793 = vpack.c.b16 %v2753, %v2752
        %v2794 = vpack.c.b16 %v2755, %v2754
        %v2795 = vpack.c.b16 %v2757, %v2756
        %v2796 = vpack.c.b16 %v2759, %v2758
        %v2797 = vpack.c.b16 %v2761, %v2760
        %v2798 = vpack.c.b16 %v2763, %v2762
        %v2799 = vpack.c.b16 %v2765, %v2764
        %v2800 = vpack.c.b16 %v2767, %v2766
        %v2801 = vpack.c.b16 %v2769, %v2768
        %v2802 = vpack.c.b16 %v2771, %v2770
        %v2803 = vpack.c.b16 %v2773, %v2772
        %v2804 = vpack.c.b16 %v2775, %v2774
        %v2805 = vpack.c.b16 %v2777, %v2776
        %v2806 = vpack.c.b16 %v2779, %v2778
        %v2807 = vpack.c.b16 %v2781, %v2780
        %v2808 = vpack.c.b16 %v2783, %v2782
        %v2809 = vpack.c.b16 %v2785, %v2784
        %2834 = vmatpush.bf16.msra.mxu0 %v2689
        %2835 = vmatpush.bf16.msra.mxu0 %v2688
        %2836 = vmatpush.bf16.msra.mxu0 %v2687
        %2837 = vmatpush.bf16.msra.mxu0 %v2686
        %2838 = vmatpush.bf16.msra.mxu0 %v2685
        %2839 = vmatpush.bf16.msra.mxu0 %v2684
        %2840 = vmatpush.bf16.msra.mxu0 %v2683
        %2841 = vmatpush.bf16.msra.mxu0 %v2682
        %2842 = vmatmul.bf16.gmra.mxu0 %v2786
        %v2843 = vpop.f32.mrf.mxu0
        %v2844 = vadd.f32 0.0, %v2843
        %v2845 = vpop.f32.mrf.mxu0
        %v2846 = vadd.f32 0.0, %v2845
        %2847 = vmatmul.bf16.gmra.mxu0 %v2787
        %v2848 = vpop.f32.mrf.mxu0
        %v2849 = vadd.f32 0.0, %v2848
        %v2850 = vpop.f32.mrf.mxu0
        %v2851 = vadd.f32 0.0, %v2850
        %2852 = vmatmul.bf16.gmra.mxu0 %v2788
        %v2853 = vpop.f32.mrf.mxu0
        %v2854 = vadd.f32 0.0, %v2853
        %v2855 = vpop.f32.mrf.mxu0
        %v2856 = vadd.f32 0.0, %v2855
        %2857 = vmatmul.bf16.gmra.mxu0 %v2789
        %v2858 = vpop.f32.mrf.mxu0
        %v2859 = vadd.f32 0.0, %v2858
        %v2860 = vpop.f32.mrf.mxu0
        %v2861 = vadd.f32 0.0, %v2860
        %2862 = vmatmul.bf16.gmra.mxu0 %v2790
        %v2863 = vpop.f32.mrf.mxu0
        %v2864 = vadd.f32 0.0, %v2863
        %v2865 = vpop.f32.mrf.mxu0
        %v2866 = vadd.f32 0.0, %v2865
        %2867 = vmatmul.bf16.gmra.mxu0 %v2791
        %v2868 = vpop.f32.mrf.mxu0
        %v2869 = vadd.f32 0.0, %v2868
        %v2870 = vpop.f32.mrf.mxu0
        %v2871 = vadd.f32 0.0, %v2870
        %2872 = vmatmul.bf16.gmra.mxu0 %v2792
        %v2873 = vpop.f32.mrf.mxu0
        %v2874 = vadd.f32 0.0, %v2873
        %v2875 = vpop.f32.mrf.mxu0
        %v2876 = vadd.f32 0.0, %v2875
        %2877 = vmatmul.bf16.gmra.mxu0 %v2793
        %v2878 = vpop.f32.mrf.mxu0
        %v2879 = vadd.f32 0.0, %v2878
        %v2880 = vpop.f32.mrf.mxu0
        %v2881 = vadd.f32 0.0, %v2880
        %2882 = vmatmul.bf16.gmra.mxu0 %v2794
        %v2883 = vpop.f32.mrf.mxu0
        %v2884 = vadd.f32 0.0, %v2883
        %v2885 = vpop.f32.mrf.mxu0
        %v2886 = vadd.f32 0.0, %v2885
        %2887 = vmatmul.bf16.gmra.mxu0 %v2795
        %v2888 = vpop.f32.mrf.mxu0
        %v2889 = vadd.f32 0.0, %v2888
        %v2890 = vpop.f32.mrf.mxu0
        %v2891 = vadd.f32 0.0, %v2890
        %2892 = vmatmul.bf16.gmra.mxu0 %v2796
        %v2893 = vpop.f32.mrf.mxu0
        %v2894 = vadd.f32 0.0, %v2893
        %v2895 = vpop.f32.mrf.mxu0
        %v2896 = vadd.f32 0.0, %v2895
        %2897 = vmatmul.bf16.gmra.mxu0 %v2797
        %v2898 = vpop.f32.mrf.mxu0
        %v2899 = vadd.f32 0.0, %v2898
        %v2900 = vpop.f32.mrf.mxu0
        %v2901 = vadd.f32 0.0, %v2900
        %2902 = vmatmul.bf16.gmra.mxu0 %v2798
        %v2903 = vpop.f32.mrf.mxu0
        %v2904 = vadd.f32 0.0, %v2903
        %v2905 = vpop.f32.mrf.mxu0
        %v2906 = vadd.f32 0.0, %v2905
        %2907 = vmatmul.bf16.gmra.mxu0 %v2799
        %v2908 = vpop.f32.mrf.mxu0
        %v2909 = vadd.f32 0.0, %v2908
        %v2910 = vpop.f32.mrf.mxu0
        %v2911 = vadd.f32 0.0, %v2910
        %2912 = vmatmul.bf16.gmra.mxu0 %v2800
        %v2913 = vpop.f32.mrf.mxu0
        %v2914 = vadd.f32 0.0, %v2913
        %v2915 = vpop.f32.mrf.mxu0
        %v2916 = vadd.f32 0.0, %v2915
        %2917 = vmatmul.bf16.gmra.mxu0 %v2801
        %v2918 = vpop.f32.mrf.mxu0
        %v2919 = vadd.f32 0.0, %v2918
        %v2920 = vpop.f32.mrf.mxu0
        %v2921 = vadd.f32 0.0, %v2920
        %2922 = vmatmul.bf16.gmra.mxu0 %v2802
        %v2923 = vpop.f32.mrf.mxu0
        %v2924 = vadd.f32 0.0, %v2923
        %v2925 = vpop.f32.mrf.mxu0
        %v2926 = vadd.f32 0.0, %v2925
        %2927 = vmatmul.bf16.gmra.mxu0 %v2803
        %v2928 = vpop.f32.mrf.mxu0
        %v2929 = vadd.f32 0.0, %v2928
        %v2930 = vpop.f32.mrf.mxu0
        %v2931 = vadd.f32 0.0, %v2930
        %2932 = vmatmul.bf16.gmra.mxu0 %v2804
        %v2933 = vpop.f32.mrf.mxu0
        %v2934 = vadd.f32 0.0, %v2933
        %v2935 = vpop.f32.mrf.mxu0
        %v2936 = vadd.f32 0.0, %v2935
        %2937 = vmatmul.bf16.gmra.mxu0 %v2805
        %v2938 = vpop.f32.mrf.mxu0
        %v2939 = vadd.f32 0.0, %v2938
        %v2940 = vpop.f32.mrf.mxu0
        %v2941 = vadd.f32 0.0, %v2940
        %2942 = vmatmul.bf16.gmra.mxu0 %v2806
        %v2943 = vpop.f32.mrf.mxu0
        %v2944 = vadd.f32 0.0, %v2943
        %v2945 = vpop.f32.mrf.mxu0
        %v2946 = vadd.f32 0.0, %v2945
        %2947 = vmatmul.bf16.gmra.mxu0 %v2807
        %v2948 = vpop.f32.mrf.mxu0
        %v2949 = vadd.f32 0.0, %v2948
        %v2950 = vpop.f32.mrf.mxu0
        %v2951 = vadd.f32 0.0, %v2950
        %2952 = vmatmul.bf16.gmra.mxu0 %v2808
        %v2953 = vpop.f32.mrf.mxu0
        %v2954 = vadd.f32 0.0, %v2953
        %v2955 = vpop.f32.mrf.mxu0
        %v2956 = vadd.f32 0.0, %v2955
        %2957 = vmatmul.bf16.gmra.mxu0 %v2809
        %v2958 = vpop.f32.mrf.mxu0
        %v2959 = vadd.f32 0.0, %v2958
        %v2960 = vpop.f32.mrf.mxu0
        %v2961 = vadd.f32 0.0, %v2960
        %2962 = vdwg.mxu0
        %v2963 = vld [vmem:[%s2 + $0x570] sm:$0xff]
        %v2964 = vld [vmem:[%s2 + $0x580] sm:$0xff]
        %v2966 = vsel %vm2408, %v2884, 0
        %v2969 = vsel %vm2408, %v2886, 0
        %v2972 = vsel %vm2408, %v2889, 0
        %v2975 = vsel %vm2408, %v2891, 0
        %v2978 = vsel %vm2408, %v2894, 0
        %v2981 = vsel %vm2408, %v2896, 0
        %v2984 = vsel %vm2408, %v2899, 0
        %v2987 = vsel %vm2408, %v2901, 0
        %v2990 = vsel %vm2408, %v2904, 0
        %v2993 = vsel %vm2408, %v2906, 0
        %v2996 = vsel %vm2408, %v2909, 0
        %v2999 = vsel %vm2408, %v2911, 0
        %v3002 = vsel %vm2408, %v2914, 0
        %v3005 = vsel %vm2408, %v2916, 0
        %v3008 = vsel %vm2408, %v2919, 0
        %v3011 = vsel %vm2408, %v2921, 0
        %3013 = vmatpush.msra.mxu0 0.0
        %3014 = vmatpush.msra.mxu0 0.0
        %3015 = vmatpush.msra.mxu0 0.0
        %3016 = vmatpush.msra.mxu0 0.0
        %3017 = vmatpush.msra.mxu0 0.0
        %3018 = vmatpush.msra.mxu0 0.0
        %3019 = vmatpush.msra.mxu0 0.0
        %3020 = vmatpush.msra.mxu0 0.0
        %3021 = vmatpush.msra.mxu0 0.0
        %3022 = vmatpush.msra.mxu0 0.0
        %3023 = vmatpush.msra.mxu0 0.0
        %3024 = vmatpush.msra.mxu0 0.0
        %3025 = vmatpush.msra.mxu0 0.0
        %3026 = vmatpush.msra.mxu0 0.0
        %3027 = vmatpush.msra.mxu0 0.0
        %3028 = vmatpush.msra.mxu0 %v2964
        %3029 = vmatmul.f32.gmra.mxu0 %v2966
        %v3030 = vpop.f32.mrf.mxu0
        %v3031 = vadd.f32 0.0, %v3030
        %3032 = vmatmul.f32.gmra.mxu0 %v2969
        %v3033 = vpop.f32.mrf.mxu0
        %v3034 = vadd.f32 0.0, %v3033
        %3035 = vmatmul.f32.gmra.mxu0 %v2972
        %v3036 = vpop.f32.mrf.mxu0
        %v3037 = vadd.f32 0.0, %v3036
        %3038 = vmatmul.f32.gmra.mxu0 %v2975
        %v3039 = vpop.f32.mrf.mxu0
        %v3040 = vadd.f32 0.0, %v3039
        %3041 = vmatmul.f32.gmra.mxu0 %v2978
        %v3042 = vpop.f32.mrf.mxu0
        %v3043 = vadd.f32 0.0, %v3042
        %3044 = vmatmul.f32.gmra.mxu0 %v2981
        %v3045 = vpop.f32.mrf.mxu0
        %v3046 = vadd.f32 0.0, %v3045
        %3047 = vmatmul.f32.gmra.mxu0 %v2984
        %v3048 = vpop.f32.mrf.mxu0
        %v3049 = vadd.f32 0.0, %v3048
        %3050 = vmatmul.f32.gmra.mxu0 %v2987
        %v3051 = vpop.f32.mrf.mxu0
        %v3052 = vadd.f32 0.0, %v3051
        %3053 = vmatmul.f32.gmra.mxu0 %v2990
        %v3054 = vpop.f32.mrf.mxu0
        %v3055 = vadd.f32 0.0, %v3054
        %3056 = vmatmul.f32.gmra.mxu0 %v2993
        %v3057 = vpop.f32.mrf.mxu0
        %v3058 = vadd.f32 0.0, %v3057
        %3059 = vmatmul.f32.gmra.mxu0 %v2996
        %v3060 = vpop.f32.mrf.mxu0
        %v3061 = vadd.f32 0.0, %v3060
        %3062 = vmatmul.f32.gmra.mxu0 %v2999
        %v3063 = vpop.f32.mrf.mxu0
        %v3064 = vadd.f32 0.0, %v3063
        %3065 = vmatmul.f32.gmra.mxu0 %v3002
        %v3066 = vpop.f32.mrf.mxu0
        %v3067 = vadd.f32 0.0, %v3066
        %3068 = vmatmul.f32.gmra.mxu0 %v3005
        %v3069 = vpop.f32.mrf.mxu0
        %v3070 = vadd.f32 0.0, %v3069
        %3071 = vmatmul.f32.gmra.mxu0 %v3008
        %v3072 = vpop.f32.mrf.mxu0
        %v3073 = vadd.f32 0.0, %v3072
        %3074 = vmatmul.f32.gmra.mxu0 %v3011
        %v3075 = vpop.f32.mrf.mxu0
        %v3076 = vadd.f32 0.0, %v3075
        %3077 = vdwg.mxu0
        %v3079 = vsel %vm2408, %v2844, 0
        %v3082 = vsel %vm2408, %v2846, 0
        %v3085 = vsel %vm2408, %v2849, 0
        %v3088 = vsel %vm2408, %v2851, 0
        %v3091 = vsel %vm2408, %v2854, 0
        %v3094 = vsel %vm2408, %v2856, 0
        %v3097 = vsel %vm2408, %v2859, 0
        %v3100 = vsel %vm2408, %v2861, 0
        %v3103 = vsel %vm2408, %v2864, 0
        %v3106 = vsel %vm2408, %v2866, 0
        %v3109 = vsel %vm2408, %v2869, 0
        %v3112 = vsel %vm2408, %v2871, 0
        %v3115 = vsel %vm2408, %v2874, 0
        %v3118 = vsel %vm2408, %v2876, 0
        %v3121 = vsel %vm2408, %v2879, 0
        %v3124 = vsel %vm2408, %v2881, 0
        %3126 = vmatpush.msra.mxu0 0.0
        %3127 = vmatpush.msra.mxu0 0.0
        %3128 = vmatpush.msra.mxu0 0.0
        %3129 = vmatpush.msra.mxu0 0.0
        %3130 = vmatpush.msra.mxu0 0.0
        %3131 = vmatpush.msra.mxu0 0.0
        %3132 = vmatpush.msra.mxu0 0.0
        %3133 = vmatpush.msra.mxu0 0.0
        %3134 = vmatpush.msra.mxu0 0.0
        %3135 = vmatpush.msra.mxu0 0.0
        %3136 = vmatpush.msra.mxu0 0.0
        %3137 = vmatpush.msra.mxu0 0.0
        %3138 = vmatpush.msra.mxu0 0.0
        %3139 = vmatpush.msra.mxu0 0.0
        %3140 = vmatpush.msra.mxu0 0.0
        %3141 = vmatpush.msra.mxu0 %v2963
        %3142 = vmatmul.f32.gmra.mxu0 %v3079
        %v3143 = vpop.f32.mrf.mxu0
        %v3144 = vadd.f32 %v3031, %v3143
        %3145 = vmatmul.f32.gmra.mxu0 %v3082
        %v3146 = vpop.f32.mrf.mxu0
        %v3147 = vadd.f32 %v3034, %v3146
        %3148 = vmatmul.f32.gmra.mxu0 %v3085
        %v3149 = vpop.f32.mrf.mxu0
        %v3150 = vadd.f32 %v3037, %v3149
        %3151 = vmatmul.f32.gmra.mxu0 %v3088
        %v3152 = vpop.f32.mrf.mxu0
        %v3153 = vadd.f32 %v3040, %v3152
        %3154 = vmatmul.f32.gmra.mxu0 %v3091
        %v3155 = vpop.f32.mrf.mxu0
        %v3156 = vadd.f32 %v3043, %v3155
        %3157 = vmatmul.f32.gmra.mxu0 %v3094
        %v3158 = vpop.f32.mrf.mxu0
        %v3159 = vadd.f32 %v3046, %v3158
        %3160 = vmatmul.f32.gmra.mxu0 %v3097
        %v3161 = vpop.f32.mrf.mxu0
        %v3162 = vadd.f32 %v3049, %v3161
        %3163 = vmatmul.f32.gmra.mxu0 %v3100
        %v3164 = vpop.f32.mrf.mxu0
        %v3165 = vadd.f32 %v3052, %v3164
        %3166 = vmatmul.f32.gmra.mxu0 %v3103
        %v3167 = vpop.f32.mrf.mxu0
        %v3168 = vadd.f32 %v3055, %v3167
        %3169 = vmatmul.f32.gmra.mxu0 %v3106
        %v3170 = vpop.f32.mrf.mxu0
        %v3171 = vadd.f32 %v3058, %v3170
        %3172 = vmatmul.f32.gmra.mxu0 %v3109
        %v3173 = vpop.f32.mrf.mxu0
        %v3174 = vadd.f32 %v3061, %v3173
        %3175 = vmatmul.f32.gmra.mxu0 %v3112
        %v3176 = vpop.f32.mrf.mxu0
        %v3177 = vadd.f32 %v3064, %v3176
        %3178 = vmatmul.f32.gmra.mxu0 %v3115
        %v3179 = vpop.f32.mrf.mxu0
        %v3180 = vadd.f32 %v3067, %v3179
        %3181 = vmatmul.f32.gmra.mxu0 %v3118
        %v3182 = vpop.f32.mrf.mxu0
        %v3183 = vadd.f32 %v3070, %v3182
        %3184 = vmatmul.f32.gmra.mxu0 %v3121
        %v3185 = vpop.f32.mrf.mxu0
        %v3186 = vadd.f32 %v3073, %v3185
        %3187 = vmatmul.f32.gmra.mxu0 %v3124
        %v3188 = vpop.f32.mrf.mxu0
        %v3189 = vadd.f32 %v3076, %v3188
        %3190 = vdwg.mxu0
        %v3191 = vld [vmem:[%s2 + $0x590] sm:$0xff]
        %v3193 = vsel %vm2408, %v2924, 0
        %v3196 = vsel %vm2408, %v2926, 0
        %v3199 = vsel %vm2408, %v2929, 0
        %v3202 = vsel %vm2408, %v2931, 0
        %v3205 = vsel %vm2408, %v2934, 0
        %v3208 = vsel %vm2408, %v2936, 0
        %v3211 = vsel %vm2408, %v2939, 0
        %v3214 = vsel %vm2408, %v2941, 0
        %v3217 = vsel %vm2408, %v2944, 0
        %v3220 = vsel %vm2408, %v2946, 0
        %v3223 = vsel %vm2408, %v2949, 0
        %v3226 = vsel %vm2408, %v2951, 0
        %v3229 = vsel %vm2408, %v2954, 0
        %v3232 = vsel %vm2408, %v2956, 0
        %v3235 = vsel %vm2408, %v2959, 0
        %v3238 = vsel %vm2408, %v2961, 0
        %3240 = vmatpush.msra.mxu0 0.0
        %3241 = vmatpush.msra.mxu0 0.0
        %3242 = vmatpush.msra.mxu0 0.0
        %3243 = vmatpush.msra.mxu0 0.0
        %3244 = vmatpush.msra.mxu0 0.0
        %3245 = vmatpush.msra.mxu0 0.0
        %3246 = vmatpush.msra.mxu0 0.0
        %3247 = vmatpush.msra.mxu0 0.0
        %3248 = vmatpush.msra.mxu0 0.0
        %3249 = vmatpush.msra.mxu0 0.0
        %3250 = vmatpush.msra.mxu0 0.0
        %3251 = vmatpush.msra.mxu0 0.0
        %3252 = vmatpush.msra.mxu0 0.0
        %3253 = vmatpush.msra.mxu0 0.0
        %3254 = vmatpush.msra.mxu0 0.0
        %3255 = vmatpush.msra.mxu0 %v3191
        %3256 = vmatmul.f32.gmra.mxu0 %v3193
        %v3257 = vpop.f32.mrf.mxu0
        %v3258 = vadd.f32 0.0, %v3257
        %3259 = vmatmul.f32.gmra.mxu0 %v3196
        %v3260 = vpop.f32.mrf.mxu0
        %v3261 = vadd.f32 0.0, %v3260
        %3262 = vmatmul.f32.gmra.mxu0 %v3199
        %v3263 = vpop.f32.mrf.mxu0
        %v3264 = vadd.f32 0.0, %v3263
        %3265 = vmatmul.f32.gmra.mxu0 %v3202
        %v3266 = vpop.f32.mrf.mxu0
        %v3267 = vadd.f32 0.0, %v3266
        %3268 = vmatmul.f32.gmra.mxu0 %v3205
        %v3269 = vpop.f32.mrf.mxu0
        %v3270 = vadd.f32 0.0, %v3269
        %3271 = vmatmul.f32.gmra.mxu0 %v3208
        %v3272 = vpop.f32.mrf.mxu0
        %v3273 = vadd.f32 0.0, %v3272
        %3274 = vmatmul.f32.gmra.mxu0 %v3211
        %v3275 = vpop.f32.mrf.mxu0
        %v3276 = vadd.f32 0.0, %v3275
        %3277 = vmatmul.f32.gmra.mxu0 %v3214
        %v3278 = vpop.f32.mrf.mxu0
        %v3279 = vadd.f32 0.0, %v3278
        %3280 = vmatmul.f32.gmra.mxu0 %v3217
        %v3281 = vpop.f32.mrf.mxu0
        %v3282 = vadd.f32 0.0, %v3281
        %3283 = vmatmul.f32.gmra.mxu0 %v3220
        %v3284 = vpop.f32.mrf.mxu0
        %v3285 = vadd.f32 0.0, %v3284
        %3286 = vmatmul.f32.gmra.mxu0 %v3223
        %v3287 = vpop.f32.mrf.mxu0
        %v3288 = vadd.f32 0.0, %v3287
        %3289 = vmatmul.f32.gmra.mxu0 %v3226
        %v3290 = vpop.f32.mrf.mxu0
        %v3291 = vadd.f32 0.0, %v3290
        %3292 = vmatmul.f32.gmra.mxu0 %v3229
        %v3293 = vpop.f32.mrf.mxu0
        %v3294 = vadd.f32 0.0, %v3293
        %3295 = vmatmul.f32.gmra.mxu0 %v3232
        %v3296 = vpop.f32.mrf.mxu0
        %v3297 = vadd.f32 0.0, %v3296
        %3298 = vmatmul.f32.gmra.mxu0 %v3235
        %v3299 = vpop.f32.mrf.mxu0
        %v3300 = vadd.f32 0.0, %v3299
        %3301 = vmatmul.f32.gmra.mxu0 %v3238
        %v3302 = vpop.f32.mrf.mxu0
        %v3303 = vadd.f32 0.0, %v3302
        %3304 = vdwg.mxu0
        %v3305 = vadd.f32 %v3144, %v3258
        %v3306 = vadd.f32 %v3147, %v3261
        %v3307 = vadd.f32 %v3150, %v3264
        %v3308 = vadd.f32 %v3153, %v3267
        %v3309 = vadd.f32 %v3156, %v3270
        %v3310 = vadd.f32 %v3159, %v3273
        %v3311 = vadd.f32 %v3162, %v3276
        %v3312 = vadd.f32 %v3165, %v3279
        %v3313 = vadd.f32 %v3168, %v3282
        %v3314 = vadd.f32 %v3171, %v3285
        %v3315 = vadd.f32 %v3174, %v3288
        %v3316 = vadd.f32 %v3177, %v3291
        %v3317 = vadd.f32 %v3180, %v3294
        %v3318 = vadd.f32 %v3183, %v3297
        %v3319 = vadd.f32 %v3186, %v3300
        %v3320 = vadd.f32 %v3189, %v3303
        %v3321 = vld [vmem:[%s2 + $0x5a0] sm:$0xff]
        %v3322 = vld [vmem:[%s2 + $0x5b0] sm:$0xff]
        %v3323 = vld [vmem:[%s2 + $0x5c0] sm:$0xff]
        %v3324 = vld [vmem:[%s2 + $0x5d0] sm:$0xff]
        %v3325 = vld [vmem:[%s2 + $0x5e0] sm:$0xff]
        %v3326 = vld [vmem:[%s2 + $0x5f0] sm:$0xff]
        %v3327 = vld [vmem:[%s2 + $0x600] sm:$0xff]
        %v3328 = vld [vmem:[%s2 + $0x610] sm:$0xff]
        %v3329 = vld [vmem:[%s2 + $0x620] sm:$0xff]
        %v3330 = vld [vmem:[%s2 + $0x630] sm:$0xff]
        %v3331 = vld [vmem:[%s2 + $0x640] sm:$0xff]
        %v3332 = vld [vmem:[%s2 + $0x650] sm:$0xff]
        %v3333 = vld [vmem:[%s2 + $0x660] sm:$0xff]
        %v3334 = vld [vmem:[%s2 + $0x670] sm:$0xff]
        %v3335 = vld [vmem:[%s2 + $0x680] sm:$0xff]
        %v3336 = vld [vmem:[%s2 + $0x690] sm:$0xff]
        %3338 = vset.pattern.permute.xlu0 0
        %3339 = vperm.xlu0 %3338, %v3321
        %v3340 = vpop.permute.xlu0 %3339
        %3343 = vset.pattern.permute.xlu0 0
        %3344 = vperm.xlu0 %3343, %v3322
        %v3345 = vpop.permute.xlu0 %3344
        %3348 = vset.pattern.permute.xlu0 0
        %3349 = vperm.xlu0 %3348, %v3323
        %v3350 = vpop.permute.xlu0 %3349
        %3353 = vset.pattern.permute.xlu0 0
        %3354 = vperm.xlu0 %3353, %v3324
        %v3355 = vpop.permute.xlu0 %3354
        %3358 = vset.pattern.permute.xlu0 0
        %3359 = vperm.xlu0 %3358, %v3325
        %v3360 = vpop.permute.xlu0 %3359
        %3363 = vset.pattern.permute.xlu0 0
        %3364 = vperm.xlu0 %3363, %v3326
        %v3365 = vpop.permute.xlu0 %3364
        %3368 = vset.pattern.permute.xlu0 0
        %3369 = vperm.xlu0 %3368, %v3327
        %v3370 = vpop.permute.xlu0 %3369
        %3373 = vset.pattern.permute.xlu0 0
        %3374 = vperm.xlu0 %3373, %v3328
        %v3375 = vpop.permute.xlu0 %3374
        %3378 = vset.pattern.permute.xlu0 0
        %3379 = vperm.xlu0 %3378, %v3329
        %v3380 = vpop.permute.xlu0 %3379
        %3383 = vset.pattern.permute.xlu0 0
        %3384 = vperm.xlu0 %3383, %v3330
        %v3385 = vpop.permute.xlu0 %3384
        %3388 = vset.pattern.permute.xlu0 0
        %3389 = vperm.xlu0 %3388, %v3331
        %v3390 = vpop.permute.xlu0 %3389
        %3393 = vset.pattern.permute.xlu0 0
        %3394 = vperm.xlu0 %3393, %v3332
        %v3395 = vpop.permute.xlu0 %3394
        %3398 = vset.pattern.permute.xlu0 0
        %3399 = vperm.xlu0 %3398, %v3333
        %v3400 = vpop.permute.xlu0 %3399
        %3403 = vset.pattern.permute.xlu0 0
        %3404 = vperm.xlu0 %3403, %v3334
        %v3405 = vpop.permute.xlu0 %3404
        %3408 = vset.pattern.permute.xlu0 0
        %3409 = vperm.xlu0 %3408, %v3335
        %v3410 = vpop.permute.xlu0 %3409
        %3413 = vset.pattern.permute.xlu0 0
        %3414 = vperm.xlu0 %3413, %v3336
        %v3415 = vpop.permute.xlu0 %3414
        %v3417 = vadd.f32 %v3305, %v3340
        %v3418 = vadd.f32 %v3306, %v3345
        %v3419 = vadd.f32 %v3307, %v3350
        %v3420 = vadd.f32 %v3308, %v3355
        %v3421 = vadd.f32 %v3309, %v3360
        %v3422 = vadd.f32 %v3310, %v3365
        %v3423 = vadd.f32 %v3311, %v3370
        %v3424 = vadd.f32 %v3312, %v3375
        %v3425 = vadd.f32 %v3313, %v3380
        %v3426 = vadd.f32 %v3314, %v3385
        %v3427 = vadd.f32 %v3315, %v3390
        %v3428 = vadd.f32 %v3316, %v3395
        %v3429 = vadd.f32 %v3317, %v3400
        %v3430 = vadd.f32 %v3318, %v3405
        %v3431 = vadd.f32 %v3319, %v3410
        %v3432 = vadd.f32 %v3320, %v3415
        %v3433 = vsel %vm2408, %v3417, 0.0
        %v3434 = vsel %vm2408, %v3418, 0.0
        %v3435 = vadd.f32 %v3433, %v3434
        %v3436 = vsel %vm2408, %v3419, 0.0
        %v3437 = vadd.f32 %v3435, %v3436
        %v3438 = vsel %vm2408, %v3420, 0.0
        %v3439 = vadd.f32 %v3437, %v3438
        %v3440 = vsel %vm2408, %v3421, 0.0
        %v3441 = vadd.f32 %v3439, %v3440
        %v3442 = vsel %vm2408, %v3422, 0.0
        %v3443 = vadd.f32 %v3441, %v3442
        %v3444 = vsel %vm2408, %v3423, 0.0
        %v3445 = vadd.f32 %v3443, %v3444
        %v3446 = vsel %vm2408, %v3424, 0.0
        %v3447 = vadd.f32 %v3445, %v3446
        %v3448 = vsel %vm2408, %v3425, 0.0
        %v3449 = vadd.f32 %v3447, %v3448
        %v3450 = vsel %vm2408, %v3426, 0.0
        %v3451 = vadd.f32 %v3449, %v3450
        %v3452 = vsel %vm2408, %v3427, 0.0
        %v3453 = vadd.f32 %v3451, %v3452
        %v3454 = vsel %vm2408, %v3428, 0.0
        %v3455 = vadd.f32 %v3453, %v3454
        %v3456 = vsel %vm2408, %v3429, 0.0
        %v3457 = vadd.f32 %v3455, %v3456
        %v3458 = vsel %vm2408, %v3430, 0.0
        %v3459 = vadd.f32 %v3457, %v3458
        %v3460 = vsel %vm2408, %v3431, 0.0
        %v3461 = vadd.f32 %v3459, %v3460
        %v3462 = vsel %vm2408, %v3432, 0.0
        %v3463 = vadd.f32 %v3461, %v3462
        %3464 = vadd.xlane.f32.xlu0 %v3463
        %v3465 = vpop.xlane.xlu0 %3464
        %v3466 = vrot.slane %v3465, 4
        %v3467 = vadd.f32 %v3465, %v3466
        %v3468 = vrot.slane %v3467, 2
        %v3469 = vadd.f32 %v3467, %v3468
        %v3470 = vrot.slane %v3469, 1
        %v3471 = vadd.f32 %v3469, %v3470
        %s3472 = vtos %v3471
        %s3473 = smul.f32 %s3472, 0.0009765625
        %v3474 = vstv %s3473
        %v3475 = vsub.f32 %v3417, %v3474
        %v3476 = vsub.f32 %v3418, %v3474
        %v3477 = vsub.f32 %v3419, %v3474
        %v3478 = vsub.f32 %v3420, %v3474
        %v3479 = vsub.f32 %v3421, %v3474
        %v3480 = vsub.f32 %v3422, %v3474
        %v3481 = vsub.f32 %v3423, %v3474
        %v3482 = vsub.f32 %v3424, %v3474
        %v3483 = vsub.f32 %v3425, %v3474
        %v3484 = vsub.f32 %v3426, %v3474
        %v3485 = vsub.f32 %v3427, %v3474
        %v3486 = vsub.f32 %v3428, %v3474
        %v3487 = vsub.f32 %v3429, %v3474
        %v3488 = vsub.f32 %v3430, %v3474
        %v3489 = vsub.f32 %v3431, %v3474
        %v3490 = vsub.f32 %v3432, %v3474
        %v3491 = vmul.f32 %v3475, %v3475
        %v3492 = vmul.f32 %v3476, %v3476
        %v3493 = vmul.f32 %v3477, %v3477
        %v3494 = vmul.f32 %v3478, %v3478
        %v3495 = vmul.f32 %v3479, %v3479
        %v3496 = vmul.f32 %v3480, %v3480
        %v3497 = vmul.f32 %v3481, %v3481
        %v3498 = vmul.f32 %v3482, %v3482
        %v3499 = vmul.f32 %v3483, %v3483
        %v3500 = vmul.f32 %v3484, %v3484
        %v3501 = vmul.f32 %v3485, %v3485
        %v3502 = vmul.f32 %v3486, %v3486
        %v3503 = vmul.f32 %v3487, %v3487
        %v3504 = vmul.f32 %v3488, %v3488
        %v3505 = vmul.f32 %v3489, %v3489
        %v3506 = vmul.f32 %v3490, %v3490
        %v3507 = vsel %vm2408, %v3491, 0.0
        %v3508 = vsel %vm2408, %v3492, 0.0
        %v3509 = vadd.f32 %v3507, %v3508
        %v3510 = vsel %vm2408, %v3493, 0.0
        %v3511 = vadd.f32 %v3509, %v3510
        %v3512 = vsel %vm2408, %v3494, 0.0
        %v3513 = vadd.f32 %v3511, %v3512
        %v3514 = vsel %vm2408, %v3495, 0.0
        %v3515 = vadd.f32 %v3513, %v3514
        %v3516 = vsel %vm2408, %v3496, 0.0
        %v3517 = vadd.f32 %v3515, %v3516
        %v3518 = vsel %vm2408, %v3497, 0.0
        %v3519 = vadd.f32 %v3517, %v3518
        %v3520 = vsel %vm2408, %v3498, 0.0
        %v3521 = vadd.f32 %v3519, %v3520
        %v3522 = vsel %vm2408, %v3499, 0.0
        %v3523 = vadd.f32 %v3521, %v3522
        %v3524 = vsel %vm2408, %v3500, 0.0
        %v3525 = vadd.f32 %v3523, %v3524
        %v3526 = vsel %vm2408, %v3501, 0.0
        %v3527 = vadd.f32 %v3525, %v3526
        %v3528 = vsel %vm2408, %v3502, 0.0
        %v3529 = vadd.f32 %v3527, %v3528
        %v3530 = vsel %vm2408, %v3503, 0.0
        %v3531 = vadd.f32 %v3529, %v3530
        %v3532 = vsel %vm2408, %v3504, 0.0
        %v3533 = vadd.f32 %v3531, %v3532
        %v3534 = vsel %vm2408, %v3505, 0.0
        %v3535 = vadd.f32 %v3533, %v3534
        %v3536 = vsel %vm2408, %v3506, 0.0
        %v3537 = vadd.f32 %v3535, %v3536
        %3538 = vadd.xlane.f32.xlu0 %v3537
        %v3539 = vpop.xlane.xlu0 %3538
        %v3540 = vrot.slane %v3539, 4
        %v3541 = vadd.f32 %v3539, %v3540
        %v3542 = vrot.slane %v3541, 2
        %v3543 = vadd.f32 %v3541, %v3542
        %v3544 = vrot.slane %v3543, 1
        %v3545 = vadd.f32 %v3543, %v3544
        %s3546 = vtos %v3545
        %s3547 = smul.f32 %s3546, 0.0009765625
        %v3548 = vld [vmem:[%s2 + $0x6a0] sm:$0xff]
        %v3549 = vld [vmem:[%s2 + $0x6b0] sm:$0xff]
        %v3550 = vld [vmem:[%s2 + $0x6c0] sm:$0xff]
        %v3551 = vld [vmem:[%s2 + $0x6d0] sm:$0xff]
        %v3552 = vld [vmem:[%s2 + $0x6e0] sm:$0xff]
        %v3553 = vld [vmem:[%s2 + $0x6f0] sm:$0xff]
        %v3554 = vld [vmem:[%s2 + $0x700] sm:$0xff]
        %v3555 = vld [vmem:[%s2 + $0x710] sm:$0xff]
        %v3556 = vld [vmem:[%s2 + $0x720] sm:$0xff]
        %v3557 = vld [vmem:[%s2 + $0x730] sm:$0xff]
        %v3558 = vld [vmem:[%s2 + $0x740] sm:$0xff]
        %v3559 = vld [vmem:[%s2 + $0x750] sm:$0xff]
        %v3560 = vld [vmem:[%s2 + $0x760] sm:$0xff]
        %v3561 = vld [vmem:[%s2 + $0x770] sm:$0xff]
        %v3562 = vld [vmem:[%s2 + $0x780] sm:$0xff]
        %v3563 = vld [vmem:[%s2 + $0x790] sm:$0xff]
        %v3564 = vld [vmem:[%s2 + $0x7a0] sm:$0xff]
        %v3565 = vld [vmem:[%s2 + $0x7b0] sm:$0xff]
        %v3566 = vld [vmem:[%s2 + $0x7c0] sm:$0xff]
        %v3567 = vld [vmem:[%s2 + $0x7d0] sm:$0xff]
        %v3568 = vld [vmem:[%s2 + $0x7e0] sm:$0xff]
        %v3569 = vld [vmem:[%s2 + $0x7f0] sm:$0xff]
        %v3570 = vld [vmem:[%s2 + $0x800] sm:$0xff]
        %v3571 = vld [vmem:[%s2 + $0x810] sm:$0xff]
        %v3572 = vld [vmem:[%s2 + $0x820] sm:$0xff]
        %v3573 = vld [vmem:[%s2 + $0x830] sm:$0xff]
        %v3574 = vld [vmem:[%s2 + $0x840] sm:$0xff]
        %v3575 = vld [vmem:[%s2 + $0x850] sm:$0xff]
        %v3576 = vld [vmem:[%s2 + $0x860] sm:$0xff]
        %v3577 = vld [vmem:[%s2 + $0x870] sm:$0xff]
        %v3578 = vld [vmem:[%s2 + $0x880] sm:$0xff]
        %v3579 = vld [vmem:[%s2 + $0x890] sm:$0xff]
        %s3580 = sadd.f32 %s3547, 1e-05
        %v3581 = vstv %s3580
        %v3582 = vrsqrt.pop %v3581
        %v3583 = vmul.f32 %v3582, %v3581
        %v3584 = vmul.f32 %v3583, %v3582
        %v3585 = vmul.f32 0.5, %v3584
        %v3586 = vsub.f32 1.5, %v3585
        %v3587 = vmul.f32 %v3582, %v3586
        %vm3588 = vweird.f32 %v3581
        %vm3589 = vweird.f32 %v3582
        %vm3590 = vmor %vm3588, %vm3589
        %v3591 = vsel %vm3590, %v3582, %v3587
        %s3592 = vtos %v3591
        %v3593 = vstv %s3592
        %v3594 = vmul.f32 %v3475, %v3593
        %v3595 = vmul.f32 %v3476, %v3593
        %v3596 = vmul.f32 %v3477, %v3593
        %v3597 = vmul.f32 %v3478, %v3593
        %v3598 = vmul.f32 %v3479, %v3593
        %v3599 = vmul.f32 %v3480, %v3593
        %v3600 = vmul.f32 %v3481, %v3593
        %v3601 = vmul.f32 %v3482, %v3593
        %v3602 = vmul.f32 %v3483, %v3593
        %v3603 = vmul.f32 %v3484, %v3593
        %v3604 = vmul.f32 %v3485, %v3593
        %v3605 = vmul.f32 %v3486, %v3593
        %v3606 = vmul.f32 %v3487, %v3593
        %v3607 = vmul.f32 %v3488, %v3593
        %v3608 = vmul.f32 %v3489, %v3593
        %v3609 = vmul.f32 %v3490, %v3593
        %v3610 = vmul.f32 %v3594, %v3548
        %v3611 = vmul.f32 %v3595, %v3549
        %v3612 = vmul.f32 %v3596, %v3550
        %v3613 = vmul.f32 %v3597, %v3551
        %v3614 = vmul.f32 %v3598, %v3552
        %v3615 = vmul.f32 %v3599, %v3553
        %v3616 = vmul.f32 %v3600, %v3554
        %v3617 = vmul.f32 %v3601, %v3555
        %v3618 = vmul.f32 %v3602, %v3556
        %v3619 = vmul.f32 %v3603, %v3557
        %v3620 = vmul.f32 %v3604, %v3558
        %v3621 = vmul.f32 %v3605, %v3559
        %v3622 = vmul.f32 %v3606, %v3560
        %v3623 = vmul.f32 %v3607, %v3561
        %v3624 = vmul.f32 %v3608, %v3562
        %v3625 = vmul.f32 %v3609, %v3563
        %v3626 = vadd.f32 %v3610, %v3564
        %v3627 = vadd.f32 %v3611, %v3565
        %v3628 = vadd.f32 %v3612, %v3566
        %v3629 = vadd.f32 %v3613, %v3567
        %v3630 = vadd.f32 %v3614, %v3568
        %v3631 = vadd.f32 %v3615, %v3569
        %v3632 = vadd.f32 %v3616, %v3570
        %v3633 = vadd.f32 %v3617, %v3571
        %v3634 = vadd.f32 %v3618, %v3572
        %v3635 = vadd.f32 %v3619, %v3573
        %v3636 = vadd.f32 %v3620, %v3574
        %v3637 = vadd.f32 %v3621, %v3575
        %v3638 = vadd.f32 %v3622, %v3576
        %v3639 = vadd.f32 %v3623, %v3577
        %v3640 = vadd.f32 %v3624, %v3578
        %v3641 = vadd.f32 %v3625, %v3579
        %v3642 = vmax.f32 %v3626, 0.0
        %v3643 = vmax.f32 %v3627, 0.0
        %v3644 = vmax.f32 %v3628, 0.0
        %v3645 = vmax.f32 %v3629, 0.0
        %v3646 = vmax.f32 %v3630, 0.0
        %v3647 = vmax.f32 %v3631, 0.0
        %v3648 = vmax.f32 %v3632, 0.0
        %v3649 = vmax.f32 %v3633, 0.0
        %v3650 = vmax.f32 %v3634, 0.0
        %v3651 = vmax.f32 %v3635, 0.0
        %v3652 = vmax.f32 %v3636, 0.0
        %v3653 = vmax.f32 %v3637, 0.0
        %v3654 = vmax.f32 %v3638, 0.0
        %v3655 = vmax.f32 %v3639, 0.0
        %v3656 = vmax.f32 %v3640, 0.0
        %v3657 = vmax.f32 %v3641, 0.0
        %v3658 = vld [vmem:[%s1 + $0x5c0] sm:$0xf]
        %v3659 = vld [vmem:[%s1 + $0x5c8] sm:$0xf]
        %v3660 = vld [vmem:[%s1 + $0x5d0] sm:$0xf]
        %v3661 = vld [vmem:[%s1 + $0x5d8] sm:$0xf]
        %v3662 = vld [vmem:[%s1 + $0x5e0] sm:$0xf]
        %v3663 = vld [vmem:[%s1 + $0x5e8] sm:$0xf]
        %v3664 = vld [vmem:[%s1 + $0x5f0] sm:$0xf]
        %v3665 = vld [vmem:[%s1 + $0x5f8] sm:$0xf]
        %v3666 = vld [vmem:[%s1 + $0x600] sm:$0xf]
        %v3667 = vld [vmem:[%s1 + $0x608] sm:$0xf]
        %v3668 = vld [vmem:[%s1 + $0x610] sm:$0xf]
        %v3669 = vld [vmem:[%s1 + $0x618] sm:$0xf]
        %v3670 = vld [vmem:[%s1 + $0x620] sm:$0xf]
        %v3671 = vld [vmem:[%s1 + $0x628] sm:$0xf]
        %v3672 = vld [vmem:[%s1 + $0x630] sm:$0xf]
        %v3673 = vld [vmem:[%s1 + $0x638] sm:$0xf]
        %v3674 = vld [vmem:[%s1 + $0x640] sm:$0xf]
        %v3675 = vld [vmem:[%s1 + $0x648] sm:$0xf]
        %v3676 = vld [vmem:[%s1 + $0x650] sm:$0xf]
        %v3677 = vld [vmem:[%s1 + $0x658] sm:$0xf]
        %v3678 = vld [vmem:[%s1 + $0x660] sm:$0xf]
        %v3679 = vld [vmem:[%s1 + $0x668] sm:$0xf]
        %v3680 = vld [vmem:[%s1 + $0x670] sm:$0xf]
        %v3681 = vld [vmem:[%s1 + $0x678] sm:$0xf]
        %v3682 = vld [vmem:[%s1 + $0x680] sm:$0xf]
        %v3683 = vld [vmem:[%s1 + $0x688] sm:$0xf]
        %v3684 = vld [vmem:[%s1 + $0x690] sm:$0xf]
        %v3685 = vld [vmem:[%s1 + $0x698] sm:$0xf]
        %v3686 = vld [vmem:[%s1 + $0x6a0] sm:$0xf]
        %v3687 = vld [vmem:[%s1 + $0x6a8] sm:$0xf]
        %v3688 = vld [vmem:[%s1 + $0x6b0] sm:$0xf]
        %v3689 = vld [vmem:[%s1 + $0x6b8] sm:$0xf]
        %v3690 = vld [vmem:[%s1 + $0x6c0] sm:$0xf]
        %v3691 = vld [vmem:[%s1 + $0x6c8] sm:$0xf]
        %v3692 = vld [vmem:[%s1 + $0x6d0] sm:$0xf]
        %v3693 = vld [vmem:[%s1 + $0x6d8] sm:$0xf]
        %v3694 = vld [vmem:[%s1 + $0x6e0] sm:$0xf]
        %v3695 = vld [vmem:[%s1 + $0x6e8] sm:$0xf]
        %v3696 = vld [vmem:[%s1 + $0x6f0] sm:$0xf]
        %v3697 = vld [vmem:[%s1 + $0x6f8] sm:$0xf]
        %v3698 = vld [vmem:[%s1 + $0x700] sm:$0xf]
        %v3699 = vld [vmem:[%s1 + $0x708] sm:$0xf]
        %v3700 = vld [vmem:[%s1 + $0x710] sm:$0xf]
        %v3701 = vld [vmem:[%s1 + $0x718] sm:$0xf]
        %v3702 = vld [vmem:[%s1 + $0x720] sm:$0xf]
        %v3703 = vld [vmem:[%s1 + $0x728] sm:$0xf]
        %v3704 = vld [vmem:[%s1 + $0x730] sm:$0xf]
        %v3705 = vld [vmem:[%s1 + $0x738] sm:$0xf]
        %v3706 = vpack.c.bf16 %v3643, %v3642
        %v3707 = vpack.c.bf16 %v3645, %v3644
        %v3708 = vpack.c.bf16 %v3647, %v3646
        %v3709 = vpack.c.bf16 %v3649, %v3648
        %v3710 = vpack.c.bf16 %v3651, %v3650
        %v3711 = vpack.c.bf16 %v3653, %v3652
        %v3712 = vpack.c.bf16 %v3655, %v3654
        %v3713 = vpack.c.bf16 %v3657, %v3656
        %v3762 = vunpack.c.l.b16 %v3658
        %v3763 = vunpack.c.l.b16 %v3659
        %v3764 = vunpack.c.l.b16 %v3660
        %v3765 = vunpack.c.l.b16 %v3661
        %v3766 = vunpack.c.l.b16 %v3662
        %v3767 = vunpack.c.l.b16 %v3663
        %v3768 = vunpack.c.l.b16 %v3664
        %v3769 = vunpack.c.l.b16 %v3665
        %v3770 = vunpack.c.l.b16 %v3666
        %v3771 = vunpack.c.l.b16 %v3667
        %v3772 = vunpack.c.l.b16 %v3668
        %v3773 = vunpack.c.l.b16 %v3669
        %v3774 = vunpack.c.l.b16 %v3670
        %v3775 = vunpack.c.l.b16 %v3671
        %v3776 = vunpack.c.l.b16 %v3672
        %v3777 = vunpack.c.l.b16 %v3673
        %v3778 = vunpack.c.l.b16 %v3674
        %v3779 = vunpack.c.l.b16 %v3675
        %v3780 = vunpack.c.l.b16 %v3676
        %v3781 = vunpack.c.l.b16 %v3677
        %v3782 = vunpack.c.l.b16 %v3678
        %v3783 = vunpack.c.l.b16 %v3679
        %v3784 = vunpack.c.l.b16 %v3680
        %v3785 = vunpack.c.l.b16 %v3681
        %v3786 = vunpack.c.l.b16 %v3682
        %v3787 = vunpack.c.l.b16 %v3683
        %v3788 = vunpack.c.l.b16 %v3684
        %v3789 = vunpack.c.l.b16 %v3685
        %v3790 = vunpack.c.l.b16 %v3686
        %v3791 = vunpack.c.l.b16 %v3687
        %v3792 = vunpack.c.l.b16 %v3688
        %v3793 = vunpack.c.l.b16 %v3689
        %v3794 = vunpack.c.l.b16 %v3690
        %v3795 = vunpack.c.l.b16 %v3691
        %v3796 = vunpack.c.l.b16 %v3692
        %v3797 = vunpack.c.l.b16 %v3693
        %v3798 = vunpack.c.l.b16 %v3694
        %v3799 = vunpack.c.l.b16 %v3695
        %v3800 = vunpack.c.l.b16 %v3696
        %v3801 = vunpack.c.l.b16 %v3697
        %v3802 = vunpack.c.l.b16 %v3698
        %v3803 = vunpack.c.l.b16 %v3699
        %v3804 = vunpack.c.l.b16 %v3700
        %v3805 = vunpack.c.l.b16 %v3701
        %v3806 = vunpack.c.l.b16 %v3702
        %v3807 = vunpack.c.l.b16 %v3703
        %v3808 = vunpack.c.l.b16 %v3704
        %v3809 = vunpack.c.l.b16 %v3705
        %v3810 = vpack.c.b16 %v3763, %v3762
        %v3811 = vpack.c.b16 %v3765, %v3764
        %v3812 = vpack.c.b16 %v3767, %v3766
        %v3813 = vpack.c.b16 %v3769, %v3768
        %v3814 = vpack.c.b16 %v3771, %v3770
        %v3815 = vpack.c.b16 %v3773, %v3772
        %v3816 = vpack.c.b16 %v3775, %v3774
        %v3817 = vpack.c.b16 %v3777, %v3776
        %v3818 = vpack.c.b16 %v3779, %v3778
        %v3819 = vpack.c.b16 %v3781, %v3780
        %v3820 = vpack.c.b16 %v3783, %v3782
        %v3821 = vpack.c.b16 %v3785, %v3784
        %v3822 = vpack.c.b16 %v3787, %v3786
        %v3823 = vpack.c.b16 %v3789, %v3788
        %v3824 = vpack.c.b16 %v3791, %v3790
        %v3825 = vpack.c.b16 %v3793, %v3792
        %v3826 = vpack.c.b16 %v3795, %v3794
        %v3827 = vpack.c.b16 %v3797, %v3796
        %v3828 = vpack.c.b16 %v3799, %v3798
        %v3829 = vpack.c.b16 %v3801, %v3800
        %v3830 = vpack.c.b16 %v3803, %v3802
        %v3831 = vpack.c.b16 %v3805, %v3804
        %v3832 = vpack.c.b16 %v3807, %v3806
        %v3833 = vpack.c.b16 %v3809, %v3808
        %3858 = vmatpush.bf16.msra.mxu0 %v3713
        %3859 = vmatpush.bf16.msra.mxu0 %v3712
        %3860 = vmatpush.bf16.msra.mxu0 %v3711
        %3861 = vmatpush.bf16.msra.mxu0 %v3710
        %3862 = vmatpush.bf16.msra.mxu0 %v3709
        %3863 = vmatpush.bf16.msra.mxu0 %v3708
        %3864 = vmatpush.bf16.msra.mxu0 %v3707
        %3865 = vmatpush.bf16.msra.mxu0 %v3706
        %3866 = vmatmul.bf16.gmra.mxu0 %v3810
        %v3867 = vpop.f32.mrf.mxu0
        %v3868 = vadd.f32 0.0, %v3867
        %v3869 = vpop.f32.mrf.mxu0
        %v3870 = vadd.f32 0.0, %v3869
        %3871 = vmatmul.bf16.gmra.mxu0 %v3811
        %v3872 = vpop.f32.mrf.mxu0
        %v3873 = vadd.f32 0.0, %v3872
        %v3874 = vpop.f32.mrf.mxu0
        %v3875 = vadd.f32 0.0, %v3874
        %3876 = vmatmul.bf16.gmra.mxu0 %v3812
        %v3877 = vpop.f32.mrf.mxu0
        %v3878 = vadd.f32 0.0, %v3877
        %v3879 = vpop.f32.mrf.mxu0
        %v3880 = vadd.f32 0.0, %v3879
        %3881 = vmatmul.bf16.gmra.mxu0 %v3813
        %v3882 = vpop.f32.mrf.mxu0
        %v3883 = vadd.f32 0.0, %v3882
        %v3884 = vpop.f32.mrf.mxu0
        %v3885 = vadd.f32 0.0, %v3884
        %3886 = vmatmul.bf16.gmra.mxu0 %v3814
        %v3887 = vpop.f32.mrf.mxu0
        %v3888 = vadd.f32 0.0, %v3887
        %v3889 = vpop.f32.mrf.mxu0
        %v3890 = vadd.f32 0.0, %v3889
        %3891 = vmatmul.bf16.gmra.mxu0 %v3815
        %v3892 = vpop.f32.mrf.mxu0
        %v3893 = vadd.f32 0.0, %v3892
        %v3894 = vpop.f32.mrf.mxu0
        %v3895 = vadd.f32 0.0, %v3894
        %3896 = vmatmul.bf16.gmra.mxu0 %v3816
        %v3897 = vpop.f32.mrf.mxu0
        %v3898 = vadd.f32 0.0, %v3897
        %v3899 = vpop.f32.mrf.mxu0
        %v3900 = vadd.f32 0.0, %v3899
        %3901 = vmatmul.bf16.gmra.mxu0 %v3817
        %v3902 = vpop.f32.mrf.mxu0
        %v3903 = vadd.f32 0.0, %v3902
        %v3904 = vpop.f32.mrf.mxu0
        %v3905 = vadd.f32 0.0, %v3904
        %3906 = vmatmul.bf16.gmra.mxu0 %v3818
        %v3907 = vpop.f32.mrf.mxu0
        %v3908 = vadd.f32 0.0, %v3907
        %v3909 = vpop.f32.mrf.mxu0
        %v3910 = vadd.f32 0.0, %v3909
        %3911 = vmatmul.bf16.gmra.mxu0 %v3819
        %v3912 = vpop.f32.mrf.mxu0
        %v3913 = vadd.f32 0.0, %v3912
        %v3914 = vpop.f32.mrf.mxu0
        %v3915 = vadd.f32 0.0, %v3914
        %3916 = vmatmul.bf16.gmra.mxu0 %v3820
        %v3917 = vpop.f32.mrf.mxu0
        %v3918 = vadd.f32 0.0, %v3917
        %v3919 = vpop.f32.mrf.mxu0
        %v3920 = vadd.f32 0.0, %v3919
        %3921 = vmatmul.bf16.gmra.mxu0 %v3821
        %v3922 = vpop.f32.mrf.mxu0
        %v3923 = vadd.f32 0.0, %v3922
        %v3924 = vpop.f32.mrf.mxu0
        %v3925 = vadd.f32 0.0, %v3924
        %3926 = vmatmul.bf16.gmra.mxu0 %v3822
        %v3927 = vpop.f32.mrf.mxu0
        %v3928 = vadd.f32 0.0, %v3927
        %v3929 = vpop.f32.mrf.mxu0
        %v3930 = vadd.f32 0.0, %v3929
        %3931 = vmatmul.bf16.gmra.mxu0 %v3823
        %v3932 = vpop.f32.mrf.mxu0
        %v3933 = vadd.f32 0.0, %v3932
        %v3934 = vpop.f32.mrf.mxu0
        %v3935 = vadd.f32 0.0, %v3934
        %3936 = vmatmul.bf16.gmra.mxu0 %v3824
        %v3937 = vpop.f32.mrf.mxu0
        %v3938 = vadd.f32 0.0, %v3937
        %v3939 = vpop.f32.mrf.mxu0
        %v3940 = vadd.f32 0.0, %v3939
        %3941 = vmatmul.bf16.gmra.mxu0 %v3825
        %v3942 = vpop.f32.mrf.mxu0
        %v3943 = vadd.f32 0.0, %v3942
        %v3944 = vpop.f32.mrf.mxu0
        %v3945 = vadd.f32 0.0, %v3944
        %3946 = vmatmul.bf16.gmra.mxu0 %v3826
        %v3947 = vpop.f32.mrf.mxu0
        %v3948 = vadd.f32 0.0, %v3947
        %v3949 = vpop.f32.mrf.mxu0
        %v3950 = vadd.f32 0.0, %v3949
        %3951 = vmatmul.bf16.gmra.mxu0 %v3827
        %v3952 = vpop.f32.mrf.mxu0
        %v3953 = vadd.f32 0.0, %v3952
        %v3954 = vpop.f32.mrf.mxu0
        %v3955 = vadd.f32 0.0, %v3954
        %3956 = vmatmul.bf16.gmra.mxu0 %v3828
        %v3957 = vpop.f32.mrf.mxu0
        %v3958 = vadd.f32 0.0, %v3957
        %v3959 = vpop.f32.mrf.mxu0
        %v3960 = vadd.f32 0.0, %v3959
        %3961 = vmatmul.bf16.gmra.mxu0 %v3829
        %v3962 = vpop.f32.mrf.mxu0
        %v3963 = vadd.f32 0.0, %v3962
        %v3964 = vpop.f32.mrf.mxu0
        %v3965 = vadd.f32 0.0, %v3964
        %3966 = vmatmul.bf16.gmra.mxu0 %v3830
        %v3967 = vpop.f32.mrf.mxu0
        %v3968 = vadd.f32 0.0, %v3967
        %v3969 = vpop.f32.mrf.mxu0
        %v3970 = vadd.f32 0.0, %v3969
        %3971 = vmatmul.bf16.gmra.mxu0 %v3831
        %v3972 = vpop.f32.mrf.mxu0
        %v3973 = vadd.f32 0.0, %v3972
        %v3974 = vpop.f32.mrf.mxu0
        %v3975 = vadd.f32 0.0, %v3974
        %3976 = vmatmul.bf16.gmra.mxu0 %v3832
        %v3977 = vpop.f32.mrf.mxu0
        %v3978 = vadd.f32 0.0, %v3977
        %v3979 = vpop.f32.mrf.mxu0
        %v3980 = vadd.f32 0.0, %v3979
        %3981 = vmatmul.bf16.gmra.mxu0 %v3833
        %v3982 = vpop.f32.mrf.mxu0
        %v3983 = vadd.f32 0.0, %v3982
        %v3984 = vpop.f32.mrf.mxu0
        %v3985 = vadd.f32 0.0, %v3984
        %3986 = vdwg.mxu0
        %v3987 = vld [vmem:[%s2 + $0x8a0] sm:$0xff]
        %v3988 = vld [vmem:[%s2 + $0x8b0] sm:$0xff]
        %v3990 = vsel %vm2408, %v3908, 0
        %v3993 = vsel %vm2408, %v3910, 0
        %v3996 = vsel %vm2408, %v3913, 0
        %v3999 = vsel %vm2408, %v3915, 0
        %v4002 = vsel %vm2408, %v3918, 0
        %v4005 = vsel %vm2408, %v3920, 0
        %v4008 = vsel %vm2408, %v3923, 0
        %v4011 = vsel %vm2408, %v3925, 0
        %v4014 = vsel %vm2408, %v3928, 0
        %v4017 = vsel %vm2408, %v3930, 0
        %v4020 = vsel %vm2408, %v3933, 0
        %v4023 = vsel %vm2408, %v3935, 0
        %v4026 = vsel %vm2408, %v3938, 0
        %v4029 = vsel %vm2408, %v3940, 0
        %v4032 = vsel %vm2408, %v3943, 0
        %v4035 = vsel %vm2408, %v3945, 0
        %4037 = vmatpush.msra.mxu0 0.0
        %4038 = vmatpush.msra.mxu0 0.0
        %4039 = vmatpush.msra.mxu0 0.0
        %4040 = vmatpush.msra.mxu0 0.0
        %4041 = vmatpush.msra.mxu0 0.0
        %4042 = vmatpush.msra.mxu0 0.0
        %4043 = vmatpush.msra.mxu0 0.0
        %4044 = vmatpush.msra.mxu0 0.0
        %4045 = vmatpush.msra.mxu0 0.0
        %4046 = vmatpush.msra.mxu0 0.0
        %4047 = vmatpush.msra.mxu0 0.0
        %4048 = vmatpush.msra.mxu0 0.0
        %4049 = vmatpush.msra.mxu0 0.0
        %4050 = vmatpush.msra.mxu0 0.0
        %4051 = vmatpush.msra.mxu0 0.0
        %4052 = vmatpush.msra.mxu0 %v3988
        %4053 = vmatmul.f32.gmra.mxu0 %v3990
        %v4054 = vpop.f32.mrf.mxu0
        %v4055 = vadd.f32 0.0, %v4054
        %4056 = vmatmul.f32.gmra.mxu0 %v3993
        %v4057 = vpop.f32.mrf.mxu0
        %v4058 = vadd.f32 0.0, %v4057
        %4059 = vmatmul.f32.gmra.mxu0 %v3996
        %v4060 = vpop.f32.mrf.mxu0
        %v4061 = vadd.f32 0.0, %v4060
        %4062 = vmatmul.f32.gmra.mxu0 %v3999
        %v4063 = vpop.f32.mrf.mxu0
        %v4064 = vadd.f32 0.0, %v4063
        %4065 = vmatmul.f32.gmra.mxu0 %v4002
        %v4066 = vpop.f32.mrf.mxu0
        %v4067 = vadd.f32 0.0, %v4066
        %4068 = vmatmul.f32.gmra.mxu0 %v4005
        %v4069 = vpop.f32.mrf.mxu0
        %v4070 = vadd.f32 0.0, %v4069
        %4071 = vmatmul.f32.gmra.mxu0 %v4008
        %v4072 = vpop.f32.mrf.mxu0
        %v4073 = vadd.f32 0.0, %v4072
        %4074 = vmatmul.f32.gmra.mxu0 %v4011
        %v4075 = vpop.f32.mrf.mxu0
        %v4076 = vadd.f32 0.0, %v4075
        %4077 = vmatmul.f32.gmra.mxu0 %v4014
        %v4078 = vpop.f32.mrf.mxu0
        %v4079 = vadd.f32 0.0, %v4078
        %4080 = vmatmul.f32.gmra.mxu0 %v4017
        %v4081 = vpop.f32.mrf.mxu0
        %v4082 = vadd.f32 0.0, %v4081
        %4083 = vmatmul.f32.gmra.mxu0 %v4020
        %v4084 = vpop.f32.mrf.mxu0
        %v4085 = vadd.f32 0.0, %v4084
        %4086 = vmatmul.f32.gmra.mxu0 %v4023
        %v4087 = vpop.f32.mrf.mxu0
        %v4088 = vadd.f32 0.0, %v4087
        %4089 = vmatmul.f32.gmra.mxu0 %v4026
        %v4090 = vpop.f32.mrf.mxu0
        %v4091 = vadd.f32 0.0, %v4090
        %4092 = vmatmul.f32.gmra.mxu0 %v4029
        %v4093 = vpop.f32.mrf.mxu0
        %v4094 = vadd.f32 0.0, %v4093
        %4095 = vmatmul.f32.gmra.mxu0 %v4032
        %v4096 = vpop.f32.mrf.mxu0
        %v4097 = vadd.f32 0.0, %v4096
        %4098 = vmatmul.f32.gmra.mxu0 %v4035
        %v4099 = vpop.f32.mrf.mxu0
        %v4100 = vadd.f32 0.0, %v4099
        %4101 = vdwg.mxu0
        %v4103 = vsel %vm2408, %v3868, 0
        %v4106 = vsel %vm2408, %v3870, 0
        %v4109 = vsel %vm2408, %v3873, 0
        %v4112 = vsel %vm2408, %v3875, 0
        %v4115 = vsel %vm2408, %v3878, 0
        %v4118 = vsel %vm2408, %v3880, 0
        %v4121 = vsel %vm2408, %v3883, 0
        %v4124 = vsel %vm2408, %v3885, 0
        %v4127 = vsel %vm2408, %v3888, 0
        %v4130 = vsel %vm2408, %v3890, 0
        %v4133 = vsel %vm2408, %v3893, 0
        %v4136 = vsel %vm2408, %v3895, 0
        %v4139 = vsel %vm2408, %v3898, 0
        %v4142 = vsel %vm2408, %v3900, 0
        %v4145 = vsel %vm2408, %v3903, 0
        %v4148 = vsel %vm2408, %v3905, 0
        %4150 = vmatpush.msra.mxu0 0.0
        %4151 = vmatpush.msra.mxu0 0.0
        %4152 = vmatpush.msra.mxu0 0.0
        %4153 = vmatpush.msra.mxu0 0.0
        %4154 = vmatpush.msra.mxu0 0.0
        %4155 = vmatpush.msra.mxu0 0.0
        %4156 = vmatpush.msra.mxu0 0.0
        %4157 = vmatpush.msra.mxu0 0.0
        %4158 = vmatpush.msra.mxu0 0.0
        %4159 = vmatpush.msra.mxu0 0.0
        %4160 = vmatpush.msra.mxu0 0.0
        %4161 = vmatpush.msra.mxu0 0.0
        %4162 = vmatpush.msra.mxu0 0.0
        %4163 = vmatpush.msra.mxu0 0.0
        %4164 = vmatpush.msra.mxu0 0.0
        %4165 = vmatpush.msra.mxu0 %v3987
        %4166 = vmatmul.f32.gmra.mxu0 %v4103
        %v4167 = vpop.f32.mrf.mxu0
        %v4168 = vadd.f32 %v4055, %v4167
        %4169 = vmatmul.f32.gmra.mxu0 %v4106
        %v4170 = vpop.f32.mrf.mxu0
        %v4171 = vadd.f32 %v4058, %v4170
        %4172 = vmatmul.f32.gmra.mxu0 %v4109
        %v4173 = vpop.f32.mrf.mxu0
        %v4174 = vadd.f32 %v4061, %v4173
        %4175 = vmatmul.f32.gmra.mxu0 %v4112
        %v4176 = vpop.f32.mrf.mxu0
        %v4177 = vadd.f32 %v4064, %v4176
        %4178 = vmatmul.f32.gmra.mxu0 %v4115
        %v4179 = vpop.f32.mrf.mxu0
        %v4180 = vadd.f32 %v4067, %v4179
        %4181 = vmatmul.f32.gmra.mxu0 %v4118
        %v4182 = vpop.f32.mrf.mxu0
        %v4183 = vadd.f32 %v4070, %v4182
        %4184 = vmatmul.f32.gmra.mxu0 %v4121
        %v4185 = vpop.f32.mrf.mxu0
        %v4186 = vadd.f32 %v4073, %v4185
        %4187 = vmatmul.f32.gmra.mxu0 %v4124
        %v4188 = vpop.f32.mrf.mxu0
        %v4189 = vadd.f32 %v4076, %v4188
        %4190 = vmatmul.f32.gmra.mxu0 %v4127
        %v4191 = vpop.f32.mrf.mxu0
        %v4192 = vadd.f32 %v4079, %v4191
        %4193 = vmatmul.f32.gmra.mxu0 %v4130
        %v4194 = vpop.f32.mrf.mxu0
        %v4195 = vadd.f32 %v4082, %v4194
        %4196 = vmatmul.f32.gmra.mxu0 %v4133
        %v4197 = vpop.f32.mrf.mxu0
        %v4198 = vadd.f32 %v4085, %v4197
        %4199 = vmatmul.f32.gmra.mxu0 %v4136
        %v4200 = vpop.f32.mrf.mxu0
        %v4201 = vadd.f32 %v4088, %v4200
        %4202 = vmatmul.f32.gmra.mxu0 %v4139
        %v4203 = vpop.f32.mrf.mxu0
        %v4204 = vadd.f32 %v4091, %v4203
        %4205 = vmatmul.f32.gmra.mxu0 %v4142
        %v4206 = vpop.f32.mrf.mxu0
        %v4207 = vadd.f32 %v4094, %v4206
        %4208 = vmatmul.f32.gmra.mxu0 %v4145
        %v4209 = vpop.f32.mrf.mxu0
        %v4210 = vadd.f32 %v4097, %v4209
        %4211 = vmatmul.f32.gmra.mxu0 %v4148
        %v4212 = vpop.f32.mrf.mxu0
        %v4213 = vadd.f32 %v4100, %v4212
        %4214 = vdwg.mxu0
        %v4215 = vld [vmem:[%s2 + $0x8c0] sm:$0xff]
        %v4217 = vsel %vm2408, %v3948, 0
        %v4220 = vsel %vm2408, %v3950, 0
        %v4223 = vsel %vm2408, %v3953, 0
        %v4226 = vsel %vm2408, %v3955, 0
        %v4229 = vsel %vm2408, %v3958, 0
        %v4232 = vsel %vm2408, %v3960, 0
        %v4235 = vsel %vm2408, %v3963, 0
        %v4238 = vsel %vm2408, %v3965, 0
        %v4241 = vsel %vm2408, %v3968, 0
        %v4244 = vsel %vm2408, %v3970, 0
        %v4247 = vsel %vm2408, %v3973, 0
        %v4250 = vsel %vm2408, %v3975, 0
        %v4253 = vsel %vm2408, %v3978, 0
        %v4256 = vsel %vm2408, %v3980, 0
        %v4259 = vsel %vm2408, %v3983, 0
        %v4262 = vsel %vm2408, %v3985, 0
        %4264 = vmatpush.msra.mxu0 0.0
        %4265 = vmatpush.msra.mxu0 0.0
        %4266 = vmatpush.msra.mxu0 0.0
        %4267 = vmatpush.msra.mxu0 0.0
        %4268 = vmatpush.msra.mxu0 0.0
        %4269 = vmatpush.msra.mxu0 0.0
        %4270 = vmatpush.msra.mxu0 0.0
        %4271 = vmatpush.msra.mxu0 0.0
        %4272 = vmatpush.msra.mxu0 0.0
        %4273 = vmatpush.msra.mxu0 0.0
        %4274 = vmatpush.msra.mxu0 0.0
        %4275 = vmatpush.msra.mxu0 0.0
        %4276 = vmatpush.msra.mxu0 0.0
        %4277 = vmatpush.msra.mxu0 0.0
        %4278 = vmatpush.msra.mxu0 0.0
        %4279 = vmatpush.msra.mxu0 %v4215
        %4280 = vmatmul.f32.gmra.mxu0 %v4217
        %v4281 = vpop.f32.mrf.mxu0
        %v4282 = vadd.f32 0.0, %v4281
        %4283 = vmatmul.f32.gmra.mxu0 %v4220
        %v4284 = vpop.f32.mrf.mxu0
        %v4285 = vadd.f32 0.0, %v4284
        %4286 = vmatmul.f32.gmra.mxu0 %v4223
        %v4287 = vpop.f32.mrf.mxu0
        %v4288 = vadd.f32 0.0, %v4287
        %4289 = vmatmul.f32.gmra.mxu0 %v4226
        %v4290 = vpop.f32.mrf.mxu0
        %v4291 = vadd.f32 0.0, %v4290
        %4292 = vmatmul.f32.gmra.mxu0 %v4229
        %v4293 = vpop.f32.mrf.mxu0
        %v4294 = vadd.f32 0.0, %v4293
        %4295 = vmatmul.f32.gmra.mxu0 %v4232
        %v4296 = vpop.f32.mrf.mxu0
        %v4297 = vadd.f32 0.0, %v4296
        %4298 = vmatmul.f32.gmra.mxu0 %v4235
        %v4299 = vpop.f32.mrf.mxu0
        %v4300 = vadd.f32 0.0, %v4299
        %4301 = vmatmul.f32.gmra.mxu0 %v4238
        %v4302 = vpop.f32.mrf.mxu0
        %v4303 = vadd.f32 0.0, %v4302
        %4304 = vmatmul.f32.gmra.mxu0 %v4241
        %v4305 = vpop.f32.mrf.mxu0
        %v4306 = vadd.f32 0.0, %v4305
        %4307 = vmatmul.f32.gmra.mxu0 %v4244
        %v4308 = vpop.f32.mrf.mxu0
        %v4309 = vadd.f32 0.0, %v4308
        %4310 = vmatmul.f32.gmra.mxu0 %v4247
        %v4311 = vpop.f32.mrf.mxu0
        %v4312 = vadd.f32 0.0, %v4311
        %4313 = vmatmul.f32.gmra.mxu0 %v4250
        %v4314 = vpop.f32.mrf.mxu0
        %v4315 = vadd.f32 0.0, %v4314
        %4316 = vmatmul.f32.gmra.mxu0 %v4253
        %v4317 = vpop.f32.mrf.mxu0
        %v4318 = vadd.f32 0.0, %v4317
        %4319 = vmatmul.f32.gmra.mxu0 %v4256
        %v4320 = vpop.f32.mrf.mxu0
        %v4321 = vadd.f32 0.0, %v4320
        %4322 = vmatmul.f32.gmra.mxu0 %v4259
        %v4323 = vpop.f32.mrf.mxu0
        %v4324 = vadd.f32 0.0, %v4323
        %4325 = vmatmul.f32.gmra.mxu0 %v4262
        %v4326 = vpop.f32.mrf.mxu0
        %v4327 = vadd.f32 0.0, %v4326
        %4328 = vdwg.mxu0
        %v4329 = vadd.f32 %v4168, %v4282
        %v4330 = vadd.f32 %v4171, %v4285
        %v4331 = vadd.f32 %v4174, %v4288
        %v4332 = vadd.f32 %v4177, %v4291
        %v4333 = vadd.f32 %v4180, %v4294
        %v4334 = vadd.f32 %v4183, %v4297
        %v4335 = vadd.f32 %v4186, %v4300
        %v4336 = vadd.f32 %v4189, %v4303
        %v4337 = vadd.f32 %v4192, %v4306
        %v4338 = vadd.f32 %v4195, %v4309
        %v4339 = vadd.f32 %v4198, %v4312
        %v4340 = vadd.f32 %v4201, %v4315
        %v4341 = vadd.f32 %v4204, %v4318
        %v4342 = vadd.f32 %v4207, %v4321
        %v4343 = vadd.f32 %v4210, %v4324
        %v4344 = vadd.f32 %v4213, %v4327
        %v4345 = vld [vmem:[%s2 + $0x8d0] sm:$0xff]
        %v4346 = vld [vmem:[%s2 + $0x8e0] sm:$0xff]
        %v4347 = vld [vmem:[%s2 + $0x8f0] sm:$0xff]
        %v4348 = vld [vmem:[%s2 + $0x900] sm:$0xff]
        %v4349 = vld [vmem:[%s2 + $0x910] sm:$0xff]
        %v4350 = vld [vmem:[%s2 + $0x920] sm:$0xff]
        %v4351 = vld [vmem:[%s2 + $0x930] sm:$0xff]
        %v4352 = vld [vmem:[%s2 + $0x940] sm:$0xff]
        %v4353 = vld [vmem:[%s2 + $0x950] sm:$0xff]
        %v4354 = vld [vmem:[%s2 + $0x960] sm:$0xff]
        %v4355 = vld [vmem:[%s2 + $0x970] sm:$0xff]
        %v4356 = vld [vmem:[%s2 + $0x980] sm:$0xff]
        %v4357 = vld [vmem:[%s2 + $0x990] sm:$0xff]
        %v4358 = vld [vmem:[%s2 + $0x9a0] sm:$0xff]
        %v4359 = vld [vmem:[%s2 + $0x9b0] sm:$0xff]
        %v4360 = vld [vmem:[%s2 + $0x9c0] sm:$0xff]
        %4362 = vset.pattern.permute.xlu0 0
        %4363 = vperm.xlu0 %4362, %v4345
        %v4364 = vpop.permute.xlu0 %4363
        %4367 = vset.pattern.permute.xlu0 0
        %4368 = vperm.xlu0 %4367, %v4346
        %v4369 = vpop.permute.xlu0 %4368
        %4372 = vset.pattern.permute.xlu0 0
        %4373 = vperm.xlu0 %4372, %v4347
        %v4374 = vpop.permute.xlu0 %4373
        %4377 = vset.pattern.permute.xlu0 0
        %4378 = vperm.xlu0 %4377, %v4348
        %v4379 = vpop.permute.xlu0 %4378
        %4382 = vset.pattern.permute.xlu0 0
        %4383 = vperm.xlu0 %4382, %v4349
        %v4384 = vpop.permute.xlu0 %4383
        %4387 = vset.pattern.permute.xlu0 0
        %4388 = vperm.xlu0 %4387, %v4350
        %v4389 = vpop.permute.xlu0 %4388
        %4392 = vset.pattern.permute.xlu0 0
        %4393 = vperm.xlu0 %4392, %v4351
        %v4394 = vpop.permute.xlu0 %4393
        %4397 = vset.pattern.permute.xlu0 0
        %4398 = vperm.xlu0 %4397, %v4352
        %v4399 = vpop.permute.xlu0 %4398
        %4402 = vset.pattern.permute.xlu0 0
        %4403 = vperm.xlu0 %4402, %v4353
        %v4404 = vpop.permute.xlu0 %4403
        %4407 = vset.pattern.permute.xlu0 0
        %4408 = vperm.xlu0 %4407, %v4354
        %v4409 = vpop.permute.xlu0 %4408
        %4412 = vset.pattern.permute.xlu0 0
        %4413 = vperm.xlu0 %4412, %v4355
        %v4414 = vpop.permute.xlu0 %4413
        %4417 = vset.pattern.permute.xlu0 0
        %4418 = vperm.xlu0 %4417, %v4356
        %v4419 = vpop.permute.xlu0 %4418
        %4422 = vset.pattern.permute.xlu0 0
        %4423 = vperm.xlu0 %4422, %v4357
        %v4424 = vpop.permute.xlu0 %4423
        %4427 = vset.pattern.permute.xlu0 0
        %4428 = vperm.xlu0 %4427, %v4358
        %v4429 = vpop.permute.xlu0 %4428
        %4432 = vset.pattern.permute.xlu0 0
        %4433 = vperm.xlu0 %4432, %v4359
        %v4434 = vpop.permute.xlu0 %4433
        %4437 = vset.pattern.permute.xlu0 0
        %4438 = vperm.xlu0 %4437, %v4360
        %v4439 = vpop.permute.xlu0 %4438
        %v4441 = vadd.f32 %v4329, %v4364
        %v4442 = vadd.f32 %v4330, %v4369
        %v4443 = vadd.f32 %v4331, %v4374
        %v4444 = vadd.f32 %v4332, %v4379
        %v4445 = vadd.f32 %v4333, %v4384
        %v4446 = vadd.f32 %v4334, %v4389
        %v4447 = vadd.f32 %v4335, %v4394
        %v4448 = vadd.f32 %v4336, %v4399
        %v4449 = vadd.f32 %v4337, %v4404
        %v4450 = vadd.f32 %v4338, %v4409
        %v4451 = vadd.f32 %v4339, %v4414
        %v4452 = vadd.f32 %v4340, %v4419
        %v4453 = vadd.f32 %v4341, %v4424
        %v4454 = vadd.f32 %v4342, %v4429
        %v4455 = vadd.f32 %v4343, %v4434
        %v4456 = vadd.f32 %v4344, %v4439
        %v4457 = vsel %vm2408, %v4441, 0.0
        %v4458 = vsel %vm2408, %v4442, 0.0
        %v4459 = vadd.f32 %v4457, %v4458
        %v4460 = vsel %vm2408, %v4443, 0.0
        %v4461 = vadd.f32 %v4459, %v4460
        %v4462 = vsel %vm2408, %v4444, 0.0
        %v4463 = vadd.f32 %v4461, %v4462
        %v4464 = vsel %vm2408, %v4445, 0.0
        %v4465 = vadd.f32 %v4463, %v4464
        %v4466 = vsel %vm2408, %v4446, 0.0
        %v4467 = vadd.f32 %v4465, %v4466
        %v4468 = vsel %vm2408, %v4447, 0.0
        %v4469 = vadd.f32 %v4467, %v4468
        %v4470 = vsel %vm2408, %v4448, 0.0
        %v4471 = vadd.f32 %v4469, %v4470
        %v4472 = vsel %vm2408, %v4449, 0.0
        %v4473 = vadd.f32 %v4471, %v4472
        %v4474 = vsel %vm2408, %v4450, 0.0
        %v4475 = vadd.f32 %v4473, %v4474
        %v4476 = vsel %vm2408, %v4451, 0.0
        %v4477 = vadd.f32 %v4475, %v4476
        %v4478 = vsel %vm2408, %v4452, 0.0
        %v4479 = vadd.f32 %v4477, %v4478
        %v4480 = vsel %vm2408, %v4453, 0.0
        %v4481 = vadd.f32 %v4479, %v4480
        %v4482 = vsel %vm2408, %v4454, 0.0
        %v4483 = vadd.f32 %v4481, %v4482
        %v4484 = vsel %vm2408, %v4455, 0.0
        %v4485 = vadd.f32 %v4483, %v4484
        %v4486 = vsel %vm2408, %v4456, 0.0
        %v4487 = vadd.f32 %v4485, %v4486
        %4488 = vadd.xlane.f32.xlu0 %v4487
        %v4489 = vpop.xlane.xlu0 %4488
        %v4490 = vrot.slane %v4489, 4
        %v4491 = vadd.f32 %v4489, %v4490
        %v4492 = vrot.slane %v4491, 2
        %v4493 = vadd.f32 %v4491, %v4492
        %v4494 = vrot.slane %v4493, 1
        %v4495 = vadd.f32 %v4493, %v4494
        %s4496 = vtos %v4495
        %s4497 = smul.f32 %s4496, 0.0009765625
        %v4498 = vstv %s4497
        %v4499 = vsub.f32 %v4441, %v4498
        %v4500 = vsub.f32 %v4442, %v4498
        %v4501 = vsub.f32 %v4443, %v4498
        %v4502 = vsub.f32 %v4444, %v4498
        %v4503 = vsub.f32 %v4445, %v4498
        %v4504 = vsub.f32 %v4446, %v4498
        %v4505 = vsub.f32 %v4447, %v4498
        %v4506 = vsub.f32 %v4448, %v4498
        %v4507 = vsub.f32 %v4449, %v4498
        %v4508 = vsub.f32 %v4450, %v4498
        %v4509 = vsub.f32 %v4451, %v4498
        %v4510 = vsub.f32 %v4452, %v4498
        %v4511 = vsub.f32 %v4453, %v4498
        %v4512 = vsub.f32 %v4454, %v4498
        %v4513 = vsub.f32 %v4455, %v4498
        %v4514 = vsub.f32 %v4456, %v4498
        %v4515 = vmul.f32 %v4499, %v4499
        %v4516 = vmul.f32 %v4500, %v4500
        %v4517 = vmul.f32 %v4501, %v4501
        %v4518 = vmul.f32 %v4502, %v4502
        %v4519 = vmul.f32 %v4503, %v4503
        %v4520 = vmul.f32 %v4504, %v4504
        %v4521 = vmul.f32 %v4505, %v4505
        %v4522 = vmul.f32 %v4506, %v4506
        %v4523 = vmul.f32 %v4507, %v4507
        %v4524 = vmul.f32 %v4508, %v4508
        %v4525 = vmul.f32 %v4509, %v4509
        %v4526 = vmul.f32 %v4510, %v4510
        %v4527 = vmul.f32 %v4511, %v4511
        %v4528 = vmul.f32 %v4512, %v4512
        %v4529 = vmul.f32 %v4513, %v4513
        %v4530 = vmul.f32 %v4514, %v4514
        %v4531 = vsel %vm2408, %v4515, 0.0
        %v4532 = vsel %vm2408, %v4516, 0.0
        %v4533 = vadd.f32 %v4531, %v4532
        %v4534 = vsel %vm2408, %v4517, 0.0
        %v4535 = vadd.f32 %v4533, %v4534
        %v4536 = vsel %vm2408, %v4518, 0.0
        %v4537 = vadd.f32 %v4535, %v4536
        %v4538 = vsel %vm2408, %v4519, 0.0
        %v4539 = vadd.f32 %v4537, %v4538
        %v4540 = vsel %vm2408, %v4520, 0.0
        %v4541 = vadd.f32 %v4539, %v4540
        %v4542 = vsel %vm2408, %v4521, 0.0
        %v4543 = vadd.f32 %v4541, %v4542
        %v4544 = vsel %vm2408, %v4522, 0.0
        %v4545 = vadd.f32 %v4543, %v4544
        %v4546 = vsel %vm2408, %v4523, 0.0
        %v4547 = vadd.f32 %v4545, %v4546
        %v4548 = vsel %vm2408, %v4524, 0.0
        %v4549 = vadd.f32 %v4547, %v4548
        %v4550 = vsel %vm2408, %v4525, 0.0
        %v4551 = vadd.f32 %v4549, %v4550
        %v4552 = vsel %vm2408, %v4526, 0.0
        %v4553 = vadd.f32 %v4551, %v4552
        %v4554 = vsel %vm2408, %v4527, 0.0
        %v4555 = vadd.f32 %v4553, %v4554
        %v4556 = vsel %vm2408, %v4528, 0.0
        %v4557 = vadd.f32 %v4555, %v4556
        %v4558 = vsel %vm2408, %v4529, 0.0
        %v4559 = vadd.f32 %v4557, %v4558
        %v4560 = vsel %vm2408, %v4530, 0.0
        %v4561 = vadd.f32 %v4559, %v4560
        %4562 = vadd.xlane.f32.xlu0 %v4561
        %v4563 = vpop.xlane.xlu0 %4562
        %v4564 = vrot.slane %v4563, 4
        %v4565 = vadd.f32 %v4563, %v4564
        %v4566 = vrot.slane %v4565, 2
        %v4567 = vadd.f32 %v4565, %v4566
        %v4568 = vrot.slane %v4567, 1
        %v4569 = vadd.f32 %v4567, %v4568
        %s4570 = vtos %v4569
        %s4571 = smul.f32 %s4570, 0.0009765625
        %v4572 = vld [vmem:[%s2 + $0x9d0] sm:$0xff]
        %v4573 = vld [vmem:[%s2 + $0x9e0] sm:$0xff]
        %v4574 = vld [vmem:[%s2 + $0x9f0] sm:$0xff]
        %v4575 = vld [vmem:[%s2 + $0xa00] sm:$0xff]
        %v4576 = vld [vmem:[%s2 + $0xa10] sm:$0xff]
        %v4577 = vld [vmem:[%s2 + $0xa20] sm:$0xff]
        %v4578 = vld [vmem:[%s2 + $0xa30] sm:$0xff]
        %v4579 = vld [vmem:[%s2 + $0xa40] sm:$0xff]
        %v4580 = vld [vmem:[%s2 + $0xa50] sm:$0xff]
        %v4581 = vld [vmem:[%s2 + $0xa60] sm:$0xff]
        %v4582 = vld [vmem:[%s2 + $0xa70] sm:$0xff]
        %v4583 = vld [vmem:[%s2 + $0xa80] sm:$0xff]
        %v4584 = vld [vmem:[%s2 + $0xa90] sm:$0xff]
        %v4585 = vld [vmem:[%s2 + $0xaa0] sm:$0xff]
        %v4586 = vld [vmem:[%s2 + $0xab0] sm:$0xff]
        %v4587 = vld [vmem:[%s2 + $0xac0] sm:$0xff]
        %v4588 = vld [vmem:[%s2 + $0xad0] sm:$0xff]
        %v4589 = vld [vmem:[%s2 + $0xae0] sm:$0xff]
        %v4590 = vld [vmem:[%s2 + $0xaf0] sm:$0xff]
        %v4591 = vld [vmem:[%s2 + $0xb00] sm:$0xff]
        %v4592 = vld [vmem:[%s2 + $0xb10] sm:$0xff]
        %v4593 = vld [vmem:[%s2 + $0xb20] sm:$0xff]
        %v4594 = vld [vmem:[%s2 + $0xb30] sm:$0xff]
        %v4595 = vld [vmem:[%s2 + $0xb40] sm:$0xff]
        %v4596 = vld [vmem:[%s2 + $0xb50] sm:$0xff]
        %v4597 = vld [vmem:[%s2 + $0xb60] sm:$0xff]
        %v4598 = vld [vmem:[%s2 + $0xb70] sm:$0xff]
        %v4599 = vld [vmem:[%s2 + $0xb80] sm:$0xff]
        %v4600 = vld [vmem:[%s2 + $0xb90] sm:$0xff]
        %v4601 = vld [vmem:[%s2 + $0xba0] sm:$0xff]
        %v4602 = vld [vmem:[%s2 + $0xbb0] sm:$0xff]
        %v4603 = vld [vmem:[%s2 + $0xbc0] sm:$0xff]
        %s4604 = sadd.f32 %s4571, 1e-05
        %v4605 = vstv %s4604
        %v4606 = vrsqrt.pop %v4605
        %v4607 = vmul.f32 %v4606, %v4605
        %v4608 = vmul.f32 %v4607, %v4606
        %v4609 = vmul.f32 0.5, %v4608
        %v4610 = vsub.f32 1.5, %v4609
        %v4611 = vmul.f32 %v4606, %v4610
        %vm4612 = vweird.f32 %v4605
        %vm4613 = vweird.f32 %v4606
        %vm4614 = vmor %vm4612, %vm4613
        %v4615 = vsel %vm4614, %v4606, %v4611
        %s4616 = vtos %v4615
        %v4617 = vstv %s4616
        %v4618 = vmul.f32 %v4499, %v4617
        %v4619 = vmul.f32 %v4500, %v4617
        %v4620 = vmul.f32 %v4501, %v4617
        %v4621 = vmul.f32 %v4502, %v4617
        %v4622 = vmul.f32 %v4503, %v4617
        %v4623 = vmul.f32 %v4504, %v4617
        %v4624 = vmul.f32 %v4505, %v4617
        %v4625 = vmul.f32 %v4506, %v4617
        %v4626 = vmul.f32 %v4507, %v4617
        %v4627 = vmul.f32 %v4508, %v4617
        %v4628 = vmul.f32 %v4509, %v4617
        %v4629 = vmul.f32 %v4510, %v4617
        %v4630 = vmul.f32 %v4511, %v4617
        %v4631 = vmul.f32 %v4512, %v4617
        %v4632 = vmul.f32 %v4513, %v4617
        %v4633 = vmul.f32 %v4514, %v4617
        %v4634 = vmul.f32 %v4618, %v4572
        %v4635 = vmul.f32 %v4619, %v4573
        %v4636 = vmul.f32 %v4620, %v4574
        %v4637 = vmul.f32 %v4621, %v4575
        %v4638 = vmul.f32 %v4622, %v4576
        %v4639 = vmul.f32 %v4623, %v4577
        %v4640 = vmul.f32 %v4624, %v4578
        %v4641 = vmul.f32 %v4625, %v4579
        %v4642 = vmul.f32 %v4626, %v4580
        %v4643 = vmul.f32 %v4627, %v4581
        %v4644 = vmul.f32 %v4628, %v4582
        %v4645 = vmul.f32 %v4629, %v4583
        %v4646 = vmul.f32 %v4630, %v4584
        %v4647 = vmul.f32 %v4631, %v4585
        %v4648 = vmul.f32 %v4632, %v4586
        %v4649 = vmul.f32 %v4633, %v4587
        %v4650 = vadd.f32 %v4634, %v4588
        %v4651 = vadd.f32 %v4635, %v4589
        %v4652 = vadd.f32 %v4636, %v4590
        %v4653 = vadd.f32 %v4637, %v4591
        %v4654 = vadd.f32 %v4638, %v4592
        %v4655 = vadd.f32 %v4639, %v4593
        %v4656 = vadd.f32 %v4640, %v4594
        %v4657 = vadd.f32 %v4641, %v4595
        %v4658 = vadd.f32 %v4642, %v4596
        %v4659 = vadd.f32 %v4643, %v4597
        %v4660 = vadd.f32 %v4644, %v4598
        %v4661 = vadd.f32 %v4645, %v4599
        %v4662 = vadd.f32 %v4646, %v4600
        %v4663 = vadd.f32 %v4647, %v4601
        %v4664 = vadd.f32 %v4648, %v4602
        %v4665 = vadd.f32 %v4649, %v4603
        %v4666 = vmax.f32 %v4650, 0.0
        %v4667 = vmax.f32 %v4651, 0.0
        %v4668 = vmax.f32 %v4652, 0.0
        %v4669 = vmax.f32 %v4653, 0.0
        %v4670 = vmax.f32 %v4654, 0.0
        %v4671 = vmax.f32 %v4655, 0.0
        %v4672 = vmax.f32 %v4656, 0.0
        %v4673 = vmax.f32 %v4657, 0.0
        %v4674 = vmax.f32 %v4658, 0.0
        %v4675 = vmax.f32 %v4659, 0.0
        %v4676 = vmax.f32 %v4660, 0.0
        %v4677 = vmax.f32 %v4661, 0.0
        %v4678 = vmax.f32 %v4662, 0.0
        %v4679 = vmax.f32 %v4663, 0.0
        %v4680 = vmax.f32 %v4664, 0.0
        %v4681 = vmax.f32 %v4665, 0.0
        %v4682 = vadd.f32 %v2618, %v4666
        %v4683 = vadd.f32 %v2619, %v4667
        %v4684 = vadd.f32 %v2620, %v4668
        %v4685 = vadd.f32 %v2621, %v4669
        %v4686 = vadd.f32 %v2622, %v4670
        %v4687 = vadd.f32 %v2623, %v4671
        %v4688 = vadd.f32 %v2624, %v4672
        %v4689 = vadd.f32 %v2625, %v4673
        %v4690 = vadd.f32 %v2626, %v4674
        %v4691 = vadd.f32 %v2627, %v4675
        %v4692 = vadd.f32 %v2628, %v4676
        %v4693 = vadd.f32 %v2629, %v4677
        %v4694 = vadd.f32 %v2630, %v4678
        %v4695 = vadd.f32 %v2631, %v4679
        %v4696 = vadd.f32 %v2632, %v4680
        %v4697 = vadd.f32 %v2633, %v4681
        %v4698 = vld [vmem:[%s1 + $0x740] sm:$0xf]
        %v4699 = vld [vmem:[%s1 + $0x748] sm:$0xf]
        %v4700 = vld [vmem:[%s1 + $0x750] sm:$0xf]
        %v4701 = vld [vmem:[%s1 + $0x758] sm:$0xf]
        %v4702 = vld [vmem:[%s1 + $0x760] sm:$0xf]
        %v4703 = vld [vmem:[%s1 + $0x768] sm:$0xf]
        %v4704 = vld [vmem:[%s1 + $0x770] sm:$0xf]
        %v4705 = vld [vmem:[%s1 + $0x778] sm:$0xf]
        %v4706 = vld [vmem:[%s1 + $0x780] sm:$0xf]
        %v4707 = vld [vmem:[%s1 + $0x788] sm:$0xf]
        %v4708 = vld [vmem:[%s1 + $0x790] sm:$0xf]
        %v4709 = vld [vmem:[%s1 + $0x798] sm:$0xf]
        %v4710 = vld [vmem:[%s1 + $0x7a0] sm:$0xf]
        %v4711 = vld [vmem:[%s1 + $0x7a8] sm:$0xf]
        %v4712 = vld [vmem:[%s1 + $0x7b0] sm:$0xf]
        %v4713 = vld [vmem:[%s1 + $0x7b8] sm:$0xf]
        %v4714 = vld [vmem:[%s1 + $0x7c0] sm:$0xf]
        %v4715 = vld [vmem:[%s1 + $0x7c8] sm:$0xf]
        %v4716 = vld [vmem:[%s1 + $0x7d0] sm:$0xf]
        %v4717 = vld [vmem:[%s1 + $0x7d8] sm:$0xf]
        %v4718 = vld [vmem:[%s1 + $0x7e0] sm:$0xf]
        %v4719 = vld [vmem:[%s1 + $0x7e8] sm:$0xf]
        %v4720 = vld [vmem:[%s1 + $0x7f0] sm:$0xf]
        %v4721 = vld [vmem:[%s1 + $0x7f8] sm:$0xf]
        %v4722 = vld [vmem:[%s1 + $0x800] sm:$0xf]
        %v4723 = vld [vmem:[%s1 + $0x808] sm:$0xf]
        %v4724 = vld [vmem:[%s1 + $0x810] sm:$0xf]
        %v4725 = vld [vmem:[%s1 + $0x818] sm:$0xf]
        %v4726 = vld [vmem:[%s1 + $0x820] sm:$0xf]
        %v4727 = vld [vmem:[%s1 + $0x828] sm:$0xf]
        %v4728 = vld [vmem:[%s1 + $0x830] sm:$0xf]
        %v4729 = vld [vmem:[%s1 + $0x838] sm:$0xf]
        %v4730 = vld [vmem:[%s1 + $0x840] sm:$0xf]
        %v4731 = vld [vmem:[%s1 + $0x848] sm:$0xf]
        %v4732 = vld [vmem:[%s1 + $0x850] sm:$0xf]
        %v4733 = vld [vmem:[%s1 + $0x858] sm:$0xf]
        %v4734 = vld [vmem:[%s1 + $0x860] sm:$0xf]
        %v4735 = vld [vmem:[%s1 + $0x868] sm:$0xf]
        %v4736 = vld [vmem:[%s1 + $0x870] sm:$0xf]
        %v4737 = vld [vmem:[%s1 + $0x878] sm:$0xf]
        %v4738 = vld [vmem:[%s1 + $0x880] sm:$0xf]
        %v4739 = vld [vmem:[%s1 + $0x888] sm:$0xf]
        %v4740 = vld [vmem:[%s1 + $0x890] sm:$0xf]
        %v4741 = vld [vmem:[%s1 + $0x898] sm:$0xf]
        %v4742 = vld [vmem:[%s1 + $0x8a0] sm:$0xf]
        %v4743 = vld [vmem:[%s1 + $0x8a8] sm:$0xf]
        %v4744 = vld [vmem:[%s1 + $0x8b0] sm:$0xf]
        %v4745 = vld [vmem:[%s1 + $0x8b8] sm:$0xf]
        %v4746 = vld [vmem:[%s1 + $0x8c0] sm:$0xf]
        %v4747 = vld [vmem:[%s1 + $0x8c8] sm:$0xf]
        %v4748 = vpack.c.bf16 %v4683, %v4682
        %v4749 = vpack.c.bf16 %v4685, %v4684
        %v4750 = vpack.c.bf16 %v4687, %v4686
        %v4751 = vpack.c.bf16 %v4689, %v4688
        %v4752 = vpack.c.bf16 %v4691, %v4690
        %v4753 = vpack.c.bf16 %v4693, %v4692
        %v4754 = vpack.c.bf16 %v4695, %v4694
        %v4755 = vpack.c.bf16 %v4697, %v4696
        %v4806 = vunpack.c.l.b16 %v4698
        %v4807 = vunpack.c.l.b16 %v4699
        %v4808 = vunpack.c.l.b16 %v4700
        %v4809 = vunpack.c.l.b16 %v4701
        %v4810 = vunpack.c.l.b16 %v4702
        %v4811 = vunpack.c.l.b16 %v4703
        %v4812 = vunpack.c.l.b16 %v4704
        %v4813 = vunpack.c.l.b16 %v4705
        %v4814 = vunpack.c.l.b16 %v4706
        %v4815 = vunpack.c.l.b16 %v4707
        %v4816 = vunpack.c.l.b16 %v4708
        %v4817 = vunpack.c.l.b16 %v4709
        %v4818 = vunpack.c.l.b16 %v4710
        %v4819 = vunpack.c.l.b16 %v4711
        %v4820 = vunpack.c.l.b16 %v4712
        %v4821 = vunpack.c.l.b16 %v4713
        %v4822 = vunpack.c.l.b16 %v4714
        %v4823 = vunpack.c.l.b16 %v4715
        %v4824 = vunpack.c.l.b16 %v4716
        %v4825 = vunpack.c.l.b16 %v4717
        %v4826 = vunpack.c.l.b16 %v4718
        %v4827 = vunpack.c.l.b16 %v4719
        %v4828 = vunpack.c.l.b16 %v4720
        %v4829 = vunpack.c.l.b16 %v4721
        %v4830 = vunpack.c.l.b16 %v4722
        %v4831 = vunpack.c.l.b16 %v4723
        %v4832 = vunpack.c.l.b16 %v4724
        %v4833 = vunpack.c.l.b16 %v4725
        %v4834 = vunpack.c.l.b16 %v4726
        %v4835 = vunpack.c.l.b16 %v4727
        %v4836 = vunpack.c.l.b16 %v4728
        %v4837 = vunpack.c.l.b16 %v4729
        %v4838 = vunpack.c.l.b16 %v4730
        %v4839 = vunpack.c.l.b16 %v4731
        %v4840 = vunpack.c.l.b16 %v4732
        %v4841 = vunpack.c.l.b16 %v4733
        %v4842 = vunpack.c.l.b16 %v4734
        %v4843 = vunpack.c.l.b16 %v4735
        %v4844 = vunpack.c.l.b16 %v4736
        %v4845 = vunpack.c.l.b16 %v4737
        %v4846 = vunpack.c.l.b16 %v4738
        %v4847 = vunpack.c.l.b16 %v4739
        %v4848 = vunpack.c.l.b16 %v4740
        %v4849 = vunpack.c.l.b16 %v4741
        %v4850 = vunpack.c.l.b16 %v4742
        %v4851 = vunpack.c.l.b16 %v4743
        %v4852 = vunpack.c.l.b16 %v4744
        %v4853 = vunpack.c.l.b16 %v4745
        %v4854 = vunpack.c.l.b16 %v4746
        %v4855 = vunpack.c.l.b16 %v4747
        %v4856 = vpack.c.b16 %v4807, %v4806
        %v4857 = vpack.c.b16 %v4809, %v4808
        %v4858 = vpack.c.b16 %v4811, %v4810
        %v4859 = vpack.c.b16 %v4813, %v4812
        %v4860 = vpack.c.b16 %v4815, %v4814
        %v4861 = vpack.c.b16 %v4817, %v4816
        %v4862 = vpack.c.b16 %v4819, %v4818
        %v4863 = vpack.c.b16 %v4821, %v4820
        %v4864 = vpack.c.b16 %v4823, %v4822
        %v4865 = vpack.c.b16 %v4825, %v4824
        %v4866 = vpack.c.b16 %v4827, %v4826
        %v4867 = vpack.c.b16 %v4829, %v4828
        %v4868 = vpack.c.b16 %v4831, %v4830
        %v4869 = vpack.c.b16 %v4833, %v4832
        %v4870 = vpack.c.b16 %v4835, %v4834
        %v4871 = vpack.c.b16 %v4837, %v4836
        %v4872 = vpack.c.b16 %v4839, %v4838
        %v4873 = vpack.c.b16 %v4841, %v4840
        %v4874 = vpack.c.b16 %v4843, %v4842
        %v4875 = vpack.c.b16 %v4845, %v4844
        %v4876 = vpack.c.b16 %v4847, %v4846
        %v4877 = vpack.c.b16 %v4849, %v4848
        %v4878 = vpack.c.b16 %v4851, %v4850
        %v4879 = vpack.c.b16 %v4853, %v4852
        %v4880 = vpack.c.b16 %v4855, %v4854
        %4906 = vmatpush.bf16.msra.mxu0 %v4755
        %4907 = vmatpush.bf16.msra.mxu0 %v4754
        %4908 = vmatpush.bf16.msra.mxu0 %v4753
        %4909 = vmatpush.bf16.msra.mxu0 %v4752
        %4910 = vmatpush.bf16.msra.mxu0 %v4751
        %4911 = vmatpush.bf16.msra.mxu0 %v4750
        %4912 = vmatpush.bf16.msra.mxu0 %v4749
        %4913 = vmatpush.bf16.msra.mxu0 %v4748
        %4914 = vmatmul.bf16.gmra.mxu0 %v4856
        %v4915 = vpop.f32.mrf.mxu0
        %v4916 = vadd.f32 0.0, %v4915
        %v4917 = vpop.f32.mrf.mxu0
        %v4918 = vadd.f32 0.0, %v4917
        %4919 = vmatmul.bf16.gmra.mxu0 %v4857
        %v4920 = vpop.f32.mrf.mxu0
        %v4921 = vadd.f32 0.0, %v4920
        %v4922 = vpop.f32.mrf.mxu0
        %v4923 = vadd.f32 0.0, %v4922
        %4924 = vmatmul.bf16.gmra.mxu0 %v4858
        %v4925 = vpop.f32.mrf.mxu0
        %v4926 = vadd.f32 0.0, %v4925
        %v4927 = vpop.f32.mrf.mxu0
        %v4928 = vadd.f32 0.0, %v4927
        %4929 = vmatmul.bf16.gmra.mxu0 %v4859
        %v4930 = vpop.f32.mrf.mxu0
        %v4931 = vadd.f32 0.0, %v4930
        %v4932 = vpop.f32.mrf.mxu0
        %v4933 = vadd.f32 0.0, %v4932
        %4934 = vmatmul.bf16.gmra.mxu0 %v4860
        %v4935 = vpop.f32.mrf.mxu0
        %v4936 = vadd.f32 0.0, %v4935
        %v4937 = vpop.f32.mrf.mxu0
        %v4938 = vadd.f32 0.0, %v4937
        %4939 = vmatmul.bf16.gmra.mxu0 %v4861
        %v4940 = vpop.f32.mrf.mxu0
        %v4941 = vadd.f32 0.0, %v4940
        %v4942 = vpop.f32.mrf.mxu0
        %v4943 = vadd.f32 0.0, %v4942
        %4944 = vmatmul.bf16.gmra.mxu0 %v4862
        %v4945 = vpop.f32.mrf.mxu0
        %v4946 = vadd.f32 0.0, %v4945
        %v4947 = vpop.f32.mrf.mxu0
        %v4948 = vadd.f32 0.0, %v4947
        %4949 = vmatmul.bf16.gmra.mxu0 %v4863
        %v4950 = vpop.f32.mrf.mxu0
        %v4951 = vadd.f32 0.0, %v4950
        %v4952 = vpop.f32.mrf.mxu0
        %v4953 = vadd.f32 0.0, %v4952
        %4954 = vmatmul.bf16.gmra.mxu0 %v4864
        %v4955 = vpop.f32.mrf.mxu0
        %v4956 = vadd.f32 0.0, %v4955
        %v4957 = vpop.f32.mrf.mxu0
        %v4958 = vadd.f32 0.0, %v4957
        %4959 = vmatmul.bf16.gmra.mxu0 %v4865
        %v4960 = vpop.f32.mrf.mxu0
        %v4961 = vadd.f32 0.0, %v4960
        %v4962 = vpop.f32.mrf.mxu0
        %v4963 = vadd.f32 0.0, %v4962
        %4964 = vmatmul.bf16.gmra.mxu0 %v4866
        %v4965 = vpop.f32.mrf.mxu0
        %v4966 = vadd.f32 0.0, %v4965
        %v4967 = vpop.f32.mrf.mxu0
        %v4968 = vadd.f32 0.0, %v4967
        %4969 = vmatmul.bf16.gmra.mxu0 %v4867
        %v4970 = vpop.f32.mrf.mxu0
        %v4971 = vadd.f32 0.0, %v4970
        %v4972 = vpop.f32.mrf.mxu0
        %v4973 = vadd.f32 0.0, %v4972
        %4974 = vmatmul.bf16.gmra.mxu0 %v4868
        %v4975 = vpop.f32.mrf.mxu0
        %v4976 = vadd.f32 0.0, %v4975
        %v4977 = vpop.f32.mrf.mxu0
        %v4978 = vadd.f32 0.0, %v4977
        %4979 = vmatmul.bf16.gmra.mxu0 %v4869
        %v4980 = vpop.f32.mrf.mxu0
        %v4981 = vadd.f32 0.0, %v4980
        %v4982 = vpop.f32.mrf.mxu0
        %v4983 = vadd.f32 0.0, %v4982
        %4984 = vmatmul.bf16.gmra.mxu0 %v4870
        %v4985 = vpop.f32.mrf.mxu0
        %v4986 = vadd.f32 0.0, %v4985
        %v4987 = vpop.f32.mrf.mxu0
        %v4988 = vadd.f32 0.0, %v4987
        %4989 = vmatmul.bf16.gmra.mxu0 %v4871
        %v4990 = vpop.f32.mrf.mxu0
        %v4991 = vadd.f32 0.0, %v4990
        %v4992 = vpop.f32.mrf.mxu0
        %v4993 = vadd.f32 0.0, %v4992
        %4994 = vmatmul.bf16.gmra.mxu0 %v4872
        %v4995 = vpop.f32.mrf.mxu0
        %v4996 = vadd.f32 0.0, %v4995
        %v4997 = vpop.f32.mrf.mxu0
        %v4998 = vadd.f32 0.0, %v4997
        %4999 = vmatmul.bf16.gmra.mxu0 %v4873
        %v5000 = vpop.f32.mrf.mxu0
        %v5001 = vadd.f32 0.0, %v5000
        %v5002 = vpop.f32.mrf.mxu0
        %v5003 = vadd.f32 0.0, %v5002
        %5004 = vmatmul.bf16.gmra.mxu0 %v4874
        %v5005 = vpop.f32.mrf.mxu0
        %v5006 = vadd.f32 0.0, %v5005
        %v5007 = vpop.f32.mrf.mxu0
        %v5008 = vadd.f32 0.0, %v5007
        %5009 = vmatmul.bf16.gmra.mxu0 %v4875
        %v5010 = vpop.f32.mrf.mxu0
        %v5011 = vadd.f32 0.0, %v5010
        %v5012 = vpop.f32.mrf.mxu0
        %v5013 = vadd.f32 0.0, %v5012
        %5014 = vmatmul.bf16.gmra.mxu0 %v4876
        %v5015 = vpop.f32.mrf.mxu0
        %v5016 = vadd.f32 0.0, %v5015
        %v5017 = vpop.f32.mrf.mxu0
        %v5018 = vadd.f32 0.0, %v5017
        %5019 = vmatmul.bf16.gmra.mxu0 %v4877
        %v5020 = vpop.f32.mrf.mxu0
        %v5021 = vadd.f32 0.0, %v5020
        %v5022 = vpop.f32.mrf.mxu0
        %v5023 = vadd.f32 0.0, %v5022
        %5024 = vmatmul.bf16.gmra.mxu0 %v4878
        %v5025 = vpop.f32.mrf.mxu0
        %v5026 = vadd.f32 0.0, %v5025
        %v5027 = vpop.f32.mrf.mxu0
        %v5028 = vadd.f32 0.0, %v5027
        %5029 = vmatmul.bf16.gmra.mxu0 %v4879
        %v5030 = vpop.f32.mrf.mxu0
        %v5031 = vadd.f32 0.0, %v5030
        %v5032 = vpop.f32.mrf.mxu0
        %v5033 = vadd.f32 0.0, %v5032
        %5034 = vmatmul.bf16.gmra.mxu0 %v4880
        %v5035 = vpop.f32.mrf.mxu0
        %v5036 = vadd.f32 0.0, %v5035
        %v5037 = vpop.f32.mrf.mxu0
        %v5038 = vadd.f32 0.0, %v5037
        %5039 = vdwg.mxu0
        %v5040 = vld [vmem:[%s2 + $0xbd0] sm:$0xff]
        %v5041 = vld [vmem:[%s2 + $0xbe0] sm:$0xff]
        %v5043 = vsel %vm2408, %v4941, 0
        %v5046 = vsel %vm2408, %v4943, 0
        %v5049 = vsel %vm2408, %v4946, 0
        %v5052 = vsel %vm2408, %v4948, 0
        %v5055 = vsel %vm2408, %v4951, 0
        %v5058 = vsel %vm2408, %v4953, 0
        %v5061 = vsel %vm2408, %v4956, 0
        %v5064 = vsel %vm2408, %v4958, 0
        %v5067 = vsel %vm2408, %v4961, 0
        %v5070 = vsel %vm2408, %v4963, 0
        %5072 = vmatpush.msra.mxu0 0.0
        %5073 = vmatpush.msra.mxu0 0.0
        %5074 = vmatpush.msra.mxu0 0.0
        %5075 = vmatpush.msra.mxu0 0.0
        %5076 = vmatpush.msra.mxu0 0.0
        %5077 = vmatpush.msra.mxu0 0.0
        %5078 = vmatpush.msra.mxu0 0.0
        %5079 = vmatpush.msra.mxu0 0.0
        %5080 = vmatpush.msra.mxu0 0.0
        %5081 = vmatpush.msra.mxu0 0.0
        %5082 = vmatpush.msra.mxu0 0.0
        %5083 = vmatpush.msra.mxu0 0.0
        %5084 = vmatpush.msra.mxu0 0.0
        %5085 = vmatpush.msra.mxu0 0.0
        %5086 = vmatpush.msra.mxu0 0.0
        %5087 = vmatpush.msra.mxu0 %v5041
        %5088 = vmatmul.f32.gmra.mxu0 %v5043
        %v5089 = vpop.f32.mrf.mxu0
        %v5090 = vadd.f32 0.0, %v5089
        %5091 = vmatmul.f32.gmra.mxu0 %v5046
        %v5092 = vpop.f32.mrf.mxu0
        %v5093 = vadd.f32 0.0, %v5092
        %5094 = vmatmul.f32.gmra.mxu0 %v5049
        %v5095 = vpop.f32.mrf.mxu0
        %v5096 = vadd.f32 0.0, %v5095
        %5097 = vmatmul.f32.gmra.mxu0 %v5052
        %v5098 = vpop.f32.mrf.mxu0
        %v5099 = vadd.f32 0.0, %v5098
        %5100 = vmatmul.f32.gmra.mxu0 %v5055
        %v5101 = vpop.f32.mrf.mxu0
        %v5102 = vadd.f32 0.0, %v5101
        %5103 = vmatmul.f32.gmra.mxu0 %v5058
        %v5104 = vpop.f32.mrf.mxu0
        %v5105 = vadd.f32 0.0, %v5104
        %5106 = vmatmul.f32.gmra.mxu0 %v5061
        %v5107 = vpop.f32.mrf.mxu0
        %v5108 = vadd.f32 0.0, %v5107
        %5109 = vmatmul.f32.gmra.mxu0 %v5064
        %v5110 = vpop.f32.mrf.mxu0
        %v5111 = vadd.f32 0.0, %v5110
        %5112 = vmatmul.f32.gmra.mxu0 %v5067
        %v5113 = vpop.f32.mrf.mxu0
        %v5114 = vadd.f32 0.0, %v5113
        %5115 = vmatmul.f32.gmra.mxu0 %v5070
        %v5116 = vpop.f32.mrf.mxu0
        %v5117 = vadd.f32 0.0, %v5116
        %5118 = vdwg.mxu0
        %v5120 = vsel %vm2408, %v4916, 0
        %v5123 = vsel %vm2408, %v4918, 0
        %v5126 = vsel %vm2408, %v4921, 0
        %v5129 = vsel %vm2408, %v4923, 0
        %v5132 = vsel %vm2408, %v4926, 0
        %v5135 = vsel %vm2408, %v4928, 0
        %v5138 = vsel %vm2408, %v4931, 0
        %v5141 = vsel %vm2408, %v4933, 0
        %v5144 = vsel %vm2408, %v4936, 0
        %v5147 = vsel %vm2408, %v4938, 0
        %5149 = vmatpush.msra.mxu0 0.0
        %5150 = vmatpush.msra.mxu0 0.0
        %5151 = vmatpush.msra.mxu0 0.0
        %5152 = vmatpush.msra.mxu0 0.0
        %5153 = vmatpush.msra.mxu0 0.0
        %5154 = vmatpush.msra.mxu0 0.0
        %5155 = vmatpush.msra.mxu0 0.0
        %5156 = vmatpush.msra.mxu0 0.0
        %5157 = vmatpush.msra.mxu0 0.0
        %5158 = vmatpush.msra.mxu0 0.0
        %5159 = vmatpush.msra.mxu0 0.0
        %5160 = vmatpush.msra.mxu0 0.0
        %5161 = vmatpush.msra.mxu0 0.0
        %5162 = vmatpush.msra.mxu0 0.0
        %5163 = vmatpush.msra.mxu0 0.0
        %5164 = vmatpush.msra.mxu0 %v5040
        %5165 = vmatmul.f32.gmra.mxu0 %v5120
        %v5166 = vpop.f32.mrf.mxu0
        %v5167 = vadd.f32 %v5090, %v5166
        %5168 = vmatmul.f32.gmra.mxu0 %v5123
        %v5169 = vpop.f32.mrf.mxu0
        %v5170 = vadd.f32 %v5093, %v5169
        %5171 = vmatmul.f32.gmra.mxu0 %v5126
        %v5172 = vpop.f32.mrf.mxu0
        %v5173 = vadd.f32 %v5096, %v5172
        %5174 = vmatmul.f32.gmra.mxu0 %v5129
        %v5175 = vpop.f32.mrf.mxu0
        %v5176 = vadd.f32 %v5099, %v5175
        %5177 = vmatmul.f32.gmra.mxu0 %v5132
        %v5178 = vpop.f32.mrf.mxu0
        %v5179 = vadd.f32 %v5102, %v5178
        %5180 = vmatmul.f32.gmra.mxu0 %v5135
        %v5181 = vpop.f32.mrf.mxu0
        %v5182 = vadd.f32 %v5105, %v5181
        %5183 = vmatmul.f32.gmra.mxu0 %v5138
        %v5184 = vpop.f32.mrf.mxu0
        %v5185 = vadd.f32 %v5108, %v5184
        %5186 = vmatmul.f32.gmra.mxu0 %v5141
        %v5187 = vpop.f32.mrf.mxu0
        %v5188 = vadd.f32 %v5111, %v5187
        %5189 = vmatmul.f32.gmra.mxu0 %v5144
        %v5190 = vpop.f32.mrf.mxu0
        %v5191 = vadd.f32 %v5114, %v5190
        %5192 = vmatmul.f32.gmra.mxu0 %v5147
        %v5193 = vpop.f32.mrf.mxu0
        %v5194 = vadd.f32 %v5117, %v5193
        %5195 = vdwg.mxu0
        %v5196 = vld [vmem:[%s2 + $0xbf0] sm:$0xff]
        %v5198 = vsel %vm2408, %v4966, 0
        %v5201 = vsel %vm2408, %v4968, 0
        %v5204 = vsel %vm2408, %v4971, 0
        %v5207 = vsel %vm2408, %v4973, 0
        %v5210 = vsel %vm2408, %v4976, 0
        %v5213 = vsel %vm2408, %v4978, 0
        %v5216 = vsel %vm2408, %v4981, 0
        %v5219 = vsel %vm2408, %v4983, 0
        %v5222 = vsel %vm2408, %v4986, 0
        %v5225 = vsel %vm2408, %v4988, 0
        %5227 = vmatpush.msra.mxu0 0.0
        %5228 = vmatpush.msra.mxu0 0.0
        %5229 = vmatpush.msra.mxu0 0.0
        %5230 = vmatpush.msra.mxu0 0.0
        %5231 = vmatpush.msra.mxu0 0.0
        %5232 = vmatpush.msra.mxu0 0.0
        %5233 = vmatpush.msra.mxu0 0.0
        %5234 = vmatpush.msra.mxu0 0.0
        %5235 = vmatpush.msra.mxu0 0.0
        %5236 = vmatpush.msra.mxu0 0.0
        %5237 = vmatpush.msra.mxu0 0.0
        %5238 = vmatpush.msra.mxu0 0.0
        %5239 = vmatpush.msra.mxu0 0.0
        %5240 = vmatpush.msra.mxu0 0.0
        %5241 = vmatpush.msra.mxu0 0.0
        %5242 = vmatpush.msra.mxu0 %v5196
        %5243 = vmatmul.f32.gmra.mxu0 %v5198
        %v5244 = vpop.f32.mrf.mxu0
        %v5245 = vadd.f32 0.0, %v5244
        %5246 = vmatmul.f32.gmra.mxu0 %v5201
        %v5247 = vpop.f32.mrf.mxu0
        %v5248 = vadd.f32 0.0, %v5247
        %5249 = vmatmul.f32.gmra.mxu0 %v5204
        %v5250 = vpop.f32.mrf.mxu0
        %v5251 = vadd.f32 0.0, %v5250
        %5252 = vmatmul.f32.gmra.mxu0 %v5207
        %v5253 = vpop.f32.mrf.mxu0
        %v5254 = vadd.f32 0.0, %v5253
        %5255 = vmatmul.f32.gmra.mxu0 %v5210
        %v5256 = vpop.f32.mrf.mxu0
        %v5257 = vadd.f32 0.0, %v5256
        %5258 = vmatmul.f32.gmra.mxu0 %v5213
        %v5259 = vpop.f32.mrf.mxu0
        %v5260 = vadd.f32 0.0, %v5259
        %5261 = vmatmul.f32.gmra.mxu0 %v5216
        %v5262 = vpop.f32.mrf.mxu0
        %v5263 = vadd.f32 0.0, %v5262
        %5264 = vmatmul.f32.gmra.mxu0 %v5219
        %v5265 = vpop.f32.mrf.mxu0
        %v5266 = vadd.f32 0.0, %v5265
        %5267 = vmatmul.f32.gmra.mxu0 %v5222
        %v5268 = vpop.f32.mrf.mxu0
        %v5269 = vadd.f32 0.0, %v5268
        %5270 = vmatmul.f32.gmra.mxu0 %v5225
        %v5271 = vpop.f32.mrf.mxu0
        %v5272 = vadd.f32 0.0, %v5271
        %5273 = vdwg.mxu0
        %v5274 = vadd.f32 %v5167, %v5245
        %v5275 = vadd.f32 %v5170, %v5248
        %v5276 = vadd.f32 %v5173, %v5251
        %v5277 = vadd.f32 %v5176, %v5254
        %v5278 = vadd.f32 %v5179, %v5257
        %v5279 = vadd.f32 %v5182, %v5260
        %v5280 = vadd.f32 %v5185, %v5263
        %v5281 = vadd.f32 %v5188, %v5266
        %v5282 = vadd.f32 %v5191, %v5269
        %v5283 = vadd.f32 %v5194, %v5272
        %v5284 = vld [vmem:[%s2 + $0xc00] sm:$0xff]
        %v5286 = vsel %vm2408, %v4991, 0
        %v5289 = vsel %vm2408, %v4993, 0
        %v5292 = vsel %vm2408, %v4996, 0
        %v5295 = vsel %vm2408, %v4998, 0
        %v5298 = vsel %vm2408, %v5001, 0
        %v5301 = vsel %vm2408, %v5003, 0
        %v5304 = vsel %vm2408, %v5006, 0
        %v5307 = vsel %vm2408, %v5008, 0
        %v5310 = vsel %vm2408, %v5011, 0
        %v5313 = vsel %vm2408, %v5013, 0
        %5315 = vmatpush.msra.mxu0 0.0
        %5316 = vmatpush.msra.mxu0 0.0
        %5317 = vmatpush.msra.mxu0 0.0
        %5318 = vmatpush.msra.mxu0 0.0
        %5319 = vmatpush.msra.mxu0 0.0
        %5320 = vmatpush.msra.mxu0 0.0
        %5321 = vmatpush.msra.mxu0 0.0
        %5322 = vmatpush.msra.mxu0 0.0
        %5323 = vmatpush.msra.mxu0 0.0
        %5324 = vmatpush.msra.mxu0 0.0
        %5325 = vmatpush.msra.mxu0 0.0
        %5326 = vmatpush.msra.mxu0 0.0
        %5327 = vmatpush.msra.mxu0 0.0
        %5328 = vmatpush.msra.mxu0 0.0
        %5329 = vmatpush.msra.mxu0 0.0
        %5330 = vmatpush.msra.mxu0 %v5284
        %5331 = vmatmul.f32.gmra.mxu0 %v5286
        %v5332 = vpop.f32.mrf.mxu0
        %v5333 = vadd.f32 0.0, %v5332
        %5334 = vmatmul.f32.gmra.mxu0 %v5289
        %v5335 = vpop.f32.mrf.mxu0
        %v5336 = vadd.f32 0.0, %v5335
        %5337 = vmatmul.f32.gmra.mxu0 %v5292
        %v5338 = vpop.f32.mrf.mxu0
        %v5339 = vadd.f32 0.0, %v5338
        %5340 = vmatmul.f32.gmra.mxu0 %v5295
        %v5341 = vpop.f32.mrf.mxu0
        %v5342 = vadd.f32 0.0, %v5341
        %5343 = vmatmul.f32.gmra.mxu0 %v5298
        %v5344 = vpop.f32.mrf.mxu0
        %v5345 = vadd.f32 0.0, %v5344
        %5346 = vmatmul.f32.gmra.mxu0 %v5301
        %v5347 = vpop.f32.mrf.mxu0
        %v5348 = vadd.f32 0.0, %v5347
        %5349 = vmatmul.f32.gmra.mxu0 %v5304
        %v5350 = vpop.f32.mrf.mxu0
        %v5351 = vadd.f32 0.0, %v5350
        %5352 = vmatmul.f32.gmra.mxu0 %v5307
        %v5353 = vpop.f32.mrf.mxu0
        %v5354 = vadd.f32 0.0, %v5353
        %5355 = vmatmul.f32.gmra.mxu0 %v5310
        %v5356 = vpop.f32.mrf.mxu0
        %v5357 = vadd.f32 0.0, %v5356
        %5358 = vmatmul.f32.gmra.mxu0 %v5313
        %v5359 = vpop.f32.mrf.mxu0
        %v5360 = vadd.f32 0.0, %v5359
        %5361 = vdwg.mxu0
        %v5362 = vadd.f32 %v5274, %v5333
        %v5363 = vadd.f32 %v5275, %v5336
        %v5364 = vadd.f32 %v5276, %v5339
        %v5365 = vadd.f32 %v5277, %v5342
        %v5366 = vadd.f32 %v5278, %v5345
        %v5367 = vadd.f32 %v5279, %v5348
        %v5368 = vadd.f32 %v5280, %v5351
        %v5369 = vadd.f32 %v5281, %v5354
        %v5370 = vadd.f32 %v5282, %v5357
        %v5371 = vadd.f32 %v5283, %v5360
        %v5372 = vld [vmem:[%s2 + $0xc10] sm:$0xff]
        %v5374 = vsel %vm2408, %v5016, 0
        %v5377 = vsel %vm2408, %v5018, 0
        %v5380 = vsel %vm2408, %v5021, 0
        %v5383 = vsel %vm2408, %v5023, 0
        %v5386 = vsel %vm2408, %v5026, 0
        %v5389 = vsel %vm2408, %v5028, 0
        %v5392 = vsel %vm2408, %v5031, 0
        %v5395 = vsel %vm2408, %v5033, 0
        %v5398 = vsel %vm2408, %v5036, 0
        %v5401 = vsel %vm2408, %v5038, 0
        %5403 = vmatpush.msra.mxu0 0.0
        %5404 = vmatpush.msra.mxu0 0.0
        %5405 = vmatpush.msra.mxu0 0.0
        %5406 = vmatpush.msra.mxu0 0.0
        %5407 = vmatpush.msra.mxu0 0.0
        %5408 = vmatpush.msra.mxu0 0.0
        %5409 = vmatpush.msra.mxu0 0.0
        %5410 = vmatpush.msra.mxu0 0.0
        %5411 = vmatpush.msra.mxu0 0.0
        %5412 = vmatpush.msra.mxu0 0.0
        %5413 = vmatpush.msra.mxu0 0.0
        %5414 = vmatpush.msra.mxu0 0.0
        %5415 = vmatpush.msra.mxu0 0.0
        %5416 = vmatpush.msra.mxu0 0.0
        %5417 = vmatpush.msra.mxu0 0.0
        %5418 = vmatpush.msra.mxu0 %v5372
        %5419 = vmatmul.f32.gmra.mxu0 %v5374
        %v5420 = vpop.f32.mrf.mxu0
        %v5421 = vadd.f32 0.0, %v5420
        %5422 = vmatmul.f32.gmra.mxu0 %v5377
        %v5423 = vpop.f32.mrf.mxu0
        %v5424 = vadd.f32 0.0, %v5423
        %5425 = vmatmul.f32.gmra.mxu0 %v5380
        %v5426 = vpop.f32.mrf.mxu0
        %v5427 = vadd.f32 0.0, %v5426
        %5428 = vmatmul.f32.gmra.mxu0 %v5383
        %v5429 = vpop.f32.mrf.mxu0
        %v5430 = vadd.f32 0.0, %v5429
        %5431 = vmatmul.f32.gmra.mxu0 %v5386
        %v5432 = vpop.f32.mrf.mxu0
        %v5433 = vadd.f32 0.0, %v5432
        %5434 = vmatmul.f32.gmra.mxu0 %v5389
        %v5435 = vpop.f32.mrf.mxu0
        %v5436 = vadd.f32 0.0, %v5435
        %5437 = vmatmul.f32.gmra.mxu0 %v5392
        %v5438 = vpop.f32.mrf.mxu0
        %v5439 = vadd.f32 0.0, %v5438
        %5440 = vmatmul.f32.gmra.mxu0 %v5395
        %v5441 = vpop.f32.mrf.mxu0
        %v5442 = vadd.f32 0.0, %v5441
        %5443 = vmatmul.f32.gmra.mxu0 %v5398
        %v5444 = vpop.f32.mrf.mxu0
        %v5445 = vadd.f32 0.0, %v5444
        %5446 = vmatmul.f32.gmra.mxu0 %v5401
        %v5447 = vpop.f32.mrf.mxu0
        %v5448 = vadd.f32 0.0, %v5447
        %5449 = vdwg.mxu0
        %v5450 = vadd.f32 %v5362, %v5421
        %v5451 = vadd.f32 %v5363, %v5424
        %v5452 = vadd.f32 %v5364, %v5427
        %v5453 = vadd.f32 %v5365, %v5430
        %v5454 = vadd.f32 %v5366, %v5433
        %v5455 = vadd.f32 %v5367, %v5436
        %v5456 = vadd.f32 %v5368, %v5439
        %v5457 = vadd.f32 %v5369, %v5442
        %v5458 = vadd.f32 %v5370, %v5445
        %v5459 = vadd.f32 %v5371, %v5448
        %vm5460 = vcmask 252928
        %v5461 = vsel %vm5460, %v5450, 0.0
        %v5462 = vsel %vm5460, %v5451, 0.0
        %v5463 = vadd.f32 %v5461, %v5462
        %v5464 = vsel %vm5460, %v5452, 0.0
        %v5465 = vadd.f32 %v5463, %v5464
        %v5466 = vsel %vm5460, %v5453, 0.0
        %v5467 = vadd.f32 %v5465, %v5466
        %v5468 = vsel %vm5460, %v5454, 0.0
        %v5469 = vadd.f32 %v5467, %v5468
        %v5470 = vsel %vm5460, %v5455, 0.0
        %v5471 = vadd.f32 %v5469, %v5470
        %v5472 = vsel %vm5460, %v5456, 0.0
        %v5473 = vadd.f32 %v5471, %v5472
        %v5474 = vsel %vm5460, %v5457, 0.0
        %v5475 = vadd.f32 %v5473, %v5474
        %v5476 = vsel %vm5460, %v5458, 0.0
        %v5477 = vadd.f32 %v5475, %v5476
        %v5478 = vsel %vm5460, %v5459, 0.0
        %v5479 = vadd.f32 %v5477, %v5478
        %5480 = vadd.xlane.f32.xlu0 %v5479
        %v5481 = vpop.xlane.xlu0 %5480
        %v5482 = vrot.slane %v5481, 4
        %v5483 = vadd.f32 %v5481, %v5482
        %v5484 = vrot.slane %v5483, 2
        %v5485 = vadd.f32 %v5483, %v5484
        %v5486 = vrot.slane %v5485, 1
        %v5487 = vadd.f32 %v5485, %v5486
        %s5488 = vtos %v5487
        %s5489 = smul.f32 %s5488, 0.0004032258
        %v5490 = vstv %s5489
        %v5491 = vsub.f32 %v5450, %v5490
        %v5492 = vsub.f32 %v5451, %v5490
        %v5493 = vsub.f32 %v5452, %v5490
        %v5494 = vsub.f32 %v5453, %v5490
        %v5495 = vsub.f32 %v5454, %v5490
        %v5496 = vsub.f32 %v5455, %v5490
        %v5497 = vsub.f32 %v5456, %v5490
        %v5498 = vsub.f32 %v5457, %v5490
        %v5499 = vsub.f32 %v5458, %v5490
        %v5500 = vsub.f32 %v5459, %v5490
        %v5501 = vmul.f32 %v5491, %v5491
        %v5502 = vmul.f32 %v5492, %v5492
        %v5503 = vmul.f32 %v5493, %v5493
        %v5504 = vmul.f32 %v5494, %v5494
        %v5505 = vmul.f32 %v5495, %v5495
        %v5506 = vmul.f32 %v5496, %v5496
        %v5507 = vmul.f32 %v5497, %v5497
        %v5508 = vmul.f32 %v5498, %v5498
        %v5509 = vmul.f32 %v5499, %v5499
        %v5510 = vmul.f32 %v5500, %v5500
        %v5511 = vsel %vm5460, %v5501, 0.0
        %v5512 = vsel %vm5460, %v5502, 0.0
        %v5513 = vadd.f32 %v5511, %v5512
        %v5514 = vsel %vm5460, %v5503, 0.0
        %v5515 = vadd.f32 %v5513, %v5514
        %v5516 = vsel %vm5460, %v5504, 0.0
        %v5517 = vadd.f32 %v5515, %v5516
        %v5518 = vsel %vm5460, %v5505, 0.0
        %v5519 = vadd.f32 %v5517, %v5518
        %v5520 = vsel %vm5460, %v5506, 0.0
        %v5521 = vadd.f32 %v5519, %v5520
        %v5522 = vsel %vm5460, %v5507, 0.0
        %v5523 = vadd.f32 %v5521, %v5522
        %v5524 = vsel %vm5460, %v5508, 0.0
        %v5525 = vadd.f32 %v5523, %v5524
        %v5526 = vsel %vm5460, %v5509, 0.0
        %v5527 = vadd.f32 %v5525, %v5526
        %v5528 = vsel %vm5460, %v5510, 0.0
        %v5529 = vadd.f32 %v5527, %v5528
        %5530 = vadd.xlane.f32.xlu0 %v5529
        %v5531 = vpop.xlane.xlu0 %5530
        %v5532 = vrot.slane %v5531, 4
        %v5533 = vadd.f32 %v5531, %v5532
        %v5534 = vrot.slane %v5533, 2
        %v5535 = vadd.f32 %v5533, %v5534
        %v5536 = vrot.slane %v5535, 1
        %v5537 = vadd.f32 %v5535, %v5536
        %s5538 = vtos %v5537
        %s5539 = smul.f32 %s5538, 0.0004032258
        %v5540 = vld [vmem:[%s2 + $0xc20] sm:$0xff]
        %v5541 = vld [vmem:[%s2 + $0xc30] sm:$0xff]
        %v5542 = vld [vmem:[%s2 + $0xc40] sm:$0xff]
        %v5543 = vld [vmem:[%s2 + $0xc50] sm:$0xff]
        %v5544 = vld [vmem:[%s2 + $0xc60] sm:$0xff]
        %v5545 = vld [vmem:[%s2 + $0xc70] sm:$0xff]
        %v5546 = vld [vmem:[%s2 + $0xc80] sm:$0xff]
        %v5547 = vld [vmem:[%s2 + $0xc90] sm:$0xff]
        %v5548 = vld [vmem:[%s2 + $0xca0] sm:$0xff]
        %v5549 = vld [vmem:[%s2 + $0xcb0] sm:$0xff]
        %v5550 = vld [vmem:[%s2 + $0xcc0] sm:$0xff]
        %v5551 = vld [vmem:[%s2 + $0xcd0] sm:$0xff]
        %v5552 = vld [vmem:[%s2 + $0xce0] sm:$0xff]
        %v5553 = vld [vmem:[%s2 + $0xcf0] sm:$0xff]
        %v5554 = vld [vmem:[%s2 + $0xd00] sm:$0xff]
        %v5555 = vld [vmem:[%s2 + $0xd10] sm:$0xff]
        %v5556 = vld [vmem:[%s2 + $0xd20] sm:$0xff]
        %v5557 = vld [vmem:[%s2 + $0xd30] sm:$0xff]
        %v5558 = vld [vmem:[%s2 + $0xd40] sm:$0xff]
        %v5559 = vld [vmem:[%s2 + $0xd50] sm:$0xff]
        %s5560 = sadd.f32 %s5539, 1e-05
        %v5561 = vstv %s5560
        %v5562 = vrsqrt.pop %v5561
        %v5563 = vmul.f32 %v5562, %v5561
        %v5564 = vmul.f32 %v5563, %v5562
        %v5565 = vmul.f32 0.5, %v5564
        %v5566 = vsub.f32 1.5, %v5565
        %v5567 = vmul.f32 %v5562, %v5566
        %vm5568 = vweird.f32 %v5561
        %vm5569 = vweird.f32 %v5562
        %vm5570 = vmor %vm5568, %vm5569
        %v5571 = vsel %vm5570, %v5562, %v5567
        %s5572 = vtos %v5571
        %v5573 = vstv %s5572
        %v5574 = vmul.f32 %v5491, %v5573
        %v5575 = vmul.f32 %v5492, %v5573
        %v5576 = vmul.f32 %v5493, %v5573
        %v5577 = vmul.f32 %v5494, %v5573
        %v5578 = vmul.f32 %v5495, %v5573
        %v5579 = vmul.f32 %v5496, %v5573
        %v5580 = vmul.f32 %v5497, %v5573
        %v5581 = vmul.f32 %v5498, %v5573
        %v5582 = vmul.f32 %v5499, %v5573
        %v5583 = vmul.f32 %v5500, %v5573
        %v5584 = vmul.f32 %v5574, %v5540
        %v5585 = vmul.f32 %v5575, %v5541
        %v5586 = vmul.f32 %v5576, %v5542
        %v5587 = vmul.f32 %v5577, %v5543
        %v5588 = vmul.f32 %v5578, %v5544
        %v5589 = vmul.f32 %v5579, %v5545
        %v5590 = vmul.f32 %v5580, %v5546
        %v5591 = vmul.f32 %v5581, %v5547
        %v5592 = vmul.f32 %v5582, %v5548
        %v5593 = vmul.f32 %v5583, %v5549
        %v5594 = vadd.f32 %v5584, %v5550
        %v5595 = vadd.f32 %v5585, %v5551
        %v5596 = vadd.f32 %v5586, %v5552
        %v5597 = vadd.f32 %v5587, %v5553
        %v5598 = vadd.f32 %v5588, %v5554
        %v5599 = vadd.f32 %v5589, %v5555
        %v5600 = vadd.f32 %v5590, %v5556
        %v5601 = vadd.f32 %v5591, %v5557
        %v5602 = vadd.f32 %v5592, %v5558
        %v5603 = vadd.f32 %v5593, %v5559
        %v5604 = vmax.f32 %v5594, 0.0
        %v5605 = vmax.f32 %v5595, 0.0
        %v5606 = vmax.f32 %v5596, 0.0
        %v5607 = vmax.f32 %v5597, 0.0
        %v5608 = vmax.f32 %v5598, 0.0
        %v5609 = vmax.f32 %v5599, 0.0
        %v5610 = vmax.f32 %v5600, 0.0
        %v5611 = vmax.f32 %v5601, 0.0
        %v5612 = vmax.f32 %v5602, 0.0
        %v5613 = vmax.f32 %v5603, 0.0
        %v5614 = vld [vmem:[%s1 + $0x8d0] sm:$0xf]
        %v5615 = vld [vmem:[%s1 + $0x8d8] sm:$0xf]
        %v5616 = vld [vmem:[%s1 + $0x8e0] sm:$0xf]
        %v5617 = vld [vmem:[%s1 + $0x8e8] sm:$0xf]
        %v5618 = vld [vmem:[%s1 + $0x8f0] sm:$0xf]
        %v5619 = vld [vmem:[%s1 + $0x8f8] sm:$0xf]
        %v5620 = vld [vmem:[%s1 + $0x900] sm:$0xf]
        %v5621 = vld [vmem:[%s1 + $0x908] sm:$0xf]
        %v5622 = vld [vmem:[%s1 + $0x910] sm:$0xf]
        %v5623 = vld [vmem:[%s1 + $0x918] sm:$0xf]
        %v5624 = vld [vmem:[%s1 + $0x920] sm:$0xf]
        %v5625 = vld [vmem:[%s1 + $0x928] sm:$0xf]
        %v5626 = vld [vmem:[%s1 + $0x930] sm:$0xf]
        %v5627 = vld [vmem:[%s1 + $0x938] sm:$0xf]
        %v5628 = vld [vmem:[%s1 + $0x940] sm:$0xf]
        %v5629 = vld [vmem:[%s1 + $0x948] sm:$0xf]
        %v5630 = vld [vmem:[%s1 + $0x950] sm:$0xf]
        %v5631 = vld [vmem:[%s1 + $0x958] sm:$0xf]
        %v5632 = vld [vmem:[%s1 + $0x960] sm:$0xf]
        %v5633 = vld [vmem:[%s1 + $0x968] sm:$0xf]
        %v5634 = vld [vmem:[%s1 + $0x970] sm:$0xf]
        %v5635 = vld [vmem:[%s1 + $0x978] sm:$0xf]
        %v5636 = vld [vmem:[%s1 + $0x980] sm:$0xf]
        %v5637 = vld [vmem:[%s1 + $0x988] sm:$0xf]
        %v5638 = vld [vmem:[%s1 + $0x990] sm:$0xf]
        %v5639 = vld [vmem:[%s1 + $0x998] sm:$0xf]
        %v5640 = vld [vmem:[%s1 + $0x9a0] sm:$0xf]
        %v5641 = vld [vmem:[%s1 + $0x9a8] sm:$0xf]
        %v5642 = vld [vmem:[%s1 + $0x9b0] sm:$0xf]
        %v5643 = vld [vmem:[%s1 + $0x9b8] sm:$0xf]
        %v5644 = vpack.c.bf16 %v5605, %v5604
        %v5645 = vpack.c.bf16 %v5607, %v5606
        %v5646 = vpack.c.bf16 %v5609, %v5608
        %v5647 = vpack.c.bf16 %v5611, %v5610
        %v5648 = vpack.c.bf16 %v5613, %v5612
        %v5679 = vunpack.c.l.b16 %v5614
        %v5680 = vunpack.c.l.b16 %v5615
        %v5681 = vunpack.c.l.b16 %v5616
        %v5682 = vunpack.c.l.b16 %v5617
        %v5683 = vunpack.c.l.b16 %v5618
        %v5684 = vunpack.c.l.b16 %v5619
        %v5685 = vunpack.c.l.b16 %v5620
        %v5686 = vunpack.c.l.b16 %v5621
        %v5687 = vunpack.c.l.b16 %v5622
        %v5688 = vunpack.c.l.b16 %v5623
        %v5689 = vunpack.c.l.b16 %v5624
        %v5690 = vunpack.c.l.b16 %v5625
        %v5691 = vunpack.c.l.b16 %v5626
        %v5692 = vunpack.c.l.b16 %v5627
        %v5693 = vunpack.c.l.b16 %v5628
        %v5694 = vunpack.c.l.b16 %v5629
        %v5695 = vunpack.c.l.b16 %v5630
        %v5696 = vunpack.c.l.b16 %v5631
        %v5697 = vunpack.c.l.b16 %v5632
        %v5698 = vunpack.c.l.b16 %v5633
        %v5699 = vunpack.c.l.b16 %v5634
        %v5700 = vunpack.c.l.b16 %v5635
        %v5701 = vunpack.c.l.b16 %v5636
        %v5702 = vunpack.c.l.b16 %v5637
        %v5703 = vunpack.c.l.b16 %v5638
        %v5704 = vunpack.c.l.b16 %v5639
        %v5705 = vunpack.c.l.b16 %v5640
        %v5706 = vunpack.c.l.b16 %v5641
        %v5707 = vunpack.c.l.b16 %v5642
        %v5708 = vunpack.c.l.b16 %v5643
        %v5709 = vpack.c.b16 %v5680, %v5679
        %v5710 = vpack.c.b16 %v5682, %v5681
        %v5711 = vpack.c.b16 %v5684, %v5683
        %v5712 = vpack.c.b16 %v5686, %v5685
        %v5713 = vpack.c.b16 %v5688, %v5687
        %v5714 = vpack.c.b16 %v5690, %v5689
        %v5715 = vpack.c.b16 %v5692, %v5691
        %v5716 = vpack.c.b16 %v5694, %v5693
        %v5717 = vpack.c.b16 %v5696, %v5695
        %v5718 = vpack.c.b16 %v5698, %v5697
        %v5719 = vpack.c.b16 %v5700, %v5699
        %v5720 = vpack.c.b16 %v5702, %v5701
        %v5721 = vpack.c.b16 %v5704, %v5703
        %v5722 = vpack.c.b16 %v5706, %v5705
        %v5723 = vpack.c.b16 %v5708, %v5707
        %vm5724 = vcmask 654336
        %v5726 = vsel %vm5724, %v5709, 0
        %v5729 = vsel %vm5724, %v5710, 0
        %v5732 = vsel %vm5724, %v5711, 0
        %v5735 = vsel %vm5724, %v5712, 0
        %v5738 = vsel %vm5724, %v5713, 0
        %v5741 = vsel %vm5724, %v5714, 0
        %v5744 = vsel %vm5724, %v5715, 0
        %v5747 = vsel %vm5724, %v5716, 0
        %v5750 = vsel %vm5724, %v5717, 0
        %v5753 = vsel %vm5724, %v5718, 0
        %v5756 = vsel %vm5724, %v5719, 0
        %v5759 = vsel %vm5724, %v5720, 0
        %v5762 = vsel %vm5724, %v5721, 0
        %v5765 = vsel %vm5724, %v5722, 0
        %v5768 = vsel %vm5724, %v5723, 0
        %5770 = vmatpush.bf16.msra.mxu0 0
        %5771 = vmatpush.bf16.msra.mxu0 0
        %5772 = vmatpush.bf16.msra.mxu0 0
        %5773 = vmatpush.bf16.msra.mxu0 %v5648
        %5774 = vmatpush.bf16.msra.mxu0 %v5647
        %5775 = vmatpush.bf16.msra.mxu0 %v5646
        %5776 = vmatpush.bf16.msra.mxu0 %v5645
        %5777 = vmatpush.bf16.msra.mxu0 %v5644
        %5778 = vmatmul.bf16.gmra.mxu0 %v5726
        %v5779 = vpop.f32.mrf.mxu0
        %v5780 = vadd.f32 0.0, %v5779
        %v5781 = vpop.f32.mrf.mxu0
        %v5782 = vadd.f32 0.0, %v5781
        %5783 = vmatmul.bf16.gmra.mxu0 %v5729
        %v5784 = vpop.f32.mrf.mxu0
        %v5785 = vadd.f32 0.0, %v5784
        %v5786 = vpop.f32.mrf.mxu0
        %v5787 = vadd.f32 0.0, %v5786
        %5788 = vmatmul.bf16.gmra.mxu0 %v5732
        %v5789 = vpop.f32.mrf.mxu0
        %v5790 = vadd.f32 0.0, %v5789
        %v5791 = vpop.f32.mrf.mxu0
        %v5792 = vadd.f32 0.0, %v5791
        %5793 = vmatmul.bf16.gmra.mxu0 %v5735
        %v5794 = vpop.f32.mrf.mxu0
        %v5795 = vadd.f32 0.0, %v5794
        %v5796 = vpop.f32.mrf.mxu0
        %v5797 = vadd.f32 0.0, %v5796
        %5798 = vmatmul.bf16.gmra.mxu0 %v5738
        %v5799 = vpop.f32.mrf.mxu0
        %v5800 = vadd.f32 0.0, %v5799
        %v5801 = vpop.f32.mrf.mxu0
        %v5802 = vadd.f32 0.0, %v5801
        %5803 = vmatmul.bf16.gmra.mxu0 %v5741
        %v5804 = vpop.f32.mrf.mxu0
        %v5805 = vadd.f32 0.0, %v5804
        %v5806 = vpop.f32.mrf.mxu0
        %v5807 = vadd.f32 0.0, %v5806
        %5808 = vmatmul.bf16.gmra.mxu0 %v5744
        %v5809 = vpop.f32.mrf.mxu0
        %v5810 = vadd.f32 0.0, %v5809
        %v5811 = vpop.f32.mrf.mxu0
        %v5812 = vadd.f32 0.0, %v5811
        %5813 = vmatmul.bf16.gmra.mxu0 %v5747
        %v5814 = vpop.f32.mrf.mxu0
        %v5815 = vadd.f32 0.0, %v5814
        %v5816 = vpop.f32.mrf.mxu0
        %v5817 = vadd.f32 0.0, %v5816
        %5818 = vmatmul.bf16.gmra.mxu0 %v5750
        %v5819 = vpop.f32.mrf.mxu0
        %v5820 = vadd.f32 0.0, %v5819
        %v5821 = vpop.f32.mrf.mxu0
        %v5822 = vadd.f32 0.0, %v5821
        %5823 = vmatmul.bf16.gmra.mxu0 %v5753
        %v5824 = vpop.f32.mrf.mxu0
        %v5825 = vadd.f32 0.0, %v5824
        %v5826 = vpop.f32.mrf.mxu0
        %v5827 = vadd.f32 0.0, %v5826
        %5828 = vmatmul.bf16.gmra.mxu0 %v5756
        %v5829 = vpop.f32.mrf.mxu0
        %v5830 = vadd.f32 0.0, %v5829
        %v5831 = vpop.f32.mrf.mxu0
        %v5832 = vadd.f32 0.0, %v5831
        %5833 = vmatmul.bf16.gmra.mxu0 %v5759
        %v5834 = vpop.f32.mrf.mxu0
        %v5835 = vadd.f32 0.0, %v5834
        %v5836 = vpop.f32.mrf.mxu0
        %v5837 = vadd.f32 0.0, %v5836
        %5838 = vmatmul.bf16.gmra.mxu0 %v5762
        %v5839 = vpop.f32.mrf.mxu0
        %v5840 = vadd.f32 0.0, %v5839
        %v5841 = vpop.f32.mrf.mxu0
        %v5842 = vadd.f32 0.0, %v5841
        %5843 = vmatmul.bf16.gmra.mxu0 %v5765
        %v5844 = vpop.f32.mrf.mxu0
        %v5845 = vadd.f32 0.0, %v5844
        %v5846 = vpop.f32.mrf.mxu0
        %v5847 = vadd.f32 0.0, %v5846
        %5848 = vmatmul.bf16.gmra.mxu0 %v5768
        %v5849 = vpop.f32.mrf.mxu0
        %v5850 = vadd.f32 0.0, %v5849
        %v5851 = vpop.f32.mrf.mxu0
        %v5852 = vadd.f32 0.0, %v5851
        %5853 = vdwg.mxu0
        %v5854 = vld [vmem:[%s2 + $0xd60] sm:$0xff]
        %v5855 = vld [vmem:[%s2 + $0xd70] sm:$0xff]
        %v5856 = vld [vmem:[%s2 + $0xd80] sm:$0xff]
        %v5857 = vld [vmem:[%s2 + $0xd90] sm:$0x7f]
        %v5858 = vld [vmem:[%s2 + $0xda0] sm:$0xff]
        %v5859 = vld [vmem:[%s2 + $0xdb0] sm:$0xff]
        %v5860 = vld [vmem:[%s2 + $0xdc0] sm:$0xff]
        %v5861 = vld [vmem:[%s2 + $0xdd0] sm:$0x7f]
        %v5863 = vsel %vm5460, %v5805, 0
        %v5866 = vsel %vm5460, %v5807, 0
        %v5869 = vsel %vm5460, %v5810, 0
        %v5872 = vsel %vm5460, %v5812, 0
        %v5875 = vsel %vm5460, %v5815, 0
        %v5878 = vsel %vm5460, %v5817, 0
        %v5881 = vsel %vm5460, %v5820, 0
        %v5884 = vsel %vm5460, %v5822, 0
        %v5887 = vsel %vm5460, %v5825, 0
        %v5890 = vsel %vm5460, %v5827, 0
        %vm5892 = vcmask 1046528
        %v5894 = vsel %vm5892, %v5861, 0
        %5896 = vmatpush.msra.mxu0 0.0
        %5897 = vmatpush.msra.mxu0 0.0
        %5898 = vmatpush.msra.mxu0 0.0
        %5899 = vmatpush.msra.mxu0 0.0
        %5900 = vmatpush.msra.mxu0 0.0
        %5901 = vmatpush.msra.mxu0 0.0
        %5902 = vmatpush.msra.mxu0 0.0
        %5903 = vmatpush.msra.mxu0 0.0
        %5904 = vmatpush.msra.mxu0 0.0
        %5905 = vmatpush.msra.mxu0 0.0
        %5906 = vmatpush.msra.mxu0 0.0
        %5907 = vmatpush.msra.mxu0 0.0
        %5908 = vmatpush.msra.mxu0 %v5894
        %5909 = vmatpush.msra.mxu0 %v5860
        %5910 = vmatpush.msra.mxu0 %v5859
        %5911 = vmatpush.msra.mxu0 %v5858
        %5912 = vmatmul.f32.gmra.mxu0 %v5863
        %v5913 = vpop.f32.mrf.mxu0
        %v5914 = vadd.f32 0.0, %v5913
        %5915 = vmatmul.f32.gmra.mxu0 %v5866
        %v5916 = vpop.f32.mrf.mxu0
        %v5917 = vadd.f32 0.0, %v5916
        %5918 = vmatmul.f32.gmra.mxu0 %v5869
        %v5919 = vpop.f32.mrf.mxu0
        %v5920 = vadd.f32 0.0, %v5919
        %5921 = vmatmul.f32.gmra.mxu0 %v5872
        %v5922 = vpop.f32.mrf.mxu0
        %v5923 = vadd.f32 0.0, %v5922
        %5924 = vmatmul.f32.gmra.mxu0 %v5875
        %v5925 = vpop.f32.mrf.mxu0
        %v5926 = vadd.f32 0.0, %v5925
        %5927 = vmatmul.f32.gmra.mxu0 %v5878
        %v5928 = vpop.f32.mrf.mxu0
        %v5929 = vadd.f32 0.0, %v5928
        %5930 = vmatmul.f32.gmra.mxu0 %v5881
        %v5931 = vpop.f32.mrf.mxu0
        %v5932 = vadd.f32 0.0, %v5931
        %5933 = vmatmul.f32.gmra.mxu0 %v5884
        %v5934 = vpop.f32.mrf.mxu0
        %v5935 = vadd.f32 0.0, %v5934
        %5936 = vmatmul.f32.gmra.mxu0 %v5887
        %v5937 = vpop.f32.mrf.mxu0
        %v5938 = vadd.f32 0.0, %v5937
        %5939 = vmatmul.f32.gmra.mxu0 %v5890
        %v5940 = vpop.f32.mrf.mxu0
        %v5941 = vadd.f32 0.0, %v5940
        %5942 = vdwg.mxu0
        %v5944 = vsel %vm5460, %v5780, 0
        %v5947 = vsel %vm5460, %v5782, 0
        %v5950 = vsel %vm5460, %v5785, 0
        %v5953 = vsel %vm5460, %v5787, 0
        %v5956 = vsel %vm5460, %v5790, 0
        %v5959 = vsel %vm5460, %v5792, 0
        %v5962 = vsel %vm5460, %v5795, 0
        %v5965 = vsel %vm5460, %v5797, 0
        %v5968 = vsel %vm5460, %v5800, 0
        %v5971 = vsel %vm5460, %v5802, 0
        %v5974 = vsel %vm5892, %v5857, 0
        %5976 = vmatpush.msra.mxu0 0.0
        %5977 = vmatpush.msra.mxu0 0.0
        %5978 = vmatpush.msra.mxu0 0.0
        %5979 = vmatpush.msra.mxu0 0.0
        %5980 = vmatpush.msra.mxu0 0.0
        %5981 = vmatpush.msra.mxu0 0.0
        %5982 = vmatpush.msra.mxu0 0.0
        %5983 = vmatpush.msra.mxu0 0.0
        %5984 = vmatpush.msra.mxu0 0.0
        %5985 = vmatpush.msra.mxu0 0.0
        %5986 = vmatpush.msra.mxu0 0.0
        %5987 = vmatpush.msra.mxu0 0.0
        %5988 = vmatpush.msra.mxu0 %v5974
        %5989 = vmatpush.msra.mxu0 %v5856
        %5990 = vmatpush.msra.mxu0 %v5855
        %5991 = vmatpush.msra.mxu0 %v5854
        %5992 = vmatmul.f32.gmra.mxu0 %v5944
        %v5993 = vpop.f32.mrf.mxu0
        %v5994 = vadd.f32 %v5914, %v5993
        %5995 = vmatmul.f32.gmra.mxu0 %v5947
        %v5996 = vpop.f32.mrf.mxu0
        %v5997 = vadd.f32 %v5917, %v5996
        %5998 = vmatmul.f32.gmra.mxu0 %v5950
        %v5999 = vpop.f32.mrf.mxu0
        %v6000 = vadd.f32 %v5920, %v5999
        %6001 = vmatmul.f32.gmra.mxu0 %v5953
        %v6002 = vpop.f32.mrf.mxu0
        %v6003 = vadd.f32 %v5923, %v6002
        %6004 = vmatmul.f32.gmra.mxu0 %v5956
        %v6005 = vpop.f32.mrf.mxu0
        %v6006 = vadd.f32 %v5926, %v6005
        %6007 = vmatmul.f32.gmra.mxu0 %v5959
        %v6008 = vpop.f32.mrf.mxu0
        %v6009 = vadd.f32 %v5929, %v6008
        %6010 = vmatmul.f32.gmra.mxu0 %v5962
        %v6011 = vpop.f32.mrf.mxu0
        %v6012 = vadd.f32 %v5932, %v6011
        %6013 = vmatmul.f32.gmra.mxu0 %v5965
        %v6014 = vpop.f32.mrf.mxu0
        %v6015 = vadd.f32 %v5935, %v6014
        %6016 = vmatmul.f32.gmra.mxu0 %v5968
        %v6017 = vpop.f32.mrf.mxu0
        %v6018 = vadd.f32 %v5938, %v6017
        %6019 = vmatmul.f32.gmra.mxu0 %v5971
        %v6020 = vpop.f32.mrf.mxu0
        %v6021 = vadd.f32 %v5941, %v6020
        %6022 = vdwg.mxu0
        %v6023 = vld [vmem:[%s2 + $0xde0] sm:$0xff]
        %v6024 = vld [vmem:[%s2 + $0xdf0] sm:$0xff]
        %v6025 = vld [vmem:[%s2 + $0xe00] sm:$0xff]
        %v6026 = vld [vmem:[%s2 + $0xe10] sm:$0x7f]
        %v6028 = vsel %vm5460, %v5830, 0
        %v6031 = vsel %vm5460, %v5832, 0
        %v6034 = vsel %vm5460, %v5835, 0
        %v6037 = vsel %vm5460, %v5837, 0
        %v6040 = vsel %vm5460, %v5840, 0
        %v6043 = vsel %vm5460, %v5842, 0
        %v6046 = vsel %vm5460, %v5845, 0
        %v6049 = vsel %vm5460, %v5847, 0
        %v6052 = vsel %vm5460, %v5850, 0
        %v6055 = vsel %vm5460, %v5852, 0
        %v6058 = vsel %vm5892, %v6026, 0
        %6060 = vmatpush.msra.mxu0 0.0
        %6061 = vmatpush.msra.mxu0 0.0
        %6062 = vmatpush.msra.mxu0 0.0
        %6063 = vmatpush.msra.mxu0 0.0
        %6064 = vmatpush.msra.mxu0 0.0
        %6065 = vmatpush.msra.mxu0 0.0
        %6066 = vmatpush.msra.mxu0 0.0
        %6067 = vmatpush.msra.mxu0 0.0
        %6068 = vmatpush.msra.mxu0 0.0
        %6069 = vmatpush.msra.mxu0 0.0
        %6070 = vmatpush.msra.mxu0 0.0
        %6071 = vmatpush.msra.mxu0 0.0
        %6072 = vmatpush.msra.mxu0 %v6058
        %6073 = vmatpush.msra.mxu0 %v6025
        %6074 = vmatpush.msra.mxu0 %v6024
        %6075 = vmatpush.msra.mxu0 %v6023
        %6076 = vmatmul.f32.gmra.mxu0 %v6028
        %v6077 = vpop.f32.mrf.mxu0
        %v6078 = vadd.f32 0.0, %v6077
        %6079 = vmatmul.f32.gmra.mxu0 %v6031
        %v6080 = vpop.f32.mrf.mxu0
        %v6081 = vadd.f32 0.0, %v6080
        %6082 = vmatmul.f32.gmra.mxu0 %v6034
        %v6083 = vpop.f32.mrf.mxu0
        %v6084 = vadd.f32 0.0, %v6083
        %6085 = vmatmul.f32.gmra.mxu0 %v6037
        %v6086 = vpop.f32.mrf.mxu0
        %v6087 = vadd.f32 0.0, %v6086
        %6088 = vmatmul.f32.gmra.mxu0 %v6040
        %v6089 = vpop.f32.mrf.mxu0
        %v6090 = vadd.f32 0.0, %v6089
        %6091 = vmatmul.f32.gmra.mxu0 %v6043
        %v6092 = vpop.f32.mrf.mxu0
        %v6093 = vadd.f32 0.0, %v6092
        %6094 = vmatmul.f32.gmra.mxu0 %v6046
        %v6095 = vpop.f32.mrf.mxu0
        %v6096 = vadd.f32 0.0, %v6095
        %6097 = vmatmul.f32.gmra.mxu0 %v6049
        %v6098 = vpop.f32.mrf.mxu0
        %v6099 = vadd.f32 0.0, %v6098
        %6100 = vmatmul.f32.gmra.mxu0 %v6052
        %v6101 = vpop.f32.mrf.mxu0
        %v6102 = vadd.f32 0.0, %v6101
        %6103 = vmatmul.f32.gmra.mxu0 %v6055
        %v6104 = vpop.f32.mrf.mxu0
        %v6105 = vadd.f32 0.0, %v6104
        %6106 = vdwg.mxu0
        %v6107 = vadd.f32 %v5994, %v6078
        %v6108 = vadd.f32 %v5997, %v6081
        %v6109 = vadd.f32 %v6000, %v6084
        %v6110 = vadd.f32 %v6003, %v6087
        %v6111 = vadd.f32 %v6006, %v6090
        %v6112 = vadd.f32 %v6009, %v6093
        %v6113 = vadd.f32 %v6012, %v6096
        %v6114 = vadd.f32 %v6015, %v6099
        %v6115 = vadd.f32 %v6018, %v6102
        %v6116 = vadd.f32 %v6021, %v6105
        %v6117 = vld [vmem:[%s2 + $0xe20] sm:$0xff]
        %v6118 = vld [vmem:[%s2 + $0xe30] sm:$0xff]
        %v6119 = vld [vmem:[%s2 + $0xe40] sm:$0xff]
        %v6120 = vld [vmem:[%s2 + $0xe50] sm:$0xff]
        %v6121 = vld [vmem:[%s2 + $0xe60] sm:$0xff]
        %v6122 = vld [vmem:[%s2 + $0xe70] sm:$0xff]
        %v6123 = vld [vmem:[%s2 + $0xe80] sm:$0xff]
        %v6124 = vld [vmem:[%s2 + $0xe90] sm:$0xff]
        %v6125 = vld [vmem:[%s2 + $0xea0] sm:$0xff]
        %v6126 = vld [vmem:[%s2 + $0xeb0] sm:$0xff]
        %6128 = vset.pattern.permute.xlu0 0
        %6129 = vperm.xlu0 %6128, %v6117
        %v6130 = vpop.permute.xlu0 %6129
        %6133 = vset.pattern.permute.xlu0 0
        %6134 = vperm.xlu0 %6133, %v6118
        %v6135 = vpop.permute.xlu0 %6134
        %6138 = vset.pattern.permute.xlu0 0
        %6139 = vperm.xlu0 %6138, %v6119
        %v6140 = vpop.permute.xlu0 %6139
        %6143 = vset.pattern.permute.xlu0 0
        %6144 = vperm.xlu0 %6143, %v6120
        %v6145 = vpop.permute.xlu0 %6144
        %6148 = vset.pattern.permute.xlu0 0
        %6149 = vperm.xlu0 %6148, %v6121
        %v6150 = vpop.permute.xlu0 %6149
        %6153 = vset.pattern.permute.xlu0 0
        %6154 = vperm.xlu0 %6153, %v6122
        %v6155 = vpop.permute.xlu0 %6154
        %6158 = vset.pattern.permute.xlu0 0
        %6159 = vperm.xlu0 %6158, %v6123
        %v6160 = vpop.permute.xlu0 %6159
        %6163 = vset.pattern.permute.xlu0 0
        %6164 = vperm.xlu0 %6163, %v6124
        %v6165 = vpop.permute.xlu0 %6164
        %6168 = vset.pattern.permute.xlu0 0
        %6169 = vperm.xlu0 %6168, %v6125
        %v6170 = vpop.permute.xlu0 %6169
        %6173 = vset.pattern.permute.xlu0 0
        %6174 = vperm.xlu0 %6173, %v6126
        %v6175 = vpop.permute.xlu0 %6174
        %v6177 = vadd.f32 %v6107, %v6130
        %v6178 = vadd.f32 %v6108, %v6135
        %v6179 = vadd.f32 %v6109, %v6140
        %v6180 = vadd.f32 %v6110, %v6145
        %v6181 = vadd.f32 %v6111, %v6150
        %v6182 = vadd.f32 %v6112, %v6155
        %v6183 = vadd.f32 %v6113, %v6160
        %v6184 = vadd.f32 %v6114, %v6165
        %v6185 = vadd.f32 %v6115, %v6170
        %v6186 = vadd.f32 %v6116, %v6175
        %v6187 = vsel %vm5460, %v6177, 0.0
        %v6188 = vsel %vm5460, %v6178, 0.0
        %v6189 = vadd.f32 %v6187, %v6188
        %v6190 = vsel %vm5460, %v6179, 0.0
        %v6191 = vadd.f32 %v6189, %v6190
        %v6192 = vsel %vm5460, %v6180, 0.0
        %v6193 = vadd.f32 %v6191, %v6192
        %v6194 = vsel %vm5460, %v6181, 0.0
        %v6195 = vadd.f32 %v6193, %v6194
        %v6196 = vsel %vm5460, %v6182, 0.0
        %v6197 = vadd.f32 %v6195, %v6196
        %v6198 = vsel %vm5460, %v6183, 0.0
        %v6199 = vadd.f32 %v6197, %v6198
        %v6200 = vsel %vm5460, %v6184, 0.0
        %v6201 = vadd.f32 %v6199, %v6200
        %v6202 = vsel %vm5460, %v6185, 0.0
        %v6203 = vadd.f32 %v6201, %v6202
        %v6204 = vsel %vm5460, %v6186, 0.0
        %v6205 = vadd.f32 %v6203, %v6204
        %6206 = vadd.xlane.f32.xlu0 %v6205
        %v6207 = vpop.xlane.xlu0 %6206
        %v6208 = vrot.slane %v6207, 4
        %v6209 = vadd.f32 %v6207, %v6208
        %v6210 = vrot.slane %v6209, 2
        %v6211 = vadd.f32 %v6209, %v6210
        %v6212 = vrot.slane %v6211, 1
        %v6213 = vadd.f32 %v6211, %v6212
        %s6214 = vtos %v6213
        %s6215 = smul.f32 %s6214, 0.0004032258
        %v6216 = vstv %s6215
        %v6217 = vsub.f32 %v6177, %v6216
        %v6218 = vsub.f32 %v6178, %v6216
        %v6219 = vsub.f32 %v6179, %v6216
        %v6220 = vsub.f32 %v6180, %v6216
        %v6221 = vsub.f32 %v6181, %v6216
        %v6222 = vsub.f32 %v6182, %v6216
        %v6223 = vsub.f32 %v6183, %v6216
        %v6224 = vsub.f32 %v6184, %v6216
        %v6225 = vsub.f32 %v6185, %v6216
        %v6226 = vsub.f32 %v6186, %v6216
        %v6227 = vmul.f32 %v6217, %v6217
        %v6228 = vmul.f32 %v6218, %v6218
        %v6229 = vmul.f32 %v6219, %v6219
        %v6230 = vmul.f32 %v6220, %v6220
        %v6231 = vmul.f32 %v6221, %v6221
        %v6232 = vmul.f32 %v6222, %v6222
        %v6233 = vmul.f32 %v6223, %v6223
        %v6234 = vmul.f32 %v6224, %v6224
        %v6235 = vmul.f32 %v6225, %v6225
        %v6236 = vmul.f32 %v6226, %v6226
        %v6237 = vsel %vm5460, %v6227, 0.0
        %v6238 = vsel %vm5460, %v6228, 0.0
        %v6239 = vadd.f32 %v6237, %v6238
        %v6240 = vsel %vm5460, %v6229, 0.0
        %v6241 = vadd.f32 %v6239, %v6240
        %v6242 = vsel %vm5460, %v6230, 0.0
        %v6243 = vadd.f32 %v6241, %v6242
        %v6244 = vsel %vm5460, %v6231, 0.0
        %v6245 = vadd.f32 %v6243, %v6244
        %v6246 = vsel %vm5460, %v6232, 0.0
        %v6247 = vadd.f32 %v6245, %v6246
        %v6248 = vsel %vm5460, %v6233, 0.0
        %v6249 = vadd.f32 %v6247, %v6248
        %v6250 = vsel %vm5460, %v6234, 0.0
        %v6251 = vadd.f32 %v6249, %v6250
        %v6252 = vsel %vm5460, %v6235, 0.0
        %v6253 = vadd.f32 %v6251, %v6252
        %v6254 = vsel %vm5460, %v6236, 0.0
        %v6255 = vadd.f32 %v6253, %v6254
        %6256 = vadd.xlane.f32.xlu0 %v6255
        %v6257 = vpop.xlane.xlu0 %6256
        %v6258 = vrot.slane %v6257, 4
        %v6259 = vadd.f32 %v6257, %v6258
        %v6260 = vrot.slane %v6259, 2
        %v6261 = vadd.f32 %v6259, %v6260
        %v6262 = vrot.slane %v6261, 1
        %v6263 = vadd.f32 %v6261, %v6262
        %s6264 = vtos %v6263
        %s6265 = smul.f32 %s6264, 0.0004032258
        %v6266 = vld [vmem:[%s2 + $0xec0] sm:$0xff]
        %v6267 = vld [vmem:[%s2 + $0xed0] sm:$0xff]
        %v6268 = vld [vmem:[%s2 + $0xee0] sm:$0xff]
        %v6269 = vld [vmem:[%s2 + $0xef0] sm:$0xff]
        %v6270 = vld [vmem:[%s2 + $0xf00] sm:$0xff]
        %v6271 = vld [vmem:[%s2 + $0xf10] sm:$0xff]
        %v6272 = vld [vmem:[%s2 + $0xf20] sm:$0xff]
        %v6273 = vld [vmem:[%s2 + $0xf30] sm:$0xff]
        %v6274 = vld [vmem:[%s2 + $0xf40] sm:$0xff]
        %v6275 = vld [vmem:[%s2 + $0xf50] sm:$0xff]
        %v6276 = vld [vmem:[%s2 + $0xf60] sm:$0xff]
        %v6277 = vld [vmem:[%s2 + $0xf70] sm:$0xff]
        %v6278 = vld [vmem:[%s2 + $0xf80] sm:$0xff]
        %v6279 = vld [vmem:[%s2 + $0xf90] sm:$0xff]
        %v6280 = vld [vmem:[%s2 + $0xfa0] sm:$0xff]
        %v6281 = vld [vmem:[%s2 + $0xfb0] sm:$0xff]
        %v6282 = vld [vmem:[%s2 + $0xfc0] sm:$0xff]
        %v6283 = vld [vmem:[%s2 + $0xfd0] sm:$0xff]
        %v6284 = vld [vmem:[%s2 + $0xfe0] sm:$0xff]
        %v6285 = vld [vmem:[%s2 + $0xff0] sm:$0xff]
        %s6286 = sadd.f32 %s6265, 1e-05
        %v6287 = vstv %s6286
        %v6288 = vrsqrt.pop %v6287
        %v6289 = vmul.f32 %v6288, %v6287
        %v6290 = vmul.f32 %v6289, %v6288
        %v6291 = vmul.f32 0.5, %v6290
        %v6292 = vsub.f32 1.5, %v6291
        %v6293 = vmul.f32 %v6288, %v6292
        %vm6294 = vweird.f32 %v6287
        %vm6295 = vweird.f32 %v6288
        %vm6296 = vmor %vm6294, %vm6295
        %v6297 = vsel %vm6296, %v6288, %v6293
        %s6298 = vtos %v6297
        %v6299 = vstv %s6298
        %v6300 = vmul.f32 %v6217, %v6299
        %v6301 = vmul.f32 %v6218, %v6299
        %v6302 = vmul.f32 %v6219, %v6299
        %v6303 = vmul.f32 %v6220, %v6299
        %v6304 = vmul.f32 %v6221, %v6299
        %v6305 = vmul.f32 %v6222, %v6299
        %v6306 = vmul.f32 %v6223, %v6299
        %v6307 = vmul.f32 %v6224, %v6299
        %v6308 = vmul.f32 %v6225, %v6299
        %v6309 = vmul.f32 %v6226, %v6299
        %v6310 = vmul.f32 %v6300, %v6266
        %v6311 = vmul.f32 %v6301, %v6267
        %v6312 = vmul.f32 %v6302, %v6268
        %v6313 = vmul.f32 %v6303, %v6269
        %v6314 = vmul.f32 %v6304, %v6270
        %v6315 = vmul.f32 %v6305, %v6271
        %v6316 = vmul.f32 %v6306, %v6272
        %v6317 = vmul.f32 %v6307, %v6273
        %v6318 = vmul.f32 %v6308, %v6274
        %v6319 = vmul.f32 %v6309, %v6275
        %v6320 = vadd.f32 %v6310, %v6276
        %v6321 = vadd.f32 %v6311, %v6277
        %v6322 = vadd.f32 %v6312, %v6278
        %v6323 = vadd.f32 %v6313, %v6279
        %v6324 = vadd.f32 %v6314, %v6280
        %v6325 = vadd.f32 %v6315, %v6281
        %v6326 = vadd.f32 %v6316, %v6282
        %v6327 = vadd.f32 %v6317, %v6283
        %v6328 = vadd.f32 %v6318, %v6284
        %v6329 = vadd.f32 %v6319, %v6285
        %v6330 = vmax.f32 %v6320, 0.0
        %v6331 = vmax.f32 %v6321, 0.0
        %v6332 = vmax.f32 %v6322, 0.0
        %v6333 = vmax.f32 %v6323, 0.0
        %v6334 = vmax.f32 %v6324, 0.0
        %v6335 = vmax.f32 %v6325, 0.0
        %v6336 = vmax.f32 %v6326, 0.0
        %v6337 = vmax.f32 %v6327, 0.0
        %v6338 = vmax.f32 %v6328, 0.0
        %v6339 = vmax.f32 %v6329, 0.0
        %v6340 = vld [vmem:[%s1 + $0x9c0] sm:$0xf]
        %v6341 = vld [vmem:[%s1 + $0x9c8] sm:$0xf]
        %v6342 = vld [vmem:[%s1 + $0x9d0] sm:$0xf]
        %v6343 = vld [vmem:[%s1 + $0x9d8] sm:$0xf]
        %v6344 = vld [vmem:[%s1 + $0x9e0] sm:$0xf]
        %v6345 = vld [vmem:[%s1 + $0x9e8] sm:$0xf]
        %v6346 = vld [vmem:[%s1 + $0x9f0] sm:$0xf]
        %v6347 = vld [vmem:[%s1 + $0x9f8] sm:$0xf]
        %v6348 = vld [vmem:[%s1 + $0xa00] sm:$0xf]
        %v6349 = vld [vmem:[%s1 + $0xa08] sm:$0xf]
        %v6350 = vld [vmem:[%s1 + $0xa10] sm:$0xf]
        %v6351 = vld [vmem:[%s1 + $0xa18] sm:$0xf]
        %v6352 = vld [vmem:[%s1 + $0xa20] sm:$0xf]
        %v6353 = vld [vmem:[%s1 + $0xa28] sm:$0xf]
        %v6354 = vld [vmem:[%s1 + $0xa30] sm:$0xf]
        %v6355 = vld [vmem:[%s1 + $0xa38] sm:$0xf]
        %v6356 = vld [vmem:[%s1 + $0xa40] sm:$0xf]
        %v6357 = vld [vmem:[%s1 + $0xa48] sm:$0xf]
        %v6358 = vld [vmem:[%s1 + $0xa50] sm:$0xf]
        %v6359 = vld [vmem:[%s1 + $0xa58] sm:$0xf]
        %v6360 = vld [vmem:[%s1 + $0xa60] sm:$0xf]
        %v6361 = vld [vmem:[%s1 + $0xa68] sm:$0xf]
        %v6362 = vld [vmem:[%s1 + $0xa70] sm:$0xf]
        %v6363 = vld [vmem:[%s1 + $0xa78] sm:$0xf]
        %v6364 = vld [vmem:[%s1 + $0xa80] sm:$0xf]
        %v6365 = vld [vmem:[%s1 + $0xa88] sm:$0xf]
        %v6366 = vld [vmem:[%s1 + $0xa90] sm:$0xf]
        %v6367 = vld [vmem:[%s1 + $0xa98] sm:$0xf]
        %v6368 = vld [vmem:[%s1 + $0xaa0] sm:$0xf]
        %v6369 = vld [vmem:[%s1 + $0xaa8] sm:$0xf]
        %v6370 = vpack.c.bf16 %v6331, %v6330
        %v6371 = vpack.c.bf16 %v6333, %v6332
        %v6372 = vpack.c.bf16 %v6335, %v6334
        %v6373 = vpack.c.bf16 %v6337, %v6336
        %v6374 = vpack.c.bf16 %v6339, %v6338
        %v6405 = vunpack.c.l.b16 %v6340
        %v6406 = vunpack.c.l.b16 %v6341
        %v6407 = vunpack.c.l.b16 %v6342
        %v6408 = vunpack.c.l.b16 %v6343
        %v6409 = vunpack.c.l.b16 %v6344
        %v6410 = vunpack.c.l.b16 %v6345
        %v6411 = vunpack.c.l.b16 %v6346
        %v6412 = vunpack.c.l.b16 %v6347
        %v6413 = vunpack.c.l.b16 %v6348
        %v6414 = vunpack.c.l.b16 %v6349
        %v6415 = vunpack.c.l.b16 %v6350
        %v6416 = vunpack.c.l.b16 %v6351
        %v6417 = vunpack.c.l.b16 %v6352
        %v6418 = vunpack.c.l.b16 %v6353
        %v6419 = vunpack.c.l.b16 %v6354
        %v6420 = vunpack.c.l.b16 %v6355
        %v6421 = vunpack.c.l.b16 %v6356
        %v6422 = vunpack.c.l.b16 %v6357
        %v6423 = vunpack.c.l.b16 %v6358
        %v6424 = vunpack.c.l.b16 %v6359
        %v6425 = vunpack.c.l.b16 %v6360
        %v6426 = vunpack.c.l.b16 %v6361
        %v6427 = vunpack.c.l.b16 %v6362
        %v6428 = vunpack.c.l.b16 %v6363
        %v6429 = vunpack.c.l.b16 %v6364
        %v6430 = vunpack.c.l.b16 %v6365
        %v6431 = vunpack.c.l.b16 %v6366
        %v6432 = vunpack.c.l.b16 %v6367
        %v6433 = vunpack.c.l.b16 %v6368
        %v6434 = vunpack.c.l.b16 %v6369
        %v6435 = vpack.c.b16 %v6406, %v6405
        %v6436 = vpack.c.b16 %v6408, %v6407
        %v6437 = vpack.c.b16 %v6410, %v6409
        %v6438 = vpack.c.b16 %v6412, %v6411
        %v6439 = vpack.c.b16 %v6414, %v6413
        %v6440 = vpack.c.b16 %v6416, %v6415
        %v6441 = vpack.c.b16 %v6418, %v6417
        %v6442 = vpack.c.b16 %v6420, %v6419
        %v6443 = vpack.c.b16 %v6422, %v6421
        %v6444 = vpack.c.b16 %v6424, %v6423
        %v6445 = vpack.c.b16 %v6426, %v6425
        %v6446 = vpack.c.b16 %v6428, %v6427
        %v6447 = vpack.c.b16 %v6430, %v6429
        %v6448 = vpack.c.b16 %v6432, %v6431
        %v6449 = vpack.c.b16 %v6434, %v6433
        %v6451 = vsel %vm5724, %v6435, 0
        %v6454 = vsel %vm5724, %v6436, 0
        %v6457 = vsel %vm5724, %v6437, 0
        %v6460 = vsel %vm5724, %v6438, 0
        %v6463 = vsel %vm5724, %v6439, 0
        %v6466 = vsel %vm5724, %v6440, 0
        %v6469 = vsel %vm5724, %v6441, 0
        %v6472 = vsel %vm5724, %v6442, 0
        %v6475 = vsel %vm5724, %v6443, 0
        %v6478 = vsel %vm5724, %v6444, 0
        %v6481 = vsel %vm5724, %v6445, 0
        %v6484 = vsel %vm5724, %v6446, 0
        %v6487 = vsel %vm5724, %v6447, 0
        %v6490 = vsel %vm5724, %v6448, 0
        %v6493 = vsel %vm5724, %v6449, 0
        %6495 = vmatpush.bf16.msra.mxu0 0
        %6496 = vmatpush.bf16.msra.mxu0 0
        %6497 = vmatpush.bf16.msra.mxu0 0
        %6498 = vmatpush.bf16.msra.mxu0 %v6374
        %6499 = vmatpush.bf16.msra.mxu0 %v6373
        %6500 = vmatpush.bf16.msra.mxu0 %v6372
        %6501 = vmatpush.bf16.msra.mxu0 %v6371
        %6502 = vmatpush.bf16.msra.mxu0 %v6370
        %6503 = vmatmul.bf16.gmra.mxu0 %v6451
        %v6504 = vpop.f32.mrf.mxu0
        %v6505 = vadd.f32 0.0, %v6504
        %v6506 = vpop.f32.mrf.mxu0
        %v6507 = vadd.f32 0.0, %v6506
        %6508 = vmatmul.bf16.gmra.mxu0 %v6454
        %v6509 = vpop.f32.mrf.mxu0
        %v6510 = vadd.f32 0.0, %v6509
        %v6511 = vpop.f32.mrf.mxu0
        %v6512 = vadd.f32 0.0, %v6511
        %6513 = vmatmul.bf16.gmra.mxu0 %v6457
        %v6514 = vpop.f32.mrf.mxu0
        %v6515 = vadd.f32 0.0, %v6514
        %v6516 = vpop.f32.mrf.mxu0
        %v6517 = vadd.f32 0.0, %v6516
        %6518 = vmatmul.bf16.gmra.mxu0 %v6460
        %v6519 = vpop.f32.mrf.mxu0
        %v6520 = vadd.f32 0.0, %v6519
        %v6521 = vpop.f32.mrf.mxu0
        %v6522 = vadd.f32 0.0, %v6521
        %6523 = vmatmul.bf16.gmra.mxu0 %v6463
        %v6524 = vpop.f32.mrf.mxu0
        %v6525 = vadd.f32 0.0, %v6524
        %v6526 = vpop.f32.mrf.mxu0
        %v6527 = vadd.f32 0.0, %v6526
        %6528 = vmatmul.bf16.gmra.mxu0 %v6466
        %v6529 = vpop.f32.mrf.mxu0
        %v6530 = vadd.f32 0.0, %v6529
        %v6531 = vpop.f32.mrf.mxu0
        %v6532 = vadd.f32 0.0, %v6531
        %6533 = vmatmul.bf16.gmra.mxu0 %v6469
        %v6534 = vpop.f32.mrf.mxu0
        %v6535 = vadd.f32 0.0, %v6534
        %v6536 = vpop.f32.mrf.mxu0
        %v6537 = vadd.f32 0.0, %v6536
        %6538 = vmatmul.bf16.gmra.mxu0 %v6472
        %v6539 = vpop.f32.mrf.mxu0
        %v6540 = vadd.f32 0.0, %v6539
        %v6541 = vpop.f32.mrf.mxu0
        %v6542 = vadd.f32 0.0, %v6541
        %6543 = vmatmul.bf16.gmra.mxu0 %v6475
        %v6544 = vpop.f32.mrf.mxu0
        %v6545 = vadd.f32 0.0, %v6544
        %v6546 = vpop.f32.mrf.mxu0
        %v6547 = vadd.f32 0.0, %v6546
        %6548 = vmatmul.bf16.gmra.mxu0 %v6478
        %v6549 = vpop.f32.mrf.mxu0
        %v6550 = vadd.f32 0.0, %v6549
        %v6551 = vpop.f32.mrf.mxu0
        %v6552 = vadd.f32 0.0, %v6551
        %6553 = vmatmul.bf16.gmra.mxu0 %v6481
        %v6554 = vpop.f32.mrf.mxu0
        %v6555 = vadd.f32 0.0, %v6554
        %v6556 = vpop.f32.mrf.mxu0
        %v6557 = vadd.f32 0.0, %v6556
        %6558 = vmatmul.bf16.gmra.mxu0 %v6484
        %v6559 = vpop.f32.mrf.mxu0
        %v6560 = vadd.f32 0.0, %v6559
        %v6561 = vpop.f32.mrf.mxu0
        %v6562 = vadd.f32 0.0, %v6561
        %6563 = vmatmul.bf16.gmra.mxu0 %v6487
        %v6564 = vpop.f32.mrf.mxu0
        %v6565 = vadd.f32 0.0, %v6564
        %v6566 = vpop.f32.mrf.mxu0
        %v6567 = vadd.f32 0.0, %v6566
        %6568 = vmatmul.bf16.gmra.mxu0 %v6490
        %v6569 = vpop.f32.mrf.mxu0
        %v6570 = vadd.f32 0.0, %v6569
        %v6571 = vpop.f32.mrf.mxu0
        %v6572 = vadd.f32 0.0, %v6571
        %6573 = vmatmul.bf16.gmra.mxu0 %v6493
        %v6574 = vpop.f32.mrf.mxu0
        %v6575 = vadd.f32 0.0, %v6574
        %v6576 = vpop.f32.mrf.mxu0
        %v6577 = vadd.f32 0.0, %v6576
        %6578 = vdwg.mxu0
        %v6579 = vld [vmem:[%s2 + $0x1000] sm:$0xff]
        %v6580 = vld [vmem:[%s2 + $0x1010] sm:$0xff]
        %v6581 = vld [vmem:[%s2 + $0x1020] sm:$0xff]
        %v6582 = vld [vmem:[%s2 + $0x1030] sm:$0x7f]
        %v6583 = vld [vmem:[%s2 + $0x1040] sm:$0xff]
        %v6584 = vld [vmem:[%s2 + $0x1050] sm:$0xff]
        %v6585 = vld [vmem:[%s2 + $0x1060] sm:$0xff]
        %v6586 = vld [vmem:[%s2 + $0x1070] sm:$0x7f]
        %v6588 = vsel %vm5460, %v6530, 0
        %v6591 = vsel %vm5460, %v6532, 0
        %v6594 = vsel %vm5460, %v6535, 0
        %v6597 = vsel %vm5460, %v6537, 0
        %v6600 = vsel %vm5460, %v6540, 0
        %v6603 = vsel %vm5460, %v6542, 0
        %v6606 = vsel %vm5460, %v6545, 0
        %v6609 = vsel %vm5460, %v6547, 0
        %v6612 = vsel %vm5460, %v6550, 0
        %v6615 = vsel %vm5460, %v6552, 0
        %v6618 = vsel %vm5892, %v6586, 0
        %6620 = vmatpush.msra.mxu0 0.0
        %6621 = vmatpush.msra.mxu0 0.0
        %6622 = vmatpush.msra.mxu0 0.0
        %6623 = vmatpush.msra.mxu0 0.0
        %6624 = vmatpush.msra.mxu0 0.0
        %6625 = vmatpush.msra.mxu0 0.0
        %6626 = vmatpush.msra.mxu0 0.0
        %6627 = vmatpush.msra.mxu0 0.0
        %6628 = vmatpush.msra.mxu0 0.0
        %6629 = vmatpush.msra.mxu0 0.0
        %6630 = vmatpush.msra.mxu0 0.0
        %6631 = vmatpush.msra.mxu0 0.0
        %6632 = vmatpush.msra.mxu0 %v6618
        %6633 = vmatpush.msra.mxu0 %v6585
        %6634 = vmatpush.msra.mxu0 %v6584
        %6635 = vmatpush.msra.mxu0 %v6583
        %6636 = vmatmul.f32.gmra.mxu0 %v6588
        %v6637 = vpop.f32.mrf.mxu0
        %v6638 = vadd.f32 0.0, %v6637
        %6639 = vmatmul.f32.gmra.mxu0 %v6591
        %v6640 = vpop.f32.mrf.mxu0
        %v6641 = vadd.f32 0.0, %v6640
        %6642 = vmatmul.f32.gmra.mxu0 %v6594
        %v6643 = vpop.f32.mrf.mxu0
        %v6644 = vadd.f32 0.0, %v6643
        %6645 = vmatmul.f32.gmra.mxu0 %v6597
        %v6646 = vpop.f32.mrf.mxu0
        %v6647 = vadd.f32 0.0, %v6646
        %6648 = vmatmul.f32.gmra.mxu0 %v6600
        %v6649 = vpop.f32.mrf.mxu0
        %v6650 = vadd.f32 0.0, %v6649
        %6651 = vmatmul.f32.gmra.mxu0 %v6603
        %v6652 = vpop.f32.mrf.mxu0
        %v6653 = vadd.f32 0.0, %v6652
        %6654 = vmatmul.f32.gmra.mxu0 %v6606
        %v6655 = vpop.f32.mrf.mxu0
        %v6656 = vadd.f32 0.0, %v6655
        %6657 = vmatmul.f32.gmra.mxu0 %v6609
        %v6658 = vpop.f32.mrf.mxu0
        %v6659 = vadd.f32 0.0, %v6658
        %6660 = vmatmul.f32.gmra.mxu0 %v6612
        %v6661 = vpop.f32.mrf.mxu0
        %v6662 = vadd.f32 0.0, %v6661
        %6663 = vmatmul.f32.gmra.mxu0 %v6615
        %v6664 = vpop.f32.mrf.mxu0
        %v6665 = vadd.f32 0.0, %v6664
        %6666 = vdwg.mxu0
        %v6668 = vsel %vm5460, %v6505, 0
        %v6671 = vsel %vm5460, %v6507, 0
        %v6674 = vsel %vm5460, %v6510, 0
        %v6677 = vsel %vm5460, %v6512, 0
        %v6680 = vsel %vm5460, %v6515, 0
        %v6683 = vsel %vm5460, %v6517, 0
        %v6686 = vsel %vm5460, %v6520, 0
        %v6689 = vsel %vm5460, %v6522, 0
        %v6692 = vsel %vm5460, %v6525, 0
        %v6695 = vsel %vm5460, %v6527, 0
        %v6698 = vsel %vm5892, %v6582, 0
        %6700 = vmatpush.msra.mxu0 0.0
        %6701 = vmatpush.msra.mxu0 0.0
        %6702 = vmatpush.msra.mxu0 0.0
        %6703 = vmatpush.msra.mxu0 0.0
        %6704 = vmatpush.msra.mxu0 0.0
        %6705 = vmatpush.msra.mxu0 0.0
        %6706 = vmatpush.msra.mxu0 0.0
        %6707 = vmatpush.msra.mxu0 0.0
        %6708 = vmatpush.msra.mxu0 0.0
        %6709 = vmatpush.msra.mxu0 0.0
        %6710 = vmatpush.msra.mxu0 0.0
        %6711 = vmatpush.msra.mxu0 0.0
        %6712 = vmatpush.msra.mxu0 %v6698
        %6713 = vmatpush.msra.mxu0 %v6581
        %6714 = vmatpush.msra.mxu0 %v6580
        %6715 = vmatpush.msra.mxu0 %v6579
        %6716 = vmatmul.f32.gmra.mxu0 %v6668
        %v6717 = vpop.f32.mrf.mxu0
        %v6718 = vadd.f32 %v6638, %v6717
        %6719 = vmatmul.f32.gmra.mxu0 %v6671
        %v6720 = vpop.f32.mrf.mxu0
        %v6721 = vadd.f32 %v6641, %v6720
        %6722 = vmatmul.f32.gmra.mxu0 %v6674
        %v6723 = vpop.f32.mrf.mxu0
        %v6724 = vadd.f32 %v6644, %v6723
        %6725 = vmatmul.f32.gmra.mxu0 %v6677
        %v6726 = vpop.f32.mrf.mxu0
        %v6727 = vadd.f32 %v6647, %v6726
        %6728 = vmatmul.f32.gmra.mxu0 %v6680
        %v6729 = vpop.f32.mrf.mxu0
        %v6730 = vadd.f32 %v6650, %v6729
        %6731 = vmatmul.f32.gmra.mxu0 %v6683
        %v6732 = vpop.f32.mrf.mxu0
        %v6733 = vadd.f32 %v6653, %v6732
        %6734 = vmatmul.f32.gmra.mxu0 %v6686
        %v6735 = vpop.f32.mrf.mxu0
        %v6736 = vadd.f32 %v6656, %v6735
        %6737 = vmatmul.f32.gmra.mxu0 %v6689
        %v6738 = vpop.f32.mrf.mxu0
        %v6739 = vadd.f32 %v6659, %v6738
        %6740 = vmatmul.f32.gmra.mxu0 %v6692
        %v6741 = vpop.f32.mrf.mxu0
        %v6742 = vadd.f32 %v6662, %v6741
        %6743 = vmatmul.f32.gmra.mxu0 %v6695
        %v6744 = vpop.f32.mrf.mxu0
        %v6745 = vadd.f32 %v6665, %v6744
        %6746 = vdwg.mxu0
        %v6747 = vld [vmem:[%s2 + $0x1080] sm:$0xff]
        %v6748 = vld [vmem:[%s2 + $0x1090] sm:$0xff]
        %v6749 = vld [vmem:[%s2 + $0x10a0] sm:$0xff]
        %v6750 = vld [vmem:[%s2 + $0x10b0] sm:$0x7f]
        %v6752 = vsel %vm5460, %v6555, 0
        %v6755 = vsel %vm5460, %v6557, 0
        %v6758 = vsel %vm5460, %v6560, 0
        %v6761 = vsel %vm5460, %v6562, 0
        %v6764 = vsel %vm5460, %v6565, 0
        %v6767 = vsel %vm5460, %v6567, 0
        %v6770 = vsel %vm5460, %v6570, 0
        %v6773 = vsel %vm5460, %v6572, 0
        %v6776 = vsel %vm5460, %v6575, 0
        %v6779 = vsel %vm5460, %v6577, 0
        %v6782 = vsel %vm5892, %v6750, 0
        %6784 = vmatpush.msra.mxu0 0.0
        %6785 = vmatpush.msra.mxu0 0.0
        %6786 = vmatpush.msra.mxu0 0.0
        %6787 = vmatpush.msra.mxu0 0.0
        %6788 = vmatpush.msra.mxu0 0.0
        %6789 = vmatpush.msra.mxu0 0.0
        %6790 = vmatpush.msra.mxu0 0.0
        %6791 = vmatpush.msra.mxu0 0.0
        %6792 = vmatpush.msra.mxu0 0.0
        %6793 = vmatpush.msra.mxu0 0.0
        %6794 = vmatpush.msra.mxu0 0.0
        %6795 = vmatpush.msra.mxu0 0.0
        %6796 = vmatpush.msra.mxu0 %v6782
        %6797 = vmatpush.msra.mxu0 %v6749
        %6798 = vmatpush.msra.mxu0 %v6748
        %6799 = vmatpush.msra.mxu0 %v6747
        %6800 = vmatmul.f32.gmra.mxu0 %v6752
        %v6801 = vpop.f32.mrf.mxu0
        %v6802 = vadd.f32 0.0, %v6801
        %6803 = vmatmul.f32.gmra.mxu0 %v6755
        %v6804 = vpop.f32.mrf.mxu0
        %v6805 = vadd.f32 0.0, %v6804
        %6806 = vmatmul.f32.gmra.mxu0 %v6758
        %v6807 = vpop.f32.mrf.mxu0
        %v6808 = vadd.f32 0.0, %v6807
        %6809 = vmatmul.f32.gmra.mxu0 %v6761
        %v6810 = vpop.f32.mrf.mxu0
        %v6811 = vadd.f32 0.0, %v6810
        %6812 = vmatmul.f32.gmra.mxu0 %v6764
        %v6813 = vpop.f32.mrf.mxu0
        %v6814 = vadd.f32 0.0, %v6813
        %6815 = vmatmul.f32.gmra.mxu0 %v6767
        %v6816 = vpop.f32.mrf.mxu0
        %v6817 = vadd.f32 0.0, %v6816
        %6818 = vmatmul.f32.gmra.mxu0 %v6770
        %v6819 = vpop.f32.mrf.mxu0
        %v6820 = vadd.f32 0.0, %v6819
        %6821 = vmatmul.f32.gmra.mxu0 %v6773
        %v6822 = vpop.f32.mrf.mxu0
        %v6823 = vadd.f32 0.0, %v6822
        %6824 = vmatmul.f32.gmra.mxu0 %v6776
        %v6825 = vpop.f32.mrf.mxu0
        %v6826 = vadd.f32 0.0, %v6825
        %6827 = vmatmul.f32.gmra.mxu0 %v6779
        %v6828 = vpop.f32.mrf.mxu0
        %v6829 = vadd.f32 0.0, %v6828
        %6830 = vdwg.mxu0
        %v6831 = vadd.f32 %v6718, %v6802
        %v6832 = vadd.f32 %v6721, %v6805
        %v6833 = vadd.f32 %v6724, %v6808
        %v6834 = vadd.f32 %v6727, %v6811
        %v6835 = vadd.f32 %v6730, %v6814
        %v6836 = vadd.f32 %v6733, %v6817
        %v6837 = vadd.f32 %v6736, %v6820
        %v6838 = vadd.f32 %v6739, %v6823
        %v6839 = vadd.f32 %v6742, %v6826
        %v6840 = vadd.f32 %v6745, %v6829
        %v6841 = vld [vmem:[%s2 + $0x10c0] sm:$0xff]
        %v6842 = vld [vmem:[%s2 + $0x10d0] sm:$0xff]
        %v6843 = vld [vmem:[%s2 + $0x10e0] sm:$0xff]
        %v6844 = vld [vmem:[%s2 + $0x10f0] sm:$0xff]
        %v6845 = vld [vmem:[%s2 + $0x1100] sm:$0xff]
        %v6846 = vld [vmem:[%s2 + $0x1110] sm:$0xff]
        %v6847 = vld [vmem:[%s2 + $0x1120] sm:$0xff]
        %v6848 = vld [vmem:[%s2 + $0x1130] sm:$0xff]
        %v6849 = vld [vmem:[%s2 + $0x1140] sm:$0xff]
        %v6850 = vld [vmem:[%s2 + $0x1150] sm:$0xff]
        %6852 = vset.pattern.permute.xlu0 0
        %6853 = vperm.xlu0 %6852, %v6841
        %v6854 = vpop.permute.xlu0 %6853
        %6857 = vset.pattern.permute.xlu0 0
        %6858 = vperm.xlu0 %6857, %v6842
        %v6859 = vpop.permute.xlu0 %6858
        %6862 = vset.pattern.permute.xlu0 0
        %6863 = vperm.xlu0 %6862, %v6843
        %v6864 = vpop.permute.xlu0 %6863
        %6867 = vset.pattern.permute.xlu0 0
        %6868 = vperm.xlu0 %6867, %v6844
        %v6869 = vpop.permute.xlu0 %6868
        %6872 = vset.pattern.permute.xlu0 0
        %6873 = vperm.xlu0 %6872, %v6845
        %v6874 = vpop.permute.xlu0 %6873
        %6877 = vset.pattern.permute.xlu0 0
        %6878 = vperm.xlu0 %6877, %v6846
        %v6879 = vpop.permute.xlu0 %6878
        %6882 = vset.pattern.permute.xlu0 0
        %6883 = vperm.xlu0 %6882, %v6847
        %v6884 = vpop.permute.xlu0 %6883
        %6887 = vset.pattern.permute.xlu0 0
        %6888 = vperm.xlu0 %6887, %v6848
        %v6889 = vpop.permute.xlu0 %6888
        %6892 = vset.pattern.permute.xlu0 0
        %6893 = vperm.xlu0 %6892, %v6849
        %v6894 = vpop.permute.xlu0 %6893
        %6897 = vset.pattern.permute.xlu0 0
        %6898 = vperm.xlu0 %6897, %v6850
        %v6899 = vpop.permute.xlu0 %6898
        %v6901 = vadd.f32 %v6831, %v6854
        %v6902 = vadd.f32 %v6832, %v6859
        %v6903 = vadd.f32 %v6833, %v6864
        %v6904 = vadd.f32 %v6834, %v6869
        %v6905 = vadd.f32 %v6835, %v6874
        %v6906 = vadd.f32 %v6836, %v6879
        %v6907 = vadd.f32 %v6837, %v6884
        %v6908 = vadd.f32 %v6838, %v6889
        %v6909 = vadd.f32 %v6839, %v6894
        %v6910 = vadd.f32 %v6840, %v6899
        %v6911 = vsel %vm5460, %v6901, 0.0
        %v6912 = vsel %vm5460, %v6902, 0.0
        %v6913 = vadd.f32 %v6911, %v6912
        %v6914 = vsel %vm5460, %v6903, 0.0
        %v6915 = vadd.f32 %v6913, %v6914
        %v6916 = vsel %vm5460, %v6904, 0.0
        %v6917 = vadd.f32 %v6915, %v6916
        %v6918 = vsel %vm5460, %v6905, 0.0
        %v6919 = vadd.f32 %v6917, %v6918
        %v6920 = vsel %vm5460, %v6906, 0.0
        %v6921 = vadd.f32 %v6919, %v6920
        %v6922 = vsel %vm5460, %v6907, 0.0
        %v6923 = vadd.f32 %v6921, %v6922
        %v6924 = vsel %vm5460, %v6908, 0.0
        %v6925 = vadd.f32 %v6923, %v6924
        %v6926 = vsel %vm5460, %v6909, 0.0
        %v6927 = vadd.f32 %v6925, %v6926
        %v6928 = vsel %vm5460, %v6910, 0.0
        %v6929 = vadd.f32 %v6927, %v6928
        %6930 = vadd.xlane.f32.xlu0 %v6929
        %v6931 = vpop.xlane.xlu0 %6930
        %v6932 = vrot.slane %v6931, 4
        %v6933 = vadd.f32 %v6931, %v6932
        %v6934 = vrot.slane %v6933, 2
        %v6935 = vadd.f32 %v6933, %v6934
        %v6936 = vrot.slane %v6935, 1
        %v6937 = vadd.f32 %v6935, %v6936
        %s6938 = vtos %v6937
        %s6939 = smul.f32 %s6938, 0.0004032258
        %v6940 = vstv %s6939
        %v6941 = vsub.f32 %v6901, %v6940
        %v6942 = vsub.f32 %v6902, %v6940
        %v6943 = vsub.f32 %v6903, %v6940
        %v6944 = vsub.f32 %v6904, %v6940
        %v6945 = vsub.f32 %v6905, %v6940
        %v6946 = vsub.f32 %v6906, %v6940
        %v6947 = vsub.f32 %v6907, %v6940
        %v6948 = vsub.f32 %v6908, %v6940
        %v6949 = vsub.f32 %v6909, %v6940
        %v6950 = vsub.f32 %v6910, %v6940
        %v6951 = vmul.f32 %v6941, %v6941
        %v6952 = vmul.f32 %v6942, %v6942
        %v6953 = vmul.f32 %v6943, %v6943
        %v6954 = vmul.f32 %v6944, %v6944
        %v6955 = vmul.f32 %v6945, %v6945
        %v6956 = vmul.f32 %v6946, %v6946
        %v6957 = vmul.f32 %v6947, %v6947
        %v6958 = vmul.f32 %v6948, %v6948
        %v6959 = vmul.f32 %v6949, %v6949
        %v6960 = vmul.f32 %v6950, %v6950
        %v6961 = vsel %vm5460, %v6951, 0.0
        %v6962 = vsel %vm5460, %v6952, 0.0
        %v6963 = vadd.f32 %v6961, %v6962
        %v6964 = vsel %vm5460, %v6953, 0.0
        %v6965 = vadd.f32 %v6963, %v6964
        %v6966 = vsel %vm5460, %v6954, 0.0
        %v6967 = vadd.f32 %v6965, %v6966
        %v6968 = vsel %vm5460, %v6955, 0.0
        %v6969 = vadd.f32 %v6967, %v6968
        %v6970 = vsel %vm5460, %v6956, 0.0
        %v6971 = vadd.f32 %v6969, %v6970
        %v6972 = vsel %vm5460, %v6957, 0.0
        %v6973 = vadd.f32 %v6971, %v6972
        %v6974 = vsel %vm5460, %v6958, 0.0
        %v6975 = vadd.f32 %v6973, %v6974
        %v6976 = vsel %vm5460, %v6959, 0.0
        %v6977 = vadd.f32 %v6975, %v6976
        %v6978 = vsel %vm5460, %v6960, 0.0
        %v6979 = vadd.f32 %v6977, %v6978
        %6980 = vadd.xlane.f32.xlu0 %v6979
        %v6981 = vpop.xlane.xlu0 %6980
        %v6982 = vrot.slane %v6981, 4
        %v6983 = vadd.f32 %v6981, %v6982
        %v6984 = vrot.slane %v6983, 2
        %v6985 = vadd.f32 %v6983, %v6984
        %v6986 = vrot.slane %v6985, 1
        %v6987 = vadd.f32 %v6985, %v6986
        %s6988 = vtos %v6987
        %s6989 = smul.f32 %s6988, 0.0004032258
        %v6990 = vld [vmem:[%s2 + $0x1160] sm:$0xff]
        %v6991 = vld [vmem:[%s2 + $0x1170] sm:$0xff]
        %v6992 = vld [vmem:[%s2 + $0x1180] sm:$0xff]
        %v6993 = vld [vmem:[%s2 + $0x1190] sm:$0xff]
        %v6994 = vld [vmem:[%s2 + $0x11a0] sm:$0xff]
        %v6995 = vld [vmem:[%s2 + $0x11b0] sm:$0xff]
        %v6996 = vld [vmem:[%s2 + $0x11c0] sm:$0xff]
        %v6997 = vld [vmem:[%s2 + $0x11d0] sm:$0xff]
        %v6998 = vld [vmem:[%s2 + $0x11e0] sm:$0xff]
        %v6999 = vld [vmem:[%s2 + $0x11f0] sm:$0xff]
        %v7000 = vld [vmem:[%s2 + $0x1200] sm:$0xff]
        %v7001 = vld [vmem:[%s2 + $0x1210] sm:$0xff]
        %v7002 = vld [vmem:[%s2 + $0x1220] sm:$0xff]
        %v7003 = vld [vmem:[%s2 + $0x1230] sm:$0xff]
        %v7004 = vld [vmem:[%s2 + $0x1240] sm:$0xff]
        %v7005 = vld [vmem:[%s2 + $0x1250] sm:$0xff]
        %v7006 = vld [vmem:[%s2 + $0x1260] sm:$0xff]
        %v7007 = vld [vmem:[%s2 + $0x1270] sm:$0xff]
        %v7008 = vld [vmem:[%s2 + $0x1280] sm:$0xff]
        %v7009 = vld [vmem:[%s2 + $0x1290] sm:$0xff]
        %s7010 = sadd.f32 %s6989, 1e-05
        %v7011 = vstv %s7010
        %v7012 = vrsqrt.pop %v7011
        %v7013 = vmul.f32 %v7012, %v7011
        %v7014 = vmul.f32 %v7013, %v7012
        %v7015 = vmul.f32 0.5, %v7014
        %v7016 = vsub.f32 1.5, %v7015
        %v7017 = vmul.f32 %v7012, %v7016
        %vm7018 = vweird.f32 %v7011
        %vm7019 = vweird.f32 %v7012
        %vm7020 = vmor %vm7018, %vm7019
        %v7021 = vsel %vm7020, %v7012, %v7017
        %s7022 = vtos %v7021
        %v7023 = vstv %s7022
        %v7024 = vmul.f32 %v6941, %v7023
        %v7025 = vmul.f32 %v6942, %v7023
        %v7026 = vmul.f32 %v6943, %v7023
        %v7027 = vmul.f32 %v6944, %v7023
        %v7028 = vmul.f32 %v6945, %v7023
        %v7029 = vmul.f32 %v6946, %v7023
        %v7030 = vmul.f32 %v6947, %v7023
        %v7031 = vmul.f32 %v6948, %v7023
        %v7032 = vmul.f32 %v6949, %v7023
        %v7033 = vmul.f32 %v6950, %v7023
        %v7034 = vmul.f32 %v7024, %v6990
        %v7035 = vmul.f32 %v7025, %v6991
        %v7036 = vmul.f32 %v7026, %v6992
        %v7037 = vmul.f32 %v7027, %v6993
        %v7038 = vmul.f32 %v7028, %v6994
        %v7039 = vmul.f32 %v7029, %v6995
        %v7040 = vmul.f32 %v7030, %v6996
        %v7041 = vmul.f32 %v7031, %v6997
        %v7042 = vmul.f32 %v7032, %v6998
        %v7043 = vmul.f32 %v7033, %v6999
        %v7044 = vadd.f32 %v7034, %v7000
        %v7045 = vadd.f32 %v7035, %v7001
        %v7046 = vadd.f32 %v7036, %v7002
        %v7047 = vadd.f32 %v7037, %v7003
        %v7048 = vadd.f32 %v7038, %v7004
        %v7049 = vadd.f32 %v7039, %v7005
        %v7050 = vadd.f32 %v7040, %v7006
        %v7051 = vadd.f32 %v7041, %v7007
        %v7052 = vadd.f32 %v7042, %v7008
        %v7053 = vadd.f32 %v7043, %v7009
        %v7054 = vmax.f32 %v7044, 0.0
        %v7055 = vmax.f32 %v7045, 0.0
        %v7056 = vmax.f32 %v7046, 0.0
        %v7057 = vmax.f32 %v7047, 0.0
        %v7058 = vmax.f32 %v7048, 0.0
        %v7059 = vmax.f32 %v7049, 0.0
        %v7060 = vmax.f32 %v7050, 0.0
        %v7061 = vmax.f32 %v7051, 0.0
        %v7062 = vmax.f32 %v7052, 0.0
        %v7063 = vmax.f32 %v7053, 0.0
        %v7064 = vadd.f32 %v5604, %v7054
        %v7065 = vadd.f32 %v5605, %v7055
        %v7066 = vadd.f32 %v5606, %v7056
        %v7067 = vadd.f32 %v5607, %v7057
        %v7068 = vadd.f32 %v5608, %v7058
        %v7069 = vadd.f32 %v5609, %v7059
        %v7070 = vadd.f32 %v5610, %v7060
        %v7071 = vadd.f32 %v5611, %v7061
        %v7072 = vadd.f32 %v5612, %v7062
        %v7073 = vadd.f32 %v5613, %v7063
        %v7074 = vld [vmem:[%s1 + $0xab0] sm:$0xf]
        %v7075 = vld [vmem:[%s1 + $0xab8] sm:$0xf]
        %v7076 = vld [vmem:[%s1 + $0xac0] sm:$0xf]
        %v7077 = vld [vmem:[%s1 + $0xac8] sm:$0xf]
        %v7078 = vld [vmem:[%s1 + $0xad0] sm:$0xf]
        %v7079 = vld [vmem:[%s1 + $0xad8] sm:$0xf]
        %v7080 = vld [vmem:[%s1 + $0xae0] sm:$0xf]
        %v7081 = vld [vmem:[%s1 + $0xae8] sm:$0xf]
        %v7082 = vld [vmem:[%s1 + $0xaf0] sm:$0xf]
        %v7083 = vld [vmem:[%s1 + $0xaf8] sm:$0xf]
        %v7084 = vld [vmem:[%s1 + $0xb00] sm:$0xf]
        %v7085 = vld [vmem:[%s1 + $0xb08] sm:$0xf]
        %v7086 = vld [vmem:[%s1 + $0xb10] sm:$0xf]
        %v7087 = vld [vmem:[%s1 + $0xb18] sm:$0xf]
        %v7088 = vld [vmem:[%s1 + $0xb20] sm:$0xf]
        %v7089 = vld [vmem:[%s1 + $0xb28] sm:$0xf]
        %v7090 = vld [vmem:[%s1 + $0xb30] sm:$0xf]
        %v7091 = vld [vmem:[%s1 + $0xb38] sm:$0xf]
        %v7092 = vld [vmem:[%s1 + $0xb40] sm:$0xf]
        %v7093 = vld [vmem:[%s1 + $0xb48] sm:$0xf]
        %v7094 = vld [vmem:[%s1 + $0xb50] sm:$0xf]
        %v7095 = vld [vmem:[%s1 + $0xb58] sm:$0xf]
        %v7096 = vld [vmem:[%s1 + $0xb60] sm:$0xf]
        %v7097 = vld [vmem:[%s1 + $0xb68] sm:$0xf]
        %v7098 = vld [vmem:[%s1 + $0xb70] sm:$0xf]
        %v7099 = vld [vmem:[%s1 + $0xb78] sm:$0xf]
        %v7100 = vld [vmem:[%s1 + $0xb80] sm:$0xf]
        %v7101 = vld [vmem:[%s1 + $0xb88] sm:$0xf]
        %v7102 = vld [vmem:[%s1 + $0xb90] sm:$0xf]
        %v7103 = vld [vmem:[%s1 + $0xb98] sm:$0xf]
        %v7104 = vld [vmem:[%s1 + $0xba0] sm:$0xf]
        %v7105 = vld [vmem:[%s1 + $0xba8] sm:$0xf]
        %v7106 = vld [vmem:[%s1 + $0xbb0] sm:$0xf]
        %v7107 = vld [vmem:[%s1 + $0xbb8] sm:$0xf]
        %v7108 = vld [vmem:[%s1 + $0xbc0] sm:$0xf]
        %v7109 = vld [vmem:[%s1 + $0xbc8] sm:$0xf]
        %v7110 = vld [vmem:[%s1 + $0xbd0] sm:$0xf]
        %v7111 = vld [vmem:[%s1 + $0xbd8] sm:$0xf]
        %v7112 = vld [vmem:[%s1 + $0xbe0] sm:$0xf]
        %v7113 = vld [vmem:[%s1 + $0xbe8] sm:$0xf]
        %v7114 = vpack.c.bf16 %v7065, %v7064
        %v7115 = vpack.c.bf16 %v7067, %v7066
        %v7116 = vpack.c.bf16 %v7069, %v7068
        %v7117 = vpack.c.bf16 %v7071, %v7070
        %v7118 = vpack.c.bf16 %v7073, %v7072
        %v7159 = vunpack.c.l.b16 %v7074
        %v7160 = vunpack.c.l.b16 %v7075
        %v7161 = vunpack.c.l.b16 %v7076
        %v7162 = vunpack.c.l.b16 %v7077
        %v7163 = vunpack.c.l.b16 %v7078
        %v7164 = vunpack.c.l.b16 %v7079
        %v7165 = vunpack.c.l.b16 %v7080
        %v7166 = vunpack.c.l.b16 %v7081
        %v7167 = vunpack.c.l.b16 %v7082
        %v7168 = vunpack.c.l.b16 %v7083
        %v7169 = vunpack.c.l.b16 %v7084
        %v7170 = vunpack.c.l.b16 %v7085
        %v7171 = vunpack.c.l.b16 %v7086
        %v7172 = vunpack.c.l.b16 %v7087
        %v7173 = vunpack.c.l.b16 %v7088
        %v7174 = vunpack.c.l.b16 %v7089
        %v7175 = vunpack.c.l.b16 %v7090
        %v7176 = vunpack.c.l.b16 %v7091
        %v7177 = vunpack.c.l.b16 %v7092
        %v7178 = vunpack.c.l.b16 %v7093
        %v7179 = vunpack.c.l.b16 %v7094
        %v7180 = vunpack.c.l.b16 %v7095
        %v7181 = vunpack.c.l.b16 %v7096
        %v7182 = vunpack.c.l.b16 %v7097
        %v7183 = vunpack.c.l.b16 %v7098
        %v7184 = vunpack.c.l.b16 %v7099
        %v7185 = vunpack.c.l.b16 %v7100
        %v7186 = vunpack.c.l.b16 %v7101
        %v7187 = vunpack.c.l.b16 %v7102
        %v7188 = vunpack.c.l.b16 %v7103
        %v7189 = vunpack.c.l.b16 %v7104
        %v7190 = vunpack.c.l.b16 %v7105
        %v7191 = vunpack.c.l.b16 %v7106
        %v7192 = vunpack.c.l.b16 %v7107
        %v7193 = vunpack.c.l.b16 %v7108
        %v7194 = vunpack.c.l.b16 %v7109
        %v7195 = vunpack.c.l.b16 %v7110
        %v7196 = vunpack.c.l.b16 %v7111
        %v7197 = vunpack.c.l.b16 %v7112
        %v7198 = vunpack.c.l.b16 %v7113
        %v7199 = vpack.c.b16 %v7160, %v7159
        %v7200 = vpack.c.b16 %v7162, %v7161
        %v7201 = vpack.c.b16 %v7164, %v7163
        %v7202 = vpack.c.b16 %v7166, %v7165
        %v7203 = vpack.c.b16 %v7168, %v7167
        %v7204 = vpack.c.b16 %v7170, %v7169
        %v7205 = vpack.c.b16 %v7172, %v7171
        %v7206 = vpack.c.b16 %v7174, %v7173
        %v7207 = vpack.c.b16 %v7176, %v7175
        %v7208 = vpack.c.b16 %v7178, %v7177
        %v7209 = vpack.c.b16 %v7180, %v7179
        %v7210 = vpack.c.b16 %v7182, %v7181
        %v7211 = vpack.c.b16 %v7184, %v7183
        %v7212 = vpack.c.b16 %v7186, %v7185
        %v7213 = vpack.c.b16 %v7188, %v7187
        %v7214 = vpack.c.b16 %v7190, %v7189
        %v7215 = vpack.c.b16 %v7192, %v7191
        %v7216 = vpack.c.b16 %v7194, %v7193
        %v7217 = vpack.c.b16 %v7196, %v7195
        %v7218 = vpack.c.b16 %v7198, %v7197
        %v7220 = vsel %vm5724, %v7199, 0
        %v7223 = vsel %vm5724, %v7200, 0
        %v7226 = vsel %vm5724, %v7201, 0
        %v7229 = vsel %vm5724, %v7202, 0
        %v7232 = vsel %vm5724, %v7203, 0
        %v7235 = vsel %vm5724, %v7204, 0
        %v7238 = vsel %vm5724, %v7205, 0
        %v7241 = vsel %vm5724, %v7206, 0
        %v7244 = vsel %vm5724, %v7207, 0
        %v7247 = vsel %vm5724, %v7208, 0
        %v7250 = vsel %vm5724, %v7209, 0
        %v7253 = vsel %vm5724, %v7210, 0
        %v7256 = vsel %vm5724, %v7211, 0
        %v7259 = vsel %vm5724, %v7212, 0
        %v7262 = vsel %vm5724, %v7213, 0
        %v7265 = vsel %vm5724, %v7214, 0
        %v7268 = vsel %vm5724, %v7215, 0
        %v7271 = vsel %vm5724, %v7216, 0
        %v7274 = vsel %vm5724, %v7217, 0
        %v7277 = vsel %vm5724, %v7218, 0
        %7279 = vmatpush.bf16.msra.mxu0 0
        %7280 = vmatpush.bf16.msra.mxu0 0
        %7281 = vmatpush.bf16.msra.mxu0 0
        %7282 = vmatpush.bf16.msra.mxu0 %v7118
        %7283 = vmatpush.bf16.msra.mxu0 %v7117
        %7284 = vmatpush.bf16.msra.mxu0 %v7116
        %7285 = vmatpush.bf16.msra.mxu0 %v7115
        %7286 = vmatpush.bf16.msra.mxu0 %v7114
        %7287 = vmatmul.bf16.gmra.mxu0 %v7220
        %v7288 = vpop.f32.mrf.mxu0
        %v7289 = vadd.f32 0.0, %v7288
        %v7290 = vpop.f32.mrf.mxu0
        %v7291 = vadd.f32 0.0, %v7290
        %7292 = vmatmul.bf16.gmra.mxu0 %v7223
        %v7293 = vpop.f32.mrf.mxu0
        %v7294 = vadd.f32 0.0, %v7293
        %v7295 = vpop.f32.mrf.mxu0
        %v7296 = vadd.f32 0.0, %v7295
        %7297 = vmatmul.bf16.gmra.mxu0 %v7226
        %v7298 = vpop.f32.mrf.mxu0
        %v7299 = vadd.f32 0.0, %v7298
        %v7300 = vpop.f32.mrf.mxu0
        %v7301 = vadd.f32 0.0, %v7300
        %7302 = vmatmul.bf16.gmra.mxu0 %v7229
        %v7303 = vpop.f32.mrf.mxu0
        %v7304 = vadd.f32 0.0, %v7303
        %v7305 = vpop.f32.mrf.mxu0
        %v7306 = vadd.f32 0.0, %v7305
        %7307 = vmatmul.bf16.gmra.mxu0 %v7232
        %v7308 = vpop.f32.mrf.mxu0
        %v7309 = vadd.f32 0.0, %v7308
        %v7310 = vpop.f32.mrf.mxu0
        %v7311 = vadd.f32 0.0, %v7310
        %7312 = vmatmul.bf16.gmra.mxu0 %v7235
        %v7313 = vpop.f32.mrf.mxu0
        %v7314 = vadd.f32 0.0, %v7313
        %v7315 = vpop.f32.mrf.mxu0
        %v7316 = vadd.f32 0.0, %v7315
        %7317 = vmatmul.bf16.gmra.mxu0 %v7238
        %v7318 = vpop.f32.mrf.mxu0
        %v7319 = vadd.f32 0.0, %v7318
        %v7320 = vpop.f32.mrf.mxu0
        %v7321 = vadd.f32 0.0, %v7320
        %7322 = vmatmul.bf16.gmra.mxu0 %v7241
        %v7323 = vpop.f32.mrf.mxu0
        %v7324 = vadd.f32 0.0, %v7323
        %v7325 = vpop.f32.mrf.mxu0
        %v7326 = vadd.f32 0.0, %v7325
        %7327 = vmatmul.bf16.gmra.mxu0 %v7244
        %v7328 = vpop.f32.mrf.mxu0
        %v7329 = vadd.f32 0.0, %v7328
        %v7330 = vpop.f32.mrf.mxu0
        %v7331 = vadd.f32 0.0, %v7330
        %7332 = vmatmul.bf16.gmra.mxu0 %v7247
        %v7333 = vpop.f32.mrf.mxu0
        %v7334 = vadd.f32 0.0, %v7333
        %v7335 = vpop.f32.mrf.mxu0
        %v7336 = vadd.f32 0.0, %v7335
        %7337 = vmatmul.bf16.gmra.mxu0 %v7250
        %v7338 = vpop.f32.mrf.mxu0
        %v7339 = vadd.f32 0.0, %v7338
        %v7340 = vpop.f32.mrf.mxu0
        %v7341 = vadd.f32 0.0, %v7340
        %7342 = vmatmul.bf16.gmra.mxu0 %v7253
        %v7343 = vpop.f32.mrf.mxu0
        %v7344 = vadd.f32 0.0, %v7343
        %v7345 = vpop.f32.mrf.mxu0
        %v7346 = vadd.f32 0.0, %v7345
        %7347 = vmatmul.bf16.gmra.mxu0 %v7256
        %v7348 = vpop.f32.mrf.mxu0
        %v7349 = vadd.f32 0.0, %v7348
        %v7350 = vpop.f32.mrf.mxu0
        %v7351 = vadd.f32 0.0, %v7350
        %7352 = vmatmul.bf16.gmra.mxu0 %v7259
        %v7353 = vpop.f32.mrf.mxu0
        %v7354 = vadd.f32 0.0, %v7353
        %v7355 = vpop.f32.mrf.mxu0
        %v7356 = vadd.f32 0.0, %v7355
        %7357 = vmatmul.bf16.gmra.mxu0 %v7262
        %v7358 = vpop.f32.mrf.mxu0
        %v7359 = vadd.f32 0.0, %v7358
        %v7360 = vpop.f32.mrf.mxu0
        %v7361 = vadd.f32 0.0, %v7360
        %7362 = vmatmul.bf16.gmra.mxu0 %v7265
        %v7363 = vpop.f32.mrf.mxu0
        %v7364 = vadd.f32 0.0, %v7363
        %v7365 = vpop.f32.mrf.mxu0
        %v7366 = vadd.f32 0.0, %v7365
        %7367 = vmatmul.bf16.gmra.mxu0 %v7268
        %v7368 = vpop.f32.mrf.mxu0
        %v7369 = vadd.f32 0.0, %v7368
        %v7370 = vpop.f32.mrf.mxu0
        %v7371 = vadd.f32 0.0, %v7370
        %7372 = vmatmul.bf16.gmra.mxu0 %v7271
        %v7373 = vpop.f32.mrf.mxu0
        %v7374 = vadd.f32 0.0, %v7373
        %v7375 = vpop.f32.mrf.mxu0
        %v7376 = vadd.f32 0.0, %v7375
        %7377 = vmatmul.bf16.gmra.mxu0 %v7274
        %v7378 = vpop.f32.mrf.mxu0
        %v7379 = vadd.f32 0.0, %v7378
        %v7380 = vpop.f32.mrf.mxu0
        %v7381 = vadd.f32 0.0, %v7380
        %7382 = vmatmul.bf16.gmra.mxu0 %v7277
        %v7383 = vpop.f32.mrf.mxu0
        %v7384 = vadd.f32 0.0, %v7383
        %v7385 = vpop.f32.mrf.mxu0
        %v7386 = vadd.f32 0.0, %v7385
        %7387 = vdwg.mxu0
        %v7388 = vld [vmem:[%s2 + $0x12a0] sm:$0xff]
        %v7389 = vld [vmem:[%s2 + $0x12b0] sm:$0xff]
        %v7390 = vld [vmem:[%s2 + $0x12c0] sm:$0xff]
        %v7391 = vld [vmem:[%s2 + $0x12d0] sm:$0x7f]
        %v7392 = vld [vmem:[%s2 + $0x12e0] sm:$0xff]
        %v7393 = vld [vmem:[%s2 + $0x12f0] sm:$0xff]
        %v7394 = vld [vmem:[%s2 + $0x1300] sm:$0xff]
        %v7395 = vld [vmem:[%s2 + $0x1310] sm:$0x7f]
        %v7397 = vsel %vm5460, %v7309, 0
        %v7400 = vsel %vm5460, %v7311, 0
        %v7403 = vsel %vm5460, %v7314, 0
        %v7406 = vsel %vm5460, %v7316, 0
        %v7409 = vsel %vm5460, %v7319, 0
        %v7412 = vsel %vm5460, %v7321, 0
        %v7415 = vsel %vm5460, %v7324, 0
        %v7418 = vsel %vm5460, %v7326, 0
        %v7421 = vsel %vm5892, %v7395, 0
        %7423 = vmatpush.msra.mxu0 0.0
        %7424 = vmatpush.msra.mxu0 0.0
        %7425 = vmatpush.msra.mxu0 0.0
        %7426 = vmatpush.msra.mxu0 0.0
        %7427 = vmatpush.msra.mxu0 0.0
        %7428 = vmatpush.msra.mxu0 0.0
        %7429 = vmatpush.msra.mxu0 0.0
        %7430 = vmatpush.msra.mxu0 0.0
        %7431 = vmatpush.msra.mxu0 0.0
        %7432 = vmatpush.msra.mxu0 0.0
        %7433 = vmatpush.msra.mxu0 0.0
        %7434 = vmatpush.msra.mxu0 0.0
        %7435 = vmatpush.msra.mxu0 %v7421
        %7436 = vmatpush.msra.mxu0 %v7394
        %7437 = vmatpush.msra.mxu0 %v7393
        %7438 = vmatpush.msra.mxu0 %v7392
        %7439 = vmatmul.f32.gmra.mxu0 %v7397
        %v7440 = vpop.f32.mrf.mxu0
        %v7441 = vadd.f32 0.0, %v7440
        %7442 = vmatmul.f32.gmra.mxu0 %v7400
        %v7443 = vpop.f32.mrf.mxu0
        %v7444 = vadd.f32 0.0, %v7443
        %7445 = vmatmul.f32.gmra.mxu0 %v7403
        %v7446 = vpop.f32.mrf.mxu0
        %v7447 = vadd.f32 0.0, %v7446
        %7448 = vmatmul.f32.gmra.mxu0 %v7406
        %v7449 = vpop.f32.mrf.mxu0
        %v7450 = vadd.f32 0.0, %v7449
        %7451 = vmatmul.f32.gmra.mxu0 %v7409
        %v7452 = vpop.f32.mrf.mxu0
        %v7453 = vadd.f32 0.0, %v7452
        %7454 = vmatmul.f32.gmra.mxu0 %v7412
        %v7455 = vpop.f32.mrf.mxu0
        %v7456 = vadd.f32 0.0, %v7455
        %7457 = vmatmul.f32.gmra.mxu0 %v7415
        %v7458 = vpop.f32.mrf.mxu0
        %v7459 = vadd.f32 0.0, %v7458
        %7460 = vmatmul.f32.gmra.mxu0 %v7418
        %v7461 = vpop.f32.mrf.mxu0
        %v7462 = vadd.f32 0.0, %v7461
        %7463 = vdwg.mxu0
        %v7465 = vsel %vm5460, %v7289, 0
        %v7468 = vsel %vm5460, %v7291, 0
        %v7471 = vsel %vm5460, %v7294, 0
        %v7474 = vsel %vm5460, %v7296, 0
        %v7477 = vsel %vm5460, %v7299, 0
        %v7480 = vsel %vm5460, %v7301, 0
        %v7483 = vsel %vm5460, %v7304, 0
        %v7486 = vsel %vm5460, %v7306, 0
        %v7489 = vsel %vm5892, %v7391, 0
        %7491 = vmatpush.msra.mxu0 0.0
        %7492 = vmatpush.msra.mxu0 0.0
        %7493 = vmatpush.msra.mxu0 0.0
        %7494 = vmatpush.msra.mxu0 0.0
        %7495 = vmatpush.msra.mxu0 0.0
        %7496 = vmatpush.msra.mxu0 0.0
        %7497 = vmatpush.msra.mxu0 0.0
        %7498 = vmatpush.msra.mxu0 0.0
        %7499 = vmatpush.msra.mxu0 0.0
        %7500 = vmatpush.msra.mxu0 0.0
        %7501 = vmatpush.msra.mxu0 0.0
        %7502 = vmatpush.msra.mxu0 0.0
        %7503 = vmatpush.msra.mxu0 %v7489
        %7504 = vmatpush.msra.mxu0 %v7390
        %7505 = vmatpush.msra.mxu0 %v7389
        %7506 = vmatpush.msra.mxu0 %v7388
        %7507 = vmatmul.f32.gmra.mxu0 %v7465
        %v7508 = vpop.f32.mrf.mxu0
        %v7509 = vadd.f32 %v7441, %v7508
        %7510 = vmatmul.f32.gmra.mxu0 %v7468
        %v7511 = vpop.f32.mrf.mxu0
        %v7512 = vadd.f32 %v7444, %v7511
        %7513 = vmatmul.f32.gmra.mxu0 %v7471
        %v7514 = vpop.f32.mrf.mxu0
        %v7515 = vadd.f32 %v7447, %v7514
        %7516 = vmatmul.f32.gmra.mxu0 %v7474
        %v7517 = vpop.f32.mrf.mxu0
        %v7518 = vadd.f32 %v7450, %v7517
        %7519 = vmatmul.f32.gmra.mxu0 %v7477
        %v7520 = vpop.f32.mrf.mxu0
        %v7521 = vadd.f32 %v7453, %v7520
        %7522 = vmatmul.f32.gmra.mxu0 %v7480
        %v7523 = vpop.f32.mrf.mxu0
        %v7524 = vadd.f32 %v7456, %v7523
        %7525 = vmatmul.f32.gmra.mxu0 %v7483
        %v7526 = vpop.f32.mrf.mxu0
        %v7527 = vadd.f32 %v7459, %v7526
        %7528 = vmatmul.f32.gmra.mxu0 %v7486
        %v7529 = vpop.f32.mrf.mxu0
        %v7530 = vadd.f32 %v7462, %v7529
        %7531 = vdwg.mxu0
        %v7532 = vld [vmem:[%s2 + $0x1320] sm:$0xff]
        %v7533 = vld [vmem:[%s2 + $0x1330] sm:$0xff]
        %v7534 = vld [vmem:[%s2 + $0x1340] sm:$0xff]
        %v7535 = vld [vmem:[%s2 + $0x1350] sm:$0x7f]
        %v7537 = vsel %vm5460, %v7329, 0
        %v7540 = vsel %vm5460, %v7331, 0
        %v7543 = vsel %vm5460, %v7334, 0
        %v7546 = vsel %vm5460, %v7336, 0
        %v7549 = vsel %vm5460, %v7339, 0
        %v7552 = vsel %vm5460, %v7341, 0
        %v7555 = vsel %vm5460, %v7344, 0
        %v7558 = vsel %vm5460, %v7346, 0
        %v7561 = vsel %vm5892, %v7535, 0
        %7563 = vmatpush.msra.mxu0 0.0
        %7564 = vmatpush.msra.mxu0 0.0
        %7565 = vmatpush.msra.mxu0 0.0
        %7566 = vmatpush.msra.mxu0 0.0
        %7567 = vmatpush.msra.mxu0 0.0
        %7568 = vmatpush.msra.mxu0 0.0
        %7569 = vmatpush.msra.mxu0 0.0
        %7570 = vmatpush.msra.mxu0 0.0
        %7571 = vmatpush.msra.mxu0 0.0
        %7572 = vmatpush.msra.mxu0 0.0
        %7573 = vmatpush.msra.mxu0 0.0
        %7574 = vmatpush.msra.mxu0 0.0
        %7575 = vmatpush.msra.mxu0 %v7561
        %7576 = vmatpush.msra.mxu0 %v7534
        %7577 = vmatpush.msra.mxu0 %v7533
        %7578 = vmatpush.msra.mxu0 %v7532
        %7579 = vmatmul.f32.gmra.mxu0 %v7537
        %v7580 = vpop.f32.mrf.mxu0
        %v7581 = vadd.f32 0.0, %v7580
        %7582 = vmatmul.f32.gmra.mxu0 %v7540
        %v7583 = vpop.f32.mrf.mxu0
        %v7584 = vadd.f32 0.0, %v7583
        %7585 = vmatmul.f32.gmra.mxu0 %v7543
        %v7586 = vpop.f32.mrf.mxu0
        %v7587 = vadd.f32 0.0, %v7586
        %7588 = vmatmul.f32.gmra.mxu0 %v7546
        %v7589 = vpop.f32.mrf.mxu0
        %v7590 = vadd.f32 0.0, %v7589
        %7591 = vmatmul.f32.gmra.mxu0 %v7549
        %v7592 = vpop.f32.mrf.mxu0
        %v7593 = vadd.f32 0.0, %v7592
        %7594 = vmatmul.f32.gmra.mxu0 %v7552
        %v7595 = vpop.f32.mrf.mxu0
        %v7596 = vadd.f32 0.0, %v7595
        %7597 = vmatmul.f32.gmra.mxu0 %v7555
        %v7598 = vpop.f32.mrf.mxu0
        %v7599 = vadd.f32 0.0, %v7598
        %7600 = vmatmul.f32.gmra.mxu0 %v7558
        %v7601 = vpop.f32.mrf.mxu0
        %v7602 = vadd.f32 0.0, %v7601
        %7603 = vdwg.mxu0
        %v7604 = vadd.f32 %v7509, %v7581
        %v7605 = vadd.f32 %v7512, %v7584
        %v7606 = vadd.f32 %v7515, %v7587
        %v7607 = vadd.f32 %v7518, %v7590
        %v7608 = vadd.f32 %v7521, %v7593
        %v7609 = vadd.f32 %v7524, %v7596
        %v7610 = vadd.f32 %v7527, %v7599
        %v7611 = vadd.f32 %v7530, %v7602
        %v7612 = vld [vmem:[%s2 + $0x1360] sm:$0xff]
        %v7613 = vld [vmem:[%s2 + $0x1370] sm:$0xff]
        %v7614 = vld [vmem:[%s2 + $0x1380] sm:$0xff]
        %v7615 = vld [vmem:[%s2 + $0x1390] sm:$0x7f]
        %v7617 = vsel %vm5460, %v7349, 0
        %v7620 = vsel %vm5460, %v7351, 0
        %v7623 = vsel %vm5460, %v7354, 0
        %v7626 = vsel %vm5460, %v7356, 0
        %v7629 = vsel %vm5460, %v7359, 0
        %v7632 = vsel %vm5460, %v7361, 0
        %v7635 = vsel %vm5460, %v7364, 0
        %v7638 = vsel %vm5460, %v7366, 0
        %v7641 = vsel %vm5892, %v7615, 0
        %7643 = vmatpush.msra.mxu0 0.0
        %7644 = vmatpush.msra.mxu0 0.0
        %7645 = vmatpush.msra.mxu0 0.0
        %7646 = vmatpush.msra.mxu0 0.0
        %7647 = vmatpush.msra.mxu0 0.0
        %7648 = vmatpush.msra.mxu0 0.0
        %7649 = vmatpush.msra.mxu0 0.0
        %7650 = vmatpush.msra.mxu0 0.0
        %7651 = vmatpush.msra.mxu0 0.0
        %7652 = vmatpush.msra.mxu0 0.0
        %7653 = vmatpush.msra.mxu0 0.0
        %7654 = vmatpush.msra.mxu0 0.0
        %7655 = vmatpush.msra.mxu0 %v7641
        %7656 = vmatpush.msra.mxu0 %v7614
        %7657 = vmatpush.msra.mxu0 %v7613
        %7658 = vmatpush.msra.mxu0 %v7612
        %7659 = vmatmul.f32.gmra.mxu0 %v7617
        %v7660 = vpop.f32.mrf.mxu0
        %v7661 = vadd.f32 0.0, %v7660
        %7662 = vmatmul.f32.gmra.mxu0 %v7620
        %v7663 = vpop.f32.mrf.mxu0
        %v7664 = vadd.f32 0.0, %v7663
        %7665 = vmatmul.f32.gmra.mxu0 %v7623
        %v7666 = vpop.f32.mrf.mxu0
        %v7667 = vadd.f32 0.0, %v7666
        %7668 = vmatmul.f32.gmra.mxu0 %v7626
        %v7669 = vpop.f32.mrf.mxu0
        %v7670 = vadd.f32 0.0, %v7669
        %7671 = vmatmul.f32.gmra.mxu0 %v7629
        %v7672 = vpop.f32.mrf.mxu0
        %v7673 = vadd.f32 0.0, %v7672
        %7674 = vmatmul.f32.gmra.mxu0 %v7632
        %v7675 = vpop.f32.mrf.mxu0
        %v7676 = vadd.f32 0.0, %v7675
        %7677 = vmatmul.f32.gmra.mxu0 %v7635
        %v7678 = vpop.f32.mrf.mxu0
        %v7679 = vadd.f32 0.0, %v7678
        %7680 = vmatmul.f32.gmra.mxu0 %v7638
        %v7681 = vpop.f32.mrf.mxu0
        %v7682 = vadd.f32 0.0, %v7681
        %7683 = vdwg.mxu0
        %v7684 = vadd.f32 %v7604, %v7661
        %v7685 = vadd.f32 %v7605, %v7664
        %v7686 = vadd.f32 %v7606, %v7667
        %v7687 = vadd.f32 %v7607, %v7670
        %v7688 = vadd.f32 %v7608, %v7673
        %v7689 = vadd.f32 %v7609, %v7676
        %v7690 = vadd.f32 %v7610, %v7679
        %v7691 = vadd.f32 %v7611, %v7682
        %v7692 = vld [vmem:[%s2 + $0x13a0] sm:$0xff]
        %v7693 = vld [vmem:[%s2 + $0x13b0] sm:$0xff]
        %v7694 = vld [vmem:[%s2 + $0x13c0] sm:$0xff]
        %v7695 = vld [vmem:[%s2 + $0x13d0] sm:$0x7f]
        %v7697 = vsel %vm5460, %v7369, 0
        %v7700 = vsel %vm5460, %v7371, 0
        %v7703 = vsel %vm5460, %v7374, 0
        %v7706 = vsel %vm5460, %v7376, 0
        %v7709 = vsel %vm5460, %v7379, 0
        %v7712 = vsel %vm5460, %v7381, 0
        %v7715 = vsel %vm5460, %v7384, 0
        %v7718 = vsel %vm5460, %v7386, 0
        %v7721 = vsel %vm5892, %v7695, 0
        %7723 = vmatpush.msra.mxu0 0.0
        %7724 = vmatpush.msra.mxu0 0.0
        %7725 = vmatpush.msra.mxu0 0.0
        %7726 = vmatpush.msra.mxu0 0.0
        %7727 = vmatpush.msra.mxu0 0.0
        %7728 = vmatpush.msra.mxu0 0.0
        %7729 = vmatpush.msra.mxu0 0.0
        %7730 = vmatpush.msra.mxu0 0.0
        %7731 = vmatpush.msra.mxu0 0.0
        %7732 = vmatpush.msra.mxu0 0.0
        %7733 = vmatpush.msra.mxu0 0.0
        %7734 = vmatpush.msra.mxu0 0.0
        %7735 = vmatpush.msra.mxu0 %v7721
        %7736 = vmatpush.msra.mxu0 %v7694
        %7737 = vmatpush.msra.mxu0 %v7693
        %7738 = vmatpush.msra.mxu0 %v7692
        %7739 = vmatmul.f32.gmra.mxu0 %v7697
        %v7740 = vpop.f32.mrf.mxu0
        %v7741 = vadd.f32 0.0, %v7740
        %7742 = vmatmul.f32.gmra.mxu0 %v7700
        %v7743 = vpop.f32.mrf.mxu0
        %v7744 = vadd.f32 0.0, %v7743
        %7745 = vmatmul.f32.gmra.mxu0 %v7703
        %v7746 = vpop.f32.mrf.mxu0
        %v7747 = vadd.f32 0.0, %v7746
        %7748 = vmatmul.f32.gmra.mxu0 %v7706
        %v7749 = vpop.f32.mrf.mxu0
        %v7750 = vadd.f32 0.0, %v7749
        %7751 = vmatmul.f32.gmra.mxu0 %v7709
        %v7752 = vpop.f32.mrf.mxu0
        %v7753 = vadd.f32 0.0, %v7752
        %7754 = vmatmul.f32.gmra.mxu0 %v7712
        %v7755 = vpop.f32.mrf.mxu0
        %v7756 = vadd.f32 0.0, %v7755
        %7757 = vmatmul.f32.gmra.mxu0 %v7715
        %v7758 = vpop.f32.mrf.mxu0
        %v7759 = vadd.f32 0.0, %v7758
        %7760 = vmatmul.f32.gmra.mxu0 %v7718
        %v7761 = vpop.f32.mrf.mxu0
        %v7762 = vadd.f32 0.0, %v7761
        %7763 = vdwg.mxu0
        %v7764 = vadd.f32 %v7684, %v7741
        %v7765 = vadd.f32 %v7685, %v7744
        %v7766 = vadd.f32 %v7686, %v7747
        %v7767 = vadd.f32 %v7687, %v7750
        %v7768 = vadd.f32 %v7688, %v7753
        %v7769 = vadd.f32 %v7689, %v7756
        %v7770 = vadd.f32 %v7690, %v7759
        %v7771 = vadd.f32 %v7691, %v7762
        %vm7772 = vcmask 515072
        %v7773 = vsel %vm7772, %v7764, 0.0
        %v7774 = vsel %vm7772, %v7765, 0.0
        %v7775 = vadd.f32 %v7773, %v7774
        %v7776 = vsel %vm7772, %v7766, 0.0
        %v7777 = vadd.f32 %v7775, %v7776
        %v7778 = vsel %vm7772, %v7767, 0.0
        %v7779 = vadd.f32 %v7777, %v7778
        %v7780 = vsel %vm7772, %v7768, 0.0
        %v7781 = vadd.f32 %v7779, %v7780
        %v7782 = vsel %vm7772, %v7769, 0.0
        %v7783 = vadd.f32 %v7781, %v7782
        %v7784 = vsel %vm7772, %v7770, 0.0
        %v7785 = vadd.f32 %v7783, %v7784
        %v7786 = vsel %vm7772, %v7771, 0.0
        %v7787 = vadd.f32 %v7785, %v7786
        %7788 = vadd.xlane.f32.xlu0 %v7787
        %v7789 = vpop.xlane.xlu0 %7788
        %v7790 = vrot.slane %v7789, 4
        %v7791 = vadd.f32 %v7789, %v7790
        %v7792 = vrot.slane %v7791, 2
        %v7793 = vadd.f32 %v7791, %v7792
        %v7794 = vrot.slane %v7793, 1
        %v7795 = vadd.f32 %v7793, %v7794
        %s7796 = vtos %v7795
        %s7797 = smul.f32 %s7796, 0.0002480159
        %v7798 = vstv %s7797
        %v7799 = vsub.f32 %v7764, %v7798
        %v7800 = vsub.f32 %v7765, %v7798
        %v7801 = vsub.f32 %v7766, %v7798
        %v7802 = vsub.f32 %v7767, %v7798
        %v7803 = vsub.f32 %v7768, %v7798
        %v7804 = vsub.f32 %v7769, %v7798
        %v7805 = vsub.f32 %v7770, %v7798
        %v7806 = vsub.f32 %v7771, %v7798
        %v7807 = vmul.f32 %v7799, %v7799
        %v7808 = vmul.f32 %v7800, %v7800
        %v7809 = vmul.f32 %v7801, %v7801
        %v7810 = vmul.f32 %v7802, %v7802
        %v7811 = vmul.f32 %v7803, %v7803
        %v7812 = vmul.f32 %v7804, %v7804
        %v7813 = vmul.f32 %v7805, %v7805
        %v7814 = vmul.f32 %v7806, %v7806
        %v7815 = vsel %vm7772, %v7807, 0.0
        %v7816 = vsel %vm7772, %v7808, 0.0
        %v7817 = vadd.f32 %v7815, %v7816
        %v7818 = vsel %vm7772, %v7809, 0.0
        %v7819 = vadd.f32 %v7817, %v7818
        %v7820 = vsel %vm7772, %v7810, 0.0
        %v7821 = vadd.f32 %v7819, %v7820
        %v7822 = vsel %vm7772, %v7811, 0.0
        %v7823 = vadd.f32 %v7821, %v7822
        %v7824 = vsel %vm7772, %v7812, 0.0
        %v7825 = vadd.f32 %v7823, %v7824
        %v7826 = vsel %vm7772, %v7813, 0.0
        %v7827 = vadd.f32 %v7825, %v7826
        %v7828 = vsel %vm7772, %v7814, 0.0
        %v7829 = vadd.f32 %v7827, %v7828
        %7830 = vadd.xlane.f32.xlu0 %v7829
        %v7831 = vpop.xlane.xlu0 %7830
        %v7832 = vrot.slane %v7831, 4
        %v7833 = vadd.f32 %v7831, %v7832
        %v7834 = vrot.slane %v7833, 2
        %v7835 = vadd.f32 %v7833, %v7834
        %v7836 = vrot.slane %v7835, 1
        %v7837 = vadd.f32 %v7835, %v7836
        %s7838 = vtos %v7837
        %s7839 = smul.f32 %s7838, 0.0002480159
        %v7840 = vld [vmem:[%s2 + $0x13e0] sm:$0xff]
        %v7841 = vld [vmem:[%s2 + $0x13f0] sm:$0xff]
        %v7842 = vld [vmem:[%s2 + $0x1400] sm:$0xff]
        %v7843 = vld [vmem:[%s2 + $0x1410] sm:$0xff]
        %v7844 = vld [vmem:[%s2 + $0x1420] sm:$0xff]
        %v7845 = vld [vmem:[%s2 + $0x1430] sm:$0xff]
        %v7846 = vld [vmem:[%s2 + $0x1440] sm:$0xff]
        %v7847 = vld [vmem:[%s2 + $0x1450] sm:$0xff]
        %v7848 = vld [vmem:[%s2 + $0x1460] sm:$0xff]
        %v7849 = vld [vmem:[%s2 + $0x1470] sm:$0xff]
        %v7850 = vld [vmem:[%s2 + $0x1480] sm:$0xff]
        %v7851 = vld [vmem:[%s2 + $0x1490] sm:$0xff]
        %v7852 = vld [vmem:[%s2 + $0x14a0] sm:$0xff]
        %v7853 = vld [vmem:[%s2 + $0x14b0] sm:$0xff]
        %v7854 = vld [vmem:[%s2 + $0x14c0] sm:$0xff]
        %v7855 = vld [vmem:[%s2 + $0x14d0] sm:$0xff]
        %s7856 = sadd.f32 %s7839, 1e-05
        %v7857 = vstv %s7856
        %v7858 = vrsqrt.pop %v7857
        %v7859 = vmul.f32 %v7858, %v7857
        %v7860 = vmul.f32 %v7859, %v7858
        %v7861 = vmul.f32 0.5, %v7860
        %v7862 = vsub.f32 1.5, %v7861
        %v7863 = vmul.f32 %v7858, %v7862
        %vm7864 = vweird.f32 %v7857
        %vm7865 = vweird.f32 %v7858
        %vm7866 = vmor %vm7864, %vm7865
        %v7867 = vsel %vm7866, %v7858, %v7863
        %s7868 = vtos %v7867
        %v7869 = vstv %s7868
        %v7870 = vmul.f32 %v7799, %v7869
        %v7871 = vmul.f32 %v7800, %v7869
        %v7872 = vmul.f32 %v7801, %v7869
        %v7873 = vmul.f32 %v7802, %v7869
        %v7874 = vmul.f32 %v7803, %v7869
        %v7875 = vmul.f32 %v7804, %v7869
        %v7876 = vmul.f32 %v7805, %v7869
        %v7877 = vmul.f32 %v7806, %v7869
        %v7878 = vmul.f32 %v7870, %v7840
        %v7879 = vmul.f32 %v7871, %v7841
        %v7880 = vmul.f32 %v7872, %v7842
        %v7881 = vmul.f32 %v7873, %v7843
        %v7882 = vmul.f32 %v7874, %v7844
        %v7883 = vmul.f32 %v7875, %v7845
        %v7884 = vmul.f32 %v7876, %v7846
        %v7885 = vmul.f32 %v7877, %v7847
        %v7886 = vadd.f32 %v7878, %v7848
        %v7887 = vadd.f32 %v7879, %v7849
        %v7888 = vadd.f32 %v7880, %v7850
        %v7889 = vadd.f32 %v7881, %v7851
        %v7890 = vadd.f32 %v7882, %v7852
        %v7891 = vadd.f32 %v7883, %v7853
        %v7892 = vadd.f32 %v7884, %v7854
        %v7893 = vadd.f32 %v7885, %v7855
        %v7894 = vmax.f32 %v7886, 0.0
        %v7895 = vmax.f32 %v7887, 0.0
        %v7896 = vmax.f32 %v7888, 0.0
        %v7897 = vmax.f32 %v7889, 0.0
        %v7898 = vmax.f32 %v7890, 0.0
        %v7899 = vmax.f32 %v7891, 0.0
        %v7900 = vmax.f32 %v7892, 0.0
        %v7901 = vmax.f32 %v7893, 0.0
        %v7902 = vld [vmem:[%s1 + $0xbf0] sm:$0xf]
        %v7903 = vld [vmem:[%s1 + $0xbf8] sm:$0xf]
        %v7904 = vld [vmem:[%s1 + $0xc00] sm:$0xf]
        %v7905 = vld [vmem:[%s1 + $0xc08] sm:$0xf]
        %v7906 = vld [vmem:[%s1 + $0xc10] sm:$0xf]
        %v7907 = vld [vmem:[%s1 + $0xc18] sm:$0xf]
        %v7908 = vld [vmem:[%s1 + $0xc20] sm:$0xf]
        %v7909 = vld [vmem:[%s1 + $0xc28] sm:$0xf]
        %v7910 = vld [vmem:[%s1 + $0xc30] sm:$0xf]
        %v7911 = vld [vmem:[%s1 + $0xc38] sm:$0xf]
        %v7912 = vpack.c.bf16 %v7895, %v7894
        %v7913 = vpack.c.bf16 %v7897, %v7896
        %v7914 = vpack.c.bf16 %v7899, %v7898
        %v7915 = vpack.c.bf16 %v7901, %v7900
        %v7926 = vunpack.c.l.b16 %v7902
        %v7927 = vunpack.c.l.b16 %v7903
        %v7928 = vunpack.c.l.b16 %v7904
        %v7929 = vunpack.c.l.b16 %v7905
        %v7930 = vunpack.c.l.b16 %v7906
        %v7931 = vunpack.c.l.b16 %v7907
        %v7932 = vunpack.c.l.b16 %v7908
        %v7933 = vunpack.c.l.b16 %v7909
        %v7934 = vunpack.c.l.b16 %v7910
        %v7935 = vunpack.c.l.b16 %v7911
        %v7936 = vpack.c.b16 %v7927, %v7926
        %v7937 = vpack.c.b16 %v7929, %v7928
        %v7938 = vpack.c.b16 %v7931, %v7930
        %v7939 = vpack.c.b16 %v7933, %v7932
        %v7940 = vpack.c.b16 %v7935, %v7934
        %v7942 = vsel %vm1472, %v7936, 0
        %v7945 = vsel %vm1472, %v7937, 0
        %v7948 = vsel %vm1472, %v7938, 0
        %v7951 = vsel %vm1472, %v7939, 0
        %v7954 = vsel %vm1472, %v7940, 0
        %7956 = vmatpush.bf16.msra.mxu0 0
        %7957 = vmatpush.bf16.msra.mxu0 0
        %7958 = vmatpush.bf16.msra.mxu0 0
        %7959 = vmatpush.bf16.msra.mxu0 0
        %7960 = vmatpush.bf16.msra.mxu0 %v7915
        %7961 = vmatpush.bf16.msra.mxu0 %v7914
        %7962 = vmatpush.bf16.msra.mxu0 %v7913
        %7963 = vmatpush.bf16.msra.mxu0 %v7912
        %7964 = vmatmul.bf16.gmra.mxu0 %v7942
        %v7965 = vpop.f32.mrf.mxu0
        %v7966 = vadd.f32 0.0, %v7965
        %v7967 = vpop.f32.mrf.mxu0
        %v7968 = vadd.f32 0.0, %v7967
        %7969 = vmatmul.bf16.gmra.mxu0 %v7945
        %v7970 = vpop.f32.mrf.mxu0
        %v7971 = vadd.f32 0.0, %v7970
        %v7972 = vpop.f32.mrf.mxu0
        %v7973 = vadd.f32 0.0, %v7972
        %7974 = vmatmul.bf16.gmra.mxu0 %v7948
        %v7975 = vpop.f32.mrf.mxu0
        %v7976 = vadd.f32 0.0, %v7975
        %v7977 = vpop.f32.mrf.mxu0
        %v7978 = vadd.f32 0.0, %v7977
        %7979 = vmatmul.bf16.gmra.mxu0 %v7951
        %v7980 = vpop.f32.mrf.mxu0
        %v7981 = vadd.f32 0.0, %v7980
        %v7982 = vpop.f32.mrf.mxu0
        %v7983 = vadd.f32 0.0, %v7982
        %7984 = vmatmul.bf16.gmra.mxu0 %v7954
        %v7985 = vpop.f32.mrf.mxu0
        %v7986 = vadd.f32 0.0, %v7985
        %v7987 = vpop.f32.mrf.mxu0
        %v7988 = vadd.f32 0.0, %v7987
        %7989 = vdwg.mxu0
        %v7990 = vld [vmem:[%s2 + $0x14e0] sm:$0xff]
        %v7991 = vld [vmem:[%s2 + $0x14e8] sm:$0xff]
        %v7992 = vld [vmem:[%s2 + $0x14f0] sm:$0xff]
        %v7993 = vld [vmem:[%s2 + $0x14f8] sm:$0xff]
        %v7994 = vld [vmem:[%s2 + $0x1500] sm:$0xff]
        %v7995 = vld [vmem:[%s2 + $0x1508] sm:$0xff]
        %v7996 = vld [vmem:[%s2 + $0x1510] sm:$0xff]
        %v7997 = vld [vmem:[%s2 + $0x1518] sm:$0xff]
        %v7998 = vld [vmem:[%s2 + $0x1520] sm:$0xff]
        %v7999 = vld [vmem:[%s2 + $0x1528] sm:$0xff]
        %v8000 = vld [vmem:[%s2 + $0x1530] sm:$0xff]
        %v8001 = vld [vmem:[%s2 + $0x1538] sm:$0xff]
        %v8002 = vld [vmem:[%s2 + $0x1540] sm:$0xff]
        %v8003 = vld [vmem:[%s2 + $0x1548] sm:$0xff]
        %v8004 = vld [vmem:[%s2 + $0x1550] sm:$0x7f]
        %v8005 = vld [vmem:[%s2 + $0x1558] sm:$0x7f]
        %v8006 = vld [vmem:[%s2 + $0x1560] sm:$0xff]
        %v8007 = vld [vmem:[%s2 + $0x1568] sm:$0xff]
        %v8008 = vld [vmem:[%s2 + $0x1570] sm:$0xff]
        %v8009 = vld [vmem:[%s2 + $0x1578] sm:$0xff]
        %v8010 = vld [vmem:[%s2 + $0x1580] sm:$0xff]
        %v8011 = vld [vmem:[%s2 + $0x1588] sm:$0xff]
        %v8012 = vld [vmem:[%s2 + $0x1590] sm:$0xff]
        %v8013 = vld [vmem:[%s2 + $0x1598] sm:$0xff]
        %v8014 = vld [vmem:[%s2 + $0x15a0] sm:$0xff]
        %v8015 = vld [vmem:[%s2 + $0x15a8] sm:$0xff]
        %v8016 = vld [vmem:[%s2 + $0x15b0] sm:$0xff]
        %v8017 = vld [vmem:[%s2 + $0x15b8] sm:$0xff]
        %v8018 = vld [vmem:[%s2 + $0x15c0] sm:$0xff]
        %v8019 = vld [vmem:[%s2 + $0x15c8] sm:$0xff]
        %v8020 = vld [vmem:[%s2 + $0x15d0] sm:$0x7f]
        %v8021 = vld [vmem:[%s2 + $0x15d8] sm:$0x7f]
        %v8023 = vsel %vm7772, %v7971, 0
        %v8026 = vsel %vm7772, %v7973, 0
        %v8029 = vsel %vm5892, %v8020, 0
        %v8032 = vsel %vm5892, %v8021, 0
        %8034 = vmatpush.msra.mxu0 0.0
        %8035 = vmatpush.msra.mxu0 0.0
        %8036 = vmatpush.msra.mxu0 0.0
        %8037 = vmatpush.msra.mxu0 0.0
        %8038 = vmatpush.msra.mxu0 0.0
        %8039 = vmatpush.msra.mxu0 0.0
        %8040 = vmatpush.msra.mxu0 0.0
        %8041 = vmatpush.msra.mxu0 0.0
        %8042 = vmatpush.msra.mxu0 %v8029
        %8043 = vmatpush.msra.mxu0 %v8018
        %8044 = vmatpush.msra.mxu0 %v8016
        %8045 = vmatpush.msra.mxu0 %v8014
        %8046 = vmatpush.msra.mxu0 %v8012
        %8047 = vmatpush.msra.mxu0 %v8010
        %8048 = vmatpush.msra.mxu0 %v8008
        %8049 = vmatpush.msra.mxu0 %v8006
        %8050 = vmatmul.f32.gmra.mxu0 %v8023
        %v8051 = vpop.f32.mrf.mxu0
        %v8052 = vadd.f32 0.0, %v8051
        %8053 = vmatmul.f32.gmra.mxu0 %v8026
        %v8054 = vpop.f32.mrf.mxu0
        %v8055 = vadd.f32 0.0, %v8054
        %8056 = vdwg.mxu0
        %8057 = vmatpush.msra.mxu0 0.0
        %8058 = vmatpush.msra.mxu0 0.0
        %8059 = vmatpush.msra.mxu0 0.0
        %8060 = vmatpush.msra.mxu0 0.0
        %8061 = vmatpush.msra.mxu0 0.0
        %8062 = vmatpush.msra.mxu0 0.0
        %8063 = vmatpush.msra.mxu0 0.0
        %8064 = vmatpush.msra.mxu0 0.0
        %8065 = vmatpush.msra.mxu0 %v8032
        %8066 = vmatpush.msra.mxu0 %v8019
        %8067 = vmatpush.msra.mxu0 %v8017
        %8068 = vmatpush.msra.mxu0 %v8015
        %8069 = vmatpush.msra.mxu0 %v8013
        %8070 = vmatpush.msra.mxu0 %v8011
        %8071 = vmatpush.msra.mxu0 %v8009
        %8072 = vmatpush.msra.mxu0 %v8007
        %8073 = vmatmul.f32.gmra.mxu0 %v8023
        %v8074 = vpop.f32.mrf.mxu0
        %v8075 = vadd.f32 0.0, %v8074
        %8076 = vmatmul.f32.gmra.mxu0 %v8026
        %v8077 = vpop.f32.mrf.mxu0
        %v8078 = vadd.f32 0.0, %v8077
        %8079 = vdwg.mxu0
        %v8081 = vsel %vm7772, %v7966, 0
        %v8084 = vsel %vm7772, %v7968, 0
        %v8087 = vsel %vm5892, %v8004, 0
        %v8090 = vsel %vm5892, %v8005, 0
        %8092 = vmatpush.msra.mxu0 0.0
        %8093 = vmatpush.msra.mxu0 0.0
        %8094 = vmatpush.msra.mxu0 0.0
        %8095 = vmatpush.msra.mxu0 0.0
        %8096 = vmatpush.msra.mxu0 0.0
        %8097 = vmatpush.msra.mxu0 0.0
        %8098 = vmatpush.msra.mxu0 0.0
        %8099 = vmatpush.msra.mxu0 0.0
        %8100 = vmatpush.msra.mxu0 %v8087
        %8101 = vmatpush.msra.mxu0 %v8002
        %8102 = vmatpush.msra.mxu0 %v8000
        %8103 = vmatpush.msra.mxu0 %v7998
        %8104 = vmatpush.msra.mxu0 %v7996
        %8105 = vmatpush.msra.mxu0 %v7994
        %8106 = vmatpush.msra.mxu0 %v7992
        %8107 = vmatpush.msra.mxu0 %v7990
        %8108 = vmatmul.f32.gmra.mxu0 %v8081
        %v8109 = vpop.f32.mrf.mxu0
        %v8110 = vadd.f32 %v8052, %v8109
        %8111 = vmatmul.f32.gmra.mxu0 %v8084
        %v8112 = vpop.f32.mrf.mxu0
        %v8113 = vadd.f32 %v8055, %v8112
        %8114 = vdwg.mxu0
        %8115 = vmatpush.msra.mxu0 0.0
        %8116 = vmatpush.msra.mxu0 0.0
        %8117 = vmatpush.msra.mxu0 0.0
        %8118 = vmatpush.msra.mxu0 0.0
        %8119 = vmatpush.msra.mxu0 0.0
        %8120 = vmatpush.msra.mxu0 0.0
        %8121 = vmatpush.msra.mxu0 0.0
        %8122 = vmatpush.msra.mxu0 0.0
        %8123 = vmatpush.msra.mxu0 %v8090
        %8124 = vmatpush.msra.mxu0 %v8003
        %8125 = vmatpush.msra.mxu0 %v8001
        %8126 = vmatpush.msra.mxu0 %v7999
        %8127 = vmatpush.msra.mxu0 %v7997
        %8128 = vmatpush.msra.mxu0 %v7995
        %8129 = vmatpush.msra.mxu0 %v7993
        %8130 = vmatpush.msra.mxu0 %v7991
        %8131 = vmatmul.f32.gmra.mxu0 %v8081
        %v8132 = vpop.f32.mrf.mxu0
        %v8133 = vadd.f32 %v8075, %v8132
        %8134 = vmatmul.f32.gmra.mxu0 %v8084
        %v8135 = vpop.f32.mrf.mxu0
        %v8136 = vadd.f32 %v8078, %v8135
        %8137 = vdwg.mxu0
        %v8138 = vld [vmem:[%s2 + $0x15e0] sm:$0xff]
        %v8139 = vld [vmem:[%s2 + $0x15e8] sm:$0xff]
        %v8140 = vld [vmem:[%s2 + $0x15f0] sm:$0xff]
        %v8141 = vld [vmem:[%s2 + $0x15f8] sm:$0xff]
        %v8142 = vld [vmem:[%s2 + $0x1600] sm:$0xff]
        %v8143 = vld [vmem:[%s2 + $0x1608] sm:$0xff]
        %v8144 = vld [vmem:[%s2 + $0x1610] sm:$0xff]
        %v8145 = vld [vmem:[%s2 + $0x1618] sm:$0xff]
        %v8146 = vld [vmem:[%s2 + $0x1620] sm:$0xff]
        %v8147 = vld [vmem:[%s2 + $0x1628] sm:$0xff]
        %v8148 = vld [vmem:[%s2 + $0x1630] sm:$0xff]
        %v8149 = vld [vmem:[%s2 + $0x1638] sm:$0xff]
        %v8150 = vld [vmem:[%s2 + $0x1640] sm:$0xff]
        %v8151 = vld [vmem:[%s2 + $0x1648] sm:$0xff]
        %v8152 = vld [vmem:[%s2 + $0x1650] sm:$0x7f]
        %v8153 = vld [vmem:[%s2 + $0x1658] sm:$0x7f]
        %v8155 = vsel %vm7772, %v7976, 0
        %v8158 = vsel %vm7772, %v7978, 0
        %v8161 = vsel %vm5892, %v8152, 0
        %v8164 = vsel %vm5892, %v8153, 0
        %8166 = vmatpush.msra.mxu0 0.0
        %8167 = vmatpush.msra.mxu0 0.0
        %8168 = vmatpush.msra.mxu0 0.0
        %8169 = vmatpush.msra.mxu0 0.0
        %8170 = vmatpush.msra.mxu0 0.0
        %8171 = vmatpush.msra.mxu0 0.0
        %8172 = vmatpush.msra.mxu0 0.0
        %8173 = vmatpush.msra.mxu0 0.0
        %8174 = vmatpush.msra.mxu0 %v8161
        %8175 = vmatpush.msra.mxu0 %v8150
        %8176 = vmatpush.msra.mxu0 %v8148
        %8177 = vmatpush.msra.mxu0 %v8146
        %8178 = vmatpush.msra.mxu0 %v8144
        %8179 = vmatpush.msra.mxu0 %v8142
        %8180 = vmatpush.msra.mxu0 %v8140
        %8181 = vmatpush.msra.mxu0 %v8138
        %8182 = vmatmul.f32.gmra.mxu0 %v8155
        %v8183 = vpop.f32.mrf.mxu0
        %v8184 = vadd.f32 0.0, %v8183
        %8185 = vmatmul.f32.gmra.mxu0 %v8158
        %v8186 = vpop.f32.mrf.mxu0
        %v8187 = vadd.f32 0.0, %v8186
        %8188 = vdwg.mxu0
        %8189 = vmatpush.msra.mxu0 0.0
        %8190 = vmatpush.msra.mxu0 0.0
        %8191 = vmatpush.msra.mxu0 0.0
        %8192 = vmatpush.msra.mxu0 0.0
        %8193 = vmatpush.msra.mxu0 0.0
        %8194 = vmatpush.msra.mxu0 0.0
        %8195 = vmatpush.msra.mxu0 0.0
        %8196 = vmatpush.msra.mxu0 0.0
        %8197 = vmatpush.msra.mxu0 %v8164
        %8198 = vmatpush.msra.mxu0 %v8151
        %8199 = vmatpush.msra.mxu0 %v8149
        %8200 = vmatpush.msra.mxu0 %v8147
        %8201 = vmatpush.msra.mxu0 %v8145
        %8202 = vmatpush.msra.mxu0 %v8143
        %8203 = vmatpush.msra.mxu0 %v8141
        %8204 = vmatpush.msra.mxu0 %v8139
        %8205 = vmatmul.f32.gmra.mxu0 %v8155
        %v8206 = vpop.f32.mrf.mxu0
        %v8207 = vadd.f32 0.0, %v8206
        %8208 = vmatmul.f32.gmra.mxu0 %v8158
        %v8209 = vpop.f32.mrf.mxu0
        %v8210 = vadd.f32 0.0, %v8209
        %8211 = vdwg.mxu0
        %v8212 = vadd.f32 %v8110, %v8184
        %v8213 = vadd.f32 %v8133, %v8207
        %v8214 = vadd.f32 %v8113, %v8187
        %v8215 = vadd.f32 %v8136, %v8210
        %v8216 = vld [vmem:[%s2 + $0x1660] sm:$0xff]
        %v8217 = vld [vmem:[%s2 + $0x1668] sm:$0xff]
        %v8218 = vld [vmem:[%s2 + $0x1670] sm:$0xff]
        %v8219 = vld [vmem:[%s2 + $0x1678] sm:$0xff]
        %v8220 = vld [vmem:[%s2 + $0x1680] sm:$0xff]
        %v8221 = vld [vmem:[%s2 + $0x1688] sm:$0xff]
        %v8222 = vld [vmem:[%s2 + $0x1690] sm:$0xff]
        %v8223 = vld [vmem:[%s2 + $0x1698] sm:$0xff]
        %v8224 = vld [vmem:[%s2 + $0x16a0] sm:$0xff]
        %v8225 = vld [vmem:[%s2 + $0x16a8] sm:$0xff]
        %v8226 = vld [vmem:[%s2 + $0x16b0] sm:$0xff]
        %v8227 = vld [vmem:[%s2 + $0x16b8] sm:$0xff]
        %v8228 = vld [vmem:[%s2 + $0x16c0] sm:$0xff]
        %v8229 = vld [vmem:[%s2 + $0x16c8] sm:$0xff]
        %v8230 = vld [vmem:[%s2 + $0x16d0] sm:$0x7f]
        %v8231 = vld [vmem:[%s2 + $0x16d8] sm:$0x7f]
        %v8233 = vsel %vm7772, %v7981, 0
        %v8236 = vsel %vm7772, %v7983, 0
        %v8239 = vsel %vm5892, %v8230, 0
        %v8242 = vsel %vm5892, %v8231, 0
        %8244 = vmatpush.msra.mxu0 0.0
        %8245 = vmatpush.msra.mxu0 0.0
        %8246 = vmatpush.msra.mxu0 0.0
        %8247 = vmatpush.msra.mxu0 0.0
        %8248 = vmatpush.msra.mxu0 0.0
        %8249 = vmatpush.msra.mxu0 0.0
        %8250 = vmatpush.msra.mxu0 0.0
        %8251 = vmatpush.msra.mxu0 0.0
        %8252 = vmatpush.msra.mxu0 %v8239
        %8253 = vmatpush.msra.mxu0 %v8228
        %8254 = vmatpush.msra.mxu0 %v8226
        %8255 = vmatpush.msra.mxu0 %v8224
        %8256 = vmatpush.msra.mxu0 %v8222
        %8257 = vmatpush.msra.mxu0 %v8220
        %8258 = vmatpush.msra.mxu0 %v8218
        %8259 = vmatpush.msra.mxu0 %v8216
        %8260 = vmatmul.f32.gmra.mxu0 %v8233
        %v8261 = vpop.f32.mrf.mxu0
        %v8262 = vadd.f32 0.0, %v8261
        %8263 = vmatmul.f32.gmra.mxu0 %v8236
        %v8264 = vpop.f32.mrf.mxu0
        %v8265 = vadd.f32 0.0, %v8264
        %8266 = vdwg.mxu0
        %8267 = vmatpush.msra.mxu0 0.0
        %8268 = vmatpush.msra.mxu0 0.0
        %8269 = vmatpush.msra.mxu0 0.0
        %8270 = vmatpush.msra.mxu0 0.0
        %8271 = vmatpush.msra.mxu0 0.0
        %8272 = vmatpush.msra.mxu0 0.0
        %8273 = vmatpush.msra.mxu0 0.0
        %8274 = vmatpush.msra.mxu0 0.0
        %8275 = vmatpush.msra.mxu0 %v8242
        %8276 = vmatpush.msra.mxu0 %v8229
        %8277 = vmatpush.msra.mxu0 %v8227
        %8278 = vmatpush.msra.mxu0 %v8225
        %8279 = vmatpush.msra.mxu0 %v8223
        %8280 = vmatpush.msra.mxu0 %v8221
        %8281 = vmatpush.msra.mxu0 %v8219
        %8282 = vmatpush.msra.mxu0 %v8217
        %8283 = vmatmul.f32.gmra.mxu0 %v8233
        %v8284 = vpop.f32.mrf.mxu0
        %v8285 = vadd.f32 0.0, %v8284
        %8286 = vmatmul.f32.gmra.mxu0 %v8236
        %v8287 = vpop.f32.mrf.mxu0
        %v8288 = vadd.f32 0.0, %v8287
        %8289 = vdwg.mxu0
        %v8290 = vadd.f32 %v8212, %v8262
        %v8291 = vadd.f32 %v8213, %v8285
        %v8292 = vadd.f32 %v8214, %v8265
        %v8293 = vadd.f32 %v8215, %v8288
        %v8294 = vld [vmem:[%s2 + $0x16e0] sm:$0xff]
        %v8295 = vld [vmem:[%s2 + $0x16e8] sm:$0xff]
        %v8296 = vld [vmem:[%s2 + $0x16f0] sm:$0xff]
        %v8297 = vld [vmem:[%s2 + $0x16f8] sm:$0xff]
        %v8298 = vld [vmem:[%s2 + $0x1700] sm:$0xff]
        %v8299 = vld [vmem:[%s2 + $0x1708] sm:$0xff]
        %v8300 = vld [vmem:[%s2 + $0x1710] sm:$0xff]
        %v8301 = vld [vmem:[%s2 + $0x1718] sm:$0xff]
        %v8302 = vld [vmem:[%s2 + $0x1720] sm:$0xff]
        %v8303 = vld [vmem:[%s2 + $0x1728] sm:$0xff]
        %v8304 = vld [vmem:[%s2 + $0x1730] sm:$0xff]
        %v8305 = vld [vmem:[%s2 + $0x1738] sm:$0xff]
        %v8306 = vld [vmem:[%s2 + $0x1740] sm:$0xff]
        %v8307 = vld [vmem:[%s2 + $0x1748] sm:$0xff]
        %v8308 = vld [vmem:[%s2 + $0x1750] sm:$0x7f]
        %v8309 = vld [vmem:[%s2 + $0x1758] sm:$0x7f]
        %v8311 = vsel %vm7772, %v7986, 0
        %v8314 = vsel %vm7772, %v7988, 0
        %v8317 = vsel %vm5892, %v8308, 0
        %v8320 = vsel %vm5892, %v8309, 0
        %8322 = vmatpush.msra.mxu0 0.0
        %8323 = vmatpush.msra.mxu0 0.0
        %8324 = vmatpush.msra.mxu0 0.0
        %8325 = vmatpush.msra.mxu0 0.0
        %8326 = vmatpush.msra.mxu0 0.0
        %8327 = vmatpush.msra.mxu0 0.0
        %8328 = vmatpush.msra.mxu0 0.0
        %8329 = vmatpush.msra.mxu0 0.0
        %8330 = vmatpush.msra.mxu0 %v8317
        %8331 = vmatpush.msra.mxu0 %v8306
        %8332 = vmatpush.msra.mxu0 %v8304
        %8333 = vmatpush.msra.mxu0 %v8302
        %8334 = vmatpush.msra.mxu0 %v8300
        %8335 = vmatpush.msra.mxu0 %v8298
        %8336 = vmatpush.msra.mxu0 %v8296
        %8337 = vmatpush.msra.mxu0 %v8294
        %8338 = vmatmul.f32.gmra.mxu0 %v8311
        %v8339 = vpop.f32.mrf.mxu0
        %v8340 = vadd.f32 0.0, %v8339
        %8341 = vmatmul.f32.gmra.mxu0 %v8314
        %v8342 = vpop.f32.mrf.mxu0
        %v8343 = vadd.f32 0.0, %v8342
        %8344 = vdwg.mxu0
        %8345 = vmatpush.msra.mxu0 0.0
        %8346 = vmatpush.msra.mxu0 0.0
        %8347 = vmatpush.msra.mxu0 0.0
        %8348 = vmatpush.msra.mxu0 0.0
        %8349 = vmatpush.msra.mxu0 0.0
        %8350 = vmatpush.msra.mxu0 0.0
        %8351 = vmatpush.msra.mxu0 0.0
        %8352 = vmatpush.msra.mxu0 0.0
        %8353 = vmatpush.msra.mxu0 %v8320
        %8354 = vmatpush.msra.mxu0 %v8307
        %8355 = vmatpush.msra.mxu0 %v8305
        %8356 = vmatpush.msra.mxu0 %v8303
        %8357 = vmatpush.msra.mxu0 %v8301
        %8358 = vmatpush.msra.mxu0 %v8299
        %8359 = vmatpush.msra.mxu0 %v8297
        %8360 = vmatpush.msra.mxu0 %v8295
        %8361 = vmatmul.f32.gmra.mxu0 %v8311
        %v8362 = vpop.f32.mrf.mxu0
        %v8363 = vadd.f32 0.0, %v8362
        %8364 = vmatmul.f32.gmra.mxu0 %v8314
        %v8365 = vpop.f32.mrf.mxu0
        %v8366 = vadd.f32 0.0, %v8365
        %8367 = vdwg.mxu0
        %v8368 = vadd.f32 %v8290, %v8340
        %v8369 = vadd.f32 %v8291, %v8363
        %v8370 = vadd.f32 %v8292, %v8343
        %v8371 = vadd.f32 %v8293, %v8366
        %v8372 = vld [vmem:[%s2 + $0x1760] sm:$0xff]
        %v8373 = vld [vmem:[%s2 + $0x1770] sm:$0xff]
        %8375 = vset.pattern.permute.xlu0 0
        %8376 = vperm.xlu0 %8375, %v8372
        %v8377 = vpop.permute.xlu0 %8376
        %8380 = vset.pattern.permute.xlu0 0
        %8381 = vperm.xlu0 %8380, %v8373
        %v8382 = vpop.permute.xlu0 %8381
        %v8384 = vadd.f32 %v8368, %v8377
        %v8385 = vadd.f32 %v8369, %v8377
        %v8386 = vadd.f32 %v8370, %v8382
        %v8387 = vadd.f32 %v8371, %v8382
        %v8388 = vmax.f32 %v8384, 0.0
        %v8389 = vmax.f32 %v8385, 0.0
        %v8390 = vmax.f32 %v8386, 0.0
        %v8391 = vmax.f32 %v8387, 0.0
        %v8392 = vand.u32 2147483647, %v8384
        %v8393 = vand.u32 2147483647, %v8385
        %v8394 = vand.u32 2147483647, %v8386
        %v8395 = vand.u32 2147483647, %v8387
        %v8396 = vsub.f32 0.0, %v8392
        %v8397 = vsub.f32 0.0, %v8393
        %v8398 = vsub.f32 0.0, %v8394
        %v8399 = vsub.f32 0.0, %v8395
        %v8400 = vmul.f32 %v8396, 1.442695
        %v8401 = vpow.pop %v8400
        %v8402 = vmul.f32 %v8397, 1.442695
        %v8403 = vpow.pop %v8402
        %v8404 = vmul.f32 %v8398, 1.442695
        %v8405 = vpow.pop %v8404
        %v8406 = vmul.f32 %v8399, 1.442695
        %v8407 = vpow.pop %v8406
        %v8408 = vadd.f32 %v8401, 1.0
        %v8409 = vlog2.pop %v8408
        %v8410 = vmul.f32 %v8409, 0.6931472
        %v8411 = vmul.f32 -0.5, %v8401
        %v8412 = vadd.f32 %v8411, 1.0
        %v8413 = vmul.f32 %v8412, %v8401
        %v8414 = vand.u32 2147483647, %v8401
        %vm8415 = vcmp.lt.f32.partialorder %v8414, 0.0004427343
        %v8416 = vsel %vm8415, %v8413, %v8410
        %v8417 = vadd.f32 %v8403, 1.0
        %v8418 = vlog2.pop %v8417
        %v8419 = vmul.f32 %v8418, 0.6931472
        %v8420 = vmul.f32 -0.5, %v8403
        %v8421 = vadd.f32 %v8420, 1.0
        %v8422 = vmul.f32 %v8421, %v8403
        %v8423 = vand.u32 2147483647, %v8403
        %vm8424 = vcmp.lt.f32.partialorder %v8423, 0.0004427343
        %v8425 = vsel %vm8424, %v8422, %v8419
        %v8426 = vadd.f32 %v8405, 1.0
        %v8427 = vlog2.pop %v8426
        %v8428 = vmul.f32 %v8427, 0.6931472
        %v8429 = vmul.f32 -0.5, %v8405
        %v8430 = vadd.f32 %v8429, 1.0
        %v8431 = vmul.f32 %v8430, %v8405
        %v8432 = vand.u32 2147483647, %v8405
        %vm8433 = vcmp.lt.f32.partialorder %v8432, 0.0004427343
        %v8434 = vsel %vm8433, %v8431, %v8428
        %v8435 = vadd.f32 %v8407, 1.0
        %v8436 = vlog2.pop %v8435
        %v8437 = vmul.f32 %v8436, 0.6931472
        %v8438 = vmul.f32 -0.5, %v8407
        %v8439 = vadd.f32 %v8438, 1.0
        %v8440 = vmul.f32 %v8439, %v8407
        %v8441 = vand.u32 2147483647, %v8407
        %vm8442 = vcmp.lt.f32.partialorder %v8441, 0.0004427343
        %v8443 = vsel %vm8442, %v8440, %v8437
        %v8444 = vadd.f32 %v8388, %v8416
        %v8445 = vadd.f32 %v8389, %v8425
        %v8446 = vadd.f32 %v8390, %v8434
        %v8447 = vadd.f32 %v8391, %v8443
        %8448 = vst [vmem:[%s163] sm:$0xff] %v8444
        %vm8449 = vcmask 7168
        %8450 = vst.msk [vmem:[%s163 + $0x8] sm:$0xff] %vm8449, %v8445
        %8451 = vst [vmem:[%s163 + $0x10] sm:$0xff] %v8446
        %8452 = vst.msk [vmem:[%s163 + $0x18] sm:$0xff] %vm8449, %v8447
        %s8453 = sand.u32 %s93, 1
        %s8454 = scalar_lea.sflag [#allocation3], %s8453
        %s8455 = sand.u32 %s93, 1
        %s8456 = smul.addr %s8455, 32
        %s8457 = scalar_lea.vmem [#allocation2], %s8456
        // Predicated region
        $region33: #{fwd.1} parent=31 // pred_check
          %p8458 = pneg %p103
        $region34: #{fwd.1} parent=31 // pred_check_branch
          %8460 = sbr.rel (%p8458) target = $region36
        $region35: #{fwd.1} parent=31 // pred_region
          %8462 = vsyncadd %s8454, 0
          %s8463 = smul.addr %s17, 4
          %s8464 = smul.addr %s8463, 8
          %s8465 = scalar_lea.hbm %s3, %s8464
          %s8466 = sshll.u32 %s8457, 4
          %s8467 = int_to_ptr.vmem [resolvable:$true] %s8466
          %s8468 = sshll.u32 %s8465, 4
          %s8469 = int_to_ptr.hbm [resolvable:$true] %s8468
          %8474 = dma.vmem_to_hbm [thread:$0]  %s8467, 512, %s8469, %s8454, 256, 256, 16
        $region36: #{fwd.1} parent=31 // pred_fallthru
          _
      $region32: #{fwd.1} parent=5 // pred_fallthru
        _
      %p8475 = scmp.le.s32.totalorder 2, %s12
      // Predicated region
      $region37: #{fwd.1} parent=5 // pred_check
        %p8476 = pneg %p8475
      $region38: #{fwd.1} parent=5 // pred_check_branch
        %8478 = sbr.rel (%p8476) target = $region40
      $region39: #{fwd.1} parent=5 // pred_region
        %s8479 = ssub.s32 %s12, 2
        // Predicated region
        $region41: #{fwd.1} parent=39 // pred_check
          %p8480 = pneg %p109
        $region42: #{fwd.1} parent=39 // pred_check_branch
          %8482 = sbr.rel (%p8480) target = $region44
        $region43: #{fwd.1} parent=39 // pred_region
          %s8483 = sand.u32 %s94, 1
          %s8484 = scalar_lea.sflag [#allocation3], %s8483
          %s8485 = sand.u32 %s94, 1
          %s8486 = smul.addr %s8485, 32
          %s8487 = scalar_lea.vmem [#allocation2], %s8486
          %8489 = dma.done %s8484, 512
        $region44: #{fwd.1} parent=39 // pred_fallthru
          _
      $region40: #{fwd.1} parent=5 // pred_fallthru
        _
    $region6: #{fwd.1} parent=1 // loop_footer
      %s16 = sadd.s32 1, %s12
    $region7: #{fwd.1} parent=1 // loop_footer_branch
      %11 = sbr.rel target = $region3
    $region8: #{fwd.1} parent=1 // loop_exit
      _
    %8490 = vsyncpa [#allocation3], 1
    %s8491 = scalar_lea.sflag [#allocation3], 1
    %8492 = vsyncpa %s8491, 1

</llo_original>
